<compile_context>
chip_gen: v7x
topology: tpu7x:2x2x1
jax: 0.10.0
libtpu: 0.0.40
codegen_flags: <defaults>
</compile_context>

<pallas_src>
import functools
import math

import jax
import jax.numpy as jnp
from jax.experimental import pallas as pl
from jax.experimental.pallas import tpu as pltpu

F32 = jnp.float32
BF16 = jnp.bfloat16
EPS = 1e-8          # gvp _norm_no_nan eps
LN_EPS = 1e-5       # torch.nn.LayerNorm default eps
VMEM_LIMIT = 48 * 1024 * 1024   # headroom under v7x's 64 MiB physical VMEM


# ----------------------------------------------------------------------------- helpers

def _round_up(x, m):
    return ((x + m - 1) // m) * m


def _row_block(n, target):
    """Row tile: big (target) when possible, 8-aligned and clamped for tiny inputs."""
    return min(target, _round_up(max(int(n), 1), 8))


def _resident_spec(a):
    """Weight stays resident in VMEM across the 1-D row grid."""
    nd = a.ndim
    return pl.BlockSpec(a.shape, lambda i, nd=nd: (0,) * nd)


def _kron3(w):
    """Block-diagonal kron(I3, w): applies w independently to x/y/z slab blocks."""
    return jnp.kron(jnp.eye(3, dtype=w.dtype), w)


def _norm3(x, y, z):
    return jnp.sqrt(jnp.maximum(x * x + y * y + z * z, EPS))


def _layernorm(s, g, b):
    mu = jnp.mean(s, axis=-1, keepdims=True)
    var = jnp.mean(jnp.square(s - mu), axis=-1, keepdims=True)
    return (s - mu) * jax.lax.rsqrt(var + LN_EPS) * g + b


def _gvp_apply(s, v, whk, wss, wsv, bs, *, wvk=None,
               scalar_act=False, vector_act=False):
    """One GVP layer (Jing et al., vector_gate=False) on lane-dense slabs.

    v is (m, 3*vi) as [x|y|z]; whk/wvk are kron(I3, wh)/(I3, wv) block-diagonal
    so the xyz components are transformed with one matmul and no row-axis
    concatenation/relayout.  The tiny-K `wsv` contraction (K = h <= 5) is
    unrolled as VPU broadcast-FMAs instead of an MXU launch.  When wvk is None
    the vector output is dead and its matmul is skipped entirely.
    """
    h = whk.shape[1] // 3
    vh = jnp.dot(v, whk, preferred_element_type=F32)               # (m, 3h)
    vn = _norm3(vh[:, :h], vh[:, h:2 * h], vh[:, 2 * h:])          # (m, h)

    s_out = jnp.dot(s.astype(wss.dtype), wss, preferred_element_type=F32) + bs
    for c in range(h):                                             # K<=5 -> VPU FMAs
        s_out = s_out + vn[:, c:c + 1] * wsv[c:c + 1, :]
    if scalar_act:
        s_out = jnp.maximum(s_out, 0.0)

    if wvk is None:          # vector output unused downstream (ff2)
        return s_out, None

    vo = wvk.shape[1] // 3
    o = jnp.dot(vh, wvk, preferred_element_type=F32)               # (m, 3vo)
    if vector_act:           # sigmoid gating by output vector norm
        gate = jax.nn.sigmoid(_norm3(o[:, :vo], o[:, vo:2 * vo], o[:, 2 * vo:]))
        o = o * jnp.concatenate([gate, gate, gate], axis=-1)
    return s_out, o


# ----------------------------------------------------------------------------- kernels

def linear_bias_kernel(x_ref, w_ref, b_ref, o_ref):
    o_ref[...] = (jnp.dot(x_ref[...], w_ref[...], preferred_element_type=F32)
                  + b_ref[...])


def message_gvp_kernel(ms_ref, mv_ref,
                       wh1, wv1, ws1, wx1, b1,
                       wh2, wv2, ws2, wx2, b2,
                       wh3, wv3, ws3, wx3, b3,
                       o_ref):
    s, v = _gvp_apply(ms_ref[...], mv_ref[...], wh1[...], ws1[...], wx1[...],
                      b1[...], wvk=wv1[...], scalar_act=True, vector_act=True)
    s, v = _gvp_apply(s, v, wh2[...], ws2[...], wx2[...],
                      b2[...], wvk=wv2[...], scalar_act=True, vector_act=True)
    s, v = _gvp_apply(s, v, wh3[...], ws3[...], wx3[...],
                      b3[...], wvk=wv3[...], scalar_act=False, vector_act=False)
    # single lane-dense (rows, 128+6) bf16 output slab (scalar | vector)
    o_ref[...] = jnp.concatenate([s, v], axis=-1).astype(o_ref.dtype)


def scatter_mean_kernel(dst_ref, invdeg_ref, msg_ref, o_ref, acc_ref, *, bn):
    # TODO(synk): incidence-matmul scatter is O(N*E); a sorted-edge segment sum
    # via PrefetchScalarGridSpec would be O(E) for very large graphs.
    i = pl.program_id(0)
    j = pl.program_id(1)

    @pl.when(j == 0)
    def _():
        acc_ref[...] = jnp.zeros_like(acc_ref)

    # On-chip (node-tile x edge-tile) one-hot incidence block.  Edge padding
    # carries dst = -1, so padded columns never match any row and no extra
    # where/col-mask is needed (padded message rows are finite by construction).
    dst = dst_ref[...]                                                  # (1, be)
    be = dst.shape[1]
    rows = i * bn + jax.lax.broadcasted_iota(jnp.int32, (bn, be), 0)
    mask = (rows == dst).astype(BF16)                                   # exact 0/1

    acc_ref[...] += jnp.dot(mask, msg_ref[...], preferred_element_type=F32)

    @pl.when(j == pl.num_programs(1) - 1)
    def _():
        o_ref[...] = acc_ref[...] * invdeg_ref[...]


def node_update_kernel(s_ref, agg_ref, v_ref,
                       g0_ref, b0_ref,
                       f1wh, f1wv, f1ws, f1wx, f1b,
                       f2wh, f2ws, f2wx, f2b,
                       g1_ref, b1_ref, row_ref, rob_ref, o_ref, *, so, nv):
    agg = agg_ref[...]                                   # (bn, so + 3*nv)

    # residual + GVP LayerNorm 0
    s = _layernorm(s_ref[...] + agg[:, :so], g0_ref[...], b0_ref[...])
    v = v_ref[...] + agg[:, so:]
    vx, vy, vz = v[:, :nv], v[:, nv:2 * nv], v[:, 2 * nv:]
    vn2 = jnp.maximum(vx * vx + vy * vy + vz * vz, EPS)
    v = v * jax.lax.rsqrt(jnp.mean(vn2, axis=-1, keepdims=True))

    # feed-forward GVPs (128,2)->(512,4)->(128,2); ff2 vector output is dead
    fs, fv = _gvp_apply(s, v, f1wh[...], f1ws[...], f1wx[...], f1b[...],
                        wvk=f1wv[...], scalar_act=True, vector_act=True)
    fs, _ = _gvp_apply(fs, fv, f2wh[...], f2ws[...], f2wx[...], f2b[...])

    # residual + LayerNorm 1 (scalar branch only: read_out uses the scalar embedding)
    s = _layernorm(s + fs, g1_ref[...], b1_ref[...])

    # read_out + sigmoid
    o_ref[...] = jax.nn.sigmoid(
        jnp.dot(s, row_ref[...], preferred_element_type=F32) + rob_ref[...])


# ----------------------------------------------------------------------------- pallas_call wrappers

def linear_scalar_call(x, w_bf16, b, *, target_rows=1024):
    n, k = x.shape
    m = w_bf16.shape[1]
    br = _row_block(n, target_rows)
    return pl.pallas_call(
        linear_bias_kernel,
        grid=(pl.cdiv(n, br),),
        in_specs=[pl.BlockSpec((br, k), lambda i: (i, 0)),
                  pl.BlockSpec((k, m), lambda i: (0, 0)),
                  pl.BlockSpec((1, m), lambda i: (0, 0))],
        out_specs=pl.BlockSpec((br, m), lambda i: (i, 0)),
        out_shape=jax.ShapeDtypeStruct((n, m), F32),
        compiler_params=pltpu.CompilerParams(
            dimension_semantics=("parallel",),
            vmem_limit_bytes=VMEM_LIMIT),
    )(x.astype(BF16), w_bf16, b)


def message_gvp_call(m_s, m_v, p1, p2, p3, *, target_rows=512):
    e, si = m_s.shape
    vi3 = m_v.shape[1]
    so = p3[2].shape[1]
    vo = p3[1].shape[1]
    ow = so + 3 * vo
    br = _row_block(e, target_rows)

    weights = []
    for p in (p1, p2, p3):
        weights += [_kron3(p[0]), _kron3(p[1]), p[2], p[3], p[4]]
    weights = tuple(weights)

    in_specs = ([pl.BlockSpec((br, si), lambda i: (i, 0)),
                 pl.BlockSpec((br, vi3), lambda i: (i, 0))]
                + [_resident_spec(w) for w in weights])

    return pl.pallas_call(
        message_gvp_kernel,
        grid=(pl.cdiv(e, br),),
        in_specs=in_specs,
        out_specs=pl.BlockSpec((br, ow), lambda i: (i, 0)),
        out_shape=jax.ShapeDtypeStruct((e, ow), BF16),     # bf16 halves HBM traffic
        compiler_params=pltpu.CompilerParams(
            dimension_semantics=("parallel",),
            vmem_limit_bytes=VMEM_LIMIT),
    )(m_s.astype(BF16), m_v, *weights)


def scatter_mean_call(dst2d, inv_deg, msg, n_nodes, *, edge_block,
                      target_node_rows=1024):
    e_pad, cw = msg.shape
    bn = _row_block(n_nodes, target_node_rows)
    be = edge_block
    grid = (pl.cdiv(n_nodes, bn), e_pad // be)

    kern = functools.partial(scatter_mean_kernel, bn=bn)
    return pl.pallas_call(
        kern,
        grid=grid,
        in_specs=[pl.BlockSpec((1, be), lambda i, j: (0, j)),
                  pl.BlockSpec((bn, 1), lambda i, j: (i, 0)),
                  pl.BlockSpec((be, cw), lambda i, j: (j, 0))],
        out_specs=pl.BlockSpec((bn, cw), lambda i, j: (i, 0)),
        out_shape=jax.ShapeDtypeStruct((n_nodes, cw), F32),
        scratch_shapes=[pltpu.VMEM((bn, cw), F32)],
        compiler_params=pltpu.CompilerParams(
            dimension_semantics=("parallel", "arbitrary"),
            vmem_limit_bytes=VMEM_LIMIT),
    )(dst2d, inv_deg, msg)


def node_update_call(s, agg, v6, norm0, ff1, ff2, norm1, ro, *, target_rows=512):
    n, so = s.shape
    nv = v6.shape[1] // 3
    aw = agg.shape[1]
    bn = _row_block(n, target_rows)

    w_ff1 = (_kron3(ff1[0]), _kron3(ff1[1]), ff1[2], ff1[3], ff1[4])
    w_ff2 = (_kron3(ff2[0]), ff2[2], ff2[3], ff2[4])     # wv dropped: vector out dead
    weights = (*norm0, *w_ff1, *w_ff2, *norm1, *ro)

    in_specs = ([pl.BlockSpec((bn, so), lambda i: (i, 0)),
                 pl.BlockSpec((bn, aw), lambda i: (i, 0)),
                 pl.BlockSpec((bn, 3 * nv), lambda i: (i, 0))]
                + [_resident_spec(w) for w in weights])

    return pl.pallas_call(
        functools.partial(node_update_kernel, so=so, nv=nv),
        grid=(pl.cdiv(n, bn),),
        in_specs=in_specs,
        out_specs=pl.BlockSpec((bn, 1), lambda i: (i, 0)),
        out_shape=jax.ShapeDtypeStruct((n, 1), F32),
        compiler_params=pltpu.CompilerParams(
            dimension_semantics=("parallel",),
            vmem_limit_bytes=VMEM_LIMIT),
    )(s, agg, v6, *weights)


# ----------------------------------------------------------------------------- parameter init

def _linear_init(key, fan_in, fan_out, bias=True, w_dtype=F32):
    k = 1.0 / math.sqrt(fan_in)
    kw, kb = jax.random.split(key)
    w = jax.random.uniform(kw, (fan_in, fan_out), F32, -k, k).astype(w_dtype)
    if not bias:
        return w
    b = jax.random.uniform(kb, (1, fan_out), F32, -k, k)
    return w, b


def _gvp_init(key, si, vi, so, vo):
    h = max(vi, vo)
    k1, k2, k3, k4, k5 = jax.random.split(key, 5)
    wh = _linear_init(k1, vi, h, bias=False)                     # (vi, h)  f32
    wv = _linear_init(k2, h, vo, bias=False)                     # (h, vo)  f32
    kf = 1.0 / math.sqrt(si + h)
    wss = jax.random.uniform(k3, (si, so), F32, -kf, kf).astype(BF16)   # bf16 MXU path
    wsv = jax.random.uniform(k4, (h, so), F32, -kf, kf)
    bs = jax.random.uniform(k5, (1, so), F32, -kf, kf)
    return (wh, wv, wss, wsv, bs)


def init_params(key):
    ks = jax.random.split(key, 10)
    return {
        "lin": _linear_init(ks[0], 1433, 128, w_dtype=BF16),      # linear_scalar
        # GVPConv message function: 3 GVPs, in (2*128+8, 2*2+1) -> (128, 2)
        "gvp_m1": _gvp_init(ks[1], 264, 5, 128, 2),
        "gvp_m2": _gvp_init(ks[2], 128, 2, 128, 2),
        "gvp_m3": _gvp_init(ks[3], 128, 2, 128, 2),               # activations (None, None)
        "norm0": (jnp.ones((1, 128), F32), jnp.zeros((1, 128), F32)),
        # feed-forward: (128,2) -> (512,4) -> (128,2)
        "ff1": _gvp_init(ks[4], 128, 2, 512, 4),
        "ff2": _gvp_init(ks[5], 512, 4, 128, 2),                  # activations (None, None)
        "norm1": (jnp.ones((1, 128), F32), jnp.zeros((1, 128), F32)),
        "ro": _linear_init(ks[6], 128, 1),                        # read_out
    }


# ----------------------------------------------------------------------------- forward

def scoring_model_forward(params, node_s, node_v, edge_index, edge_s, edge_v):
    """sigmoid(read_out(GVPConvLayer(linear_scalar(node_s), node_v, ...)[0])).

    node_s: (N, 1433)  node_v: (N, 2, 3)
    edge_index: (2, E) int32 (row 0 = source j, row 1 = target i, PyG convention)
    edge_s: (E, 8)     edge_v: (E, 1, 3)
    """
    n = node_s.shape[0]
    e = edge_s.shape[0]

    # --- linear_scalar (Pallas, 1024-row bf16 matmul tiles, f32 accumulation)
    s = linear_scalar_call(node_s, *params["lin"])                       # (N, 128)

    # geometric vectors as lane-dense [x|y|z] slabs (glue)
    v6 = jnp.concatenate([node_v[:, :, 0], node_v[:, :, 1], node_v[:, :, 2]], -1)   # (N, 6)
    ev3 = jnp.concatenate([edge_v[:, :, 0], edge_v[:, :, 1], edge_v[:, :, 2]], -1)  # (E, 3)

    # pad the edge dimension to a multiple of the scatter edge-tile.  Padded
    # edges gather node 0 (finite values) and carry dst = -1 so they never hit
    # the incidence mask -> no per-tile guards needed inside the scatter kernel.
    be = min(512, _round_up(e, 128))
    e_pad = _round_up(e, be)
    pad = e_pad - e
    src = jnp.pad(edge_index[0], (0, pad))
    dst_g = jnp.pad(edge_index[1], (0, pad))
    dst_m = jnp.pad(edge_index[1], (0, pad), constant_values=-1)
    dst_m = dst_m.reshape(1, e_pad).astype(jnp.int32)
    edge_s_p = jnp.pad(edge_s, ((0, pad), (0, 0)))
    ev3_p = jnp.pad(ev3, ((0, pad), (0, 0)))

    # per-edge message inputs: cat((s_j, v_j), edge_attr, (s_i, v_i))  (gather glue)
    m_s = jnp.concatenate([s[src], edge_s_p, s[dst_g]], axis=-1)         # (E_pad, 264)
    sv, dvv = v6[src], v6[dst_g]
    m_v = jnp.concatenate([sv[:, 0:2], ev3_p[:, 0:1], dvv[:, 0:2],       # x components (5)
                           sv[:, 2:4], ev3_p[:, 1:2], dvv[:, 2:4],       # y components (5)
                           sv[:, 4:6], ev3_p[:, 2:3], dvv[:, 4:6]], -1)  # z components (5)

    # --- fused GVPConv message function: GVP x3 -> single (E_pad, 134) bf16 slab
    msg = message_gvp_call(m_s, m_v, params["gvp_m1"],
                           params["gvp_m2"], params["gvp_m3"])

    # --- scatter-mean at target nodes (Pallas, E-tiled, on-chip incidence mask)
    deg = jnp.zeros((n,), F32).at[edge_index[1]].add(1.0)
    inv_deg = (1.0 / jnp.maximum(deg, 1.0)).reshape(n, 1)
    agg = scatter_mean_call(dst_m, inv_deg, msg, n, edge_block=be)       # (N, 134)

    # TODO(synk): GVPConvLayer dropout (p=0.1) treated as inference-mode identity;
    # vector_gate=False (gvp-pytorch default) is assumed; the post-ff vector
    # residual/LayerNorm is skipped because read_out only consumes the scalars.
    # --- fused node update: res+LN0 -> ff GVP x2 -> res+LN1 -> read_out + sigmoid
    out = node_update_call(s, agg, v6,
                           params["norm0"], params["ff1"], params["ff2"],
                           params["norm1"], params["ro"])
    return out[:, 0]                                                     # (N,)


# ----------------------------------------------------------------------------- main

if __name__ == "__main__":
    N, E = 16, 48
    key = jax.random.PRNGKey(0)
    k1, k2, k3, k4, k5 = jax.random.split(key, 5)

    node_s = jax.random.normal(k1, (N, 1433), F32)    # concatenated residue/atom/esm/... features
    node_v = jax.random.normal(k2, (N, 2, 3), F32)    # [ToNextCA, ToLastCA]
    edge_s = jax.random.normal(k3, (E, 8), F32)       # distance_fourier
    edge_v = jax.random.normal(k4, (E, 1, 3), F32)    # direction_vector
    edge_index = jax.random.randint(k5, (2, E), 0, N, dtype=jnp.int32)

    params = init_params(jax.random.PRNGKey(42))

    fwd = jax.jit(scoring_model_forward)
    out = fwd(params, node_s, node_v, edge_index, edge_s, edge_v)
    jax.block_until_ready(out)

    assert out.shape == (N,)
    assert bool(jnp.all(jnp.isfinite(out)))
    assert bool(jnp.all((out >= 0.0) & (out <= 1.0)))
    print("KERNEL_OK")
</pallas_src>

<mosaic_0001>
module attributes {stable_mosaic.version = 11 : i64} {
  func.func private @main(%arg0: i32) attributes {dimension_semantics = [#tpu.dimension_semantics<core_parallel>], iteration_bounds = array<i64: 2>, tpu.core_type = #tpu.core_type<sc_scalar_subcore>, window_params = []} {
    return
  }
}

module attributes {stable_mosaic.version = 11 : i64} {
  func.func private @main(%arg0: i32) attributes {dimension_semantics = [#tpu.dimension_semantics<core_parallel>], iteration_bounds = array<i64: 2>, tpu.core_type = #tpu.core_type<sc_scalar_subcore>, window_params = []} {
    return
  }
}

module attributes {stable_mosaic.version = 11 : i64} {
  func.func @linear_bias_kernel(%arg0: i32, %arg1: memref<16x1433xbf16, #tpu.memory_space<vmem>>, %arg2: memref<1433x128xbf16, #tpu.memory_space<vmem>>, %arg3: memref<1x128xf32, #tpu.memory_space<vmem>>, %arg4: memref<16x128xf32, #tpu.memory_space<vmem>>) attributes {dimension_semantics = [#tpu.dimension_semantics<parallel>], iteration_bounds = array<i64: 1>, scalar_prefetch = 0 : i64, scratch_operands = 0 : i64, tpu.core_type = #tpu.core_type<tc>, window_params = [{transform_indices = @transform_0, window_bounds = array<i64: 16, 1433>}, {pipeline_mode = #tpu.pipeline_mode<synchronous>, transform_indices = @transform_1, window_bounds = array<i64: 1433, 128>}, {pipeline_mode = #tpu.pipeline_mode<synchronous>, transform_indices = @transform_2, window_bounds = array<i64: 1, 128>}, {transform_indices = @transform_3, window_bounds = array<i64: 16, 128>}]} {
    %c0 = arith.constant 0 : index
    %c0_0 = arith.constant 0 : index
    %0 = vector.load %arg1[%c0, %c0_0] : memref<16x1433xbf16, #tpu.memory_space<vmem>>, vector<16x1433xbf16>
    %c0_1 = arith.constant 0 : index
    %c0_2 = arith.constant 0 : index
    %1 = vector.load %arg2[%c0_1, %c0_2] : memref<1433x128xbf16, #tpu.memory_space<vmem>>, vector<1433x128xbf16>
    %cst = arith.constant dense<0.000000e+00> : vector<16x128xf32>
    %2 = tpu.matmul %0, %1, %cst {dimension_numbers = #tpu.dot_dimension_numbers<[1], [0], [0], [1], [0, 0, 1, 1], [], []>} : vector<16x1433xbf16>, vector<1433x128xbf16>, vector<16x128xf32> -> vector<16x128xf32>
    %c0_3 = arith.constant 0 : index
    %c0_4 = arith.constant 0 : index
    %3 = vector.load %arg3[%c0_3, %c0_4] : memref<1x128xf32, #tpu.memory_space<vmem>>, vector<1x128xf32>
    %4 = vector.broadcast %3 : vector<1x128xf32> to vector<16x128xf32>
    %5 = arith.addf %2, %4 : vector<16x128xf32>
    %c0_5 = arith.constant 0 : index
    %c0_6 = arith.constant 0 : index
    %6 = vector.load %arg4[%c0_5, %c0_6] : memref<16x128xf32, #tpu.memory_space<vmem>>, vector<16x128xf32>
    tpu.vector_store %arg4[%c0_5, %c0_6], %5 {strides = array<i32>} : memref<16x128xf32, #tpu.memory_space<vmem>>, vector<16x128xf32>,
    return
  }
  func.func @transform_0(%arg0: i32) -> (i32, i32) {
    %c0_i32 = arith.constant 0 : i32
    %c0_i32_0 = arith.constant 0 : i32
    return %arg0, %c0_i32 : i32, i32
  }
  func.func @transform_1(%arg0: i32) -> (i32, i32) {
    %c0_i32 = arith.constant 0 : i32
    %c0_i32_0 = arith.constant 0 : i32
    %c0_i32_1 = arith.constant 0 : i32
    return %c0_i32, %c0_i32_0 : i32, i32
  }
  func.func @transform_2(%arg0: i32) -> (i32, i32) {
    %c0_i32 = arith.constant 0 : i32
    %c0_i32_0 = arith.constant 0 : i32
    %c0_i32_1 = arith.constant 0 : i32
    return %c0_i32, %c0_i32_0 : i32, i32
  }
  func.func @transform_3(%arg0: i32) -> (i32, i32) {
    %c0_i32 = arith.constant 0 : i32
    %c0_i32_0 = arith.constant 0 : i32
    return %arg0, %c0_i32 : i32, i32
  }
}

module attributes {stable_mosaic.version = 11 : i64} {
  func.func @message_gvp_kernel(%arg0: i32, %arg1: memref<128x264xbf16, #tpu.memory_space<vmem>>, %arg2: memref<128x15xf32, #tpu.memory_space<vmem>>, %arg3: memref<15x15xf32, #tpu.memory_space<vmem>>, %arg4: memref<15x6xf32, #tpu.memory_space<vmem>>, %arg5: memref<264x128xbf16, #tpu.memory_space<vmem>>, %arg6: memref<5x128xf32, #tpu.memory_space<vmem>>, %arg7: memref<1x128xf32, #tpu.memory_space<vmem>>, %arg8: memref<6x6xf32, #tpu.memory_space<vmem>>, %arg9: memref<6x6xf32, #tpu.memory_space<vmem>>, %arg10: memref<128x128xbf16, #tpu.memory_space<vmem>>, %arg11: memref<2x128xf32, #tpu.memory_space<vmem>>, %arg12: memref<1x128xf32, #tpu.memory_space<vmem>>, %arg13: memref<6x6xf32, #tpu.memory_space<vmem>>, %arg14: memref<6x6xf32, #tpu.memory_space<vmem>>, %arg15: memref<128x128xbf16, #tpu.memory_space<vmem>>, %arg16: memref<2x128xf32, #tpu.memory_space<vmem>>, %arg17: memref<1x128xf32, #tpu.memory_space<vmem>>, %arg18: memref<128x134xbf16, #tpu.memory_space<vmem>>) attributes {dimension_semantics = [#tpu.dimension_semantics<parallel>], iteration_bounds = array<i64: 1>, scalar_prefetch = 0 : i64, scratch_operands = 0 : i64, tpu.core_type = #tpu.core_type<tc>, window_params = [{transform_indices = @transform_0, window_bounds = array<i64: 128, 264>}, {transform_indices = @transform_1, window_bounds = array<i64: 128, 15>}, {pipeline_mode = #tpu.pipeline_mode<synchronous>, transform_indices = @transform_2, window_bounds = array<i64: 15, 15>}, {pipeline_mode = #tpu.pipeline_mode<synchronous>, transform_indices = @transform_3, window_bounds = array<i64: 15, 6>}, {pipeline_mode = #tpu.pipeline_mode<synchronous>, transform_indices = @transform_4, window_bounds = array<i64: 264, 128>}, {pipeline_mode = #tpu.pipeline_mode<synchronous>, transform_indices = @transform_5, window_bounds = array<i64: 5, 128>}, {pipeline_mode = #tpu.pipeline_mode<synchronous>, transform_indices = @transform_6, window_bounds = array<i64: 1, 128>}, {pipeline_mode = #tpu.pipeline_mode<synchronous>, transform_indices = @transform_7, window_bounds = array<i64: 6, 6>}, {pipeline_mode = #tpu.pipeline_mode<synchronous>, transform_indices = @transform_8, window_bounds = array<i64: 6, 6>}, {pipeline_mode = #tpu.pipeline_mode<synchronous>, transform_indices = @transform_9, window_bounds = array<i64: 128, 128>}, {pipeline_mode = #tpu.pipeline_mode<synchronous>, transform_indices = @transform_10, window_bounds = array<i64: 2, 128>}, {pipeline_mode = #tpu.pipeline_mode<synchronous>, transform_indices = @transform_11, window_bounds = array<i64: 1, 128>}, {pipeline_mode = #tpu.pipeline_mode<synchronous>, transform_indices = @transform_12, window_bounds = array<i64: 6, 6>}, {pipeline_mode = #tpu.pipeline_mode<synchronous>, transform_indices = @transform_13, window_bounds = array<i64: 6, 6>}, {pipeline_mode = #tpu.pipeline_mode<synchronous>, transform_indices = @transform_14, window_bounds = array<i64: 128, 128>}, {pipeline_mode = #tpu.pipeline_mode<synchronous>, transform_indices = @transform_15, window_bounds = array<i64: 2, 128>}, {pipeline_mode = #tpu.pipeline_mode<synchronous>, transform_indices = @transform_16, window_bounds = array<i64: 1, 128>}, {transform_indices = @transform_17, window_bounds = array<i64: 128, 134>}]} {
    %c0 = arith.constant 0 : index
    %c0_0 = arith.constant 0 : index
    %0 = vector.load %arg1[%c0, %c0_0] : memref<128x264xbf16, #tpu.memory_space<vmem>>, vector<128x264xbf16>
    %c0_1 = arith.constant 0 : index
    %c0_2 = arith.constant 0 : index
    %1 = vector.load %arg2[%c0_1, %c0_2] : memref<128x15xf32, #tpu.memory_space<vmem>>, vector<128x15xf32>
    %c0_3 = arith.constant 0 : index
    %c0_4 = arith.constant 0 : index
    %2 = vector.load %arg3[%c0_3, %c0_4] : memref<15x15xf32, #tpu.memory_space<vmem>>, vector<15x15xf32>
    %c0_5 = arith.constant 0 : index
    %c0_6 = arith.constant 0 : index
    %3 = vector.load %arg5[%c0_5, %c0_6] : memref<264x128xbf16, #tpu.memory_space<vmem>>, vector<264x128xbf16>
    %c0_7 = arith.constant 0 : index
    %c0_8 = arith.constant 0 : index
    %4 = vector.load %arg6[%c0_7, %c0_8] : memref<5x128xf32, #tpu.memory_space<vmem>>, vector<5x128xf32>
    %c0_9 = arith.constant 0 : index
    %c0_10 = arith.constant 0 : index
    %5 = vector.load %arg7[%c0_9, %c0_10] : memref<1x128xf32, #tpu.memory_space<vmem>>, vector<1x128xf32>
    %c0_11 = arith.constant 0 : index
    %c0_12 = arith.constant 0 : index
    %6 = vector.load %arg4[%c0_11, %c0_12] : memref<15x6xf32, #tpu.memory_space<vmem>>, vector<15x6xf32>
    %cst = arith.constant dense<0.000000e+00> : vector<128x15xf32>
    %7 = tpu.matmul %1, %2, %cst {dimension_numbers = #tpu.dot_dimension_numbers<[1], [0], [0], [1], [0, 0, 1, 1], [], []>} : vector<128x15xf32>, vector<15x15xf32>, vector<128x15xf32> -> vector<128x15xf32>
    %8 = vector.extract_strided_slice %7 {offsets = [0, 0], sizes = [128, 5], strides = [1, 1]} : vector<128x15xf32> to vector<128x5xf32>
    %9 = vector.extract_strided_slice %7 {offsets = [0, 5], sizes = [128, 5], strides = [1, 1]} : vector<128x15xf32> to vector<128x5xf32>
    %10 = vector.extract_strided_slice %7 {offsets = [0, 10], sizes = [128, 5], strides = [1, 1]} : vector<128x15xf32> to vector<128x5xf32>
    %11 = arith.mulf %8, %8 : vector<128x5xf32>
    %12 = arith.mulf %9, %9 : vector<128x5xf32>
    %13 = arith.addf %11, %12 : vector<128x5xf32>
    %14 = arith.mulf %10, %10 : vector<128x5xf32>
    %15 = arith.addf %13, %14 : vector<128x5xf32>
    %cst_13 = arith.constant 9.99999993E-9 : f32
    %16 = vector.broadcast %cst_13 : f32 to vector<128x5xf32>
    %17 = arith.maximumf %15, %16 : vector<128x5xf32>
    %18 = math.sqrt %17 : vector<128x5xf32>
    %cst_14 = arith.constant dense<0.000000e+00> : vector<128x128xf32>
    %19 = tpu.matmul %0, %3, %cst_14 {dimension_numbers = #tpu.dot_dimension_numbers<[1], [0], [0], [1], [0, 0, 1, 1], [], []>} : vector<128x264xbf16>, vector<264x128xbf16>, vector<128x128xf32> -> vector<128x128xf32>
    %20 = vector.broadcast %5 : vector<1x128xf32> to vector<128x128xf32>
    %21 = arith.addf %19, %20 : vector<128x128xf32>
    %22 = vector.extract_strided_slice %18 {offsets = [0, 0], sizes = [128, 1], strides = [1, 1]} : vector<128x5xf32> to vector<128x1xf32>
    %23 = vector.extract_strided_slice %4 {offsets = [0, 0], sizes = [1, 128], strides = [1, 1]} : vector<5x128xf32> to vector<1x128xf32>
    %24 = vector.broadcast %22 : vector<128x1xf32> to vector<128x128xf32>
    %25 = vector.broadcast %23 : vector<1x128xf32> to vector<128x128xf32>
    %26 = arith.mulf %24, %25 : vector<128x128xf32>
    %27 = arith.addf %21, %26 : vector<128x128xf32>
    %28 = vector.extract_strided_slice %18 {offsets = [0, 1], sizes = [128, 1], strides = [1, 1]} : vector<128x5xf32> to vector<128x1xf32>
    %29 = vector.extract_strided_slice %4 {offsets = [1, 0], sizes = [1, 128], strides = [1, 1]} : vector<5x128xf32> to vector<1x128xf32>
    %30 = vector.broadcast %28 : vector<128x1xf32> to vector<128x128xf32>
    %31 = vector.broadcast %29 : vector<1x128xf32> to vector<128x128xf32>
    %32 = arith.mulf %30, %31 : vector<128x128xf32>
    %33 = arith.addf %27, %32 : vector<128x128xf32>
    %34 = vector.extract_strided_slice %18 {offsets = [0, 2], sizes = [128, 1], strides = [1, 1]} : vector<128x5xf32> to vector<128x1xf32>
    %35 = vector.extract_strided_slice %4 {offsets = [2, 0], sizes = [1, 128], strides = [1, 1]} : vector<5x128xf32> to vector<1x128xf32>
    %36 = vector.broadcast %34 : vector<128x1xf32> to vector<128x128xf32>
    %37 = vector.broadcast %35 : vector<1x128xf32> to vector<128x128xf32>
    %38 = arith.mulf %36, %37 : vector<128x128xf32>
    %39 = arith.addf %33, %38 : vector<128x128xf32>
    %40 = vector.extract_strided_slice %18 {offsets = [0, 3], sizes = [128, 1], strides = [1, 1]} : vector<128x5xf32> to vector<128x1xf32>
    %41 = vector.extract_strided_slice %4 {offsets = [3, 0], sizes = [1, 128], strides = [1, 1]} : vector<5x128xf32> to vector<1x128xf32>
    %42 = vector.broadcast %40 : vector<128x1xf32> to vector<128x128xf32>
    %43 = vector.broadcast %41 : vector<1x128xf32> to vector<128x128xf32>
    %44 = arith.mulf %42, %43 : vector<128x128xf32>
    %45 = arith.addf %39, %44 : vector<128x128xf32>
    %46 = vector.extract_strided_slice %18 {offsets = [0, 4], sizes = [128, 1], strides = [1, 1]} : vector<128x5xf32> to vector<128x1xf32>
    %47 = vector.extract_strided_slice %4 {offsets = [4, 0], sizes = [1, 128], strides = [1, 1]} : vector<5x128xf32> to vector<1x128xf32>
    %48 = vector.broadcast %46 : vector<128x1xf32> to vector<128x128xf32>
    %49 = vector.broadcast %47 : vector<1x128xf32> to vector<128x128xf32>
    %50 = arith.mulf %48, %49 : vector<128x128xf32>
    %51 = arith.addf %45, %50 : vector<128x128xf32>
    %cst_15 = arith.constant 0.000000e+00 : f32
    %52 = vector.broadcast %cst_15 : f32 to vector<128x128xf32>
    %53 = arith.maximumf %51, %52 : vector<128x128xf32>
    %cst_16 = arith.constant dense<0.000000e+00> : vector<128x6xf32>
    %54 = tpu.matmul %7, %6, %cst_16 {dimension_numbers = #tpu.dot_dimension_numbers<[1], [0], [0], [1], [0, 0, 1, 1], [], []>} : vector<128x15xf32>, vector<15x6xf32>, vector<128x6xf32> -> vector<128x6xf32>
    %55 = vector.extract_strided_slice %54 {offsets = [0, 0], sizes = [128, 2], strides = [1, 1]} : vector<128x6xf32> to vector<128x2xf32>
    %56 = vector.extract_strided_slice %54 {offsets = [0, 2], sizes = [128, 2], strides = [1, 1]} : vector<128x6xf32> to vector<128x2xf32>
    %57 = vector.extract_strided_slice %54 {offsets = [0, 4], sizes = [128, 2], strides = [1, 1]} : vector<128x6xf32> to vector<128x2xf32>
    %58 = arith.mulf %55, %55 : vector<128x2xf32>
    %59 = arith.mulf %56, %56 : vector<128x2xf32>
    %60 = arith.addf %58, %59 : vector<128x2xf32>
    %61 = arith.mulf %57, %57 : vector<128x2xf32>
    %62 = arith.addf %60, %61 : vector<128x2xf32>
    %cst_17 = arith.constant 9.99999993E-9 : f32
    %63 = vector.broadcast %cst_17 : f32 to vector<128x2xf32>
    %64 = arith.maximumf %62, %63 : vector<128x2xf32>
    %65 = math.sqrt %64 : vector<128x2xf32>
    %66 = arith.negf %65 : vector<128x2xf32>
    %67 = math.exp %66 : vector<128x2xf32>
    %cst_18 = arith.constant 1.000000e+00 : f32
    %68 = vector.broadcast %cst_18 : f32 to vector<128x2xf32>
    %69 = arith.addf %68, %67 : vector<128x2xf32>
    %70 = arith.divf %68, %69 : vector<128x2xf32>
    %71 = tpu.concatenate %70, %70, %70 in 1 : vector<128x2xf32>, vector<128x2xf32>, vector<128x2xf32> -> vector<128x6xf32>
    %72 = arith.mulf %54, %71 : vector<128x6xf32>
    %c0_19 = arith.constant 0 : index
    %c0_20 = arith.constant 0 : index
    %73 = vector.load %arg8[%c0_19, %c0_20] : memref<6x6xf32, #tpu.memory_space<vmem>>, vector<6x6xf32>
    %c0_21 = arith.constant 0 : index
    %c0_22 = arith.constant 0 : index
    %74 = vector.load %arg10[%c0_21, %c0_22] : memref<128x128xbf16, #tpu.memory_space<vmem>>, vector<128x128xbf16>
    %c0_23 = arith.constant 0 : index
    %c0_24 = arith.constant 0 : index
    %75 = vector.load %arg11[%c0_23, %c0_24] : memref<2x128xf32, #tpu.memory_space<vmem>>, vector<2x128xf32>
    %c0_25 = arith.constant 0 : index
    %c0_26 = arith.constant 0 : index
    %76 = vector.load %arg12[%c0_25, %c0_26] : memref<1x128xf32, #tpu.memory_space<vmem>>, vector<1x128xf32>
    %c0_27 = arith.constant 0 : index
    %c0_28 = arith.constant 0 : index
    %77 = vector.load %arg9[%c0_27, %c0_28] : memref<6x6xf32, #tpu.memory_space<vmem>>, vector<6x6xf32>
    %cst_29 = arith.constant dense<0.000000e+00> : vector<128x6xf32>
    %78 = tpu.matmul %72, %73, %cst_29 {dimension_numbers = #tpu.dot_dimension_numbers<[1], [0], [0], [1], [0, 0, 1, 1], [], []>} : vector<128x6xf32>, vector<6x6xf32>, vector<128x6xf32> -> vector<128x6xf32>
    %79 = vector.extract_strided_slice %78 {offsets = [0, 0], sizes = [128, 2], strides = [1, 1]} : vector<128x6xf32> to vector<128x2xf32>
    %80 = vector.extract_strided_slice %78 {offsets = [0, 2], sizes = [128, 2], strides = [1, 1]} : vector<128x6xf32> to vector<128x2xf32>
    %81 = vector.extract_strided_slice %78 {offsets = [0, 4], sizes = [128, 2], strides = [1, 1]} : vector<128x6xf32> to vector<128x2xf32>
    %82 = arith.mulf %79, %79 : vector<128x2xf32>
    %83 = arith.mulf %80, %80 : vector<128x2xf32>
    %84 = arith.addf %82, %83 : vector<128x2xf32>
    %85 = arith.mulf %81, %81 : vector<128x2xf32>
    %86 = arith.addf %84, %85 : vector<128x2xf32>
    %cst_30 = arith.constant 9.99999993E-9 : f32
    %87 = vector.broadcast %cst_30 : f32 to vector<128x2xf32>
    %88 = arith.maximumf %86, %87 : vector<128x2xf32>
    %89 = math.sqrt %88 : vector<128x2xf32>
    %90 = arith.truncf %53 : vector<128x128xf32> to vector<128x128xbf16>
    %cst_31 = arith.constant dense<0.000000e+00> : vector<128x128xf32>
    %91 = tpu.matmul %90, %74, %cst_31 {dimension_numbers = #tpu.dot_dimension_numbers<[1], [0], [0], [1], [0, 0, 1, 1], [], []>} : vector<128x128xbf16>, vector<128x128xbf16>, vector<128x128xf32> -> vector<128x128xf32>
    %92 = vector.broadcast %76 : vector<1x128xf32> to vector<128x128xf32>
    %93 = arith.addf %91, %92 : vector<128x128xf32>
    %94 = vector.extract_strided_slice %89 {offsets = [0, 0], sizes = [128, 1], strides = [1, 1]} : vector<128x2xf32> to vector<128x1xf32>
    %95 = vector.extract_strided_slice %75 {offsets = [0, 0], sizes = [1, 128], strides = [1, 1]} : vector<2x128xf32> to vector<1x128xf32>
    %96 = vector.broadcast %94 : vector<128x1xf32> to vector<128x128xf32>
    %97 = vector.broadcast %95 : vector<1x128xf32> to vector<128x128xf32>
    %98 = arith.mulf %96, %97 : vector<128x128xf32>
    %99 = arith.addf %93, %98 : vector<128x128xf32>
    %100 = vector.extract_strided_slice %89 {offsets = [0, 1], sizes = [128, 1], strides = [1, 1]} : vector<128x2xf32> to vector<128x1xf32>
    %101 = vector.extract_strided_slice %75 {offsets = [1, 0], sizes = [1, 128], strides = [1, 1]} : vector<2x128xf32> to vector<1x128xf32>
    %102 = vector.broadcast %100 : vector<128x1xf32> to vector<128x128xf32>
    %103 = vector.broadcast %101 : vector<1x128xf32> to vector<128x128xf32>
    %104 = arith.mulf %102, %103 : vector<128x128xf32>
    %105 = arith.addf %99, %104 : vector<128x128xf32>
    %cst_32 = arith.constant 0.000000e+00 : f32
    %106 = vector.broadcast %cst_32 : f32 to vector<128x128xf32>
    %107 = arith.maximumf %105, %106 : vector<128x128xf32>
    %cst_33 = arith.constant dense<0.000000e+00> : vector<128x6xf32>
    %108 = tpu.matmul %78, %77, %cst_33 {dimension_numbers = #tpu.dot_dimension_numbers<[1], [0], [0], [1], [0, 0, 1, 1], [], []>} : vector<128x6xf32>, vector<6x6xf32>, vector<128x6xf32> -> vector<128x6xf32>
    %109 = vector.extract_strided_slice %108 {offsets = [0, 0], sizes = [128, 2], strides = [1, 1]} : vector<128x6xf32> to vector<128x2xf32>
    %110 = vector.extract_strided_slice %108 {offsets = [0, 2], sizes = [128, 2], strides = [1, 1]} : vector<128x6xf32> to vector<128x2xf32>
    %111 = vector.extract_strided_slice %108 {offsets = [0, 4], sizes = [128, 2], strides = [1, 1]} : vector<128x6xf32> to vector<128x2xf32>
    %112 = arith.mulf %109, %109 : vector<128x2xf32>
    %113 = arith.mulf %110, %110 : vector<128x2xf32>
    %114 = arith.addf %112, %113 : vector<128x2xf32>
    %115 = arith.mulf %111, %111 : vector<128x2xf32>
    %116 = arith.addf %114, %115 : vector<128x2xf32>
    %cst_34 = arith.constant 9.99999993E-9 : f32
    %117 = vector.broadcast %cst_34 : f32 to vector<128x2xf32>
    %118 = arith.maximumf %116, %117 : vector<128x2xf32>
    %119 = math.sqrt %118 : vector<128x2xf32>
    %120 = arith.negf %119 : vector<128x2xf32>
    %121 = math.exp %120 : vector<128x2xf32>
    %cst_35 = arith.constant 1.000000e+00 : f32
    %122 = vector.broadcast %cst_35 : f32 to vector<128x2xf32>
    %123 = arith.addf %122, %121 : vector<128x2xf32>
    %124 = arith.divf %122, %123 : vector<128x2xf32>
    %125 = tpu.concatenate %124, %124, %124 in 1 : vector<128x2xf32>, vector<128x2xf32>, vector<128x2xf32> -> vector<128x6xf32>
    %126 = arith.mulf %108, %125 : vector<128x6xf32>
    %c0_36 = arith.constant 0 : index
    %c0_37 = arith.constant 0 : index
    %127 = vector.load %arg13[%c0_36, %c0_37] : memref<6x6xf32, #tpu.memory_space<vmem>>, vector<6x6xf32>
    %c0_38 = arith.constant 0 : index
    %c0_39 = arith.constant 0 : index
    %128 = vector.load %arg15[%c0_38, %c0_39] : memref<128x128xbf16, #tpu.memory_space<vmem>>, vector<128x128xbf16>
    %c0_40 = arith.constant 0 : index
    %c0_41 = arith.constant 0 : index
    %129 = vector.load %arg16[%c0_40, %c0_41] : memref<2x128xf32, #tpu.memory_space<vmem>>, vector<2x128xf32>
    %c0_42 = arith.constant 0 : index
    %c0_43 = arith.constant 0 : index
    %130 = vector.load %arg17[%c0_42, %c0_43] : memref<1x128xf32, #tpu.memory_space<vmem>>, vector<1x128xf32>
    %c0_44 = arith.constant 0 : index
    %c0_45 = arith.constant 0 : index
    %131 = vector.load %arg14[%c0_44, %c0_45] : memref<6x6xf32, #tpu.memory_space<vmem>>, vector<6x6xf32>
    %cst_46 = arith.constant dense<0.000000e+00> : vector<128x6xf32>
    %132 = tpu.matmul %126, %127, %cst_46 {dimension_numbers = #tpu.dot_dimension_numbers<[1], [0], [0], [1], [0, 0, 1, 1], [], []>} : vector<128x6xf32>, vector<6x6xf32>, vector<128x6xf32> -> vector<128x6xf32>
    %133 = vector.extract_strided_slice %132 {offsets = [0, 0], sizes = [128, 2], strides = [1, 1]} : vector<128x6xf32> to vector<128x2xf32>
    %134 = vector.extract_strided_slice %132 {offsets = [0, 2], sizes = [128, 2], strides = [1, 1]} : vector<128x6xf32> to vector<128x2xf32>
    %135 = vector.extract_strided_slice %132 {offsets = [0, 4], sizes = [128, 2], strides = [1, 1]} : vector<128x6xf32> to vector<128x2xf32>
    %136 = arith.mulf %133, %133 : vector<128x2xf32>
    %137 = arith.mulf %134, %134 : vector<128x2xf32>
    %138 = arith.addf %136, %137 : vector<128x2xf32>
    %139 = arith.mulf %135, %135 : vector<128x2xf32>
    %140 = arith.addf %138, %139 : vector<128x2xf32>
    %cst_47 = arith.constant 9.99999993E-9 : f32
    %141 = vector.broadcast %cst_47 : f32 to vector<128x2xf32>
    %142 = arith.maximumf %140, %141 : vector<128x2xf32>
    %143 = math.sqrt %142 : vector<128x2xf32>
    %144 = arith.truncf %107 : vector<128x128xf32> to vector<128x128xbf16>
    %cst_48 = arith.constant dense<0.000000e+00> : vector<128x128xf32>
    %145 = tpu.matmul %144, %128, %cst_48 {dimension_numbers = #tpu.dot_dimension_numbers<[1], [0], [0], [1], [0, 0, 1, 1], [], []>} : vector<128x128xbf16>, vector<128x128xbf16>, vector<128x128xf32> -> vector<128x128xf32>
    %146 = vector.broadcast %130 : vector<1x128xf32> to vector<128x128xf32>
    %147 = arith.addf %145, %146 : vector<128x128xf32>
    %148 = vector.extract_strided_slice %143 {offsets = [0, 0], sizes = [128, 1], strides = [1, 1]} : vector<128x2xf32> to vector<128x1xf32>
    %149 = vector.extract_strided_slice %129 {offsets = [0, 0], sizes = [1, 128], strides = [1, 1]} : vector<2x128xf32> to vector<1x128xf32>
    %150 = vector.broadcast %148 : vector<128x1xf32> to vector<128x128xf32>
    %151 = vector.broadcast %149 : vector<1x128xf32> to vector<128x128xf32>
    %152 = arith.mulf %150, %151 : vector<128x128xf32>
    %153 = arith.addf %147, %152 : vector<128x128xf32>
    %154 = vector.extract_strided_slice %143 {offsets = [0, 1], sizes = [128, 1], strides = [1, 1]} : vector<128x2xf32> to vector<128x1xf32>
    %155 = vector.extract_strided_slice %129 {offsets = [1, 0], sizes = [1, 128], strides = [1, 1]} : vector<2x128xf32> to vector<1x128xf32>
    %156 = vector.broadcast %154 : vector<128x1xf32> to vector<128x128xf32>
    %157 = vector.broadcast %155 : vector<1x128xf32> to vector<128x128xf32>
    %158 = arith.mulf %156, %157 : vector<128x128xf32>
    %159 = arith.addf %153, %158 : vector<128x128xf32>
    %cst_49 = arith.constant dense<0.000000e+00> : vector<128x6xf32>
    %160 = tpu.matmul %132, %131, %cst_49 {dimension_numbers = #tpu.dot_dimension_numbers<[1], [0], [0], [1], [0, 0, 1, 1], [], []>} : vector<128x6xf32>, vector<6x6xf32>, vector<128x6xf32> -> vector<128x6xf32>
    %161 = tpu.concatenate %159, %160 in 1 : vector<128x128xf32>, vector<128x6xf32> -> vector<128x134xf32>
    %162 = arith.truncf %161 : vector<128x134xf32> to vector<128x134xbf16>
    %c0_50 = arith.constant 0 : index
    %c0_51 = arith.constant 0 : index
    %163 = vector.load %arg18[%c0_50, %c0_51] : memref<128x134xbf16, #tpu.memory_space<vmem>>, vector<128x134xbf16>
    tpu.vector_store %arg18[%c0_50, %c0_51], %162 {strides = array<i32>} : memref<128x134xbf16, #tpu.memory_space<vmem>>, vector<128x134xbf16>,
    return
  }
  func.func @transform_0(%arg0: i32) -> (i32, i32) {
    %c0_i32 = arith.constant 0 : i32
    %c0_i32_0 = arith.constant 0 : i32
    return %arg0, %c0_i32 : i32, i32
  }
  func.func @transform_1(%arg0: i32) -> (i32, i32) {
    %c0_i32 = arith.constant 0 : i32
    %c0_i32_0 = arith.constant 0 : i32
    return %arg0, %c0_i32 : i32, i32
  }
  func.func @transform_2(%arg0: i32) -> (i32, i32) {
    %c0_i32 = arith.constant 0 : i32
    %c0_i32_0 = arith.constant 0 : i32
    %c0_i32_1 = arith.constant 0 : i32
    return %c0_i32, %c0_i32_0 : i32, i32
  }
  func.func @transform_3(%arg0: i32) -> (i32, i32) {
    %c0_i32 = arith.constant 0 : i32
    %c0_i32_0 = arith.constant 0 : i32
    %c0_i32_1 = arith.constant 0 : i32
    return %c0_i32, %c0_i32_0 : i32, i32
  }
  func.func @transform_4(%arg0: i32) -> (i32, i32) {
    %c0_i32 = arith.constant 0 : i32
    %c0_i32_0 = arith.constant 0 : i32
    %c0_i32_1 = arith.constant 0 : i32
    return %c0_i32, %c0_i32_0 : i32, i32
  }
  func.func @transform_5(%arg0: i32) -> (i32, i32) {
    %c0_i32 = arith.constant 0 : i32
    %c0_i32_0 = arith.constant 0 : i32
    %c0_i32_1 = arith.constant 0 : i32
    return %c0_i32, %c0_i32_0 : i32, i32
  }
  func.func @transform_6(%arg0: i32) -> (i32, i32) {
    %c0_i32 = arith.constant 0 : i32
    %c0_i32_0 = arith.constant 0 : i32
    %c0_i32_1 = arith.constant 0 : i32
    return %c0_i32, %c0_i32_0 : i32, i32
  }
  func.func @transform_7(%arg0: i32) -> (i32, i32) {
    %c0_i32 = arith.constant 0 : i32
    %c0_i32_0 = arith.constant 0 : i32
    %c0_i32_1 = arith.constant 0 : i32
    return %c0_i32, %c0_i32_0 : i32, i32
  }
  func.func @transform_8(%arg0: i32) -> (i32, i32) {
    %c0_i32 = arith.constant 0 : i32
    %c0_i32_0 = arith.constant 0 : i32
    %c0_i32_1 = arith.constant 0 : i32
    return %c0_i32, %c0_i32_0 : i32, i32
  }
  func.func @transform_9(%arg0: i32) -> (i32, i32) {
    %c0_i32 = arith.constant 0 : i32
    %c0_i32_0 = arith.constant 0 : i32
    %c0_i32_1 = arith.constant 0 : i32
    return %c0_i32, %c0_i32_0 : i32, i32
  }
  func.func @transform_10(%arg0: i32) -> (i32, i32) {
    %c0_i32 = arith.constant 0 : i32
    %c0_i32_0 = arith.constant 0 : i32
    %c0_i32_1 = arith.constant 0 : i32
    return %c0_i32, %c0_i32_0 : i32, i32
  }
  func.func @transform_11(%arg0: i32) -> (i32, i32) {
    %c0_i32 = arith.constant 0 : i32
    %c0_i32_0 = arith.constant 0 : i32
    %c0_i32_1 = arith.constant 0 : i32
    return %c0_i32, %c0_i32_0 : i32, i32
  }
  func.func @transform_12(%arg0: i32) -> (i32, i32) {
    %c0_i32 = arith.constant 0 : i32
    %c0_i32_0 = arith.constant 0 : i32
    %c0_i32_1 = arith.constant 0 : i32
    return %c0_i32, %c0_i32_0 : i32, i32
  }
  func.func @transform_13(%arg0: i32) -> (i32, i32) {
    %c0_i32 = arith.constant 0 : i32
    %c0_i32_0 = arith.constant 0 : i32
    %c0_i32_1 = arith.constant 0 : i32
    return %c0_i32, %c0_i32_0 : i32, i32
  }
  func.func @transform_14(%arg0: i32) -> (i32, i32) {
    %c0_i32 = arith.constant 0 : i32
    %c0_i32_0 = arith.constant 0 : i32
    %c0_i32_1 = arith.constant 0 : i32
    return %c0_i32, %c0_i32_0 : i32, i32
  }
  func.func @transform_15(%arg0: i32) -> (i32, i32) {
    %c0_i32 = arith.constant 0 : i32
    %c0_i32_0 = arith.constant 0 : i32
    %c0_i32_1 = arith.constant 0 : i32
    return %c0_i32, %c0_i32_0 : i32, i32
  }
  func.func @transform_16(%arg0: i32) -> (i32, i32) {
    %c0_i32 = arith.constant 0 : i32
    %c0_i32_0 = arith.constant 0 : i32
    %c0_i32_1 = arith.constant 0 : i32
    return %c0_i32, %c0_i32_0 : i32, i32
  }
  func.func @transform_17(%arg0: i32) -> (i32, i32) {
    %c0_i32 = arith.constant 0 : i32
    %c0_i32_0 = arith.constant 0 : i32
    return %arg0, %c0_i32 : i32, i32
  }
}

module attributes {stable_mosaic.version = 11 : i64} {
  func.func @scatter_mean_kernel(%arg0: i32, %arg1: i32, %arg2: memref<1x128xi32, #tpu.memory_space<vmem>>, %arg3: memref<16x1xf32, #tpu.memory_space<vmem>>, %arg4: memref<128x134xbf16, #tpu.memory_space<vmem>>, %arg5: memref<16x134xf32, #tpu.memory_space<vmem>>, %arg6: memref<16x134xf32, #tpu.memory_space<vmem>>) attributes {dimension_semantics = [#tpu.dimension_semantics<parallel>, #tpu.dimension_semantics<arbitrary>], iteration_bounds = array<i64: 1, 1>, scalar_prefetch = 0 : i64, scratch_operands = 1 : i64, tpu.core_type = #tpu.core_type<tc>, window_params = [{transform_indices = @transform_0, window_bounds = array<i64: 1, 128>}, {transform_indices = @transform_1, window_bounds = array<i64: 16, 1>}, {transform_indices = @transform_2, window_bounds = array<i64: 128, 134>}, {transform_indices = @transform_3, window_bounds = array<i64: 16, 134>}]} {
    %c0_i32 = arith.constant 0 : i32
    %0 = arith.cmpi eq, %arg1, %c0_i32 : i32
    %1 = arith.extui %0 : i1 to i32
    %c0_i32_0 = arith.constant 0 : i32
    %2 = arith.cmpi ne, %1, %c0_i32_0 : i32
    scf.if %2 {
      %cst_10 = arith.constant 0.000000e+00 : f32
      %21 = vector.broadcast %cst_10 : f32 to vector<16x134xf32>
      %c0_11 = arith.constant 0 : index
      %c0_12 = arith.constant 0 : index
      %22 = vector.load %arg6[%c0_11, %c0_12] : memref<16x134xf32, #tpu.memory_space<vmem>>, vector<16x134xf32>
      tpu.vector_store %arg6[%c0_11, %c0_12], %21 {strides = array<i32>} : memref<16x134xf32, #tpu.memory_space<vmem>>, vector<16x134xf32>,
    } else {
    }
    %c0 = arith.constant 0 : index
    %c0_1 = arith.constant 0 : index
    %3 = vector.load %arg2[%c0, %c0_1] : memref<1x128xi32, #tpu.memory_space<vmem>>, vector<1x128xi32>
    %c16_i32 = arith.constant 16 : i32
    %4 = arith.muli %arg0, %c16_i32 : i32
    %5 = tpu.iota {dimensions = array<i32: 0>} : vector<16x128xi32>
    %6 = vector.broadcast %4 : i32 to vector<16x128xi32>
    %7 = arith.addi %6, %5 : vector<16x128xi32>
    %8 = vector.broadcast %3 : vector<1x128xi32> to vector<16x128xi32>
    %9 = arith.cmpi eq, %7, %8 : vector<16x128xi32>
    %10 = arith.extui %9 : vector<16x128xi1> to vector<16x128xi32>
    %11 = arith.sitofp %10 : vector<16x128xi32> to vector<16x128xf32>
    %12 = arith.truncf %11 : vector<16x128xf32> to vector<16x128xbf16>
    %c0_2 = arith.constant 0 : index
    %c0_3 = arith.constant 0 : index
    %13 = vector.load %arg6[%c0_2, %c0_3] : memref<16x134xf32, #tpu.memory_space<vmem>>, vector<16x134xf32>
    %c0_4 = arith.constant 0 : index
    %c0_5 = arith.constant 0 : index
    %14 = vector.load %arg4[%c0_4, %c0_5] : memref<128x134xbf16, #tpu.memory_space<vmem>>, vector<128x134xbf16>
    %cst = arith.constant dense<0.000000e+00> : vector<16x134xf32>
    %15 = tpu.matmul %12, %14, %cst {dimension_numbers = #tpu.dot_dimension_numbers<[1], [0], [0], [1], [0, 0, 1, 1], [], []>} : vector<16x128xbf16>, vector<128x134xbf16>, vector<16x134xf32> -> vector<16x134xf32>
    %16 = arith.addf %13, %15 : vector<16x134xf32>
    %c0_6 = arith.constant 0 : index
    %c0_7 = arith.constant 0 : index
    %17 = vector.load %arg6[%c0_6, %c0_7] : memref<16x134xf32, #tpu.memory_space<vmem>>, vector<16x134xf32>
    tpu.vector_store %arg6[%c0_6, %c0_7], %16 {strides = array<i32>} : memref<16x134xf32, #tpu.memory_space<vmem>>, vector<16x134xf32>,
    %c0_i32_8 = arith.constant 0 : i32
    %18 = arith.cmpi eq, %arg1, %c0_i32_8 : i32
    %19 = arith.extui %18 : i1 to i32
    %c0_i32_9 = arith.constant 0 : i32
    %20 = arith.cmpi ne, %19, %c0_i32_9 : i32
    scf.if %20 {
      %c0_10 = arith.constant 0 : index
      %c0_11 = arith.constant 0 : index
      %21 = vector.load %arg6[%c0_10, %c0_11] : memref<16x134xf32, #tpu.memory_space<vmem>>, vector<16x134xf32>
      %c0_12 = arith.constant 0 : index
      %c0_13 = arith.constant 0 : index
      %22 = vector.load %arg3[%c0_12, %c0_13] : memref<16x1xf32, #tpu.memory_space<vmem>>, vector<16x1xf32>
      %23 = vector.broadcast %22 : vector<16x1xf32> to vector<16x134xf32>
      %24 = arith.mulf %21, %23 : vector<16x134xf32>
      %c0_14 = arith.constant 0 : index
      %c0_15 = arith.constant 0 : index
      %25 = vector.load %arg5[%c0_14, %c0_15] : memref<16x134xf32, #tpu.memory_space<vmem>>, vector<16x134xf32>
      tpu.vector_store %arg5[%c0_14, %c0_15], %24 {strides = array<i32>} : memref<16x134xf32, #tpu.memory_space<vmem>>, vector<16x134xf32>,
    } else {
    }
    return
  }
  func.func @transform_0(%arg0: i32, %arg1: i32) -> (i32, i32) {
    %c0_i32 = arith.constant 0 : i32
    %c0_i32_0 = arith.constant 0 : i32
    return %c0_i32, %arg1 : i32, i32
  }
  func.func @transform_1(%arg0: i32, %arg1: i32) -> (i32, i32) {
    %c0_i32 = arith.constant 0 : i32
    %c0_i32_0 = arith.constant 0 : i32
    return %arg0, %c0_i32 : i32, i32
  }
  func.func @transform_2(%arg0: i32, %arg1: i32) -> (i32, i32) {
    %c0_i32 = arith.constant 0 : i32
    %c0_i32_0 = arith.constant 0 : i32
    return %arg1, %c0_i32 : i32, i32
  }
  func.func @transform_3(%arg0: i32, %arg1: i32) -> (i32, i32) {
    %c0_i32 = arith.constant 0 : i32
    %c0_i32_0 = arith.constant 0 : i32
    return %arg0, %c0_i32 : i32, i32
  }
}

module attributes {stable_mosaic.version = 11 : i64} {
  func.func @node_update_kernel(%arg0: i32, %arg1: memref<16x128xf32, #tpu.memory_space<vmem>>, %arg2: memref<16x134xf32, #tpu.memory_space<vmem>>, %arg3: memref<16x6xf32, #tpu.memory_space<vmem>>, %arg4: memref<1x128xf32, #tpu.memory_space<vmem>>, %arg5: memref<1x128xf32, #tpu.memory_space<vmem>>, %arg6: memref<6x12xf32, #tpu.memory_space<vmem>>, %arg7: memref<12x12xf32, #tpu.memory_space<vmem>>, %arg8: memref<128x512xbf16, #tpu.memory_space<vmem>>, %arg9: memref<4x512xf32, #tpu.memory_space<vmem>>, %arg10: memref<1x512xf32, #tpu.memory_space<vmem>>, %arg11: memref<12x12xf32, #tpu.memory_space<vmem>>, %arg12: memref<512x128xbf16, #tpu.memory_space<vmem>>, %arg13: memref<4x128xf32, #tpu.memory_space<vmem>>, %arg14: memref<1x128xf32, #tpu.memory_space<vmem>>, %arg15: memref<1x128xf32, #tpu.memory_space<vmem>>, %arg16: memref<1x128xf32, #tpu.memory_space<vmem>>, %arg17: memref<128x1xf32, #tpu.memory_space<vmem>>, %arg18: memref<1x1xf32, #tpu.memory_space<vmem>>, %arg19: memref<16x1xf32, #tpu.memory_space<vmem>>) attributes {dimension_semantics = [#tpu.dimension_semantics<parallel>], iteration_bounds = array<i64: 1>, scalar_prefetch = 0 : i64, scratch_operands = 0 : i64, tpu.core_type = #tpu.core_type<tc>, window_params = [{transform_indices = @transform_0, window_bounds = array<i64: 16, 128>}, {transform_indices = @transform_1, window_bounds = array<i64: 16, 134>}, {transform_indices = @transform_2, window_bounds = array<i64: 16, 6>}, {pipeline_mode = #tpu.pipeline_mode<synchronous>, transform_indices = @transform_3, window_bounds = array<i64: 1, 128>}, {pipeline_mode = #tpu.pipeline_mode<synchronous>, transform_indices = @transform_4, window_bounds = array<i64: 1, 128>}, {pipeline_mode = #tpu.pipeline_mode<synchronous>, transform_indices = @transform_5, window_bounds = array<i64: 6, 12>}, {pipeline_mode = #tpu.pipeline_mode<synchronous>, transform_indices = @transform_6, window_bounds = array<i64: 12, 12>}, {pipeline_mode = #tpu.pipeline_mode<synchronous>, transform_indices = @transform_7, window_bounds = array<i64: 128, 512>}, {pipeline_mode = #tpu.pipeline_mode<synchronous>, transform_indices = @transform_8, window_bounds = array<i64: 4, 512>}, {pipeline_mode = #tpu.pipeline_mode<synchronous>, transform_indices = @transform_9, window_bounds = array<i64: 1, 512>}, {pipeline_mode = #tpu.pipeline_mode<synchronous>, transform_indices = @transform_10, window_bounds = array<i64: 12, 12>}, {pipeline_mode = #tpu.pipeline_mode<synchronous>, transform_indices = @transform_11, window_bounds = array<i64: 512, 128>}, {pipeline_mode = #tpu.pipeline_mode<synchronous>, transform_indices = @transform_12, window_bounds = array<i64: 4, 128>}, {pipeline_mode = #tpu.pipeline_mode<synchronous>, transform_indices = @transform_13, window_bounds = array<i64: 1, 128>}, {pipeline_mode = #tpu.pipeline_mode<synchronous>, transform_indices = @transform_14, window_bounds = array<i64: 1, 128>}, {pipeline_mode = #tpu.pipeline_mode<synchronous>, transform_indices = @transform_15, window_bounds = array<i64: 1, 128>}, {pipeline_mode = #tpu.pipeline_mode<synchronous>, transform_indices = @transform_16, window_bounds = array<i64: 128, 1>}, {pipeline_mode = #tpu.pipeline_mode<synchronous>, transform_indices = @transform_17, window_bounds = array<i64: 1, 1>}, {transform_indices = @transform_18, window_bounds = array<i64: 16, 1>}]} {
    %c0 = arith.constant 0 : index
    %c0_0 = arith.constant 0 : index
    %0 = vector.load %arg2[%c0, %c0_0] : memref<16x134xf32, #tpu.memory_space<vmem>>, vector<16x134xf32>
    %c0_1 = arith.constant 0 : index
    %c0_2 = arith.constant 0 : index
    %1 = vector.load %arg1[%c0_1, %c0_2] : memref<16x128xf32, #tpu.memory_space<vmem>>, vector<16x128xf32>
    %2 = vector.extract_strided_slice %0 {offsets = [0, 0], sizes = [16, 128], strides = [1, 1]} : vector<16x134xf32> to vector<16x128xf32>
    %3 = arith.addf %1, %2 : vector<16x128xf32>
    %c0_3 = arith.constant 0 : index
    %c0_4 = arith.constant 0 : index
    %4 = vector.load %arg4[%c0_3, %c0_4] : memref<1x128xf32, #tpu.memory_space<vmem>>, vector<1x128xf32>
    %c0_5 = arith.constant 0 : index
    %c0_6 = arith.constant 0 : index
    %5 = vector.load %arg5[%c0_5, %c0_6] : memref<1x128xf32, #tpu.memory_space<vmem>>, vector<1x128xf32>
    %cst = arith.constant dense<0.000000e+00> : vector<16xf32>
    %6 = vector.multi_reduction <add>, %3, %cst [1] : vector<16x128xf32> to vector<16xf32>
    %7 = vector.shape_cast %6 : vector<16xf32> to vector<16x1xf32>
    %cst_7 = arith.constant 1.280000e+02 : f32
    %8 = vector.broadcast %cst_7 : f32 to vector<16x1xf32>
    %9 = arith.divf %7, %8 : vector<16x1xf32>
    %10 = vector.broadcast %9 : vector<16x1xf32> to vector<16x128xf32>
    %11 = arith.subf %3, %10 : vector<16x128xf32>
    %12 = arith.mulf %11, %11 : vector<16x128xf32>
    %cst_8 = arith.constant dense<0.000000e+00> : vector<16xf32>
    %13 = vector.multi_reduction <add>, %12, %cst_8 [1] : vector<16x128xf32> to vector<16xf32>
    %14 = vector.shape_cast %13 : vector<16xf32> to vector<16x1xf32>
    %cst_9 = arith.constant 1.280000e+02 : f32
    %15 = vector.broadcast %cst_9 : f32 to vector<16x1xf32>
    %16 = arith.divf %14, %15 : vector<16x1xf32>
    %17 = vector.broadcast %9 : vector<16x1xf32> to vector<16x128xf32>
    %18 = arith.subf %3, %17 : vector<16x128xf32>
    %cst_10 = arith.constant 9.99999974E-6 : f32
    %19 = vector.broadcast %cst_10 : f32 to vector<16x1xf32>
    %20 = arith.addf %16, %19 : vector<16x1xf32>
    %21 = math.rsqrt %20 : vector<16x1xf32>
    %22 = vector.broadcast %21 : vector<16x1xf32> to vector<16x128xf32>
    %23 = arith.mulf %18, %22 : vector<16x128xf32>
    %24 = vector.broadcast %4 : vector<1x128xf32> to vector<16x128xf32>
    %25 = arith.mulf %23, %24 : vector<16x128xf32>
    %26 = vector.broadcast %5 : vector<1x128xf32> to vector<16x128xf32>
    %27 = arith.addf %25, %26 : vector<16x128xf32>
    %c0_11 = arith.constant 0 : index
    %c0_12 = arith.constant 0 : index
    %28 = vector.load %arg3[%c0_11, %c0_12] : memref<16x6xf32, #tpu.memory_space<vmem>>, vector<16x6xf32>
    %29 = vector.extract_strided_slice %0 {offsets = [0, 128], sizes = [16, 6], strides = [1, 1]} : vector<16x134xf32> to vector<16x6xf32>
    %30 = arith.addf %28, %29 : vector<16x6xf32>
    %31 = vector.extract_strided_slice %30 {offsets = [0, 0], sizes = [16, 2], strides = [1, 1]} : vector<16x6xf32> to vector<16x2xf32>
    %32 = vector.extract_strided_slice %30 {offsets = [0, 2], sizes = [16, 2], strides = [1, 1]} : vector<16x6xf32> to vector<16x2xf32>
    %33 = vector.extract_strided_slice %30 {offsets = [0, 4], sizes = [16, 2], strides = [1, 1]} : vector<16x6xf32> to vector<16x2xf32>
    %34 = arith.mulf %31, %31 : vector<16x2xf32>
    %35 = arith.mulf %32, %32 : vector<16x2xf32>
    %36 = arith.addf %34, %35 : vector<16x2xf32>
    %37 = arith.mulf %33, %33 : vector<16x2xf32>
    %38 = arith.addf %36, %37 : vector<16x2xf32>
    %cst_13 = arith.constant 9.99999993E-9 : f32
    %39 = vector.broadcast %cst_13 : f32 to vector<16x2xf32>
    %40 = arith.maximumf %38, %39 : vector<16x2xf32>
    %cst_14 = arith.constant dense<0.000000e+00> : vector<16xf32>
    %41 = vector.multi_reduction <add>, %40, %cst_14 [1] : vector<16x2xf32> to vector<16xf32>
    %42 = vector.shape_cast %41 : vector<16xf32> to vector<16x1xf32>
    %cst_15 = arith.constant 2.000000e+00 : f32
    %43 = vector.broadcast %cst_15 : f32 to vector<16x1xf32>
    %44 = arith.divf %42, %43 : vector<16x1xf32>
    %45 = math.rsqrt %44 : vector<16x1xf32>
    %46 = vector.broadcast %45 : vector<16x1xf32> to vector<16x6xf32>
    %47 = arith.mulf %30, %46 : vector<16x6xf32>
    %c0_16 = arith.constant 0 : index
    %c0_17 = arith.constant 0 : index
    %48 = vector.load %arg6[%c0_16, %c0_17] : memref<6x12xf32, #tpu.memory_space<vmem>>, vector<6x12xf32>
    %c0_18 = arith.constant 0 : index
    %c0_19 = arith.constant 0 : index
    %49 = vector.load %arg8[%c0_18, %c0_19] : memref<128x512xbf16, #tpu.memory_space<vmem>>, vector<128x512xbf16>
    %c0_20 = arith.constant 0 : index
    %c0_21 = arith.constant 0 : index
    %50 = vector.load %arg9[%c0_20, %c0_21] : memref<4x512xf32, #tpu.memory_space<vmem>>, vector<4x512xf32>
    %c0_22 = arith.constant 0 : index
    %c0_23 = arith.constant 0 : index
    %51 = vector.load %arg10[%c0_22, %c0_23] : memref<1x512xf32, #tpu.memory_space<vmem>>, vector<1x512xf32>
    %c0_24 = arith.constant 0 : index
    %c0_25 = arith.constant 0 : index
    %52 = vector.load %arg7[%c0_24, %c0_25] : memref<12x12xf32, #tpu.memory_space<vmem>>, vector<12x12xf32>
    %cst_26 = arith.constant dense<0.000000e+00> : vector<16x12xf32>
    %53 = tpu.matmul %47, %48, %cst_26 {dimension_numbers = #tpu.dot_dimension_numbers<[1], [0], [0], [1], [0, 0, 1, 1], [], []>} : vector<16x6xf32>, vector<6x12xf32>, vector<16x12xf32> -> vector<16x12xf32>
    %54 = vector.extract_strided_slice %53 {offsets = [0, 0], sizes = [16, 4], strides = [1, 1]} : vector<16x12xf32> to vector<16x4xf32>
    %55 = vector.extract_strided_slice %53 {offsets = [0, 4], sizes = [16, 4], strides = [1, 1]} : vector<16x12xf32> to vector<16x4xf32>
    %56 = vector.extract_strided_slice %53 {offsets = [0, 8], sizes = [16, 4], strides = [1, 1]} : vector<16x12xf32> to vector<16x4xf32>
    %57 = arith.mulf %54, %54 : vector<16x4xf32>
    %58 = arith.mulf %55, %55 : vector<16x4xf32>
    %59 = arith.addf %57, %58 : vector<16x4xf32>
    %60 = arith.mulf %56, %56 : vector<16x4xf32>
    %61 = arith.addf %59, %60 : vector<16x4xf32>
    %cst_27 = arith.constant 9.99999993E-9 : f32
    %62 = vector.broadcast %cst_27 : f32 to vector<16x4xf32>
    %63 = arith.maximumf %61, %62 : vector<16x4xf32>
    %64 = math.sqrt %63 : vector<16x4xf32>
    %65 = arith.truncf %27 : vector<16x128xf32> to vector<16x128xbf16>
    %cst_28 = arith.constant dense<0.000000e+00> : vector<16x512xf32>
    %66 = tpu.matmul %65, %49, %cst_28 {dimension_numbers = #tpu.dot_dimension_numbers<[1], [0], [0], [1], [0, 0, 1, 1], [], []>} : vector<16x128xbf16>, vector<128x512xbf16>, vector<16x512xf32> -> vector<16x512xf32>
    %67 = vector.broadcast %51 : vector<1x512xf32> to vector<16x512xf32>
    %68 = arith.addf %66, %67 : vector<16x512xf32>
    %69 = vector.extract_strided_slice %64 {offsets = [0, 0], sizes = [16, 1], strides = [1, 1]} : vector<16x4xf32> to vector<16x1xf32>
    %70 = vector.extract_strided_slice %50 {offsets = [0, 0], sizes = [1, 512], strides = [1, 1]} : vector<4x512xf32> to vector<1x512xf32>
    %71 = vector.broadcast %69 : vector<16x1xf32> to vector<16x512xf32>
    %72 = vector.broadcast %70 : vector<1x512xf32> to vector<16x512xf32>
    %73 = arith.mulf %71, %72 : vector<16x512xf32>
    %74 = arith.addf %68, %73 : vector<16x512xf32>
    %75 = vector.extract_strided_slice %64 {offsets = [0, 1], sizes = [16, 1], strides = [1, 1]} : vector<16x4xf32> to vector<16x1xf32>
    %76 = vector.extract_strided_slice %50 {offsets = [1, 0], sizes = [1, 512], strides = [1, 1]} : vector<4x512xf32> to vector<1x512xf32>
    %77 = vector.broadcast %75 : vector<16x1xf32> to vector<16x512xf32>
    %78 = vector.broadcast %76 : vector<1x512xf32> to vector<16x512xf32>
    %79 = arith.mulf %77, %78 : vector<16x512xf32>
    %80 = arith.addf %74, %79 : vector<16x512xf32>
    %81 = vector.extract_strided_slice %64 {offsets = [0, 2], sizes = [16, 1], strides = [1, 1]} : vector<16x4xf32> to vector<16x1xf32>
    %82 = vector.extract_strided_slice %50 {offsets = [2, 0], sizes = [1, 512], strides = [1, 1]} : vector<4x512xf32> to vector<1x512xf32>
    %83 = vector.broadcast %81 : vector<16x1xf32> to vector<16x512xf32>
    %84 = vector.broadcast %82 : vector<1x512xf32> to vector<16x512xf32>
    %85 = arith.mulf %83, %84 : vector<16x512xf32>
    %86 = arith.addf %80, %85 : vector<16x512xf32>
    %87 = vector.extract_strided_slice %64 {offsets = [0, 3], sizes = [16, 1], strides = [1, 1]} : vector<16x4xf32> to vector<16x1xf32>
    %88 = vector.extract_strided_slice %50 {offsets = [3, 0], sizes = [1, 512], strides = [1, 1]} : vector<4x512xf32> to vector<1x512xf32>
    %89 = vector.broadcast %87 : vector<16x1xf32> to vector<16x512xf32>
    %90 = vector.broadcast %88 : vector<1x512xf32> to vector<16x512xf32>
    %91 = arith.mulf %89, %90 : vector<16x512xf32>
    %92 = arith.addf %86, %91 : vector<16x512xf32>
    %cst_29 = arith.constant 0.000000e+00 : f32
    %93 = vector.broadcast %cst_29 : f32 to vector<16x512xf32>
    %94 = arith.maximumf %92, %93 : vector<16x512xf32>
    %cst_30 = arith.constant dense<0.000000e+00> : vector<16x12xf32>
    %95 = tpu.matmul %53, %52, %cst_30 {dimension_numbers = #tpu.dot_dimension_numbers<[1], [0], [0], [1], [0, 0, 1, 1], [], []>} : vector<16x12xf32>, vector<12x12xf32>, vector<16x12xf32> -> vector<16x12xf32>
    %96 = vector.extract_strided_slice %95 {offsets = [0, 0], sizes = [16, 4], strides = [1, 1]} : vector<16x12xf32> to vector<16x4xf32>
    %97 = vector.extract_strided_slice %95 {offsets = [0, 4], sizes = [16, 4], strides = [1, 1]} : vector<16x12xf32> to vector<16x4xf32>
    %98 = vector.extract_strided_slice %95 {offsets = [0, 8], sizes = [16, 4], strides = [1, 1]} : vector<16x12xf32> to vector<16x4xf32>
    %99 = arith.mulf %96, %96 : vector<16x4xf32>
    %100 = arith.mulf %97, %97 : vector<16x4xf32>
    %101 = arith.addf %99, %100 : vector<16x4xf32>
    %102 = arith.mulf %98, %98 : vector<16x4xf32>
    %103 = arith.addf %101, %102 : vector<16x4xf32>
    %cst_31 = arith.constant 9.99999993E-9 : f32
    %104 = vector.broadcast %cst_31 : f32 to vector<16x4xf32>
    %105 = arith.maximumf %103, %104 : vector<16x4xf32>
    %106 = math.sqrt %105 : vector<16x4xf32>
    %107 = arith.negf %106 : vector<16x4xf32>
    %108 = math.exp %107 : vector<16x4xf32>
    %cst_32 = arith.constant 1.000000e+00 : f32
    %109 = vector.broadcast %cst_32 : f32 to vector<16x4xf32>
    %110 = arith.addf %109, %108 : vector<16x4xf32>
    %111 = arith.divf %109, %110 : vector<16x4xf32>
    %112 = tpu.concatenate %111, %111, %111 in 1 : vector<16x4xf32>, vector<16x4xf32>, vector<16x4xf32> -> vector<16x12xf32>
    %113 = arith.mulf %95, %112 : vector<16x12xf32>
    %c0_33 = arith.constant 0 : index
    %c0_34 = arith.constant 0 : index
    %114 = vector.load %arg11[%c0_33, %c0_34] : memref<12x12xf32, #tpu.memory_space<vmem>>, vector<12x12xf32>
    %c0_35 = arith.constant 0 : index
    %c0_36 = arith.constant 0 : index
    %115 = vector.load %arg12[%c0_35, %c0_36] : memref<512x128xbf16, #tpu.memory_space<vmem>>, vector<512x128xbf16>
    %c0_37 = arith.constant 0 : index
    %c0_38 = arith.constant 0 : index
    %116 = vector.load %arg13[%c0_37, %c0_38] : memref<4x128xf32, #tpu.memory_space<vmem>>, vector<4x128xf32>
    %c0_39 = arith.constant 0 : index
    %c0_40 = arith.constant 0 : index
    %117 = vector.load %arg14[%c0_39, %c0_40] : memref<1x128xf32, #tpu.memory_space<vmem>>, vector<1x128xf32>
    %cst_41 = arith.constant dense<0.000000e+00> : vector<16x12xf32>
    %118 = tpu.matmul %113, %114, %cst_41 {dimension_numbers = #tpu.dot_dimension_numbers<[1], [0], [0], [1], [0, 0, 1, 1], [], []>} : vector<16x12xf32>, vector<12x12xf32>, vector<16x12xf32> -> vector<16x12xf32>
    %119 = vector.extract_strided_slice %118 {offsets = [0, 0], sizes = [16, 4], strides = [1, 1]} : vector<16x12xf32> to vector<16x4xf32>
    %120 = vector.extract_strided_slice %118 {offsets = [0, 4], sizes = [16, 4], strides = [1, 1]} : vector<16x12xf32> to vector<16x4xf32>
    %121 = vector.extract_strided_slice %118 {offsets = [0, 8], sizes = [16, 4], strides = [1, 1]} : vector<16x12xf32> to vector<16x4xf32>
    %122 = arith.mulf %119, %119 : vector<16x4xf32>
    %123 = arith.mulf %120, %120 : vector<16x4xf32>
    %124 = arith.addf %122, %123 : vector<16x4xf32>
    %125 = arith.mulf %121, %121 : vector<16x4xf32>
    %126 = arith.addf %124, %125 : vector<16x4xf32>
    %cst_42 = arith.constant 9.99999993E-9 : f32
    %127 = vector.broadcast %cst_42 : f32 to vector<16x4xf32>
    %128 = arith.maximumf %126, %127 : vector<16x4xf32>
    %129 = math.sqrt %128 : vector<16x4xf32>
    %130 = arith.truncf %94 : vector<16x512xf32> to vector<16x512xbf16>
    %cst_43 = arith.constant dense<0.000000e+00> : vector<16x128xf32>
    %131 = tpu.matmul %130, %115, %cst_43 {dimension_numbers = #tpu.dot_dimension_numbers<[1], [0], [0], [1], [0, 0, 1, 1], [], []>} : vector<16x512xbf16>, vector<512x128xbf16>, vector<16x128xf32> -> vector<16x128xf32>
    %132 = vector.broadcast %117 : vector<1x128xf32> to vector<16x128xf32>
    %133 = arith.addf %131, %132 : vector<16x128xf32>
    %134 = vector.extract_strided_slice %129 {offsets = [0, 0], sizes = [16, 1], strides = [1, 1]} : vector<16x4xf32> to vector<16x1xf32>
    %135 = vector.extract_strided_slice %116 {offsets = [0, 0], sizes = [1, 128], strides = [1, 1]} : vector<4x128xf32> to vector<1x128xf32>
    %136 = vector.broadcast %134 : vector<16x1xf32> to vector<16x128xf32>
    %137 = vector.broadcast %135 : vector<1x128xf32> to vector<16x128xf32>
    %138 = arith.mulf %136, %137 : vector<16x128xf32>
    %139 = arith.addf %133, %138 : vector<16x128xf32>
    %140 = vector.extract_strided_slice %129 {offsets = [0, 1], sizes = [16, 1], strides = [1, 1]} : vector<16x4xf32> to vector<16x1xf32>
    %141 = vector.extract_strided_slice %116 {offsets = [1, 0], sizes = [1, 128], strides = [1, 1]} : vector<4x128xf32> to vector<1x128xf32>
    %142 = vector.broadcast %140 : vector<16x1xf32> to vector<16x128xf32>
    %143 = vector.broadcast %141 : vector<1x128xf32> to vector<16x128xf32>
    %144 = arith.mulf %142, %143 : vector<16x128xf32>
    %145 = arith.addf %139, %144 : vector<16x128xf32>
    %146 = vector.extract_strided_slice %129 {offsets = [0, 2], sizes = [16, 1], strides = [1, 1]} : vector<16x4xf32> to vector<16x1xf32>
    %147 = vector.extract_strided_slice %116 {offsets = [2, 0], sizes = [1, 128], strides = [1, 1]} : vector<4x128xf32> to vector<1x128xf32>
    %148 = vector.broadcast %146 : vector<16x1xf32> to vector<16x128xf32>
    %149 = vector.broadcast %147 : vector<1x128xf32> to vector<16x128xf32>
    %150 = arith.mulf %148, %149 : vector<16x128xf32>
    %151 = arith.addf %145, %150 : vector<16x128xf32>
    %152 = vector.extract_strided_slice %129 {offsets = [0, 3], sizes = [16, 1], strides = [1, 1]} : vector<16x4xf32> to vector<16x1xf32>
    %153 = vector.extract_strided_slice %116 {offsets = [3, 0], sizes = [1, 128], strides = [1, 1]} : vector<4x128xf32> to vector<1x128xf32>
    %154 = vector.broadcast %152 : vector<16x1xf32> to vector<16x128xf32>
    %155 = vector.broadcast %153 : vector<1x128xf32> to vector<16x128xf32>
    %156 = arith.mulf %154, %155 : vector<16x128xf32>
    %157 = arith.addf %151, %156 : vector<16x128xf32>
    %158 = arith.addf %27, %157 : vector<16x128xf32>
    %c0_44 = arith.constant 0 : index
    %c0_45 = arith.constant 0 : index
    %159 = vector.load %arg15[%c0_44, %c0_45] : memref<1x128xf32, #tpu.memory_space<vmem>>, vector<1x128xf32>
    %c0_46 = arith.constant 0 : index
    %c0_47 = arith.constant 0 : index
    %160 = vector.load %arg16[%c0_46, %c0_47] : memref<1x128xf32, #tpu.memory_space<vmem>>, vector<1x128xf32>
    %cst_48 = arith.constant dense<0.000000e+00> : vector<16xf32>
    %161 = vector.multi_reduction <add>, %158, %cst_48 [1] : vector<16x128xf32> to vector<16xf32>
    %162 = vector.shape_cast %161 : vector<16xf32> to vector<16x1xf32>
    %cst_49 = arith.constant 1.280000e+02 : f32
    %163 = vector.broadcast %cst_49 : f32 to vector<16x1xf32>
    %164 = arith.divf %162, %163 : vector<16x1xf32>
    %165 = vector.broadcast %164 : vector<16x1xf32> to vector<16x128xf32>
    %166 = arith.subf %158, %165 : vector<16x128xf32>
    %167 = arith.mulf %166, %166 : vector<16x128xf32>
    %cst_50 = arith.constant dense<0.000000e+00> : vector<16xf32>
    %168 = vector.multi_reduction <add>, %167, %cst_50 [1] : vector<16x128xf32> to vector<16xf32>
    %169 = vector.shape_cast %168 : vector<16xf32> to vector<16x1xf32>
    %cst_51 = arith.constant 1.280000e+02 : f32
    %170 = vector.broadcast %cst_51 : f32 to vector<16x1xf32>
    %171 = arith.divf %169, %170 : vector<16x1xf32>
    %172 = vector.broadcast %164 : vector<16x1xf32> to vector<16x128xf32>
    %173 = arith.subf %158, %172 : vector<16x128xf32>
    %cst_52 = arith.constant 9.99999974E-6 : f32
    %174 = vector.broadcast %cst_52 : f32 to vector<16x1xf32>
    %175 = arith.addf %171, %174 : vector<16x1xf32>
    %176 = math.rsqrt %175 : vector<16x1xf32>
    %177 = vector.broadcast %176 : vector<16x1xf32> to vector<16x128xf32>
    %178 = arith.mulf %173, %177 : vector<16x128xf32>
    %179 = vector.broadcast %159 : vector<1x128xf32> to vector<16x128xf32>
    %180 = arith.mulf %178, %179 : vector<16x128xf32>
    %181 = vector.broadcast %160 : vector<1x128xf32> to vector<16x128xf32>
    %182 = arith.addf %180, %181 : vector<16x128xf32>
    %c0_53 = arith.constant 0 : index
    %c0_54 = arith.constant 0 : index
    %183 = vector.load %arg17[%c0_53, %c0_54] : memref<128x1xf32, #tpu.memory_space<vmem>>, vector<128x1xf32>
    %cst_55 = arith.constant dense<0.000000e+00> : vector<16x1xf32>
    %184 = tpu.matmul %182, %183, %cst_55 {dimension_numbers = #tpu.dot_dimension_numbers<[1], [0], [0], [1], [0, 0, 1, 1], [], []>} : vector<16x128xf32>, vector<128x1xf32>, vector<16x1xf32> -> vector<16x1xf32>
    %c0_56 = arith.constant 0 : index
    %c0_57 = arith.constant 0 : index
    %185 = vector.load %arg18[%c0_56, %c0_57] : memref<1x1xf32, #tpu.memory_space<vmem>>, vector<1x1xf32>
    %186 = vector.broadcast %185 : vector<1x1xf32> to vector<16x1xf32>
    %187 = arith.addf %184, %186 : vector<16x1xf32>
    %188 = arith.negf %187 : vector<16x1xf32>
    %189 = math.exp %188 : vector<16x1xf32>
    %cst_58 = arith.constant 1.000000e+00 : f32
    %190 = vector.broadcast %cst_58 : f32 to vector<16x1xf32>
    %191 = arith.addf %190, %189 : vector<16x1xf32>
    %192 = arith.divf %190, %191 : vector<16x1xf32>
    %c0_59 = arith.constant 0 : index
    %c0_60 = arith.constant 0 : index
    %193 = vector.load %arg19[%c0_59, %c0_60] : memref<16x1xf32, #tpu.memory_space<vmem>>, vector<16x1xf32>
    tpu.vector_store %arg19[%c0_59, %c0_60], %192 {strides = array<i32>} : memref<16x1xf32, #tpu.memory_space<vmem>>, vector<16x1xf32>,
    return
  }
  func.func @transform_0(%arg0: i32) -> (i32, i32) {
    %c0_i32 = arith.constant 0 : i32
    %c0_i32_0 = arith.constant 0 : i32
    return %arg0, %c0_i32 : i32, i32
  }
  func.func @transform_1(%arg0: i32) -> (i32, i32) {
    %c0_i32 = arith.constant 0 : i32
    %c0_i32_0 = arith.constant 0 : i32
    return %arg0, %c0_i32 : i32, i32
  }
  func.func @transform_2(%arg0: i32) -> (i32, i32) {
    %c0_i32 = arith.constant 0 : i32
    %c0_i32_0 = arith.constant 0 : i32
    return %arg0, %c0_i32 : i32, i32
  }
  func.func @transform_3(%arg0: i32) -> (i32, i32) {
    %c0_i32 = arith.constant 0 : i32
    %c0_i32_0 = arith.constant 0 : i32
    %c0_i32_1 = arith.constant 0 : i32
    return %c0_i32, %c0_i32_0 : i32, i32
  }
  func.func @transform_4(%arg0: i32) -> (i32, i32) {
    %c0_i32 = arith.constant 0 : i32
    %c0_i32_0 = arith.constant 0 : i32
    %c0_i32_1 = arith.constant 0 : i32
    return %c0_i32, %c0_i32_0 : i32, i32
  }
  func.func @transform_5(%arg0: i32) -> (i32, i32) {
    %c0_i32 = arith.constant 0 : i32
    %c0_i32_0 = arith.constant 0 : i32
    %c0_i32_1 = arith.constant 0 : i32
    return %c0_i32, %c0_i32_0 : i32, i32
  }
  func.func @transform_6(%arg0: i32) -> (i32, i32) {
    %c0_i32 = arith.constant 0 : i32
    %c0_i32_0 = arith.constant 0 : i32
    %c0_i32_1 = arith.constant 0 : i32
    return %c0_i32, %c0_i32_0 : i32, i32
  }
  func.func @transform_7(%arg0: i32) -> (i32, i32) {
    %c0_i32 = arith.constant 0 : i32
    %c0_i32_0 = arith.constant 0 : i32
    %c0_i32_1 = arith.constant 0 : i32
    return %c0_i32, %c0_i32_0 : i32, i32
  }
  func.func @transform_8(%arg0: i32) -> (i32, i32) {
    %c0_i32 = arith.constant 0 : i32
    %c0_i32_0 = arith.constant 0 : i32
    %c0_i32_1 = arith.constant 0 : i32
    return %c0_i32, %c0_i32_0 : i32, i32
  }
  func.func @transform_9(%arg0: i32) -> (i32, i32) {
    %c0_i32 = arith.constant 0 : i32
    %c0_i32_0 = arith.constant 0 : i32
    %c0_i32_1 = arith.constant 0 : i32
    return %c0_i32, %c0_i32_0 : i32, i32
  }
  func.func @transform_10(%arg0: i32) -> (i32, i32) {
    %c0_i32 = arith.constant 0 : i32
    %c0_i32_0 = arith.constant 0 : i32
    %c0_i32_1 = arith.constant 0 : i32
    return %c0_i32, %c0_i32_0 : i32, i32
  }
  func.func @transform_11(%arg0: i32) -> (i32, i32) {
    %c0_i32 = arith.constant 0 : i32
    %c0_i32_0 = arith.constant 0 : i32
    %c0_i32_1 = arith.constant 0 : i32
    return %c0_i32, %c0_i32_0 : i32, i32
  }
  func.func @transform_12(%arg0: i32) -> (i32, i32) {
    %c0_i32 = arith.constant 0 : i32
    %c0_i32_0 = arith.constant 0 : i32
    %c0_i32_1 = arith.constant 0 : i32
    return %c0_i32, %c0_i32_0 : i32, i32
  }
  func.func @transform_13(%arg0: i32) -> (i32, i32) {
    %c0_i32 = arith.constant 0 : i32
    %c0_i32_0 = arith.constant 0 : i32
    %c0_i32_1 = arith.constant 0 : i32
    return %c0_i32, %c0_i32_0 : i32, i32
  }
  func.func @transform_14(%arg0: i32) -> (i32, i32) {
    %c0_i32 = arith.constant 0 : i32
    %c0_i32_0 = arith.constant 0 : i32
    %c0_i32_1 = arith.constant 0 : i32
    return %c0_i32, %c0_i32_0 : i32, i32
  }
  func.func @transform_15(%arg0: i32) -> (i32, i32) {
    %c0_i32 = arith.constant 0 : i32
    %c0_i32_0 = arith.constant 0 : i32
    %c0_i32_1 = arith.constant 0 : i32
    return %c0_i32, %c0_i32_0 : i32, i32
  }
  func.func @transform_16(%arg0: i32) -> (i32, i32) {
    %c0_i32 = arith.constant 0 : i32
    %c0_i32_0 = arith.constant 0 : i32
    %c0_i32_1 = arith.constant 0 : i32
    return %c0_i32, %c0_i32_0 : i32, i32
  }
  func.func @transform_17(%arg0: i32) -> (i32, i32) {
    %c0_i32 = arith.constant 0 : i32
    %c0_i32_0 = arith.constant 0 : i32
    %c0_i32_1 = arith.constant 0 : i32
    return %c0_i32, %c0_i32_0 : i32, i32
  }
  func.func @transform_18(%arg0: i32) -> (i32, i32) {
    %c0_i32 = arith.constant 0 : i32
    %c0_i32_0 = arith.constant 0 : i32
    return %arg0, %c0_i32 : i32, i32
  }
}

</mosaic_0001>

<llo_original>
// kernel: scoring_model_forward.4
$region0: #{scoring_model_forward.4}
  #allocation0 [shape = 'u32[]', space=smem, size = 0x4, offset = 0x4, fixed_abs, tag = 'smem constant byte address 0x4 - core index']
  #allocation1 [shape = 'u32[144,128]{1,0:T(1,128)}', space=vmem, size = 0x12000, scoped, tag = 'internal scratch']
  %s0 = inlined_call_operand.vmem [shape: bf16[16,1433], index: 0, kind: input, shape index: {}]
  %s1 = inlined_call_operand.vmem [shape: bf16[1433,128], index: 1, kind: input, shape index: {}]
  %s2 = inlined_call_operand.vmem [shape: f32[1,128], index: 2, kind: input, shape index: {}]
  %s3 = inlined_call_operand.vmem [shape: f32[16,128], index: 3, kind: output, shape index: {}]
  %s4 = sld [smem:[#allocation0]]
  $region22: #{scoring_model_forward.4} parent=0
    _
  %s6 = ssub.s32 1, %s4
  %s7 = scalar_select 0, %s6, %s4
  // Predicated region
  $region2: #{scoring_model_forward.4} parent=0 // pred_check
    _
  $region3: #{scoring_model_forward.4} parent=0 // pred_check_branch
    %9 = sbr.rel (0) target = $region5
  $region4: #{scoring_model_forward.4} parent=0 // pred_region
    _
  $region5: #{scoring_model_forward.4} parent=0 // pred_fallthru
    _
  // Predicated region
  $region6: #{scoring_model_forward.4} parent=0 // pred_check
    _
  $region7: #{scoring_model_forward.4} parent=0 // pred_check_branch
    %11 = sbr.rel (0) target = $region9
  $region8: #{scoring_model_forward.4} parent=0 // pred_region
    _
  $region9: #{scoring_model_forward.4} parent=0 // pred_fallthru
    _
  // Predicated region
  $region10: #{scoring_model_forward.4} parent=0 // pred_check
    _
  $region11: #{scoring_model_forward.4} parent=0 // pred_check_branch
    %13 = sbr.rel (0) target = $region13
  $region12: #{scoring_model_forward.4} parent=0 // pred_region
    _
  $region13: #{scoring_model_forward.4} parent=0 // pred_fallthru
    _
  %v15 = vld [vmem:[%s0] sm:$0xff]
  %v16 = vld [vmem:[%s0 + $0x8] sm:$0xff]
  %v17 = vld [vmem:[%s0 + $0x10] sm:$0xff]
  %v18 = vld [vmem:[%s0 + $0x18] sm:$0xff]
  %v19 = vld [vmem:[%s0 + $0x20] sm:$0xff]
  %v20 = vld [vmem:[%s0 + $0x28] sm:$0xff]
  %v21 = vld [vmem:[%s0 + $0x30] sm:$0xff]
  %v22 = vld [vmem:[%s0 + $0x38] sm:$0xff]
  %v23 = vld [vmem:[%s0 + $0x40] sm:$0xff]
  %v24 = vld [vmem:[%s0 + $0x48] sm:$0xff]
  %v25 = vld [vmem:[%s0 + $0x50] sm:$0xff]
  %v26 = vld [vmem:[%s0 + $0x58] sm:$0xff]
  %v27 = vld [vmem:[%s1] sm:$0xf]
  %v28 = vld [vmem:[%s1 + $0x4] sm:$0xf]
  %v29 = vld [vmem:[%s1 + $0x8] sm:$0xf]
  %v30 = vld [vmem:[%s1 + $0xc] sm:$0xf]
  %v31 = vld [vmem:[%s1 + $0x10] sm:$0xf]
  %v32 = vld [vmem:[%s1 + $0x14] sm:$0xf]
  %v33 = vld [vmem:[%s1 + $0x18] sm:$0xf]
  %v34 = vld [vmem:[%s1 + $0x1c] sm:$0xf]
  %v35 = vld [vmem:[%s1 + $0x20] sm:$0xf]
  %v36 = vld [vmem:[%s1 + $0x24] sm:$0xf]
  %v37 = vld [vmem:[%s1 + $0x28] sm:$0xf]
  %v38 = vld [vmem:[%s1 + $0x2c] sm:$0xf]
  %v39 = vld [vmem:[%s1 + $0x30] sm:$0xf]
  %v40 = vld [vmem:[%s1 + $0x34] sm:$0xf]
  %v41 = vld [vmem:[%s1 + $0x38] sm:$0xf]
  %v42 = vld [vmem:[%s1 + $0x3c] sm:$0xf]
  %v43 = vld [vmem:[%s1 + $0x40] sm:$0xf]
  %v44 = vld [vmem:[%s1 + $0x44] sm:$0xf]
  %v45 = vld [vmem:[%s1 + $0x48] sm:$0xf]
  %v46 = vld [vmem:[%s1 + $0x4c] sm:$0xf]
  %v47 = vld [vmem:[%s1 + $0x50] sm:$0xf]
  %v48 = vld [vmem:[%s1 + $0x54] sm:$0xf]
  %v49 = vld [vmem:[%s1 + $0x58] sm:$0xf]
  %v50 = vld [vmem:[%s1 + $0x5c] sm:$0xf]
  %v51 = vld [vmem:[%s1 + $0x60] sm:$0xf]
  %v52 = vld [vmem:[%s1 + $0x64] sm:$0xf]
  %v53 = vld [vmem:[%s1 + $0x68] sm:$0xf]
  %v54 = vld [vmem:[%s1 + $0x6c] sm:$0xf]
  %v55 = vld [vmem:[%s1 + $0x70] sm:$0xf]
  %v56 = vld [vmem:[%s1 + $0x74] sm:$0xf]
  %v57 = vld [vmem:[%s1 + $0x78] sm:$0xf]
  %v58 = vld [vmem:[%s1 + $0x7c] sm:$0xf]
  %v59 = vld [vmem:[%s1 + $0x80] sm:$0xf]
  %v60 = vld [vmem:[%s1 + $0x84] sm:$0xf]
  %v61 = vld [vmem:[%s1 + $0x88] sm:$0xf]
  %v62 = vld [vmem:[%s1 + $0x8c] sm:$0xf]
  %v63 = vld [vmem:[%s1 + $0x90] sm:$0xf]
  %v64 = vld [vmem:[%s1 + $0x94] sm:$0xf]
  %v65 = vld [vmem:[%s1 + $0x98] sm:$0xf]
  %v66 = vld [vmem:[%s1 + $0x9c] sm:$0xf]
  %v67 = vld [vmem:[%s1 + $0xa0] sm:$0xf]
  %v68 = vld [vmem:[%s1 + $0xa4] sm:$0xf]
  %v69 = vld [vmem:[%s1 + $0xa8] sm:$0xf]
  %v70 = vld [vmem:[%s1 + $0xac] sm:$0xf]
  %v71 = vld [vmem:[%s1 + $0xb0] sm:$0xf]
  %v72 = vld [vmem:[%s1 + $0xb4] sm:$0xf]
  %v73 = vld [vmem:[%s1 + $0xb8] sm:$0xf]
  %v74 = vld [vmem:[%s1 + $0xbc] sm:$0xf]
  %v75 = vld [vmem:[%s1 + $0xc0] sm:$0xf]
  %v76 = vld [vmem:[%s1 + $0xc4] sm:$0xf]
  %v77 = vld [vmem:[%s1 + $0xc8] sm:$0xf]
  %v78 = vld [vmem:[%s1 + $0xcc] sm:$0xf]
  %v79 = vld [vmem:[%s1 + $0xd0] sm:$0xf]
  %v80 = vld [vmem:[%s1 + $0xd4] sm:$0xf]
  %v81 = vld [vmem:[%s1 + $0xd8] sm:$0xf]
  %v82 = vld [vmem:[%s1 + $0xdc] sm:$0xf]
  %v83 = vld [vmem:[%s1 + $0xe0] sm:$0xf]
  %v84 = vld [vmem:[%s1 + $0xe4] sm:$0xf]
  %v85 = vld [vmem:[%s1 + $0xe8] sm:$0xf]
  %v86 = vld [vmem:[%s1 + $0xec] sm:$0xf]
  %v87 = vld [vmem:[%s1 + $0xf0] sm:$0xf]
  %v88 = vld [vmem:[%s1 + $0xf4] sm:$0xf]
  %v89 = vld [vmem:[%s1 + $0xf8] sm:$0xf]
  %v90 = vld [vmem:[%s1 + $0xfc] sm:$0xf]
  %v91 = vld [vmem:[%s1 + $0x100] sm:$0xf]
  %v92 = vld [vmem:[%s1 + $0x104] sm:$0xf]
  %v93 = vld [vmem:[%s1 + $0x108] sm:$0xf]
  %v94 = vld [vmem:[%s1 + $0x10c] sm:$0xf]
  %v95 = vld [vmem:[%s1 + $0x110] sm:$0xf]
  %v96 = vld [vmem:[%s1 + $0x114] sm:$0xf]
  %v97 = vld [vmem:[%s1 + $0x118] sm:$0xf]
  %v98 = vld [vmem:[%s1 + $0x11c] sm:$0xf]
  %v99 = vld [vmem:[%s1 + $0x120] sm:$0xf]
  %v100 = vld [vmem:[%s1 + $0x124] sm:$0xf]
  %v101 = vld [vmem:[%s1 + $0x128] sm:$0xf]
  %v102 = vld [vmem:[%s1 + $0x12c] sm:$0xf]
  %v103 = vld [vmem:[%s1 + $0x130] sm:$0xf]
  %v104 = vld [vmem:[%s1 + $0x134] sm:$0xf]
  %v105 = vld [vmem:[%s1 + $0x138] sm:$0xf]
  %v106 = vld [vmem:[%s1 + $0x13c] sm:$0xf]
  %v107 = vld [vmem:[%s1 + $0x140] sm:$0xf]
  %v108 = vld [vmem:[%s1 + $0x144] sm:$0xf]
  %v109 = vld [vmem:[%s1 + $0x148] sm:$0xf]
  %v110 = vld [vmem:[%s1 + $0x14c] sm:$0xf]
  %v111 = vld [vmem:[%s1 + $0x150] sm:$0xf]
  %v112 = vld [vmem:[%s1 + $0x154] sm:$0xf]
  %v113 = vld [vmem:[%s1 + $0x158] sm:$0xf]
  %v114 = vld [vmem:[%s1 + $0x15c] sm:$0xf]
  %v115 = vld [vmem:[%s1 + $0x160] sm:$0xf]
  %v116 = vld [vmem:[%s1 + $0x164] sm:$0xf]
  %v117 = vld [vmem:[%s1 + $0x168] sm:$0xf]
  %v118 = vld [vmem:[%s1 + $0x16c] sm:$0xf]
  %v119 = vld [vmem:[%s1 + $0x170] sm:$0xf]
  %v120 = vld [vmem:[%s1 + $0x174] sm:$0xf]
  %v121 = vld [vmem:[%s1 + $0x178] sm:$0xf]
  %v122 = vld [vmem:[%s1 + $0x17c] sm:$0xf]
  %v123 = vld [vmem:[%s1 + $0x180] sm:$0xf]
  %v124 = vld [vmem:[%s1 + $0x184] sm:$0xf]
  %v125 = vld [vmem:[%s1 + $0x188] sm:$0xf]
  %v126 = vld [vmem:[%s1 + $0x18c] sm:$0xf]
  %v127 = vld [vmem:[%s1 + $0x190] sm:$0xf]
  %v128 = vld [vmem:[%s1 + $0x194] sm:$0xf]
  %v129 = vld [vmem:[%s1 + $0x198] sm:$0xf]
  %v130 = vld [vmem:[%s1 + $0x19c] sm:$0xf]
  %v131 = vld [vmem:[%s1 + $0x1a0] sm:$0xf]
  %v132 = vld [vmem:[%s1 + $0x1a4] sm:$0xf]
  %v133 = vld [vmem:[%s1 + $0x1a8] sm:$0xf]
  %v134 = vld [vmem:[%s1 + $0x1ac] sm:$0xf]
  %v135 = vld [vmem:[%s1 + $0x1b0] sm:$0xf]
  %v136 = vld [vmem:[%s1 + $0x1b4] sm:$0xf]
  %v137 = vld [vmem:[%s1 + $0x1b8] sm:$0xf]
  %v138 = vld [vmem:[%s1 + $0x1bc] sm:$0xf]
  %v139 = vld [vmem:[%s1 + $0x1c0] sm:$0xf]
  %v140 = vld [vmem:[%s1 + $0x1c4] sm:$0xf]
  %v141 = vld [vmem:[%s1 + $0x1c8] sm:$0xf]
  %v142 = vld [vmem:[%s1 + $0x1cc] sm:$0xf]
  %v143 = vld [vmem:[%s1 + $0x1d0] sm:$0xf]
  %v144 = vld [vmem:[%s1 + $0x1d4] sm:$0xf]
  %v145 = vld [vmem:[%s1 + $0x1d8] sm:$0xf]
  %v146 = vld [vmem:[%s1 + $0x1dc] sm:$0xf]
  %v147 = vld [vmem:[%s1 + $0x1e0] sm:$0xf]
  %v148 = vld [vmem:[%s1 + $0x1e4] sm:$0xf]
  %v149 = vld [vmem:[%s1 + $0x1e8] sm:$0xf]
  %v150 = vld [vmem:[%s1 + $0x1ec] sm:$0xf]
  %v151 = vld [vmem:[%s1 + $0x1f0] sm:$0xf]
  %v152 = vld [vmem:[%s1 + $0x1f4] sm:$0xf]
  %v153 = vld [vmem:[%s1 + $0x1f8] sm:$0xf]
  %v154 = vld [vmem:[%s1 + $0x1fc] sm:$0xf]
  %v155 = vld [vmem:[%s1 + $0x200] sm:$0xf]
  %v156 = vld [vmem:[%s1 + $0x204] sm:$0xf]
  %v157 = vld [vmem:[%s1 + $0x208] sm:$0xf]
  %v158 = vld [vmem:[%s1 + $0x20c] sm:$0xf]
  %v159 = vld [vmem:[%s1 + $0x210] sm:$0xf]
  %v160 = vld [vmem:[%s1 + $0x214] sm:$0xf]
  %v161 = vld [vmem:[%s1 + $0x218] sm:$0xf]
  %v162 = vld [vmem:[%s1 + $0x21c] sm:$0xf]
  %v163 = vld [vmem:[%s1 + $0x220] sm:$0xf]
  %v164 = vld [vmem:[%s1 + $0x224] sm:$0xf]
  %v165 = vld [vmem:[%s1 + $0x228] sm:$0xf]
  %v166 = vld [vmem:[%s1 + $0x22c] sm:$0xf]
  %v167 = vld [vmem:[%s1 + $0x230] sm:$0xf]
  %v168 = vld [vmem:[%s1 + $0x234] sm:$0xf]
  %v169 = vld [vmem:[%s1 + $0x238] sm:$0xf]
  %v170 = vld [vmem:[%s1 + $0x23c] sm:$0xf]
  %v171 = vld [vmem:[%s1 + $0x240] sm:$0xf]
  %v172 = vld [vmem:[%s1 + $0x244] sm:$0xf]
  %v173 = vld [vmem:[%s1 + $0x248] sm:$0xf]
  %v174 = vld [vmem:[%s1 + $0x24c] sm:$0xf]
  %v175 = vld [vmem:[%s1 + $0x250] sm:$0xf]
  %v176 = vld [vmem:[%s1 + $0x254] sm:$0xf]
  %v177 = vld [vmem:[%s1 + $0x258] sm:$0xf]
  %v178 = vld [vmem:[%s1 + $0x25c] sm:$0xf]
  %v179 = vld [vmem:[%s1 + $0x260] sm:$0xf]
  %v180 = vld [vmem:[%s1 + $0x264] sm:$0xf]
  %v181 = vld [vmem:[%s1 + $0x268] sm:$0xf]
  %v182 = vld [vmem:[%s1 + $0x26c] sm:$0xf]
  %v183 = vld [vmem:[%s1 + $0x270] sm:$0xf]
  %v184 = vld [vmem:[%s1 + $0x274] sm:$0xf]
  %v185 = vld [vmem:[%s1 + $0x278] sm:$0xf]
  %v186 = vld [vmem:[%s1 + $0x27c] sm:$0xf]
  %v187 = vld [vmem:[%s1 + $0x280] sm:$0xf]
  %v188 = vld [vmem:[%s1 + $0x284] sm:$0xf]
  %v189 = vld [vmem:[%s1 + $0x288] sm:$0xf]
  %v190 = vld [vmem:[%s1 + $0x28c] sm:$0xf]
  %v191 = vld [vmem:[%s1 + $0x290] sm:$0xf]
  %v192 = vld [vmem:[%s1 + $0x294] sm:$0xf]
  %v193 = vld [vmem:[%s1 + $0x298] sm:$0xf]
  %v194 = vld [vmem:[%s1 + $0x29c] sm:$0xf]
  %v195 = vld [vmem:[%s1 + $0x2a0] sm:$0xf]
  %v196 = vld [vmem:[%s1 + $0x2a4] sm:$0xf]
  %v197 = vld [vmem:[%s1 + $0x2a8] sm:$0xf]
  %v198 = vld [vmem:[%s1 + $0x2ac] sm:$0xf]
  %v199 = vld [vmem:[%s1 + $0x2b0] sm:$0xf]
  %v200 = vld [vmem:[%s1 + $0x2b4] sm:$0xf]
  %v201 = vld [vmem:[%s1 + $0x2b8] sm:$0xf]
  %v202 = vld [vmem:[%s1 + $0x2bc] sm:$0xf]
  %v203 = vld [vmem:[%s1 + $0x2c0] sm:$0xf]
  %v204 = vld [vmem:[%s1 + $0x2c4] sm:$0xf]
  %v205 = vld [vmem:[%s1 + $0x2c8] sm:$0xf]
  %v206 = vld [vmem:[%s1 + $0x2cc] sm:$0x1]
  %v207 = vld [vmem:[%s2] sm:$0x1]
  %v209 = vlaneseq
  %v210 = vshrl.u32 %v209, 7
  %v211 = vsub.s32 0, %v210
  %v212 = vrot.slane %v207, %v211
  %v226 = vunpack.c.l.b16 %v15
  %v227 = vunpack.c.h.b16 %v15
  %v228 = vunpack.c.l.b16 %v16
  %v229 = vunpack.c.h.b16 %v16
  %v230 = vunpack.c.l.b16 %v17
  %v231 = vunpack.c.h.b16 %v17
  %v232 = vunpack.c.l.b16 %v18
  %v233 = vunpack.c.h.b16 %v18
  %v234 = vunpack.c.l.b16 %v19
  %v235 = vunpack.c.h.b16 %v19
  %v236 = vunpack.c.l.b16 %v20
  %v237 = vunpack.c.h.b16 %v20
  %v238 = vunpack.c.l.b16 %v21
  %v239 = vunpack.c.h.b16 %v21
  %v240 = vunpack.c.l.b16 %v22
  %v241 = vunpack.c.h.b16 %v22
  %v242 = vunpack.c.l.b16 %v23
  %v243 = vunpack.c.h.b16 %v23
  %v244 = vunpack.c.l.b16 %v24
  %v245 = vunpack.c.h.b16 %v24
  %v246 = vunpack.c.l.b16 %v25
  %v247 = vunpack.c.h.b16 %v25
  %v248 = vunpack.c.l.b16 %v26
  %v249 = vunpack.c.h.b16 %v26
  %v250 = vpack.c.b16 %v238, %v226
  %v251 = vpack.c.b16 %v239, %v227
  %v252 = vpack.c.b16 %v240, %v228
  %v253 = vpack.c.b16 %v241, %v229
  %v254 = vpack.c.b16 %v242, %v230
  %v255 = vpack.c.b16 %v243, %v231
  %v256 = vpack.c.b16 %v244, %v232
  %v257 = vpack.c.b16 %v245, %v233
  %v258 = vpack.c.b16 %v246, %v234
  %v259 = vpack.c.b16 %v247, %v235
  %v260 = vpack.c.b16 %v248, %v236
  %v261 = vpack.c.b16 %v249, %v237
  %v453 = vunpack.c.l.b16 %v27
  %v454 = vunpack.c.l.b16 %v28
  %v455 = vunpack.c.l.b16 %v29
  %v456 = vunpack.c.l.b16 %v30
  %v457 = vunpack.c.l.b16 %v31
  %v458 = vunpack.c.l.b16 %v32
  %v459 = vunpack.c.l.b16 %v33
  %v460 = vunpack.c.l.b16 %v34
  %v461 = vunpack.c.l.b16 %v35
  %v462 = vunpack.c.l.b16 %v36
  %v463 = vunpack.c.l.b16 %v37
  %v464 = vunpack.c.l.b16 %v38
  %v465 = vunpack.c.l.b16 %v39
  %v466 = vunpack.c.l.b16 %v40
  %v467 = vunpack.c.l.b16 %v41
  %v468 = vunpack.c.l.b16 %v42
  %v469 = vunpack.c.l.b16 %v43
  %v470 = vunpack.c.l.b16 %v44
  %v471 = vunpack.c.l.b16 %v45
  %v472 = vunpack.c.l.b16 %v46
  %v473 = vunpack.c.l.b16 %v47
  %v474 = vunpack.c.l.b16 %v48
  %v475 = vunpack.c.l.b16 %v49
  %v476 = vunpack.c.l.b16 %v50
  %v477 = vunpack.c.l.b16 %v51
  %v478 = vunpack.c.l.b16 %v52
  %v479 = vunpack.c.l.b16 %v53
  %v480 = vunpack.c.l.b16 %v54
  %v481 = vunpack.c.l.b16 %v55
  %v482 = vunpack.c.l.b16 %v56
  %v483 = vunpack.c.l.b16 %v57
  %v484 = vunpack.c.l.b16 %v58
  %v485 = vunpack.c.l.b16 %v59
  %v486 = vunpack.c.l.b16 %v60
  %v487 = vunpack.c.l.b16 %v61
  %v488 = vunpack.c.l.b16 %v62
  %v489 = vunpack.c.l.b16 %v63
  %v490 = vunpack.c.l.b16 %v64
  %v491 = vunpack.c.l.b16 %v65
  %v492 = vunpack.c.l.b16 %v66
  %v493 = vunpack.c.l.b16 %v67
  %v494 = vunpack.c.l.b16 %v68
  %v495 = vunpack.c.l.b16 %v69
  %v496 = vunpack.c.l.b16 %v70
  %v497 = vunpack.c.l.b16 %v71
  %v498 = vunpack.c.l.b16 %v72
  %v499 = vunpack.c.l.b16 %v73
  %v500 = vunpack.c.l.b16 %v74
  %v501 = vunpack.c.l.b16 %v75
  %v502 = vunpack.c.l.b16 %v76
  %v503 = vunpack.c.l.b16 %v77
  %v504 = vunpack.c.l.b16 %v78
  %v505 = vunpack.c.l.b16 %v79
  %v506 = vunpack.c.l.b16 %v80
  %v507 = vunpack.c.l.b16 %v81
  %v508 = vunpack.c.l.b16 %v82
  %v509 = vunpack.c.l.b16 %v83
  %v510 = vunpack.c.l.b16 %v84
  %v511 = vunpack.c.l.b16 %v85
  %v512 = vunpack.c.l.b16 %v86
  %v513 = vunpack.c.l.b16 %v87
  %v514 = vunpack.c.l.b16 %v88
  %v515 = vunpack.c.l.b16 %v89
  %v516 = vunpack.c.l.b16 %v90
  %v517 = vunpack.c.l.b16 %v91
  %v518 = vunpack.c.l.b16 %v92
  %v519 = vunpack.c.l.b16 %v93
  %v520 = vunpack.c.l.b16 %v94
  %v521 = vunpack.c.l.b16 %v95
  %v522 = vunpack.c.l.b16 %v96
  %v523 = vunpack.c.l.b16 %v97
  %v524 = vunpack.c.l.b16 %v98
  %v525 = vunpack.c.l.b16 %v99
  %v526 = vunpack.c.l.b16 %v100
  %v527 = vunpack.c.l.b16 %v101
  %v528 = vunpack.c.l.b16 %v102
  %v529 = vunpack.c.l.b16 %v103
  %v530 = vunpack.c.l.b16 %v104
  %v531 = vunpack.c.l.b16 %v105
  %v532 = vunpack.c.l.b16 %v106
  %v533 = vunpack.c.l.b16 %v107
  %v534 = vunpack.c.l.b16 %v108
  %v535 = vunpack.c.l.b16 %v109
  %v536 = vunpack.c.l.b16 %v110
  %v537 = vunpack.c.l.b16 %v111
  %v538 = vunpack.c.l.b16 %v112
  %v539 = vunpack.c.l.b16 %v113
  %v540 = vunpack.c.l.b16 %v114
  %v541 = vunpack.c.l.b16 %v115
  %v542 = vunpack.c.l.b16 %v116
  %v543 = vunpack.c.l.b16 %v117
  %v544 = vunpack.c.l.b16 %v118
  %v545 = vunpack.c.l.b16 %v119
  %v546 = vunpack.c.l.b16 %v120
  %v547 = vunpack.c.l.b16 %v121
  %v548 = vunpack.c.l.b16 %v122
  %v549 = vunpack.c.l.b16 %v123
  %v550 = vunpack.c.l.b16 %v124
  %v551 = vunpack.c.l.b16 %v125
  %v552 = vunpack.c.l.b16 %v126
  %v553 = vunpack.c.l.b16 %v127
  %v554 = vunpack.c.l.b16 %v128
  %v555 = vunpack.c.l.b16 %v129
  %v556 = vunpack.c.l.b16 %v130
  %v557 = vunpack.c.l.b16 %v131
  %v558 = vunpack.c.l.b16 %v132
  %v559 = vunpack.c.l.b16 %v133
  %v560 = vunpack.c.l.b16 %v134
  %v561 = vunpack.c.l.b16 %v135
  %v562 = vunpack.c.l.b16 %v136
  %v563 = vunpack.c.l.b16 %v137
  %v564 = vunpack.c.l.b16 %v138
  %v565 = vunpack.c.l.b16 %v139
  %v566 = vunpack.c.l.b16 %v140
  %v567 = vunpack.c.l.b16 %v141
  %v568 = vunpack.c.l.b16 %v142
  %v569 = vunpack.c.l.b16 %v143
  %v570 = vunpack.c.l.b16 %v144
  %v571 = vunpack.c.l.b16 %v145
  %v572 = vunpack.c.l.b16 %v146
  %v573 = vunpack.c.l.b16 %v147
  %v574 = vunpack.c.l.b16 %v148
  %v575 = vunpack.c.l.b16 %v149
  %v576 = vunpack.c.l.b16 %v150
  %v577 = vunpack.c.l.b16 %v151
  %v578 = vunpack.c.l.b16 %v152
  %v579 = vunpack.c.l.b16 %v153
  %v580 = vunpack.c.l.b16 %v154
  %v581 = vunpack.c.l.b16 %v155
  %v582 = vunpack.c.l.b16 %v156
  %v583 = vunpack.c.l.b16 %v157
  %v584 = vunpack.c.l.b16 %v158
  %v585 = vunpack.c.l.b16 %v159
  %v586 = vunpack.c.l.b16 %v160
  %v587 = vunpack.c.l.b16 %v161
  %v588 = vunpack.c.l.b16 %v162
  %v589 = vunpack.c.l.b16 %v163
  %v590 = vunpack.c.l.b16 %v164
  %v591 = vunpack.c.l.b16 %v165
  %v592 = vunpack.c.l.b16 %v166
  %v593 = vunpack.c.l.b16 %v167
  %v594 = vunpack.c.l.b16 %v168
  %v595 = vunpack.c.l.b16 %v169
  %v596 = vunpack.c.l.b16 %v170
  %v597 = vunpack.c.l.b16 %v171
  %v598 = vunpack.c.l.b16 %v172
  %v599 = vunpack.c.l.b16 %v173
  %v600 = vunpack.c.l.b16 %v174
  %v601 = vunpack.c.l.b16 %v175
  %v602 = vunpack.c.l.b16 %v176
  %v603 = vunpack.c.l.b16 %v177
  %v604 = vunpack.c.l.b16 %v178
  %v605 = vunpack.c.l.b16 %v179
  %v606 = vunpack.c.l.b16 %v180
  %v607 = vunpack.c.l.b16 %v181
  %v608 = vunpack.c.l.b16 %v182
  %v609 = vunpack.c.l.b16 %v183
  %v610 = vunpack.c.l.b16 %v184
  %v611 = vunpack.c.l.b16 %v185
  %v612 = vunpack.c.l.b16 %v186
  %v613 = vunpack.c.l.b16 %v187
  %v614 = vunpack.c.l.b16 %v188
  %v615 = vunpack.c.l.b16 %v189
  %v616 = vunpack.c.l.b16 %v190
  %v617 = vunpack.c.l.b16 %v191
  %v618 = vunpack.c.l.b16 %v192
  %v619 = vunpack.c.l.b16 %v193
  %v620 = vunpack.c.l.b16 %v194
  %v621 = vunpack.c.l.b16 %v195
  %v622 = vunpack.c.l.b16 %v196
  %v623 = vunpack.c.l.b16 %v197
  %v624 = vunpack.c.l.b16 %v198
  %v625 = vunpack.c.l.b16 %v199
  %v626 = vunpack.c.l.b16 %v200
  %v627 = vunpack.c.l.b16 %v201
  %v628 = vunpack.c.l.b16 %v202
  %v629 = vunpack.c.l.b16 %v203
  %v630 = vunpack.c.l.b16 %v204
  %v631 = vunpack.c.l.b16 %v205
  %v632 = vunpack.c.l.b16 %v206
  %v633 = vpack.c.b16 %v454, %v453
  %v634 = vpack.c.b16 %v456, %v455
  %v635 = vpack.c.b16 %v458, %v457
  %v636 = vpack.c.b16 %v460, %v459
  %v637 = vpack.c.b16 %v462, %v461
  %v638 = vpack.c.b16 %v464, %v463
  %v639 = vpack.c.b16 %v466, %v465
  %v640 = vpack.c.b16 %v468, %v467
  %v641 = vpack.c.b16 %v470, %v469
  %v642 = vpack.c.b16 %v472, %v471
  %v643 = vpack.c.b16 %v474, %v473
  %v644 = vpack.c.b16 %v476, %v475
  %v645 = vpack.c.b16 %v478, %v477
  %v646 = vpack.c.b16 %v480, %v479
  %v647 = vpack.c.b16 %v482, %v481
  %v648 = vpack.c.b16 %v484, %v483
  %v649 = vpack.c.b16 %v486, %v485
  %v650 = vpack.c.b16 %v488, %v487
  %v651 = vpack.c.b16 %v490, %v489
  %v652 = vpack.c.b16 %v492, %v491
  %v653 = vpack.c.b16 %v494, %v493
  %v654 = vpack.c.b16 %v496, %v495
  %v655 = vpack.c.b16 %v498, %v497
  %v656 = vpack.c.b16 %v500, %v499
  %v657 = vpack.c.b16 %v502, %v501
  %v658 = vpack.c.b16 %v504, %v503
  %v659 = vpack.c.b16 %v506, %v505
  %v660 = vpack.c.b16 %v508, %v507
  %v661 = vpack.c.b16 %v510, %v509
  %v662 = vpack.c.b16 %v512, %v511
  %v663 = vpack.c.b16 %v514, %v513
  %v664 = vpack.c.b16 %v516, %v515
  %v665 = vpack.c.b16 %v518, %v517
  %v666 = vpack.c.b16 %v520, %v519
  %v667 = vpack.c.b16 %v522, %v521
  %v668 = vpack.c.b16 %v524, %v523
  %v669 = vpack.c.b16 %v526, %v525
  %v670 = vpack.c.b16 %v528, %v527
  %v671 = vpack.c.b16 %v530, %v529
  %v672 = vpack.c.b16 %v532, %v531
  %v673 = vpack.c.b16 %v534, %v533
  %v674 = vpack.c.b16 %v536, %v535
  %v675 = vpack.c.b16 %v538, %v537
  %v676 = vpack.c.b16 %v540, %v539
  %v677 = vpack.c.b16 %v542, %v541
  %v678 = vpack.c.b16 %v544, %v543
  %v679 = vpack.c.b16 %v546, %v545
  %v680 = vpack.c.b16 %v548, %v547
  %v681 = vpack.c.b16 %v550, %v549
  %v682 = vpack.c.b16 %v552, %v551
  %v683 = vpack.c.b16 %v554, %v553
  %v684 = vpack.c.b16 %v556, %v555
  %v685 = vpack.c.b16 %v558, %v557
  %v686 = vpack.c.b16 %v560, %v559
  %v687 = vpack.c.b16 %v562, %v561
  %v688 = vpack.c.b16 %v564, %v563
  %v689 = vpack.c.b16 %v566, %v565
  %v690 = vpack.c.b16 %v568, %v567
  %v691 = vpack.c.b16 %v570, %v569
  %v692 = vpack.c.b16 %v572, %v571
  %v693 = vpack.c.b16 %v574, %v573
  %v694 = vpack.c.b16 %v576, %v575
  %v695 = vpack.c.b16 %v578, %v577
  %v696 = vpack.c.b16 %v580, %v579
  %v697 = vpack.c.b16 %v582, %v581
  %v698 = vpack.c.b16 %v584, %v583
  %v699 = vpack.c.b16 %v586, %v585
  %v700 = vpack.c.b16 %v588, %v587
  %v701 = vpack.c.b16 %v590, %v589
  %v702 = vpack.c.b16 %v592, %v591
  %v703 = vpack.c.b16 %v594, %v593
  %v704 = vpack.c.b16 %v596, %v595
  %v705 = vpack.c.b16 %v598, %v597
  %v706 = vpack.c.b16 %v600, %v599
  %v707 = vpack.c.b16 %v602, %v601
  %v708 = vpack.c.b16 %v604, %v603
  %v709 = vpack.c.b16 %v606, %v605
  %v710 = vpack.c.b16 %v608, %v607
  %v711 = vpack.c.b16 %v610, %v609
  %v712 = vpack.c.b16 %v612, %v611
  %v713 = vpack.c.b16 %v614, %v613
  %v714 = vpack.c.b16 %v616, %v615
  %v715 = vpack.c.b16 %v618, %v617
  %v716 = vpack.c.b16 %v620, %v619
  %v717 = vpack.c.b16 %v622, %v621
  %v718 = vpack.c.b16 %v624, %v623
  %v719 = vpack.c.b16 %v626, %v625
  %v720 = vpack.c.b16 %v628, %v627
  %v721 = vpack.c.b16 %v630, %v629
  %v722 = vpack.c.b16 %v632, %v631
  %vm812 = vcmask 203776
  %v814 = vsel %vm812, %v261, 0
  %vm816 = vcmask 1043456
  %vm817 = vcmask 1044480
  %v818 = vsel %vm816, 4294967295, 65535
  %v819 = vsel %vm817, %v818, 0
  %v821 = vand.u32 %v722, %v819
  %823 = vmatprep.subr.bf16.mxu0 0
  %824 = vmatpush1.bf16.msra.mxu0 %v633
  %825 = vmatprep.subr.bf16.mxu0 0
  %826 = vmatpush1.bf16.msra.mxu0 %v634
  %827 = vmatprep.subr.bf16.mxu0 0
  %828 = vmatpush1.bf16.msra.mxu0 %v635
  %829 = vmatprep.subr.bf16.mxu0 0
  %830 = vmatpush1.bf16.msra.mxu0 %v636
  %831 = vmatprep.subr.bf16.mxu0 0
  %832 = vmatpush1.bf16.msra.mxu0 %v637
  %833 = vmatprep.subr.bf16.mxu0 0
  %834 = vmatpush1.bf16.msra.mxu0 %v638
  %835 = vmatprep.subr.bf16.mxu0 0
  %836 = vmatpush1.bf16.msra.mxu0 %v639
  %837 = vmatprep.subr.bf16.mxu0 0
  %838 = vmatpush1.bf16.msra.mxu0 %v640
  %839 = vmatprep.subr.bf16.mxu0 0
  %840 = vmatpush1.bf16.msra.mxu0 %v641
  %841 = vmatprep.subr.bf16.mxu0 0
  %842 = vmatpush1.bf16.msra.mxu0 %v642
  %843 = vmatprep.subr.bf16.mxu0 0
  %844 = vmatpush1.bf16.msra.mxu0 %v643
  %845 = vmatprep.subr.bf16.mxu0 0
  %846 = vmatpush1.bf16.msra.mxu0 %v644
  %847 = vmatprep.subr.bf16.mxu0 0
  %848 = vmatpush1.bf16.msra.mxu0 %v645
  %849 = vmatprep.subr.bf16.mxu0 0
  %850 = vmatpush1.bf16.msra.mxu0 %v646
  %851 = vmatprep.subr.bf16.mxu0 0
  %852 = vmatpush1.bf16.msra.mxu0 %v647
  %853 = vmatprep.subr.bf16.mxu0 0
  %854 = vmatpush1.bf16.msra.mxu0 %v648
  %855 = vmatprep.mubr.bf16.mxu0 %v251
  %856 = vmatmul.mubr.bf16.gmra.mrb[0].mxu0 %v250
  %v857 = vpop.f32.mrb[0].mxu0
  %v858 = vadd.f32 %v212, %v857
  %v859 = vpop.f32.mrb[0].mxu0
  %v860 = vpop.f32.mrb[0].mxu0
  %v861 = vadd.f32 %v212, %v860
  %v862 = vpop.f32.mrb[0].mxu0
  %863 = vdwg.mxu0
  %864 = vmatprep.subr.bf16.mxu0 0
  %865 = vmatpush1.bf16.msra.mxu0 %v649
  %866 = vmatprep.subr.bf16.mxu0 0
  %867 = vmatpush1.bf16.msra.mxu0 %v650
  %868 = vmatprep.subr.bf16.mxu0 0
  %869 = vmatpush1.bf16.msra.mxu0 %v651
  %870 = vmatprep.subr.bf16.mxu0 0
  %871 = vmatpush1.bf16.msra.mxu0 %v652
  %872 = vmatprep.subr.bf16.mxu0 0
  %873 = vmatpush1.bf16.msra.mxu0 %v653
  %874 = vmatprep.subr.bf16.mxu0 0
  %875 = vmatpush1.bf16.msra.mxu0 %v654
  %876 = vmatprep.subr.bf16.mxu0 0
  %877 = vmatpush1.bf16.msra.mxu0 %v655
  %878 = vmatprep.subr.bf16.mxu0 0
  %879 = vmatpush1.bf16.msra.mxu0 %v656
  %880 = vmatprep.subr.bf16.mxu0 0
  %881 = vmatpush1.bf16.msra.mxu0 %v657
  %882 = vmatprep.subr.bf16.mxu0 0
  %883 = vmatpush1.bf16.msra.mxu0 %v658
  %884 = vmatprep.subr.bf16.mxu0 0
  %885 = vmatpush1.bf16.msra.mxu0 %v659
  %886 = vmatprep.subr.bf16.mxu0 0
  %887 = vmatpush1.bf16.msra.mxu0 %v660
  %888 = vmatprep.subr.bf16.mxu0 0
  %889 = vmatpush1.bf16.msra.mxu0 %v661
  %890 = vmatprep.subr.bf16.mxu0 0
  %891 = vmatpush1.bf16.msra.mxu0 %v662
  %892 = vmatprep.subr.bf16.mxu0 0
  %893 = vmatpush1.bf16.msra.mxu0 %v663
  %894 = vmatprep.subr.bf16.mxu0 0
  %895 = vmatpush1.bf16.msra.mxu0 %v664
  %896 = vmatprep.mubr.bf16.mxu0 %v253
  %897 = vmatmul.mubr.bf16.gmra.mrb[0].mxu0 %v252
  %v898 = vpop.f32.mrb[0].mxu0
  %v899 = vadd.f32 %v858, %v898
  %v900 = vpop.f32.mrb[0].mxu0
  %v901 = vpop.f32.mrb[0].mxu0
  %v902 = vadd.f32 %v861, %v901
  %v903 = vpop.f32.mrb[0].mxu0
  %904 = vdwg.mxu0
  %905 = vmatprep.subr.bf16.mxu0 0
  %906 = vmatpush1.bf16.msra.mxu0 %v665
  %907 = vmatprep.subr.bf16.mxu0 0
  %908 = vmatpush1.bf16.msra.mxu0 %v666
  %909 = vmatprep.subr.bf16.mxu0 0
  %910 = vmatpush1.bf16.msra.mxu0 %v667
  %911 = vmatprep.subr.bf16.mxu0 0
  %912 = vmatpush1.bf16.msra.mxu0 %v668
  %913 = vmatprep.subr.bf16.mxu0 0
  %914 = vmatpush1.bf16.msra.mxu0 %v669
  %915 = vmatprep.subr.bf16.mxu0 0
  %916 = vmatpush1.bf16.msra.mxu0 %v670
  %917 = vmatprep.subr.bf16.mxu0 0
  %918 = vmatpush1.bf16.msra.mxu0 %v671
  %919 = vmatprep.subr.bf16.mxu0 0
  %920 = vmatpush1.bf16.msra.mxu0 %v672
  %921 = vmatprep.subr.bf16.mxu0 0
  %922 = vmatpush1.bf16.msra.mxu0 %v673
  %923 = vmatprep.subr.bf16.mxu0 0
  %924 = vmatpush1.bf16.msra.mxu0 %v674
  %925 = vmatprep.subr.bf16.mxu0 0
  %926 = vmatpush1.bf16.msra.mxu0 %v675
  %927 = vmatprep.subr.bf16.mxu0 0
  %928 = vmatpush1.bf16.msra.mxu0 %v676
  %929 = vmatprep.subr.bf16.mxu0 0
  %930 = vmatpush1.bf16.msra.mxu0 %v677
  %931 = vmatprep.subr.bf16.mxu0 0
  %932 = vmatpush1.bf16.msra.mxu0 %v678
  %933 = vmatprep.subr.bf16.mxu0 0
  %934 = vmatpush1.bf16.msra.mxu0 %v679
  %935 = vmatprep.subr.bf16.mxu0 0
  %936 = vmatpush1.bf16.msra.mxu0 %v680
  %937 = vmatprep.mubr.bf16.mxu0 %v255
  %938 = vmatmul.mubr.bf16.gmra.mrb[0].mxu0 %v254
  %v939 = vpop.f32.mrb[0].mxu0
  %v940 = vadd.f32 %v899, %v939
  %v941 = vpop.f32.mrb[0].mxu0
  %v942 = vpop.f32.mrb[0].mxu0
  %v943 = vadd.f32 %v902, %v942
  %v944 = vpop.f32.mrb[0].mxu0
  %945 = vdwg.mxu0
  %946 = vmatprep.subr.bf16.mxu0 0
  %947 = vmatpush1.bf16.msra.mxu0 %v681
  %948 = vmatprep.subr.bf16.mxu0 0
  %949 = vmatpush1.bf16.msra.mxu0 %v682
  %950 = vmatprep.subr.bf16.mxu0 0
  %951 = vmatpush1.bf16.msra.mxu0 %v683
  %952 = vmatprep.subr.bf16.mxu0 0
  %953 = vmatpush1.bf16.msra.mxu0 %v684
  %954 = vmatprep.subr.bf16.mxu0 0
  %955 = vmatpush1.bf16.msra.mxu0 %v685
  %956 = vmatprep.subr.bf16.mxu0 0
  %957 = vmatpush1.bf16.msra.mxu0 %v686
  %958 = vmatprep.subr.bf16.mxu0 0
  %959 = vmatpush1.bf16.msra.mxu0 %v687
  %960 = vmatprep.subr.bf16.mxu0 0
  %961 = vmatpush1.bf16.msra.mxu0 %v688
  %962 = vmatprep.subr.bf16.mxu0 0
  %963 = vmatpush1.bf16.msra.mxu0 %v689
  %964 = vmatprep.subr.bf16.mxu0 0
  %965 = vmatpush1.bf16.msra.mxu0 %v690
  %966 = vmatprep.subr.bf16.mxu0 0
  %967 = vmatpush1.bf16.msra.mxu0 %v691
  %968 = vmatprep.subr.bf16.mxu0 0
  %969 = vmatpush1.bf16.msra.mxu0 %v692
  %970 = vmatprep.subr.bf16.mxu0 0
  %971 = vmatpush1.bf16.msra.mxu0 %v693
  %972 = vmatprep.subr.bf16.mxu0 0
  %973 = vmatpush1.bf16.msra.mxu0 %v694
  %974 = vmatprep.subr.bf16.mxu0 0
  %975 = vmatpush1.bf16.msra.mxu0 %v695
  %976 = vmatprep.subr.bf16.mxu0 0
  %977 = vmatpush1.bf16.msra.mxu0 %v696
  %978 = vmatprep.mubr.bf16.mxu0 %v257
  %979 = vmatmul.mubr.bf16.gmra.mrb[0].mxu0 %v256
  %v980 = vpop.f32.mrb[0].mxu0
  %v981 = vadd.f32 %v940, %v980
  %v982 = vpop.f32.mrb[0].mxu0
  %v983 = vpop.f32.mrb[0].mxu0
  %v984 = vadd.f32 %v943, %v983
  %v985 = vpop.f32.mrb[0].mxu0
  %986 = vdwg.mxu0
  %987 = vmatprep.subr.bf16.mxu0 0
  %988 = vmatpush1.bf16.msra.mxu0 %v697
  %989 = vmatprep.subr.bf16.mxu0 0
  %990 = vmatpush1.bf16.msra.mxu0 %v698
  %991 = vmatprep.subr.bf16.mxu0 0
  %992 = vmatpush1.bf16.msra.mxu0 %v699
  %993 = vmatprep.subr.bf16.mxu0 0
  %994 = vmatpush1.bf16.msra.mxu0 %v700
  %995 = vmatprep.subr.bf16.mxu0 0
  %996 = vmatpush1.bf16.msra.mxu0 %v701
  %997 = vmatprep.subr.bf16.mxu0 0
  %998 = vmatpush1.bf16.msra.mxu0 %v702
  %999 = vmatprep.subr.bf16.mxu0 0
  %1000 = vmatpush1.bf16.msra.mxu0 %v703
  %1001 = vmatprep.subr.bf16.mxu0 0
  %1002 = vmatpush1.bf16.msra.mxu0 %v704
  %1003 = vmatprep.subr.bf16.mxu0 0
  %1004 = vmatpush1.bf16.msra.mxu0 %v705
  %1005 = vmatprep.subr.bf16.mxu0 0
  %1006 = vmatpush1.bf16.msra.mxu0 %v706
  %1007 = vmatprep.subr.bf16.mxu0 0
  %1008 = vmatpush1.bf16.msra.mxu0 %v707
  %1009 = vmatprep.subr.bf16.mxu0 0
  %1010 = vmatpush1.bf16.msra.mxu0 %v708
  %1011 = vmatprep.subr.bf16.mxu0 0
  %1012 = vmatpush1.bf16.msra.mxu0 %v709
  %1013 = vmatprep.subr.bf16.mxu0 0
  %1014 = vmatpush1.bf16.msra.mxu0 %v710
  %1015 = vmatprep.subr.bf16.mxu0 0
  %1016 = vmatpush1.bf16.msra.mxu0 %v711
  %1017 = vmatprep.subr.bf16.mxu0 0
  %1018 = vmatpush1.bf16.msra.mxu0 %v712
  %1019 = vmatprep.mubr.bf16.mxu0 %v259
  %1020 = vmatmul.mubr.bf16.gmra.mrb[0].mxu0 %v258
  %v1021 = vpop.f32.mrb[0].mxu0
  %v1022 = vadd.f32 %v981, %v1021
  %v1023 = vpop.f32.mrb[0].mxu0
  %v1024 = vpop.f32.mrb[0].mxu0
  %v1025 = vadd.f32 %v984, %v1024
  %v1026 = vpop.f32.mrb[0].mxu0
  %1027 = vdwg.mxu0
  %1028 = vmatprep.subr.bf16.mxu0 0
  %1029 = vmatpush1.bf16.msra.mxu0 %v713
  %1030 = vmatprep.subr.bf16.mxu0 0
  %1031 = vmatpush1.bf16.msra.mxu0 %v714
  %1032 = vmatprep.subr.bf16.mxu0 0
  %1033 = vmatpush1.bf16.msra.mxu0 %v715
  %1034 = vmatprep.subr.bf16.mxu0 0
  %1035 = vmatpush1.bf16.msra.mxu0 %v716
  %1036 = vmatprep.subr.bf16.mxu0 0
  %1037 = vmatpush1.bf16.msra.mxu0 %v717
  %1038 = vmatprep.subr.bf16.mxu0 0
  %1039 = vmatpush1.bf16.msra.mxu0 %v718
  %1040 = vmatprep.subr.bf16.mxu0 0
  %1041 = vmatpush1.bf16.msra.mxu0 %v719
  %1042 = vmatprep.subr.bf16.mxu0 0
  %1043 = vmatpush1.bf16.msra.mxu0 %v720
  %1044 = vmatprep.subr.bf16.mxu0 0
  %1045 = vmatpush1.bf16.msra.mxu0 %v721
  %1046 = vmatprep.subr.bf16.mxu0 0
  %1047 = vmatpush1.bf16.msra.mxu0 %v821
  %1048 = vmatprep.subr.bf16.mxu0 0
  %1049 = vmatpush1.bf16.msra.mxu0 0
  %1050 = vmatprep.subr.bf16.mxu0 0
  %1051 = vmatpush1.bf16.msra.mxu0 0
  %1052 = vmatprep.subr.bf16.mxu0 0
  %1053 = vmatpush1.bf16.msra.mxu0 0
  %1054 = vmatprep.subr.bf16.mxu0 0
  %1055 = vmatpush1.bf16.msra.mxu0 0
  %1056 = vmatprep.subr.bf16.mxu0 0
  %1057 = vmatpush1.bf16.msra.mxu0 0
  %1058 = vmatprep.subr.bf16.mxu0 0
  %1059 = vmatpush1.bf16.msra.mxu0 0
  %1060 = vmatprep.mubr.bf16.mxu0 %v814
  %1061 = vmatmul.mubr.bf16.gmra.mrb[0].mxu0 %v260
  %v1062 = vpop.f32.mrb[0].mxu0
  %v1063 = vadd.f32 %v1022, %v1062
  %v1064 = vpop.f32.mrb[0].mxu0
  %v1065 = vpop.f32.mrb[0].mxu0
  %v1066 = vadd.f32 %v1025, %v1065
  %v1067 = vpop.f32.mrb[0].mxu0
  %1068 = vdwg.mxu0
  %1069 = vst [vmem:[%s3] sm:$0xff] %v1063
  %1070 = vst [vmem:[%s3 + $0x8] sm:$0xff] %v1066
  // Predicated region
  $region14: #{scoring_model_forward.4} parent=0 // pred_check
    _
  $region15: #{scoring_model_forward.4} parent=0 // pred_check_branch
    %1072 = sbr.rel (0) target = $region17
  $region16: #{scoring_model_forward.4} parent=0 // pred_region
    _
  $region17: #{scoring_model_forward.4} parent=0 // pred_fallthru
    _
  // Predicated region
  $region18: #{scoring_model_forward.4} parent=0 // pred_check
    _
  $region19: #{scoring_model_forward.4} parent=0 // pred_check_branch
    %1074 = sbr.rel (0) target = $region21
  $region20: #{scoring_model_forward.4} parent=0 // pred_region
    _
  $region21: #{scoring_model_forward.4} parent=0 // pred_fallthru
    _

// kernel: scoring_model_forward.6
$region0: #{scoring_model_forward.6}
  #allocation0 [shape = 'u32[]', space=smem, size = 0x4, offset = 0x4, fixed_abs, tag = 'smem constant byte address 0x4 - core index']
  #allocation1 [shape = 'u32[144,128]{1,0:T(1,128)}', space=vmem, size = 0x12000, scoped, tag = 'internal scratch']
  #allocation2 [shape = 'f32[16,134]{1,0:T(8,128)}', space=vmem, size = 0x4000, scoped, tag = 'scratch operand']
  %s0 = inlined_call_operand.vmem [shape: s32[1,128], index: 0, kind: input, shape index: {}]
  %s1 = inlined_call_operand.vmem [shape: f32[16,1], index: 1, kind: input, shape index: {}]
  %s2 = inlined_call_operand.vmem [shape: bf16[128,134], index: 2, kind: input, shape index: {}]
  %s3 = inlined_call_operand.vmem [shape: f32[16,134], index: 3, kind: output, shape index: {}]
  %s4 = sld [smem:[#allocation0]]
  $region30: #{scoring_model_forward.6} parent=0
    _
  %s6 = ssub.s32 1, %s4
  %s7 = scalar_select 0, %s6, %s4
  // Predicated region
  $region2: #{scoring_model_forward.6} parent=0 // pred_check
    _
  $region3: #{scoring_model_forward.6} parent=0 // pred_check_branch
    %9 = sbr.rel (0) target = $region5
  $region4: #{scoring_model_forward.6} parent=0 // pred_region
    _
  $region5: #{scoring_model_forward.6} parent=0 // pred_fallthru
    _
  // Predicated region
  $region6: #{scoring_model_forward.6} parent=0 // pred_check
    _
  $region7: #{scoring_model_forward.6} parent=0 // pred_check_branch
    %11 = sbr.rel (0) target = $region9
  $region8: #{scoring_model_forward.6} parent=0 // pred_region
    _
  $region9: #{scoring_model_forward.6} parent=0 // pred_fallthru
    _
  // Predicated region
  $region10: #{scoring_model_forward.6} parent=0 // pred_check
    _
  $region11: #{scoring_model_forward.6} parent=0 // pred_check_branch
    %13 = sbr.rel (0) target = $region13
  $region12: #{scoring_model_forward.6} parent=0 // pred_region
    _
  $region13: #{scoring_model_forward.6} parent=0 // pred_fallthru
    _
  %p15 = scmp.eq.s32.totalorder 0, 0
  // Predicated region
  $region14: #{scoring_model_forward.6} parent=0 // pred_check
    %p16 = pneg %p15
  $region15: #{scoring_model_forward.6} parent=0 // pred_check_branch
    %18 = sbr.rel (%p16) target = $region17
  $region16: #{scoring_model_forward.6} parent=0 // pred_region
    %19 = vst [vmem:[#allocation2] sm:$0xff] 0.0
    %vm20 = vcmask 48128
    %21 = vst.msk [vmem:[#allocation2 + $0x8] sm:$0xff] %vm20, 0.0
    %22 = vst [vmem:[#allocation2 + $0x10] sm:$0xff] 0.0
    %23 = vst.msk [vmem:[#allocation2 + $0x18] sm:$0xff] %vm20, 0.0
  $region17: #{scoring_model_forward.6} parent=0 // pred_fallthru
    _
  %v24 = vld [vmem:[%s0] sm:$0x1]
  %s25 = smul.u32 0, 16
  %v26 = vlaneseq
  %v27 = vshrl.u32 %v26, 7
  %v28 = vadd.s32 %v27, 8
  %v29 = vstv %s25
  %v30 = vadd.s32 %v29, %v27
  %v31 = vadd.s32 %v29, %v28
  %v32 = vlaneseq
  %v33 = vshrl.u32 %v32, 7
  %v34 = vsub.s32 0, %v33
  %v35 = vrot.slane %v24, %v34
  %vm36 = vcmp.eq.s32.totalorder %v30, %v35
  %vm37 = vcmp.eq.s32.totalorder %v31, %v35
  %v38 = vsel %vm36, 1, 0
  %v39 = vsel %vm37, 1, 0
  %v40 = vcvt.s32.f32 %v38
  %v41 = vcvt.s32.f32 %v39
  %v42 = vpack.c.bf16 %v41, %v40
  %v43 = vld [vmem:[#allocation2] sm:$0xff]
  %v44 = vld [vmem:[#allocation2 + $0x8] sm:$0xff]
  %v45 = vld [vmem:[#allocation2 + $0x10] sm:$0xff]
  %v46 = vld [vmem:[#allocation2 + $0x18] sm:$0xff]
  %v47 = vld [vmem:[%s2] sm:$0xff]
  %v48 = vld [vmem:[%s2 + $0x8] sm:$0xff]
  %v49 = vld [vmem:[%s2 + $0x10] sm:$0xff]
  %v50 = vld [vmem:[%s2 + $0x18] sm:$0xff]
  %v51 = vld [vmem:[%s2 + $0x20] sm:$0xff]
  %v52 = vld [vmem:[%s2 + $0x28] sm:$0xff]
  %v53 = vld [vmem:[%s2 + $0x30] sm:$0xff]
  %v54 = vld [vmem:[%s2 + $0x38] sm:$0xff]
  %v55 = vld [vmem:[%s2 + $0x40] sm:$0xff]
  %v56 = vld [vmem:[%s2 + $0x48] sm:$0xff]
  %v57 = vld [vmem:[%s2 + $0x50] sm:$0xff]
  %v58 = vld [vmem:[%s2 + $0x58] sm:$0xff]
  %v59 = vld [vmem:[%s2 + $0x60] sm:$0xff]
  %v60 = vld [vmem:[%s2 + $0x68] sm:$0xff]
  %v61 = vld [vmem:[%s2 + $0x70] sm:$0xff]
  %v62 = vld [vmem:[%s2 + $0x78] sm:$0xff]
  %v79 = vunpack.c.l.b16 %v47
  %v80 = vunpack.c.h.b16 %v47
  %v81 = vunpack.c.l.b16 %v48
  %v82 = vunpack.c.h.b16 %v48
  %v83 = vunpack.c.l.b16 %v49
  %v84 = vunpack.c.h.b16 %v49
  %v85 = vunpack.c.l.b16 %v50
  %v86 = vunpack.c.h.b16 %v50
  %v87 = vunpack.c.l.b16 %v51
  %v88 = vunpack.c.h.b16 %v51
  %v89 = vunpack.c.l.b16 %v52
  %v90 = vunpack.c.h.b16 %v52
  %v91 = vunpack.c.l.b16 %v53
  %v92 = vunpack.c.h.b16 %v53
  %v93 = vunpack.c.l.b16 %v54
  %v94 = vunpack.c.h.b16 %v54
  %v95 = vunpack.c.l.b16 %v55
  %v96 = vunpack.c.h.b16 %v55
  %v97 = vunpack.c.l.b16 %v56
  %v98 = vunpack.c.h.b16 %v56
  %v99 = vunpack.c.l.b16 %v57
  %v100 = vunpack.c.h.b16 %v57
  %v101 = vunpack.c.l.b16 %v58
  %v102 = vunpack.c.h.b16 %v58
  %v103 = vunpack.c.l.b16 %v59
  %v104 = vunpack.c.h.b16 %v59
  %v105 = vunpack.c.l.b16 %v60
  %v106 = vunpack.c.h.b16 %v60
  %v107 = vunpack.c.l.b16 %v61
  %v108 = vunpack.c.h.b16 %v61
  %v109 = vunpack.c.l.b16 %v62
  %v110 = vunpack.c.h.b16 %v62
  %v111 = vpack.c.b16 %v81, %v79
  %v112 = vpack.c.b16 %v82, %v80
  %v113 = vpack.c.b16 %v85, %v83
  %v114 = vpack.c.b16 %v86, %v84
  %v115 = vpack.c.b16 %v89, %v87
  %v116 = vpack.c.b16 %v90, %v88
  %v117 = vpack.c.b16 %v93, %v91
  %v118 = vpack.c.b16 %v94, %v92
  %v119 = vpack.c.b16 %v97, %v95
  %v120 = vpack.c.b16 %v98, %v96
  %v121 = vpack.c.b16 %v101, %v99
  %v122 = vpack.c.b16 %v102, %v100
  %v123 = vpack.c.b16 %v105, %v103
  %v124 = vpack.c.b16 %v106, %v104
  %v125 = vpack.c.b16 %v109, %v107
  %v126 = vpack.c.b16 %v110, %v108
  %143 = vmatprep.subr.bf16.mxu0 %v112
  %144 = vmatpush1.bf16.msra.mxu0 %v111
  %145 = vmatprep.subr.bf16.mxu0 %v114
  %146 = vmatpush1.bf16.msra.mxu0 %v113
  %147 = vmatprep.subr.bf16.mxu0 %v116
  %148 = vmatpush1.bf16.msra.mxu0 %v115
  %149 = vmatprep.subr.bf16.mxu0 %v118
  %150 = vmatpush1.bf16.msra.mxu0 %v117
  %151 = vmatprep.subr.bf16.mxu0 %v120
  %152 = vmatpush1.bf16.msra.mxu0 %v119
  %153 = vmatprep.subr.bf16.mxu0 %v122
  %154 = vmatpush1.bf16.msra.mxu0 %v121
  %155 = vmatprep.subr.bf16.mxu0 %v124
  %156 = vmatpush1.bf16.msra.mxu0 %v123
  %157 = vmatprep.subr.bf16.mxu0 %v126
  %158 = vmatpush1.bf16.msra.mxu0 %v125
  %159 = vmatprep.subr.bf16.mxu0 0
  %160 = vmatpush1.bf16.msra.mxu0 0
  %161 = vmatprep.subr.bf16.mxu0 0
  %162 = vmatpush1.bf16.msra.mxu0 0
  %163 = vmatprep.subr.bf16.mxu0 0
  %164 = vmatpush1.bf16.msra.mxu0 0
  %165 = vmatprep.subr.bf16.mxu0 0
  %166 = vmatpush1.bf16.msra.mxu0 0
  %167 = vmatprep.subr.bf16.mxu0 0
  %168 = vmatpush1.bf16.msra.mxu0 0
  %169 = vmatprep.subr.bf16.mxu0 0
  %170 = vmatpush1.bf16.msra.mxu0 0
  %171 = vmatprep.subr.bf16.mxu0 0
  %172 = vmatpush1.bf16.msra.mxu0 0
  %173 = vmatprep.subr.bf16.mxu0 0
  %174 = vmatpush1.bf16.msra.mxu0 0
  %175 = vmatprep.mubr.bf16.mxu0 0
  %176 = vmatmul.mubr.bf16.gmra.mrb[0].mxu0 %v42
  %v177 = vpop.f32.mrb[0].mxu0
  %v178 = vadd.f32 0.0, %v177
  %v179 = vpop.f32.mrb[0].mxu0
  %v180 = vadd.f32 0.0, %v179
  %v181 = vpop.f32.mrb[0].mxu0
  %v182 = vadd.f32 0.0, %v181
  %v183 = vpop.f32.mrb[0].mxu0
  %v184 = vadd.f32 0.0, %v183
  %185 = vdwg.mxu0
  %v186 = vadd.f32 %v43, %v178
  %v187 = vadd.f32 %v44, %v180
  %v188 = vadd.f32 %v45, %v182
  %v189 = vadd.f32 %v46, %v184
  %190 = vst [vmem:[#allocation2] sm:$0xff] %v186
  %vm191 = vcmask 48128
  %192 = vst.msk [vmem:[#allocation2 + $0x8] sm:$0xff] %vm191, %v187
  %193 = vst [vmem:[#allocation2 + $0x10] sm:$0xff] %v188
  %194 = vst.msk [vmem:[#allocation2 + $0x18] sm:$0xff] %vm191, %v189
  // Predicated region
  $region18: #{scoring_model_forward.6} parent=0 // pred_check
    %p195 = pneg %p15
  $region19: #{scoring_model_forward.6} parent=0 // pred_check_branch
    %197 = sbr.rel (%p195) target = $region21
  $region20: #{scoring_model_forward.6} parent=0 // pred_region
    %v198 = vld [vmem:[#allocation2] sm:$0xff]
    %v199 = vld [vmem:[#allocation2 + $0x8] sm:$0xff]
    %v200 = vld [vmem:[#allocation2 + $0x10] sm:$0xff]
    %v201 = vld [vmem:[#allocation2 + $0x18] sm:$0xff]
    %v202 = vld [vmem:[%s1] sm:$0xff]
    %v203 = vld [vmem:[%s1 + $0x8] sm:$0xff]
    %205 = vset.pattern.permute.xlu0 0
    %206 = vperm.xlu0 %205, %v202
    %v207 = vpop.permute.xlu0 %206
    %210 = vset.pattern.permute.xlu0 0
    %211 = vperm.xlu0 %210, %v203
    %v212 = vpop.permute.xlu0 %211
    %v214 = vmul.f32 %v198, %v207
    %v215 = vmul.f32 %v199, %v207
    %v216 = vmul.f32 %v200, %v212
    %v217 = vmul.f32 %v201, %v212
    %218 = vst [vmem:[%s3] sm:$0xff] %v214
    %219 = vst.msk [vmem:[%s3 + $0x8] sm:$0xff] %vm191, %v215
    %220 = vst [vmem:[%s3 + $0x10] sm:$0xff] %v216
    %221 = vst.msk [vmem:[%s3 + $0x18] sm:$0xff] %vm191, %v217
  $region21: #{scoring_model_forward.6} parent=0 // pred_fallthru
    _
  // Predicated region
  $region22: #{scoring_model_forward.6} parent=0 // pred_check
    _
  $region23: #{scoring_model_forward.6} parent=0 // pred_check_branch
    %223 = sbr.rel (0) target = $region25
  $region24: #{scoring_model_forward.6} parent=0 // pred_region
    _
  $region25: #{scoring_model_forward.6} parent=0 // pred_fallthru
    _
  // Predicated region
  $region26: #{scoring_model_forward.6} parent=0 // pred_check
    _
  $region27: #{scoring_model_forward.6} parent=0 // pred_check_branch
    %225 = sbr.rel (0) target = $region29
  $region28: #{scoring_model_forward.6} parent=0 // pred_region
    _
  $region29: #{scoring_model_forward.6} parent=0 // pred_fallthru
    _

// kernel: scoring_model_forward.7
$region0: #{scoring_model_forward.7}
  #allocation0 [shape = 'u32[]', space=smem, size = 0x4, offset = 0x4, fixed_abs, tag = 'smem constant byte address 0x4 - core index']
  #allocation1 [shape = 'u32[144,128]{1,0:T(1,128)}', space=vmem, size = 0x12000, scoped, tag = 'internal scratch']
  #allocation2 [shape = 'f32[1,1]{1,0:T(1,128)S(1)}', space=vmem, size = 0x200, scoped, tag = 'scoped memory for scoring_model_forward.7']
  %s0 = inlined_call_operand.vmem [shape: f32[16,128], index: 0, kind: input, shape index: {}]
  %s1 = inlined_call_operand.vmem [shape: f32[16,134], index: 1, kind: input, shape index: {}]
  %s2 = inlined_call_operand.vmem [shape: f32[16,6], index: 2, kind: input, shape index: {}]
  %s3 = inlined_call_operand.vmem [shape: f32[1,128], index: 3, kind: input, shape index: {}]
  %s4 = inlined_call_operand.vmem [shape: f32[1,128], index: 4, kind: input, shape index: {}]
  %s5 = inlined_call_operand.vmem [shape: f32[6,12], index: 5, kind: input, shape index: {}]
  %s6 = inlined_call_operand.vmem [shape: f32[12,12], index: 6, kind: input, shape index: {}]
  %s7 = inlined_call_operand.vmem [shape: bf16[128,512], index: 7, kind: input, shape index: {}]
  %s8 = inlined_call_operand.vmem [shape: f32[4,512], index: 8, kind: input, shape index: {}]
  %s9 = inlined_call_operand.vmem [shape: f32[1,512], index: 9, kind: input, shape index: {}]
  %s10 = inlined_call_operand.vmem [shape: f32[12,12], index: 10, kind: input, shape index: {}]
  %s11 = inlined_call_operand.vmem [shape: bf16[512,128], index: 11, kind: input, shape index: {}]
  %s12 = inlined_call_operand.vmem [shape: f32[4,128], index: 12, kind: input, shape index: {}]
  %s13 = inlined_call_operand.vmem [shape: f32[1,128], index: 13, kind: input, shape index: {}]
  %s14 = inlined_call_operand.vmem [shape: f32[1,128], index: 14, kind: input, shape index: {}]
  %s15 = inlined_call_operand.vmem [shape: f32[1,128], index: 15, kind: input, shape index: {}]
  %s16 = inlined_call_operand.vmem [shape: f32[128,1], index: 16, kind: input, shape index: {}]
  %s17 = inlined_call_operand.<no memory space> [shape: f32[1,1], index: 17, kind: input, shape index: {}]
  %s18 = inlined_call_operand.vmem [shape: f32[16,1], index: 18, kind: output, shape index: {}]
  %s19 = sld [smem:[#allocation0]]
  $region82: #{scoring_model_forward.7} parent=0
    _
  %s21 = ssub.s32 1, %s19
  %s22 = scalar_select 0, %s21, %s19
  %v23 = vstv %s17
  %24 = vst [vmem:[#allocation2] sm:$0x1] %v23
  // Predicated region
  $region2: #{scoring_model_forward.7} parent=0 // pred_check
    _
  $region3: #{scoring_model_forward.7} parent=0 // pred_check_branch
    %26 = sbr.rel (0) target = $region5
  $region4: #{scoring_model_forward.7} parent=0 // pred_region
    _
  $region5: #{scoring_model_forward.7} parent=0 // pred_fallthru
    _
  // Predicated region
  $region6: #{scoring_model_forward.7} parent=0 // pred_check
    _
  $region7: #{scoring_model_forward.7} parent=0 // pred_check_branch
    %28 = sbr.rel (0) target = $region9
  $region8: #{scoring_model_forward.7} parent=0 // pred_region
    _
  $region9: #{scoring_model_forward.7} parent=0 // pred_fallthru
    _
  // Predicated region
  $region10: #{scoring_model_forward.7} parent=0 // pred_check
    _
  $region11: #{scoring_model_forward.7} parent=0 // pred_check_branch
    %30 = sbr.rel (0) target = $region13
  $region12: #{scoring_model_forward.7} parent=0 // pred_region
    _
  $region13: #{scoring_model_forward.7} parent=0 // pred_fallthru
    _
  // Predicated region
  $region14: #{scoring_model_forward.7} parent=0 // pred_check
    _
  $region15: #{scoring_model_forward.7} parent=0 // pred_check_branch
    %32 = sbr.rel (0) target = $region17
  $region16: #{scoring_model_forward.7} parent=0 // pred_region
    _
  $region17: #{scoring_model_forward.7} parent=0 // pred_fallthru
    _
  // Predicated region
  $region18: #{scoring_model_forward.7} parent=0 // pred_check
    _
  $region19: #{scoring_model_forward.7} parent=0 // pred_check_branch
    %34 = sbr.rel (0) target = $region21
  $region20: #{scoring_model_forward.7} parent=0 // pred_region
    _
  $region21: #{scoring_model_forward.7} parent=0 // pred_fallthru
    _
  // Predicated region
  $region22: #{scoring_model_forward.7} parent=0 // pred_check
    _
  $region23: #{scoring_model_forward.7} parent=0 // pred_check_branch
    %36 = sbr.rel (0) target = $region25
  $region24: #{scoring_model_forward.7} parent=0 // pred_region
    _
  $region25: #{scoring_model_forward.7} parent=0 // pred_fallthru
    _
  // Predicated region
  $region26: #{scoring_model_forward.7} parent=0 // pred_check
    _
  $region27: #{scoring_model_forward.7} parent=0 // pred_check_branch
    %38 = sbr.rel (0) target = $region29
  $region28: #{scoring_model_forward.7} parent=0 // pred_region
    _
  $region29: #{scoring_model_forward.7} parent=0 // pred_fallthru
    _
  // Predicated region
  $region30: #{scoring_model_forward.7} parent=0 // pred_check
    _
  $region31: #{scoring_model_forward.7} parent=0 // pred_check_branch
    %40 = sbr.rel (0) target = $region33
  $region32: #{scoring_model_forward.7} parent=0 // pred_region
    _
  $region33: #{scoring_model_forward.7} parent=0 // pred_fallthru
    _
  // Predicated region
  $region34: #{scoring_model_forward.7} parent=0 // pred_check
    _
  $region35: #{scoring_model_forward.7} parent=0 // pred_check_branch
    %42 = sbr.rel (0) target = $region37
  $region36: #{scoring_model_forward.7} parent=0 // pred_region
    _
  $region37: #{scoring_model_forward.7} parent=0 // pred_fallthru
    _
  // Predicated region
  $region38: #{scoring_model_forward.7} parent=0 // pred_check
    _
  $region39: #{scoring_model_forward.7} parent=0 // pred_check_branch
    %44 = sbr.rel (0) target = $region41
  $region40: #{scoring_model_forward.7} parent=0 // pred_region
    _
  $region41: #{scoring_model_forward.7} parent=0 // pred_fallthru
    _
  // Predicated region
  $region42: #{scoring_model_forward.7} parent=0 // pred_check
    _
  $region43: #{scoring_model_forward.7} parent=0 // pred_check_branch
    %46 = sbr.rel (0) target = $region45
  $region44: #{scoring_model_forward.7} parent=0 // pred_region
    _
  $region45: #{scoring_model_forward.7} parent=0 // pred_fallthru
    _
  // Predicated region
  $region46: #{scoring_model_forward.7} parent=0 // pred_check
    _
  $region47: #{scoring_model_forward.7} parent=0 // pred_check_branch
    %48 = sbr.rel (0) target = $region49
  $region48: #{scoring_model_forward.7} parent=0 // pred_region
    _
  $region49: #{scoring_model_forward.7} parent=0 // pred_fallthru
    _
  // Predicated region
  $region50: #{scoring_model_forward.7} parent=0 // pred_check
    _
  $region51: #{scoring_model_forward.7} parent=0 // pred_check_branch
    %50 = sbr.rel (0) target = $region53
  $region52: #{scoring_model_forward.7} parent=0 // pred_region
    _
  $region53: #{scoring_model_forward.7} parent=0 // pred_fallthru
    _
  // Predicated region
  $region54: #{scoring_model_forward.7} parent=0 // pred_check
    _
  $region55: #{scoring_model_forward.7} parent=0 // pred_check_branch
    %52 = sbr.rel (0) target = $region57
  $region56: #{scoring_model_forward.7} parent=0 // pred_region
    _
  $region57: #{scoring_model_forward.7} parent=0 // pred_fallthru
    _
  // Predicated region
  $region58: #{scoring_model_forward.7} parent=0 // pred_check
    _
  $region59: #{scoring_model_forward.7} parent=0 // pred_check_branch
    %54 = sbr.rel (0) target = $region61
  $region60: #{scoring_model_forward.7} parent=0 // pred_region
    _
  $region61: #{scoring_model_forward.7} parent=0 // pred_fallthru
    _
  // Predicated region
  $region62: #{scoring_model_forward.7} parent=0 // pred_check
    _
  $region63: #{scoring_model_forward.7} parent=0 // pred_check_branch
    %56 = sbr.rel (0) target = $region65
  $region64: #{scoring_model_forward.7} parent=0 // pred_region
    _
  $region65: #{scoring_model_forward.7} parent=0 // pred_fallthru
    _
  // Predicated region
  $region66: #{scoring_model_forward.7} parent=0 // pred_check
    _
  $region67: #{scoring_model_forward.7} parent=0 // pred_check_branch
    %58 = sbr.rel (0) target = $region69
  $region68: #{scoring_model_forward.7} parent=0 // pred_region
    _
  $region69: #{scoring_model_forward.7} parent=0 // pred_fallthru
    _
  // Predicated region
  $region70: #{scoring_model_forward.7} parent=0 // pred_check
    _
  $region71: #{scoring_model_forward.7} parent=0 // pred_check_branch
    %60 = sbr.rel (0) target = $region73
  $region72: #{scoring_model_forward.7} parent=0 // pred_region
    _
  $region73: #{scoring_model_forward.7} parent=0 // pred_fallthru
    _
  %v62 = vld [vmem:[%s1] sm:$0xff]
  %v63 = vld [vmem:[%s1 + $0x8] sm:$0xff]
  %v64 = vld [vmem:[%s1 + $0x10] sm:$0xff]
  %v65 = vld [vmem:[%s1 + $0x18] sm:$0xff]
  %v66 = vld [vmem:[%s0] sm:$0xff]
  %v67 = vld [vmem:[%s0 + $0x8] sm:$0xff]
  %v68 = vadd.f32 %v66, %v62
  %v69 = vadd.f32 %v67, %v64
  %v70 = vld [vmem:[%s3] sm:$0x1]
  %v71 = vld [vmem:[%s4] sm:$0x1]
  %72 = vadd.xlane.f32.xlu0 %v68
  %v73 = vpop.xlane.xlu0 %72
  %74 = vadd.xlane.f32.xlu0 %v69
  %v75 = vpop.xlane.xlu0 %74
  %v76 = vrcp.pop 128.0
  %v77 = vmul.f32 %v73, %v76
  %v78 = vmul.f32 %v75, %v76
  %v79 = vsub.f32 %v68, %v77
  %v80 = vsub.f32 %v69, %v78
  %v81 = vmul.f32 %v79, %v79
  %v82 = vmul.f32 %v80, %v80
  %83 = vadd.xlane.f32.xlu0 %v81
  %v84 = vpop.xlane.xlu0 %83
  %85 = vadd.xlane.f32.xlu0 %v82
  %v86 = vpop.xlane.xlu0 %85
  %v87 = vmul.f32 %v84, %v76
  %v88 = vmul.f32 %v86, %v76
  %v89 = vadd.f32 %v87, 1e-05
  %v90 = vadd.f32 %v88, 1e-05
  %v91 = vrsqrt.pop %v89
  %v92 = vrsqrt.pop %v90
  %v93 = vmul.f32 %v79, %v91
  %v94 = vmul.f32 %v80, %v92
  %v96 = vlaneseq
  %v97 = vshrl.u32 %v96, 7
  %v98 = vsub.s32 0, %v97
  %v99 = vrot.slane %v70, %v98
  %v101 = vmul.f32 %v93, %v99
  %v102 = vmul.f32 %v94, %v99
  %v104 = vlaneseq
  %v105 = vshrl.u32 %v104, 7
  %v106 = vsub.s32 0, %v105
  %v107 = vrot.slane %v71, %v106
  %v109 = vadd.f32 %v101, %v107
  %v110 = vadd.f32 %v102, %v107
  %v111 = vld [vmem:[%s2] sm:$0xff]
  %v112 = vld [vmem:[%s2 + $0x8] sm:$0xff]
  %v113 = vadd.f32 %v111, %v63
  %v114 = vadd.f32 %v112, %v65
  %v115 = vmul.f32 %v113, %v113
  %v116 = vmul.f32 %v114, %v114
  %119 = vrot.lane.b32.xlu0 %v115, 126
  %v120 = vpop.permute.xlu0 %119
  %121 = vrot.lane.b32.xlu0 %v116, 126
  %v122 = vpop.permute.xlu0 %121
  %v125 = vadd.f32 %v115, %v120
  %v126 = vadd.f32 %v116, %v122
  %127 = vrot.lane.b32.xlu0 %v115, 124
  %v128 = vpop.permute.xlu0 %127
  %129 = vrot.lane.b32.xlu0 %v116, 124
  %v130 = vpop.permute.xlu0 %129
  %v133 = vadd.f32 %v125, %v128
  %v134 = vadd.f32 %v126, %v130
  %v135 = vmax.f32 %v133, 1e-08
  %v136 = vmax.f32 %v134, 1e-08
  %vm137 = vcmask 15360
  %v138 = vsel %vm137, %v135, 0.0
  %139 = vadd.xlane.f32.xlu0 %v138
  %v140 = vpop.xlane.xlu0 %139
  %v141 = vsel %vm137, %v136, 0.0
  %142 = vadd.xlane.f32.xlu0 %v141
  %v143 = vpop.xlane.xlu0 %142
  %v144 = vrcp.pop 2.0
  %v145 = vmul.f32 %v140, %v144
  %v146 = vmul.f32 %v143, %v144
  %v147 = vrsqrt.pop %v145
  %v148 = vrsqrt.pop %v146
  %v149 = vmul.f32 %v113, %v147
  %v150 = vmul.f32 %v114, %v148
  %v151 = vld [vmem:[%s5] sm:$0x3f]
  %v152 = vld [vmem:[%s7] sm:$0xff]
  %v153 = vld [vmem:[%s7 + $0x8] sm:$0xff]
  %v154 = vld [vmem:[%s7 + $0x10] sm:$0xff]
  %v155 = vld [vmem:[%s7 + $0x18] sm:$0xff]
  %v156 = vld [vmem:[%s7 + $0x20] sm:$0xff]
  %v157 = vld [vmem:[%s7 + $0x28] sm:$0xff]
  %v158 = vld [vmem:[%s7 + $0x30] sm:$0xff]
  %v159 = vld [vmem:[%s7 + $0x38] sm:$0xff]
  %v160 = vld [vmem:[%s7 + $0x40] sm:$0xff]
  %v161 = vld [vmem:[%s7 + $0x48] sm:$0xff]
  %v162 = vld [vmem:[%s7 + $0x50] sm:$0xff]
  %v163 = vld [vmem:[%s7 + $0x58] sm:$0xff]
  %v164 = vld [vmem:[%s7 + $0x60] sm:$0xff]
  %v165 = vld [vmem:[%s7 + $0x68] sm:$0xff]
  %v166 = vld [vmem:[%s7 + $0x70] sm:$0xff]
  %v167 = vld [vmem:[%s7 + $0x78] sm:$0xff]
  %v168 = vld [vmem:[%s7 + $0x80] sm:$0xff]
  %v169 = vld [vmem:[%s7 + $0x88] sm:$0xff]
  %v170 = vld [vmem:[%s7 + $0x90] sm:$0xff]
  %v171 = vld [vmem:[%s7 + $0x98] sm:$0xff]
  %v172 = vld [vmem:[%s7 + $0xa0] sm:$0xff]
  %v173 = vld [vmem:[%s7 + $0xa8] sm:$0xff]
  %v174 = vld [vmem:[%s7 + $0xb0] sm:$0xff]
  %v175 = vld [vmem:[%s7 + $0xb8] sm:$0xff]
  %v176 = vld [vmem:[%s7 + $0xc0] sm:$0xff]
  %v177 = vld [vmem:[%s7 + $0xc8] sm:$0xff]
  %v178 = vld [vmem:[%s7 + $0xd0] sm:$0xff]
  %v179 = vld [vmem:[%s7 + $0xd8] sm:$0xff]
  %v180 = vld [vmem:[%s7 + $0xe0] sm:$0xff]
  %v181 = vld [vmem:[%s7 + $0xe8] sm:$0xff]
  %v182 = vld [vmem:[%s7 + $0xf0] sm:$0xff]
  %v183 = vld [vmem:[%s7 + $0xf8] sm:$0xff]
  %v184 = vld [vmem:[%s8] sm:$0xff]
  %v185 = vld [vmem:[%s8 + $0x8] sm:$0xff]
  %v186 = vld [vmem:[%s9] sm:$0xf]
  %v187 = vld [vmem:[%s6] sm:$0xff]
  %v188 = vld [vmem:[%s6 + $0x8] sm:$0xf]
  %vm189 = vcmask 48128
  %v191 = vsel %vm189, %v149, 0
  %v194 = vsel %vm189, %v150, 0
  %vm196 = vcmask 1045504
  %v198 = vsel %vm196, %v151, 0
  %200 = vmatprep.subr.mxu0 0.0
  %201 = vmatpush1.msra.mxu0 %v198
  %202 = vmatprep.subr.mxu0 0.0
  %203 = vmatpush1.msra.mxu0 0.0
  %204 = vmatprep.subr.mxu0 0.0
  %205 = vmatpush1.msra.mxu0 0.0
  %206 = vmatprep.subr.mxu0 0.0
  %207 = vmatpush1.msra.mxu0 0.0
  %208 = vmatprep.subr.mxu0 0.0
  %209 = vmatpush1.msra.mxu0 0.0
  %210 = vmatprep.subr.mxu0 0.0
  %211 = vmatpush1.msra.mxu0 0.0
  %212 = vmatprep.subr.mxu0 0.0
  %213 = vmatpush1.msra.mxu0 0.0
  %214 = vmatprep.subr.mxu0 0.0
  %215 = vmatpush1.msra.mxu0 0.0
  %216 = vmatprep.subr.mxu0 0.0
  %217 = vmatpush1.msra.mxu0 0.0
  %218 = vmatprep.subr.mxu0 0.0
  %219 = vmatpush1.msra.mxu0 0.0
  %220 = vmatprep.subr.mxu0 0.0
  %221 = vmatpush1.msra.mxu0 0.0
  %222 = vmatprep.subr.mxu0 0.0
  %223 = vmatpush1.msra.mxu0 0.0
  %224 = vmatprep.subr.mxu0 0.0
  %225 = vmatpush1.msra.mxu0 0.0
  %226 = vmatprep.subr.mxu0 0.0
  %227 = vmatpush1.msra.mxu0 0.0
  %228 = vmatprep.subr.mxu0 0.0
  %229 = vmatpush1.msra.mxu0 0.0
  %230 = vmatprep.subr.mxu0 0.0
  %231 = vmatpush1.msra.mxu0 0.0
  %232 = vmatprep.subr.mxu0 0.0
  %233 = vmatpush1.msra.mxu0 0.0
  %234 = vmatprep.subr.mxu0 0.0
  %235 = vmatpush1.msra.mxu0 0.0
  %236 = vmatprep.subr.mxu0 0.0
  %237 = vmatpush1.msra.mxu0 0.0
  %238 = vmatprep.subr.mxu0 0.0
  %239 = vmatpush1.msra.mxu0 0.0
  %240 = vmatprep.subr.mxu0 0.0
  %241 = vmatpush1.msra.mxu0 0.0
  %242 = vmatprep.subr.mxu0 0.0
  %243 = vmatpush1.msra.mxu0 0.0
  %244 = vmatprep.subr.mxu0 0.0
  %245 = vmatpush1.msra.mxu0 0.0
  %246 = vmatprep.subr.mxu0 0.0
  %247 = vmatpush1.msra.mxu0 0.0
  %248 = vmatprep.subr.mxu0 0.0
  %249 = vmatpush1.msra.mxu0 0.0
  %250 = vmatprep.subr.mxu0 0.0
  %251 = vmatpush1.msra.mxu0 0.0
  %252 = vmatprep.subr.mxu0 0.0
  %253 = vmatpush1.msra.mxu0 0.0
  %254 = vmatprep.subr.mxu0 0.0
  %255 = vmatpush1.msra.mxu0 0.0
  %256 = vmatprep.subr.mxu0 0.0
  %257 = vmatpush1.msra.mxu0 0.0
  %258 = vmatprep.subr.mxu0 0.0
  %259 = vmatpush1.msra.mxu0 0.0
  %260 = vmatprep.subr.mxu0 0.0
  %261 = vmatpush1.msra.mxu0 0.0
  %262 = vmatprep.subr.mxu0 0.0
  %263 = vmatpush1.msra.mxu0 0.0
  %264 = vmatprep.mubr.f32.mxu0 0.0
  %265 = vmatmul.mubr.f32.gmra.mrb[0].mxu0 %v191
  %v266 = vpop.f32.mrb[0].mxu0
  %v267 = vadd.f32 0.0, %v266
  %v268 = vpop.f32.mrb[0].mxu0
  %269 = vmatprep.mubr.f32.mxu0 0.0
  %270 = vmatmul.mubr.f32.gmra.mrb[0].mxu0 %v194
  %v271 = vpop.f32.mrb[0].mxu0
  %v272 = vadd.f32 0.0, %v271
  %v273 = vpop.f32.mrb[0].mxu0
  %274 = vdwg.mxu0
  %v275 = vmul.f32 %v267, %v267
  %v276 = vmul.f32 %v272, %v272
  %279 = vrot.lane.b32.xlu0 %v275, 124
  %v280 = vpop.permute.xlu0 %279
  %281 = vrot.lane.b32.xlu0 %v276, 124
  %v282 = vpop.permute.xlu0 %281
  %v285 = vadd.f32 %v275, %v280
  %v286 = vadd.f32 %v276, %v282
  %287 = vrot.lane.b32.xlu0 %v275, 120
  %v288 = vpop.permute.xlu0 %287
  %289 = vrot.lane.b32.xlu0 %v276, 120
  %v290 = vpop.permute.xlu0 %289
  %v293 = vadd.f32 %v285, %v288
  %v294 = vadd.f32 %v286, %v290
  %v295 = vmax.f32 %v293, 1e-08
  %v296 = vmax.f32 %v294, 1e-08
  %v297 = vrsqrt.pop %v295
  %v298 = vmul.f32 %v295, %v297
  %vm299 = vcmp.eq.f32.partialorder %v295, inf
  %v300 = vsel %vm299, %v295, %v298
  %vm301 = vcmp.eq.f32.partialorder %v295, 0.0
  %v302 = vand.u32 %v295, 2147483648
  %v303 = vsel %vm301, %v302, %v300
  %v304 = vrsqrt.pop %v296
  %v305 = vmul.f32 %v296, %v304
  %vm306 = vcmp.eq.f32.partialorder %v296, inf
  %v307 = vsel %vm306, %v296, %v305
  %vm308 = vcmp.eq.f32.partialorder %v296, 0.0
  %v309 = vand.u32 %v296, 2147483648
  %v310 = vsel %vm308, %v309, %v307
  %v311 = vpack.c.bf16 %v110, %v109
  %v313 = vlaneseq
  %v314 = vshrl.u32 %v313, 7
  %v315 = vsub.s32 0, %v314
  %v316 = vrot.slane %v186, %v315
  %v317 = vlaneseq
  %v318 = vshrl.u32 %v317, 7
  %v319 = vsub.s32 1, %v318
  %v320 = vrot.slane %v186, %v319
  %v321 = vlaneseq
  %v322 = vshrl.u32 %v321, 7
  %v323 = vsub.s32 2, %v322
  %v324 = vrot.slane %v186, %v323
  %v325 = vlaneseq
  %v326 = vshrl.u32 %v325, 7
  %v327 = vsub.s32 3, %v326
  %v328 = vrot.slane %v186, %v327
  %v365 = vunpack.c.l.b16 %v152
  %v366 = vunpack.c.h.b16 %v152
  %v367 = vunpack.c.l.b16 %v153
  %v368 = vunpack.c.h.b16 %v153
  %v369 = vunpack.c.l.b16 %v154
  %v370 = vunpack.c.h.b16 %v154
  %v371 = vunpack.c.l.b16 %v155
  %v372 = vunpack.c.h.b16 %v155
  %v373 = vunpack.c.l.b16 %v156
  %v374 = vunpack.c.h.b16 %v156
  %v375 = vunpack.c.l.b16 %v157
  %v376 = vunpack.c.h.b16 %v157
  %v377 = vunpack.c.l.b16 %v158
  %v378 = vunpack.c.h.b16 %v158
  %v379 = vunpack.c.l.b16 %v159
  %v380 = vunpack.c.h.b16 %v159
  %v381 = vunpack.c.l.b16 %v160
  %v382 = vunpack.c.h.b16 %v160
  %v383 = vunpack.c.l.b16 %v161
  %v384 = vunpack.c.h.b16 %v161
  %v385 = vunpack.c.l.b16 %v162
  %v386 = vunpack.c.h.b16 %v162
  %v387 = vunpack.c.l.b16 %v163
  %v388 = vunpack.c.h.b16 %v163
  %v389 = vunpack.c.l.b16 %v164
  %v390 = vunpack.c.h.b16 %v164
  %v391 = vunpack.c.l.b16 %v165
  %v392 = vunpack.c.h.b16 %v165
  %v393 = vunpack.c.l.b16 %v166
  %v394 = vunpack.c.h.b16 %v166
  %v395 = vunpack.c.l.b16 %v167
  %v396 = vunpack.c.h.b16 %v167
  %v397 = vunpack.c.l.b16 %v168
  %v398 = vunpack.c.h.b16 %v168
  %v399 = vunpack.c.l.b16 %v169
  %v400 = vunpack.c.h.b16 %v169
  %v401 = vunpack.c.l.b16 %v170
  %v402 = vunpack.c.h.b16 %v170
  %v403 = vunpack.c.l.b16 %v171
  %v404 = vunpack.c.h.b16 %v171
  %v405 = vunpack.c.l.b16 %v172
  %v406 = vunpack.c.h.b16 %v172
  %v407 = vunpack.c.l.b16 %v173
  %v408 = vunpack.c.h.b16 %v173
  %v409 = vunpack.c.l.b16 %v174
  %v410 = vunpack.c.h.b16 %v174
  %v411 = vunpack.c.l.b16 %v175
  %v412 = vunpack.c.h.b16 %v175
  %v413 = vunpack.c.l.b16 %v176
  %v414 = vunpack.c.h.b16 %v176
  %v415 = vunpack.c.l.b16 %v177
  %v416 = vunpack.c.h.b16 %v177
  %v417 = vunpack.c.l.b16 %v178
  %v418 = vunpack.c.h.b16 %v178
  %v419 = vunpack.c.l.b16 %v179
  %v420 = vunpack.c.h.b16 %v179
  %v421 = vunpack.c.l.b16 %v180
  %v422 = vunpack.c.h.b16 %v180
  %v423 = vunpack.c.l.b16 %v181
  %v424 = vunpack.c.h.b16 %v181
  %v425 = vunpack.c.l.b16 %v182
  %v426 = vunpack.c.h.b16 %v182
  %v427 = vunpack.c.l.b16 %v183
  %v428 = vunpack.c.h.b16 %v183
  %v429 = vpack.c.b16 %v369, %v365
  %v430 = vpack.c.b16 %v370, %v366
  %v431 = vpack.c.b16 %v371, %v367
  %v432 = vpack.c.b16 %v372, %v368
  %v433 = vpack.c.b16 %v377, %v373
  %v434 = vpack.c.b16 %v378, %v374
  %v435 = vpack.c.b16 %v379, %v375
  %v436 = vpack.c.b16 %v380, %v376
  %v437 = vpack.c.b16 %v385, %v381
  %v438 = vpack.c.b16 %v386, %v382
  %v439 = vpack.c.b16 %v387, %v383
  %v440 = vpack.c.b16 %v388, %v384
  %v441 = vpack.c.b16 %v393, %v389
  %v442 = vpack.c.b16 %v394, %v390
  %v443 = vpack.c.b16 %v395, %v391
  %v444 = vpack.c.b16 %v396, %v392
  %v445 = vpack.c.b16 %v401, %v397
  %v446 = vpack.c.b16 %v402, %v398
  %v447 = vpack.c.b16 %v403, %v399
  %v448 = vpack.c.b16 %v404, %v400
  %v449 = vpack.c.b16 %v409, %v405
  %v450 = vpack.c.b16 %v410, %v406
  %v451 = vpack.c.b16 %v411, %v407
  %v452 = vpack.c.b16 %v412, %v408
  %v453 = vpack.c.b16 %v417, %v413
  %v454 = vpack.c.b16 %v418, %v414
  %v455 = vpack.c.b16 %v419, %v415
  %v456 = vpack.c.b16 %v420, %v416
  %v457 = vpack.c.b16 %v425, %v421
  %v458 = vpack.c.b16 %v426, %v422
  %v459 = vpack.c.b16 %v427, %v423
  %v460 = vpack.c.b16 %v428, %v424
  %493 = vmatprep.subr.bf16.mxu0 %v430
  %494 = vmatpush1.bf16.msra.mxu0 %v429
  %495 = vmatprep.subr.bf16.mxu0 %v434
  %496 = vmatpush1.bf16.msra.mxu0 %v433
  %497 = vmatprep.subr.bf16.mxu0 %v438
  %498 = vmatpush1.bf16.msra.mxu0 %v437
  %499 = vmatprep.subr.bf16.mxu0 %v442
  %500 = vmatpush1.bf16.msra.mxu0 %v441
  %501 = vmatprep.subr.bf16.mxu0 %v446
  %502 = vmatpush1.bf16.msra.mxu0 %v445
  %503 = vmatprep.subr.bf16.mxu0 %v450
  %504 = vmatpush1.bf16.msra.mxu0 %v449
  %505 = vmatprep.subr.bf16.mxu0 %v454
  %506 = vmatpush1.bf16.msra.mxu0 %v453
  %507 = vmatprep.subr.bf16.mxu0 %v458
  %508 = vmatpush1.bf16.msra.mxu0 %v457
  %509 = vmatprep.subr.bf16.mxu0 0
  %510 = vmatpush1.bf16.msra.mxu0 0
  %511 = vmatprep.subr.bf16.mxu0 0
  %512 = vmatpush1.bf16.msra.mxu0 0
  %513 = vmatprep.subr.bf16.mxu0 0
  %514 = vmatpush1.bf16.msra.mxu0 0
  %515 = vmatprep.subr.bf16.mxu0 0
  %516 = vmatpush1.bf16.msra.mxu0 0
  %517 = vmatprep.subr.bf16.mxu0 0
  %518 = vmatpush1.bf16.msra.mxu0 0
  %519 = vmatprep.subr.bf16.mxu0 0
  %520 = vmatpush1.bf16.msra.mxu0 0
  %521 = vmatprep.subr.bf16.mxu0 0
  %522 = vmatpush1.bf16.msra.mxu0 0
  %523 = vmatprep.subr.bf16.mxu0 0
  %524 = vmatpush1.bf16.msra.mxu0 0
  %525 = vmatprep.mubr.bf16.mxu0 0
  %526 = vmatmul.mubr.bf16.gmra.mrb[0].mxu0 %v311
  %v527 = vpop.f32.mrb[0].mxu0
  %v528 = vadd.f32 %v316, %v527
  %v529 = vpop.f32.mrb[0].mxu0
  %v530 = vadd.f32 %v320, %v529
  %v531 = vpop.f32.mrb[0].mxu0
  %v532 = vadd.f32 %v316, %v531
  %v533 = vpop.f32.mrb[0].mxu0
  %v534 = vadd.f32 %v320, %v533
  %535 = vdwg.mxu0
  %536 = vmatprep.subr.bf16.mxu0 %v432
  %537 = vmatpush1.bf16.msra.mxu0 %v431
  %538 = vmatprep.subr.bf16.mxu0 %v436
  %539 = vmatpush1.bf16.msra.mxu0 %v435
  %540 = vmatprep.subr.bf16.mxu0 %v440
  %541 = vmatpush1.bf16.msra.mxu0 %v439
  %542 = vmatprep.subr.bf16.mxu0 %v444
  %543 = vmatpush1.bf16.msra.mxu0 %v443
  %544 = vmatprep.subr.bf16.mxu0 %v448
  %545 = vmatpush1.bf16.msra.mxu0 %v447
  %546 = vmatprep.subr.bf16.mxu0 %v452
  %547 = vmatpush1.bf16.msra.mxu0 %v451
  %548 = vmatprep.subr.bf16.mxu0 %v456
  %549 = vmatpush1.bf16.msra.mxu0 %v455
  %550 = vmatprep.subr.bf16.mxu0 %v460
  %551 = vmatpush1.bf16.msra.mxu0 %v459
  %552 = vmatprep.subr.bf16.mxu0 0
  %553 = vmatpush1.bf16.msra.mxu0 0
  %554 = vmatprep.subr.bf16.mxu0 0
  %555 = vmatpush1.bf16.msra.mxu0 0
  %556 = vmatprep.subr.bf16.mxu0 0
  %557 = vmatpush1.bf16.msra.mxu0 0
  %558 = vmatprep.subr.bf16.mxu0 0
  %559 = vmatpush1.bf16.msra.mxu0 0
  %560 = vmatprep.subr.bf16.mxu0 0
  %561 = vmatpush1.bf16.msra.mxu0 0
  %562 = vmatprep.subr.bf16.mxu0 0
  %563 = vmatpush1.bf16.msra.mxu0 0
  %564 = vmatprep.subr.bf16.mxu0 0
  %565 = vmatpush1.bf16.msra.mxu0 0
  %566 = vmatprep.subr.bf16.mxu0 0
  %567 = vmatpush1.bf16.msra.mxu0 0
  %568 = vmatprep.mubr.bf16.mxu0 0
  %569 = vmatmul.mubr.bf16.gmra.mrb[0].mxu0 %v311
  %v570 = vpop.f32.mrb[0].mxu0
  %v571 = vadd.f32 %v324, %v570
  %v572 = vpop.f32.mrb[0].mxu0
  %v573 = vadd.f32 %v328, %v572
  %v574 = vpop.f32.mrb[0].mxu0
  %v575 = vadd.f32 %v324, %v574
  %v576 = vpop.f32.mrb[0].mxu0
  %v577 = vadd.f32 %v328, %v576
  %578 = vdwg.mxu0
  %580 = vset.pattern.permute.xlu0 0
  %581 = vperm.xlu0 %580, %v303
  %v582 = vpop.permute.xlu0 %581
  %585 = vset.pattern.permute.xlu0 0
  %586 = vperm.xlu0 %585, %v310
  %v587 = vpop.permute.xlu0 %586
  %v591 = vlaneseq
  %v592 = vshrl.u32 %v591, 7
  %v593 = vsub.s32 0, %v592
  %v594 = vrot.slane %v184, %v593
  %v595 = vlaneseq
  %v596 = vshrl.u32 %v595, 7
  %v597 = vsub.s32 4, %v596
  %v598 = vrot.slane %v184, %v597
  %v599 = vlaneseq
  %v600 = vshrl.u32 %v599, 7
  %v601 = vsub.s32 0, %v600
  %v602 = vrot.slane %v185, %v601
  %v603 = vlaneseq
  %v604 = vshrl.u32 %v603, 7
  %v605 = vsub.s32 4, %v604
  %v606 = vrot.slane %v185, %v605
  %v611 = vlaneseq
  %v612 = vshrl.u32 %v611, 7
  %v613 = vsub.s32 0, %v612
  %v614 = vrot.slane %v594, %v613
  %v615 = vlaneseq
  %v616 = vshrl.u32 %v615, 7
  %v617 = vsub.s32 0, %v616
  %v618 = vrot.slane %v598, %v617
  %v619 = vlaneseq
  %v620 = vshrl.u32 %v619, 7
  %v621 = vsub.s32 0, %v620
  %v622 = vrot.slane %v602, %v621
  %v623 = vlaneseq
  %v624 = vshrl.u32 %v623, 7
  %v625 = vsub.s32 0, %v624
  %v626 = vrot.slane %v606, %v625
  %v627 = vmul.f32 %v582, %v614
  %v628 = vmul.f32 %v582, %v618
  %v629 = vmul.f32 %v582, %v622
  %v630 = vmul.f32 %v582, %v626
  %v631 = vmul.f32 %v587, %v614
  %v632 = vmul.f32 %v587, %v618
  %v633 = vmul.f32 %v587, %v622
  %v634 = vmul.f32 %v587, %v626
  %v635 = vadd.f32 %v528, %v627
  %v636 = vadd.f32 %v530, %v628
  %v637 = vadd.f32 %v571, %v629
  %v638 = vadd.f32 %v573, %v630
  %v639 = vadd.f32 %v532, %v631
  %v640 = vadd.f32 %v534, %v632
  %v641 = vadd.f32 %v575, %v633
  %v642 = vadd.f32 %v577, %v634
  %643 = vset.pattern.permute.xlu0 1
  %644 = vperm.xlu0 %643, %v303
  %v645 = vpop.permute.xlu0 %644
  %647 = vset.pattern.permute.xlu0 1
  %648 = vperm.xlu0 %647, %v310
  %v649 = vpop.permute.xlu0 %648
  %v651 = vlaneseq
  %v652 = vshrl.u32 %v651, 7
  %v653 = vsub.s32 1, %v652
  %v654 = vrot.slane %v184, %v653
  %v655 = vlaneseq
  %v656 = vshrl.u32 %v655, 7
  %v657 = vsub.s32 5, %v656
  %v658 = vrot.slane %v184, %v657
  %v659 = vlaneseq
  %v660 = vshrl.u32 %v659, 7
  %v661 = vsub.s32 1, %v660
  %v662 = vrot.slane %v185, %v661
  %v663 = vlaneseq
  %v664 = vshrl.u32 %v663, 7
  %v665 = vsub.s32 5, %v664
  %v666 = vrot.slane %v185, %v665
  %v671 = vlaneseq
  %v672 = vshrl.u32 %v671, 7
  %v673 = vsub.s32 1, %v672
  %v674 = vrot.slane %v654, %v673
  %v675 = vlaneseq
  %v676 = vshrl.u32 %v675, 7
  %v677 = vsub.s32 1, %v676
  %v678 = vrot.slane %v658, %v677
  %v679 = vlaneseq
  %v680 = vshrl.u32 %v679, 7
  %v681 = vsub.s32 1, %v680
  %v682 = vrot.slane %v662, %v681
  %v683 = vlaneseq
  %v684 = vshrl.u32 %v683, 7
  %v685 = vsub.s32 1, %v684
  %v686 = vrot.slane %v666, %v685
  %v687 = vmul.f32 %v645, %v674
  %v688 = vmul.f32 %v645, %v678
  %v689 = vmul.f32 %v645, %v682
  %v690 = vmul.f32 %v645, %v686
  %v691 = vmul.f32 %v649, %v674
  %v692 = vmul.f32 %v649, %v678
  %v693 = vmul.f32 %v649, %v682
  %v694 = vmul.f32 %v649, %v686
  %v695 = vadd.f32 %v635, %v687
  %v696 = vadd.f32 %v636, %v688
  %v697 = vadd.f32 %v637, %v689
  %v698 = vadd.f32 %v638, %v690
  %v699 = vadd.f32 %v639, %v691
  %v700 = vadd.f32 %v640, %v692
  %v701 = vadd.f32 %v641, %v693
  %v702 = vadd.f32 %v642, %v694
  %703 = vset.pattern.permute.xlu0 2
  %704 = vperm.xlu0 %703, %v303
  %v705 = vpop.permute.xlu0 %704
  %707 = vset.pattern.permute.xlu0 2
  %708 = vperm.xlu0 %707, %v310
  %v709 = vpop.permute.xlu0 %708
  %v711 = vlaneseq
  %v712 = vshrl.u32 %v711, 7
  %v713 = vsub.s32 2, %v712
  %v714 = vrot.slane %v184, %v713
  %v715 = vlaneseq
  %v716 = vshrl.u32 %v715, 7
  %v717 = vsub.s32 6, %v716
  %v718 = vrot.slane %v184, %v717
  %v719 = vlaneseq
  %v720 = vshrl.u32 %v719, 7
  %v721 = vsub.s32 2, %v720
  %v722 = vrot.slane %v185, %v721
  %v723 = vlaneseq
  %v724 = vshrl.u32 %v723, 7
  %v725 = vsub.s32 6, %v724
  %v726 = vrot.slane %v185, %v725
  %v731 = vlaneseq
  %v732 = vshrl.u32 %v731, 7
  %v733 = vsub.s32 2, %v732
  %v734 = vrot.slane %v714, %v733
  %v735 = vlaneseq
  %v736 = vshrl.u32 %v735, 7
  %v737 = vsub.s32 2, %v736
  %v738 = vrot.slane %v718, %v737
  %v739 = vlaneseq
  %v740 = vshrl.u32 %v739, 7
  %v741 = vsub.s32 2, %v740
  %v742 = vrot.slane %v722, %v741
  %v743 = vlaneseq
  %v744 = vshrl.u32 %v743, 7
  %v745 = vsub.s32 2, %v744
  %v746 = vrot.slane %v726, %v745
  %v747 = vmul.f32 %v705, %v734
  %v748 = vmul.f32 %v705, %v738
  %v749 = vmul.f32 %v705, %v742
  %v750 = vmul.f32 %v705, %v746
  %v751 = vmul.f32 %v709, %v734
  %v752 = vmul.f32 %v709, %v738
  %v753 = vmul.f32 %v709, %v742
  %v754 = vmul.f32 %v709, %v746
  %v755 = vadd.f32 %v695, %v747
  %v756 = vadd.f32 %v696, %v748
  %v757 = vadd.f32 %v697, %v749
  %v758 = vadd.f32 %v698, %v750
  %v759 = vadd.f32 %v699, %v751
  %v760 = vadd.f32 %v700, %v752
  %v761 = vadd.f32 %v701, %v753
  %v762 = vadd.f32 %v702, %v754
  %763 = vset.pattern.permute.xlu0 3
  %764 = vperm.xlu0 %763, %v303
  %v765 = vpop.permute.xlu0 %764
  %767 = vset.pattern.permute.xlu0 3
  %768 = vperm.xlu0 %767, %v310
  %v769 = vpop.permute.xlu0 %768
  %v771 = vlaneseq
  %v772 = vshrl.u32 %v771, 7
  %v773 = vsub.s32 3, %v772
  %v774 = vrot.slane %v184, %v773
  %v775 = vlaneseq
  %v776 = vshrl.u32 %v775, 7
  %v777 = vsub.s32 7, %v776
  %v778 = vrot.slane %v184, %v777
  %v779 = vlaneseq
  %v780 = vshrl.u32 %v779, 7
  %v781 = vsub.s32 3, %v780
  %v782 = vrot.slane %v185, %v781
  %v783 = vlaneseq
  %v784 = vshrl.u32 %v783, 7
  %v785 = vsub.s32 7, %v784
  %v786 = vrot.slane %v185, %v785
  %v791 = vlaneseq
  %v792 = vshrl.u32 %v791, 7
  %v793 = vsub.s32 3, %v792
  %v794 = vrot.slane %v774, %v793
  %v795 = vlaneseq
  %v796 = vshrl.u32 %v795, 7
  %v797 = vsub.s32 3, %v796
  %v798 = vrot.slane %v778, %v797
  %v799 = vlaneseq
  %v800 = vshrl.u32 %v799, 7
  %v801 = vsub.s32 3, %v800
  %v802 = vrot.slane %v782, %v801
  %v803 = vlaneseq
  %v804 = vshrl.u32 %v803, 7
  %v805 = vsub.s32 3, %v804
  %v806 = vrot.slane %v786, %v805
  %v807 = vmul.f32 %v765, %v794
  %v808 = vmul.f32 %v765, %v798
  %v809 = vmul.f32 %v765, %v802
  %v810 = vmul.f32 %v765, %v806
  %v811 = vmul.f32 %v769, %v794
  %v812 = vmul.f32 %v769, %v798
  %v813 = vmul.f32 %v769, %v802
  %v814 = vmul.f32 %v769, %v806
  %v815 = vadd.f32 %v755, %v807
  %v816 = vadd.f32 %v756, %v808
  %v817 = vadd.f32 %v757, %v809
  %v818 = vadd.f32 %v758, %v810
  %v819 = vadd.f32 %v759, %v811
  %v820 = vadd.f32 %v760, %v812
  %v821 = vadd.f32 %v761, %v813
  %v822 = vadd.f32 %v762, %v814
  %v823 = vmax.f32 %v815, 0.0
  %v824 = vmax.f32 %v816, 0.0
  %v825 = vmax.f32 %v817, 0.0
  %v826 = vmax.f32 %v818, 0.0
  %v827 = vmax.f32 %v819, 0.0
  %v828 = vmax.f32 %v820, 0.0
  %v829 = vmax.f32 %v821, 0.0
  %v830 = vmax.f32 %v822, 0.0
  %vm831 = vcmask 97280
  %v833 = vsel %vm831, %v267, 0
  %v836 = vsel %vm831, %v272, 0
  %vm838 = vcmask 1043456
  %v840 = vsel %vm838, %v188, 0
  %842 = vmatprep.subr.mxu0 0.0
  %843 = vmatpush1.msra.mxu0 %v187
  %844 = vmatprep.subr.mxu0 0.0
  %845 = vmatpush1.msra.mxu0 %v840
  %846 = vmatprep.subr.mxu0 0.0
  %847 = vmatpush1.msra.mxu0 0.0
  %848 = vmatprep.subr.mxu0 0.0
  %849 = vmatpush1.msra.mxu0 0.0
  %850 = vmatprep.subr.mxu0 0.0
  %851 = vmatpush1.msra.mxu0 0.0
  %852 = vmatprep.subr.mxu0 0.0
  %853 = vmatpush1.msra.mxu0 0.0
  %854 = vmatprep.subr.mxu0 0.0
  %855 = vmatpush1.msra.mxu0 0.0
  %856 = vmatprep.subr.mxu0 0.0
  %857 = vmatpush1.msra.mxu0 0.0
  %858 = vmatprep.subr.mxu0 0.0
  %859 = vmatpush1.msra.mxu0 0.0
  %860 = vmatprep.subr.mxu0 0.0
  %861 = vmatpush1.msra.mxu0 0.0
  %862 = vmatprep.subr.mxu0 0.0
  %863 = vmatpush1.msra.mxu0 0.0
  %864 = vmatprep.subr.mxu0 0.0
  %865 = vmatpush1.msra.mxu0 0.0
  %866 = vmatprep.subr.mxu0 0.0
  %867 = vmatpush1.msra.mxu0 0.0
  %868 = vmatprep.subr.mxu0 0.0
  %869 = vmatpush1.msra.mxu0 0.0
  %870 = vmatprep.subr.mxu0 0.0
  %871 = vmatpush1.msra.mxu0 0.0
  %872 = vmatprep.subr.mxu0 0.0
  %873 = vmatpush1.msra.mxu0 0.0
  %874 = vmatprep.subr.mxu0 0.0
  %875 = vmatpush1.msra.mxu0 0.0
  %876 = vmatprep.subr.mxu0 0.0
  %877 = vmatpush1.msra.mxu0 0.0
  %878 = vmatprep.subr.mxu0 0.0
  %879 = vmatpush1.msra.mxu0 0.0
  %880 = vmatprep.subr.mxu0 0.0
  %881 = vmatpush1.msra.mxu0 0.0
  %882 = vmatprep.subr.mxu0 0.0
  %883 = vmatpush1.msra.mxu0 0.0
  %884 = vmatprep.subr.mxu0 0.0
  %885 = vmatpush1.msra.mxu0 0.0
  %886 = vmatprep.subr.mxu0 0.0
  %887 = vmatpush1.msra.mxu0 0.0
  %888 = vmatprep.subr.mxu0 0.0
  %889 = vmatpush1.msra.mxu0 0.0
  %890 = vmatprep.subr.mxu0 0.0
  %891 = vmatpush1.msra.mxu0 0.0
  %892 = vmatprep.subr.mxu0 0.0
  %893 = vmatpush1.msra.mxu0 0.0
  %894 = vmatprep.subr.mxu0 0.0
  %895 = vmatpush1.msra.mxu0 0.0
  %896 = vmatprep.subr.mxu0 0.0
  %897 = vmatpush1.msra.mxu0 0.0
  %898 = vmatprep.subr.mxu0 0.0
  %899 = vmatpush1.msra.mxu0 0.0
  %900 = vmatprep.subr.mxu0 0.0
  %901 = vmatpush1.msra.mxu0 0.0
  %902 = vmatprep.subr.mxu0 0.0
  %903 = vmatpush1.msra.mxu0 0.0
  %904 = vmatprep.subr.mxu0 0.0
  %905 = vmatpush1.msra.mxu0 0.0
  %906 = vmatprep.mubr.f32.mxu0 0.0
  %907 = vmatmul.mubr.f32.gmra.mrb[0].mxu0 %v833
  %v908 = vpop.f32.mrb[0].mxu0
  %v909 = vadd.f32 0.0, %v908
  %v910 = vpop.f32.mrb[0].mxu0
  %911 = vmatprep.mubr.f32.mxu0 0.0
  %912 = vmatmul.mubr.f32.gmra.mrb[0].mxu0 %v836
  %v913 = vpop.f32.mrb[0].mxu0
  %v914 = vadd.f32 0.0, %v913
  %v915 = vpop.f32.mrb[0].mxu0
  %916 = vdwg.mxu0
  %v917 = vmul.f32 %v909, %v909
  %v918 = vmul.f32 %v914, %v914
  %921 = vrot.lane.b32.xlu0 %v917, 124
  %v922 = vpop.permute.xlu0 %921
  %923 = vrot.lane.b32.xlu0 %v918, 124
  %v924 = vpop.permute.xlu0 %923
  %v927 = vadd.f32 %v917, %v922
  %v928 = vadd.f32 %v918, %v924
  %929 = vrot.lane.b32.xlu0 %v917, 120
  %v930 = vpop.permute.xlu0 %929
  %931 = vrot.lane.b32.xlu0 %v918, 120
  %v932 = vpop.permute.xlu0 %931
  %v935 = vadd.f32 %v927, %v930
  %v936 = vadd.f32 %v928, %v932
  %v937 = vmax.f32 %v935, 1e-08
  %v938 = vmax.f32 %v936, 1e-08
  %v939 = vrsqrt.pop %v937
  %v940 = vmul.f32 %v937, %v939
  %vm941 = vcmp.eq.f32.partialorder %v937, inf
  %v942 = vsel %vm941, %v937, %v940
  %vm943 = vcmp.eq.f32.partialorder %v937, 0.0
  %v944 = vand.u32 %v937, 2147483648
  %v945 = vsel %vm943, %v944, %v942
  %v946 = vrsqrt.pop %v938
  %v947 = vmul.f32 %v938, %v946
  %vm948 = vcmp.eq.f32.partialorder %v938, inf
  %v949 = vsel %vm948, %v938, %v947
  %vm950 = vcmp.eq.f32.partialorder %v938, 0.0
  %v951 = vand.u32 %v938, 2147483648
  %v952 = vsel %vm950, %v951, %v949
  %v953 = vxor.u32 %v945, 2147483648
  %v954 = vxor.u32 %v952, 2147483648
  %v955 = vmul.f32 %v953, 1.442695
  %v956 = vpow.pop %v955
  %v957 = vmul.f32 %v954, 1.442695
  %v958 = vpow.pop %v957
  %v959 = vadd.f32 %v956, 1.0
  %v960 = vadd.f32 %v958, 1.0
  %v961 = vrcp.pop %v959
  %v962 = vmul.f32 1.0, %v961
  %v963 = vrcp.pop %v960
  %v964 = vmul.f32 1.0, %v963
  %967 = vrot.lane.b32.xlu0 %v962, 4
  %v968 = vpop.permute.xlu0 %967
  %969 = vrot.lane.b32.xlu0 %v964, 4
  %v970 = vpop.permute.xlu0 %969
  %973 = vrot.lane.b32.xlu0 %v962, 8
  %v974 = vpop.permute.xlu0 %973
  %975 = vrot.lane.b32.xlu0 %v964, 8
  %v976 = vpop.permute.xlu0 %975
  %vm979 = vcmask 31744
  %v980 = vsel %vm979, %v962, %v968
  %v981 = vsel %vm979, %v964, %v970
  %vm982 = vcmask 64512
  %v983 = vsel %vm982, %v980, %v974
  %v984 = vsel %vm982, %v981, %v976
  %v985 = vmul.f32 %v909, %v983
  %v986 = vmul.f32 %v914, %v984
  %v987 = vld [vmem:[%s10] sm:$0xff]
  %v988 = vld [vmem:[%s10 + $0x8] sm:$0xf]
  %v989 = vld [vmem:[%s11] sm:$0xf]
  %v990 = vld [vmem:[%s11 + $0x4] sm:$0xf]
  %v991 = vld [vmem:[%s11 + $0x8] sm:$0xf]
  %v992 = vld [vmem:[%s11 + $0xc] sm:$0xf]
  %v993 = vld [vmem:[%s11 + $0x10] sm:$0xf]
  %v994 = vld [vmem:[%s11 + $0x14] sm:$0xf]
  %v995 = vld [vmem:[%s11 + $0x18] sm:$0xf]
  %v996 = vld [vmem:[%s11 + $0x1c] sm:$0xf]
  %v997 = vld [vmem:[%s11 + $0x20] sm:$0xf]
  %v998 = vld [vmem:[%s11 + $0x24] sm:$0xf]
  %v999 = vld [vmem:[%s11 + $0x28] sm:$0xf]
  %v1000 = vld [vmem:[%s11 + $0x2c] sm:$0xf]
  %v1001 = vld [vmem:[%s11 + $0x30] sm:$0xf]
  %v1002 = vld [vmem:[%s11 + $0x34] sm:$0xf]
  %v1003 = vld [vmem:[%s11 + $0x38] sm:$0xf]
  %v1004 = vld [vmem:[%s11 + $0x3c] sm:$0xf]
  %v1005 = vld [vmem:[%s11 + $0x40] sm:$0xf]
  %v1006 = vld [vmem:[%s11 + $0x44] sm:$0xf]
  %v1007 = vld [vmem:[%s11 + $0x48] sm:$0xf]
  %v1008 = vld [vmem:[%s11 + $0x4c] sm:$0xf]
  %v1009 = vld [vmem:[%s11 + $0x50] sm:$0xf]
  %v1010 = vld [vmem:[%s11 + $0x54] sm:$0xf]
  %v1011 = vld [vmem:[%s11 + $0x58] sm:$0xf]
  %v1012 = vld [vmem:[%s11 + $0x5c] sm:$0xf]
  %v1013 = vld [vmem:[%s11 + $0x60] sm:$0xf]
  %v1014 = vld [vmem:[%s11 + $0x64] sm:$0xf]
  %v1015 = vld [vmem:[%s11 + $0x68] sm:$0xf]
  %v1016 = vld [vmem:[%s11 + $0x6c] sm:$0xf]
  %v1017 = vld [vmem:[%s11 + $0x70] sm:$0xf]
  %v1018 = vld [vmem:[%s11 + $0x74] sm:$0xf]
  %v1019 = vld [vmem:[%s11 + $0x78] sm:$0xf]
  %v1020 = vld [vmem:[%s11 + $0x7c] sm:$0xf]
  %v1021 = vld [vmem:[%s11 + $0x80] sm:$0xf]
  %v1022 = vld [vmem:[%s11 + $0x84] sm:$0xf]
  %v1023 = vld [vmem:[%s11 + $0x88] sm:$0xf]
  %v1024 = vld [vmem:[%s11 + $0x8c] sm:$0xf]
  %v1025 = vld [vmem:[%s11 + $0x90] sm:$0xf]
  %v1026 = vld [vmem:[%s11 + $0x94] sm:$0xf]
  %v1027 = vld [vmem:[%s11 + $0x98] sm:$0xf]
  %v1028 = vld [vmem:[%s11 + $0x9c] sm:$0xf]
  %v1029 = vld [vmem:[%s11 + $0xa0] sm:$0xf]
  %v1030 = vld [vmem:[%s11 + $0xa4] sm:$0xf]
  %v1031 = vld [vmem:[%s11 + $0xa8] sm:$0xf]
  %v1032 = vld [vmem:[%s11 + $0xac] sm:$0xf]
  %v1033 = vld [vmem:[%s11 + $0xb0] sm:$0xf]
  %v1034 = vld [vmem:[%s11 + $0xb4] sm:$0xf]
  %v1035 = vld [vmem:[%s11 + $0xb8] sm:$0xf]
  %v1036 = vld [vmem:[%s11 + $0xbc] sm:$0xf]
  %v1037 = vld [vmem:[%s11 + $0xc0] sm:$0xf]
  %v1038 = vld [vmem:[%s11 + $0xc4] sm:$0xf]
  %v1039 = vld [vmem:[%s11 + $0xc8] sm:$0xf]
  %v1040 = vld [vmem:[%s11 + $0xcc] sm:$0xf]
  %v1041 = vld [vmem:[%s11 + $0xd0] sm:$0xf]
  %v1042 = vld [vmem:[%s11 + $0xd4] sm:$0xf]
  %v1043 = vld [vmem:[%s11 + $0xd8] sm:$0xf]
  %v1044 = vld [vmem:[%s11 + $0xdc] sm:$0xf]
  %v1045 = vld [vmem:[%s11 + $0xe0] sm:$0xf]
  %v1046 = vld [vmem:[%s11 + $0xe4] sm:$0xf]
  %v1047 = vld [vmem:[%s11 + $0xe8] sm:$0xf]
  %v1048 = vld [vmem:[%s11 + $0xec] sm:$0xf]
  %v1049 = vld [vmem:[%s11 + $0xf0] sm:$0xf]
  %v1050 = vld [vmem:[%s11 + $0xf4] sm:$0xf]
  %v1051 = vld [vmem:[%s11 + $0xf8] sm:$0xf]
  %v1052 = vld [vmem:[%s11 + $0xfc] sm:$0xf]
  %v1053 = vld [vmem:[%s12] sm:$0xf]
  %v1054 = vld [vmem:[%s13] sm:$0x1]
  %v1056 = vsel %vm831, %v985, 0
  %v1059 = vsel %vm831, %v986, 0
  %v1062 = vsel %vm838, %v988, 0
  %1064 = vmatprep.subr.mxu0 0.0
  %1065 = vmatpush1.msra.mxu0 %v987
  %1066 = vmatprep.subr.mxu0 0.0
  %1067 = vmatpush1.msra.mxu0 %v1062
  %1068 = vmatprep.subr.mxu0 0.0
  %1069 = vmatpush1.msra.mxu0 0.0
  %1070 = vmatprep.subr.mxu0 0.0
  %1071 = vmatpush1.msra.mxu0 0.0
  %1072 = vmatprep.subr.mxu0 0.0
  %1073 = vmatpush1.msra.mxu0 0.0
  %1074 = vmatprep.subr.mxu0 0.0
  %1075 = vmatpush1.msra.mxu0 0.0
  %1076 = vmatprep.subr.mxu0 0.0
  %1077 = vmatpush1.msra.mxu0 0.0
  %1078 = vmatprep.subr.mxu0 0.0
  %1079 = vmatpush1.msra.mxu0 0.0
  %1080 = vmatprep.subr.mxu0 0.0
  %1081 = vmatpush1.msra.mxu0 0.0
  %1082 = vmatprep.subr.mxu0 0.0
  %1083 = vmatpush1.msra.mxu0 0.0
  %1084 = vmatprep.subr.mxu0 0.0
  %1085 = vmatpush1.msra.mxu0 0.0
  %1086 = vmatprep.subr.mxu0 0.0
  %1087 = vmatpush1.msra.mxu0 0.0
  %1088 = vmatprep.subr.mxu0 0.0
  %1089 = vmatpush1.msra.mxu0 0.0
  %1090 = vmatprep.subr.mxu0 0.0
  %1091 = vmatpush1.msra.mxu0 0.0
  %1092 = vmatprep.subr.mxu0 0.0
  %1093 = vmatpush1.msra.mxu0 0.0
  %1094 = vmatprep.subr.mxu0 0.0
  %1095 = vmatpush1.msra.mxu0 0.0
  %1096 = vmatprep.subr.mxu0 0.0
  %1097 = vmatpush1.msra.mxu0 0.0
  %1098 = vmatprep.subr.mxu0 0.0
  %1099 = vmatpush1.msra.mxu0 0.0
  %1100 = vmatprep.subr.mxu0 0.0
  %1101 = vmatpush1.msra.mxu0 0.0
  %1102 = vmatprep.subr.mxu0 0.0
  %1103 = vmatpush1.msra.mxu0 0.0
  %1104 = vmatprep.subr.mxu0 0.0
  %1105 = vmatpush1.msra.mxu0 0.0
  %1106 = vmatprep.subr.mxu0 0.0
  %1107 = vmatpush1.msra.mxu0 0.0
  %1108 = vmatprep.subr.mxu0 0.0
  %1109 = vmatpush1.msra.mxu0 0.0
  %1110 = vmatprep.subr.mxu0 0.0
  %1111 = vmatpush1.msra.mxu0 0.0
  %1112 = vmatprep.subr.mxu0 0.0
  %1113 = vmatpush1.msra.mxu0 0.0
  %1114 = vmatprep.subr.mxu0 0.0
  %1115 = vmatpush1.msra.mxu0 0.0
  %1116 = vmatprep.subr.mxu0 0.0
  %1117 = vmatpush1.msra.mxu0 0.0
  %1118 = vmatprep.subr.mxu0 0.0
  %1119 = vmatpush1.msra.mxu0 0.0
  %1120 = vmatprep.subr.mxu0 0.0
  %1121 = vmatpush1.msra.mxu0 0.0
  %1122 = vmatprep.subr.mxu0 0.0
  %1123 = vmatpush1.msra.mxu0 0.0
  %1124 = vmatprep.subr.mxu0 0.0
  %1125 = vmatpush1.msra.mxu0 0.0
  %1126 = vmatprep.subr.mxu0 0.0
  %1127 = vmatpush1.msra.mxu0 0.0
  %1128 = vmatprep.mubr.f32.mxu0 0.0
  %1129 = vmatmul.mubr.f32.gmra.mrb[0].mxu0 %v1056
  %v1130 = vpop.f32.mrb[0].mxu0
  %v1131 = vadd.f32 0.0, %v1130
  %v1132 = vpop.f32.mrb[0].mxu0
  %1133 = vmatprep.mubr.f32.mxu0 0.0
  %1134 = vmatmul.mubr.f32.gmra.mrb[0].mxu0 %v1059
  %v1135 = vpop.f32.mrb[0].mxu0
  %v1136 = vadd.f32 0.0, %v1135
  %v1137 = vpop.f32.mrb[0].mxu0
  %1138 = vdwg.mxu0
  %v1139 = vmul.f32 %v1131, %v1131
  %v1140 = vmul.f32 %v1136, %v1136
  %1143 = vrot.lane.b32.xlu0 %v1139, 124
  %v1144 = vpop.permute.xlu0 %1143
  %1145 = vrot.lane.b32.xlu0 %v1140, 124
  %v1146 = vpop.permute.xlu0 %1145
  %v1149 = vadd.f32 %v1139, %v1144
  %v1150 = vadd.f32 %v1140, %v1146
  %1151 = vrot.lane.b32.xlu0 %v1139, 120
  %v1152 = vpop.permute.xlu0 %1151
  %1153 = vrot.lane.b32.xlu0 %v1140, 120
  %v1154 = vpop.permute.xlu0 %1153
  %v1157 = vadd.f32 %v1149, %v1152
  %v1158 = vadd.f32 %v1150, %v1154
  %v1159 = vmax.f32 %v1157, 1e-08
  %v1160 = vmax.f32 %v1158, 1e-08
  %v1161 = vrsqrt.pop %v1159
  %v1162 = vmul.f32 %v1159, %v1161
  %vm1163 = vcmp.eq.f32.partialorder %v1159, inf
  %v1164 = vsel %vm1163, %v1159, %v1162
  %vm1165 = vcmp.eq.f32.partialorder %v1159, 0.0
  %v1166 = vand.u32 %v1159, 2147483648
  %v1167 = vsel %vm1165, %v1166, %v1164
  %v1168 = vrsqrt.pop %v1160
  %v1169 = vmul.f32 %v1160, %v1168
  %vm1170 = vcmp.eq.f32.partialorder %v1160, inf
  %v1171 = vsel %vm1170, %v1160, %v1169
  %vm1172 = vcmp.eq.f32.partialorder %v1160, 0.0
  %v1173 = vand.u32 %v1160, 2147483648
  %v1174 = vsel %vm1172, %v1173, %v1171
  %v1175 = vpack.c.bf16 %v827, %v823
  %v1176 = vpack.c.bf16 %v828, %v824
  %v1177 = vpack.c.bf16 %v829, %v825
  %v1178 = vpack.c.bf16 %v830, %v826
  %v1180 = vlaneseq
  %v1181 = vshrl.u32 %v1180, 7
  %v1182 = vsub.s32 0, %v1181
  %v1183 = vrot.slane %v1054, %v1182
  %v1249 = vunpack.c.l.b16 %v989
  %v1250 = vunpack.c.l.b16 %v990
  %v1251 = vunpack.c.l.b16 %v991
  %v1252 = vunpack.c.l.b16 %v992
  %v1253 = vunpack.c.l.b16 %v993
  %v1254 = vunpack.c.l.b16 %v994
  %v1255 = vunpack.c.l.b16 %v995
  %v1256 = vunpack.c.l.b16 %v996
  %v1257 = vunpack.c.l.b16 %v997
  %v1258 = vunpack.c.l.b16 %v998
  %v1259 = vunpack.c.l.b16 %v999
  %v1260 = vunpack.c.l.b16 %v1000
  %v1261 = vunpack.c.l.b16 %v1001
  %v1262 = vunpack.c.l.b16 %v1002
  %v1263 = vunpack.c.l.b16 %v1003
  %v1264 = vunpack.c.l.b16 %v1004
  %v1265 = vunpack.c.l.b16 %v1005
  %v1266 = vunpack.c.l.b16 %v1006
  %v1267 = vunpack.c.l.b16 %v1007
  %v1268 = vunpack.c.l.b16 %v1008
  %v1269 = vunpack.c.l.b16 %v1009
  %v1270 = vunpack.c.l.b16 %v1010
  %v1271 = vunpack.c.l.b16 %v1011
  %v1272 = vunpack.c.l.b16 %v1012
  %v1273 = vunpack.c.l.b16 %v1013
  %v1274 = vunpack.c.l.b16 %v1014
  %v1275 = vunpack.c.l.b16 %v1015
  %v1276 = vunpack.c.l.b16 %v1016
  %v1277 = vunpack.c.l.b16 %v1017
  %v1278 = vunpack.c.l.b16 %v1018
  %v1279 = vunpack.c.l.b16 %v1019
  %v1280 = vunpack.c.l.b16 %v1020
  %v1281 = vunpack.c.l.b16 %v1021
  %v1282 = vunpack.c.l.b16 %v1022
  %v1283 = vunpack.c.l.b16 %v1023
  %v1284 = vunpack.c.l.b16 %v1024
  %v1285 = vunpack.c.l.b16 %v1025
  %v1286 = vunpack.c.l.b16 %v1026
  %v1287 = vunpack.c.l.b16 %v1027
  %v1288 = vunpack.c.l.b16 %v1028
  %v1289 = vunpack.c.l.b16 %v1029
  %v1290 = vunpack.c.l.b16 %v1030
  %v1291 = vunpack.c.l.b16 %v1031
  %v1292 = vunpack.c.l.b16 %v1032
  %v1293 = vunpack.c.l.b16 %v1033
  %v1294 = vunpack.c.l.b16 %v1034
  %v1295 = vunpack.c.l.b16 %v1035
  %v1296 = vunpack.c.l.b16 %v1036
  %v1297 = vunpack.c.l.b16 %v1037
  %v1298 = vunpack.c.l.b16 %v1038
  %v1299 = vunpack.c.l.b16 %v1039
  %v1300 = vunpack.c.l.b16 %v1040
  %v1301 = vunpack.c.l.b16 %v1041
  %v1302 = vunpack.c.l.b16 %v1042
  %v1303 = vunpack.c.l.b16 %v1043
  %v1304 = vunpack.c.l.b16 %v1044
  %v1305 = vunpack.c.l.b16 %v1045
  %v1306 = vunpack.c.l.b16 %v1046
  %v1307 = vunpack.c.l.b16 %v1047
  %v1308 = vunpack.c.l.b16 %v1048
  %v1309 = vunpack.c.l.b16 %v1049
  %v1310 = vunpack.c.l.b16 %v1050
  %v1311 = vunpack.c.l.b16 %v1051
  %v1312 = vunpack.c.l.b16 %v1052
  %v1313 = vpack.c.b16 %v1250, %v1249
  %v1314 = vpack.c.b16 %v1252, %v1251
  %v1315 = vpack.c.b16 %v1254, %v1253
  %v1316 = vpack.c.b16 %v1256, %v1255
  %v1317 = vpack.c.b16 %v1258, %v1257
  %v1318 = vpack.c.b16 %v1260, %v1259
  %v1319 = vpack.c.b16 %v1262, %v1261
  %v1320 = vpack.c.b16 %v1264, %v1263
  %v1321 = vpack.c.b16 %v1266, %v1265
  %v1322 = vpack.c.b16 %v1268, %v1267
  %v1323 = vpack.c.b16 %v1270, %v1269
  %v1324 = vpack.c.b16 %v1272, %v1271
  %v1325 = vpack.c.b16 %v1274, %v1273
  %v1326 = vpack.c.b16 %v1276, %v1275
  %v1327 = vpack.c.b16 %v1278, %v1277
  %v1328 = vpack.c.b16 %v1280, %v1279
  %v1329 = vpack.c.b16 %v1282, %v1281
  %v1330 = vpack.c.b16 %v1284, %v1283
  %v1331 = vpack.c.b16 %v1286, %v1285
  %v1332 = vpack.c.b16 %v1288, %v1287
  %v1333 = vpack.c.b16 %v1290, %v1289
  %v1334 = vpack.c.b16 %v1292, %v1291
  %v1335 = vpack.c.b16 %v1294, %v1293
  %v1336 = vpack.c.b16 %v1296, %v1295
  %v1337 = vpack.c.b16 %v1298, %v1297
  %v1338 = vpack.c.b16 %v1300, %v1299
  %v1339 = vpack.c.b16 %v1302, %v1301
  %v1340 = vpack.c.b16 %v1304, %v1303
  %v1341 = vpack.c.b16 %v1306, %v1305
  %v1342 = vpack.c.b16 %v1308, %v1307
  %v1343 = vpack.c.b16 %v1310, %v1309
  %v1344 = vpack.c.b16 %v1312, %v1311
  %1377 = vmatprep.subr.bf16.mxu0 0
  %1378 = vmatpush1.bf16.msra.mxu0 %v1313
  %1379 = vmatprep.subr.bf16.mxu0 0
  %1380 = vmatpush1.bf16.msra.mxu0 %v1314
  %1381 = vmatprep.subr.bf16.mxu0 0
  %1382 = vmatpush1.bf16.msra.mxu0 %v1315
  %1383 = vmatprep.subr.bf16.mxu0 0
  %1384 = vmatpush1.bf16.msra.mxu0 %v1316
  %1385 = vmatprep.subr.bf16.mxu0 0
  %1386 = vmatpush1.bf16.msra.mxu0 %v1317
  %1387 = vmatprep.subr.bf16.mxu0 0
  %1388 = vmatpush1.bf16.msra.mxu0 %v1318
  %1389 = vmatprep.subr.bf16.mxu0 0
  %1390 = vmatpush1.bf16.msra.mxu0 %v1319
  %1391 = vmatprep.subr.bf16.mxu0 0
  %1392 = vmatpush1.bf16.msra.mxu0 %v1320
  %1393 = vmatprep.subr.bf16.mxu0 0
  %1394 = vmatpush1.bf16.msra.mxu0 %v1321
  %1395 = vmatprep.subr.bf16.mxu0 0
  %1396 = vmatpush1.bf16.msra.mxu0 %v1322
  %1397 = vmatprep.subr.bf16.mxu0 0
  %1398 = vmatpush1.bf16.msra.mxu0 %v1323
  %1399 = vmatprep.subr.bf16.mxu0 0
  %1400 = vmatpush1.bf16.msra.mxu0 %v1324
  %1401 = vmatprep.subr.bf16.mxu0 0
  %1402 = vmatpush1.bf16.msra.mxu0 %v1325
  %1403 = vmatprep.subr.bf16.mxu0 0
  %1404 = vmatpush1.bf16.msra.mxu0 %v1326
  %1405 = vmatprep.subr.bf16.mxu0 0
  %1406 = vmatpush1.bf16.msra.mxu0 %v1327
  %1407 = vmatprep.subr.bf16.mxu0 0
  %1408 = vmatpush1.bf16.msra.mxu0 %v1328
  %1409 = vmatprep.mubr.bf16.mxu0 %v1176
  %1410 = vmatmul.mubr.bf16.gmra.mrb[0].mxu0 %v1175
  %v1411 = vpop.f32.mrb[0].mxu0
  %v1412 = vadd.f32 %v1183, %v1411
  %v1413 = vpop.f32.mrb[0].mxu0
  %v1414 = vpop.f32.mrb[0].mxu0
  %v1415 = vadd.f32 %v1183, %v1414
  %v1416 = vpop.f32.mrb[0].mxu0
  %1417 = vdwg.mxu0
  %1418 = vmatprep.subr.bf16.mxu0 0
  %1419 = vmatpush1.bf16.msra.mxu0 %v1329
  %1420 = vmatprep.subr.bf16.mxu0 0
  %1421 = vmatpush1.bf16.msra.mxu0 %v1330
  %1422 = vmatprep.subr.bf16.mxu0 0
  %1423 = vmatpush1.bf16.msra.mxu0 %v1331
  %1424 = vmatprep.subr.bf16.mxu0 0
  %1425 = vmatpush1.bf16.msra.mxu0 %v1332
  %1426 = vmatprep.subr.bf16.mxu0 0
  %1427 = vmatpush1.bf16.msra.mxu0 %v1333
  %1428 = vmatprep.subr.bf16.mxu0 0
  %1429 = vmatpush1.bf16.msra.mxu0 %v1334
  %1430 = vmatprep.subr.bf16.mxu0 0
  %1431 = vmatpush1.bf16.msra.mxu0 %v1335
  %1432 = vmatprep.subr.bf16.mxu0 0
  %1433 = vmatpush1.bf16.msra.mxu0 %v1336
  %1434 = vmatprep.subr.bf16.mxu0 0
  %1435 = vmatpush1.bf16.msra.mxu0 %v1337
  %1436 = vmatprep.subr.bf16.mxu0 0
  %1437 = vmatpush1.bf16.msra.mxu0 %v1338
  %1438 = vmatprep.subr.bf16.mxu0 0
  %1439 = vmatpush1.bf16.msra.mxu0 %v1339
  %1440 = vmatprep.subr.bf16.mxu0 0
  %1441 = vmatpush1.bf16.msra.mxu0 %v1340
  %1442 = vmatprep.subr.bf16.mxu0 0
  %1443 = vmatpush1.bf16.msra.mxu0 %v1341
  %1444 = vmatprep.subr.bf16.mxu0 0
  %1445 = vmatpush1.bf16.msra.mxu0 %v1342
  %1446 = vmatprep.subr.bf16.mxu0 0
  %1447 = vmatpush1.bf16.msra.mxu0 %v1343
  %1448 = vmatprep.subr.bf16.mxu0 0
  %1449 = vmatpush1.bf16.msra.mxu0 %v1344
  %1450 = vmatprep.mubr.bf16.mxu0 %v1178
  %1451 = vmatmul.mubr.bf16.gmra.mrb[0].mxu0 %v1177
  %v1452 = vpop.f32.mrb[0].mxu0
  %v1453 = vadd.f32 %v1412, %v1452
  %v1454 = vpop.f32.mrb[0].mxu0
  %v1455 = vpop.f32.mrb[0].mxu0
  %v1456 = vadd.f32 %v1415, %v1455
  %v1457 = vpop.f32.mrb[0].mxu0
  %1458 = vdwg.mxu0
  %1460 = vset.pattern.permute.xlu0 0
  %1461 = vperm.xlu0 %1460, %v1167
  %v1462 = vpop.permute.xlu0 %1461
  %1465 = vset.pattern.permute.xlu0 0
  %1466 = vperm.xlu0 %1465, %v1174
  %v1467 = vpop.permute.xlu0 %1466
  %v1469 = vlaneseq
  %v1470 = vshrl.u32 %v1469, 7
  %v1471 = vsub.s32 0, %v1470
  %v1472 = vrot.slane %v1053, %v1471
  %v1473 = vmul.f32 %v1462, %v1472
  %v1474 = vmul.f32 %v1467, %v1472
  %v1475 = vadd.f32 %v1453, %v1473
  %v1476 = vadd.f32 %v1456, %v1474
  %1477 = vset.pattern.permute.xlu0 1
  %1478 = vperm.xlu0 %1477, %v1167
  %v1479 = vpop.permute.xlu0 %1478
  %1481 = vset.pattern.permute.xlu0 1
  %1482 = vperm.xlu0 %1481, %v1174
  %v1483 = vpop.permute.xlu0 %1482
  %v1485 = vlaneseq
  %v1486 = vshrl.u32 %v1485, 7
  %v1487 = vsub.s32 1, %v1486
  %v1488 = vrot.slane %v1053, %v1487
  %v1489 = vmul.f32 %v1479, %v1488
  %v1490 = vmul.f32 %v1483, %v1488
  %v1491 = vadd.f32 %v1475, %v1489
  %v1492 = vadd.f32 %v1476, %v1490
  %1493 = vset.pattern.permute.xlu0 2
  %1494 = vperm.xlu0 %1493, %v1167
  %v1495 = vpop.permute.xlu0 %1494
  %1497 = vset.pattern.permute.xlu0 2
  %1498 = vperm.xlu0 %1497, %v1174
  %v1499 = vpop.permute.xlu0 %1498
  %v1501 = vlaneseq
  %v1502 = vshrl.u32 %v1501, 7
  %v1503 = vsub.s32 2, %v1502
  %v1504 = vrot.slane %v1053, %v1503
  %v1505 = vmul.f32 %v1495, %v1504
  %v1506 = vmul.f32 %v1499, %v1504
  %v1507 = vadd.f32 %v1491, %v1505
  %v1508 = vadd.f32 %v1492, %v1506
  %1509 = vset.pattern.permute.xlu0 3
  %1510 = vperm.xlu0 %1509, %v1167
  %v1511 = vpop.permute.xlu0 %1510
  %1513 = vset.pattern.permute.xlu0 3
  %1514 = vperm.xlu0 %1513, %v1174
  %v1515 = vpop.permute.xlu0 %1514
  %v1517 = vlaneseq
  %v1518 = vshrl.u32 %v1517, 7
  %v1519 = vsub.s32 3, %v1518
  %v1520 = vrot.slane %v1053, %v1519
  %v1521 = vmul.f32 %v1511, %v1520
  %v1522 = vmul.f32 %v1515, %v1520
  %v1523 = vadd.f32 %v1507, %v1521
  %v1524 = vadd.f32 %v1508, %v1522
  %v1525 = vadd.f32 %v109, %v1523
  %v1526 = vadd.f32 %v110, %v1524
  %v1527 = vld [vmem:[%s14] sm:$0x1]
  %v1528 = vld [vmem:[%s15] sm:$0x1]
  %1529 = vadd.xlane.f32.xlu0 %v1525
  %v1530 = vpop.xlane.xlu0 %1529
  %1531 = vadd.xlane.f32.xlu0 %v1526
  %v1532 = vpop.xlane.xlu0 %1531
  %v1533 = vmul.f32 %v1530, %v76
  %v1534 = vmul.f32 %v1532, %v76
  %v1535 = vsub.f32 %v1525, %v1533
  %v1536 = vsub.f32 %v1526, %v1534
  %v1537 = vmul.f32 %v1535, %v1535
  %v1538 = vmul.f32 %v1536, %v1536
  %1539 = vadd.xlane.f32.xlu0 %v1537
  %v1540 = vpop.xlane.xlu0 %1539
  %1541 = vadd.xlane.f32.xlu0 %v1538
  %v1542 = vpop.xlane.xlu0 %1541
  %v1543 = vmul.f32 %v1540, %v76
  %v1544 = vmul.f32 %v1542, %v76
  %v1545 = vadd.f32 %v1543, 1e-05
  %v1546 = vadd.f32 %v1544, 1e-05
  %v1547 = vrsqrt.pop %v1545
  %v1548 = vrsqrt.pop %v1546
  %v1549 = vmul.f32 %v1535, %v1547
  %v1550 = vmul.f32 %v1536, %v1548
  %v1552 = vlaneseq
  %v1553 = vshrl.u32 %v1552, 7
  %v1554 = vsub.s32 0, %v1553
  %v1555 = vrot.slane %v1527, %v1554
  %v1557 = vmul.f32 %v1549, %v1555
  %v1558 = vmul.f32 %v1550, %v1555
  %v1560 = vlaneseq
  %v1561 = vshrl.u32 %v1560, 7
  %v1562 = vsub.s32 0, %v1561
  %v1563 = vrot.slane %v1528, %v1562
  %v1565 = vadd.f32 %v1557, %v1563
  %v1566 = vadd.f32 %v1558, %v1563
  %v1567 = vld [vmem:[%s16] sm:$0xff]
  %v1568 = vld [vmem:[%s16 + $0x8] sm:$0xff]
  %v1569 = vld [vmem:[%s16 + $0x10] sm:$0xff]
  %v1570 = vld [vmem:[%s16 + $0x18] sm:$0xff]
  %v1571 = vld [vmem:[%s16 + $0x20] sm:$0xff]
  %v1572 = vld [vmem:[%s16 + $0x28] sm:$0xff]
  %v1573 = vld [vmem:[%s16 + $0x30] sm:$0xff]
  %v1574 = vld [vmem:[%s16 + $0x38] sm:$0xff]
  %v1575 = vld [vmem:[%s16 + $0x40] sm:$0xff]
  %v1576 = vld [vmem:[%s16 + $0x48] sm:$0xff]
  %v1577 = vld [vmem:[%s16 + $0x50] sm:$0xff]
  %v1578 = vld [vmem:[%s16 + $0x58] sm:$0xff]
  %v1579 = vld [vmem:[%s16 + $0x60] sm:$0xff]
  %v1580 = vld [vmem:[%s16 + $0x68] sm:$0xff]
  %v1581 = vld [vmem:[%s16 + $0x70] sm:$0xff]
  %v1582 = vld [vmem:[%s16 + $0x78] sm:$0xff]
  %v1583 = vld [vmem:[#allocation2] sm:$0x1]
  %v1585 = vlaneseq
  %v1586 = vshrl.u32 %v1585, 7
  %v1587 = vsub.s32 0, %v1586
  %v1588 = vrot.slane %v1583, %v1587
  %1590 = vmatprep.subr.mxu0 0.0
  %1591 = vmatpush1.msra.mxu0 %v1567
  %1592 = vmatprep.subr.mxu0 0.0
  %1593 = vmatpush1.msra.mxu0 %v1568
  %1594 = vmatprep.subr.mxu0 0.0
  %1595 = vmatpush1.msra.mxu0 %v1569
  %1596 = vmatprep.subr.mxu0 0.0
  %1597 = vmatpush1.msra.mxu0 %v1570
  %1598 = vmatprep.subr.mxu0 0.0
  %1599 = vmatpush1.msra.mxu0 %v1571
  %1600 = vmatprep.subr.mxu0 0.0
  %1601 = vmatpush1.msra.mxu0 %v1572
  %1602 = vmatprep.subr.mxu0 0.0
  %1603 = vmatpush1.msra.mxu0 %v1573
  %1604 = vmatprep.subr.mxu0 0.0
  %1605 = vmatpush1.msra.mxu0 %v1574
  %1606 = vmatprep.subr.mxu0 0.0
  %1607 = vmatpush1.msra.mxu0 %v1575
  %1608 = vmatprep.subr.mxu0 0.0
  %1609 = vmatpush1.msra.mxu0 %v1576
  %1610 = vmatprep.subr.mxu0 0.0
  %1611 = vmatpush1.msra.mxu0 %v1577
  %1612 = vmatprep.subr.mxu0 0.0
  %1613 = vmatpush1.msra.mxu0 %v1578
  %1614 = vmatprep.subr.mxu0 0.0
  %1615 = vmatpush1.msra.mxu0 %v1579
  %1616 = vmatprep.subr.mxu0 0.0
  %1617 = vmatpush1.msra.mxu0 %v1580
  %1618 = vmatprep.subr.mxu0 0.0
  %1619 = vmatpush1.msra.mxu0 %v1581
  %1620 = vmatprep.subr.mxu0 0.0
  %1621 = vmatpush1.msra.mxu0 %v1582
  %1622 = vmatprep.subr.mxu0 0.0
  %1623 = vmatpush1.msra.mxu0 0.0
  %1624 = vmatprep.subr.mxu0 0.0
  %1625 = vmatpush1.msra.mxu0 0.0
  %1626 = vmatprep.subr.mxu0 0.0
  %1627 = vmatpush1.msra.mxu0 0.0
  %1628 = vmatprep.subr.mxu0 0.0
  %1629 = vmatpush1.msra.mxu0 0.0
  %1630 = vmatprep.subr.mxu0 0.0
  %1631 = vmatpush1.msra.mxu0 0.0
  %1632 = vmatprep.subr.mxu0 0.0
  %1633 = vmatpush1.msra.mxu0 0.0
  %1634 = vmatprep.subr.mxu0 0.0
  %1635 = vmatpush1.msra.mxu0 0.0
  %1636 = vmatprep.subr.mxu0 0.0
  %1637 = vmatpush1.msra.mxu0 0.0
  %1638 = vmatprep.subr.mxu0 0.0
  %1639 = vmatpush1.msra.mxu0 0.0
  %1640 = vmatprep.subr.mxu0 0.0
  %1641 = vmatpush1.msra.mxu0 0.0
  %1642 = vmatprep.subr.mxu0 0.0
  %1643 = vmatpush1.msra.mxu0 0.0
  %1644 = vmatprep.subr.mxu0 0.0
  %1645 = vmatpush1.msra.mxu0 0.0
  %1646 = vmatprep.subr.mxu0 0.0
  %1647 = vmatpush1.msra.mxu0 0.0
  %1648 = vmatprep.subr.mxu0 0.0
  %1649 = vmatpush1.msra.mxu0 0.0
  %1650 = vmatprep.subr.mxu0 0.0
  %1651 = vmatpush1.msra.mxu0 0.0
  %1652 = vmatprep.subr.mxu0 0.0
  %1653 = vmatpush1.msra.mxu0 0.0
  %1654 = vmatprep.mubr.f32.mxu0 0.0
  %1655 = vmatmul.mubr.f32.gmra.mrb[0].mxu0 %v1565
  %v1656 = vpop.f32.mrb[0].mxu0
  %v1657 = vadd.f32 %v1588, %v1656
  %v1658 = vpop.f32.mrb[0].mxu0
  %1659 = vmatprep.mubr.f32.mxu0 0.0
  %1660 = vmatmul.mubr.f32.gmra.mrb[0].mxu0 %v1566
  %v1661 = vpop.f32.mrb[0].mxu0
  %v1662 = vadd.f32 %v1588, %v1661
  %v1663 = vpop.f32.mrb[0].mxu0
  %1664 = vdwg.mxu0
  %v1665 = vxor.u32 %v1657, 2147483648
  %v1666 = vxor.u32 %v1662, 2147483648
  %v1667 = vmul.f32 %v1665, 1.442695
  %v1668 = vpow.pop %v1667
  %v1669 = vmul.f32 %v1666, 1.442695
  %v1670 = vpow.pop %v1669
  %v1671 = vadd.f32 %v1668, 1.0
  %v1672 = vadd.f32 %v1670, 1.0
  %v1673 = vrcp.pop %v1671
  %v1674 = vmul.f32 1.0, %v1673
  %v1675 = vrcp.pop %v1672
  %v1676 = vmul.f32 1.0, %v1675
  %vm1677 = vcmask 7168
  %1678 = vst.msk [vmem:[%s18] sm:$0xff] %vm1677, %v1674
  %1679 = vst.msk [vmem:[%s18 + $0x8] sm:$0xff] %vm1677, %v1676
  // Predicated region
  $region74: #{scoring_model_forward.7} parent=0 // pred_check
    _
  $region75: #{scoring_model_forward.7} parent=0 // pred_check_branch
    %1681 = sbr.rel (0) target = $region77
  $region76: #{scoring_model_forward.7} parent=0 // pred_region
    _
  $region77: #{scoring_model_forward.7} parent=0 // pred_fallthru
    _
  // Predicated region
  $region78: #{scoring_model_forward.7} parent=0 // pred_check
    _
  $region79: #{scoring_model_forward.7} parent=0 // pred_check_branch
    %1683 = sbr.rel (0) target = $region81
  $region80: #{scoring_model_forward.7} parent=0 // pred_region
    _
  $region81: #{scoring_model_forward.7} parent=0 // pred_fallthru
    _

// kernel: scoring_model_forward.5
$region0: #{scoring_model_forward.5}
  #allocation0 [shape = 'u32[]', space=smem, size = 0x4, offset = 0x4, fixed_abs, tag = 'smem constant byte address 0x4 - core index']
  #allocation1 [shape = 'u32[144,128]{1,0:T(1,128)}', space=vmem, size = 0x12000, scoped, tag = 'internal scratch']
  %s0 = inlined_call_operand.vmem [shape: bf16[128,264], index: 0, kind: input, shape index: {}]
  %s1 = inlined_call_operand.vmem [shape: f32[128,15], index: 1, kind: input, shape index: {}]
  %s2 = inlined_call_operand.vmem [shape: f32[15,15], index: 2, kind: input, shape index: {}]
  %s3 = inlined_call_operand.vmem [shape: f32[15,6], index: 3, kind: input, shape index: {}]
  %s4 = inlined_call_operand.vmem [shape: bf16[264,128], index: 4, kind: input, shape index: {}]
  %s5 = inlined_call_operand.vmem [shape: f32[5,128], index: 5, kind: input, shape index: {}]
  %s6 = inlined_call_operand.vmem [shape: f32[1,128], index: 6, kind: input, shape index: {}]
  %s7 = inlined_call_operand.vmem [shape: f32[6,6], index: 7, kind: input, shape index: {}]
  %s8 = inlined_call_operand.vmem [shape: f32[6,6], index: 8, kind: input, shape index: {}]
  %s9 = inlined_call_operand.vmem [shape: bf16[128,128], index: 9, kind: input, shape index: {}]
  %s10 = inlined_call_operand.vmem [shape: f32[2,128], index: 10, kind: input, shape index: {}]
  %s11 = inlined_call_operand.vmem [shape: f32[1,128], index: 11, kind: input, shape index: {}]
  %s12 = inlined_call_operand.vmem [shape: f32[6,6], index: 12, kind: input, shape index: {}]
  %s13 = inlined_call_operand.vmem [shape: f32[6,6], index: 13, kind: input, shape index: {}]
  %s14 = inlined_call_operand.vmem [shape: bf16[128,128], index: 14, kind: input, shape index: {}]
  %s15 = inlined_call_operand.vmem [shape: f32[2,128], index: 15, kind: input, shape index: {}]
  %s16 = inlined_call_operand.vmem [shape: f32[1,128], index: 16, kind: input, shape index: {}]
  %s17 = inlined_call_operand.vmem [shape: bf16[128,134], index: 17, kind: output, shape index: {}]
  %s18 = sld [smem:[#allocation0]]
  $region78: #{scoring_model_forward.5} parent=0
    _
  %s20 = ssub.s32 1, %s18
  %s21 = scalar_select 0, %s20, %s18
  // Predicated region
  $region2: #{scoring_model_forward.5} parent=0 // pred_check
    _
  $region3: #{scoring_model_forward.5} parent=0 // pred_check_branch
    %23 = sbr.rel (0) target = $region5
  $region4: #{scoring_model_forward.5} parent=0 // pred_region
    _
  $region5: #{scoring_model_forward.5} parent=0 // pred_fallthru
    _
  // Predicated region
  $region6: #{scoring_model_forward.5} parent=0 // pred_check
    _
  $region7: #{scoring_model_forward.5} parent=0 // pred_check_branch
    %25 = sbr.rel (0) target = $region9
  $region8: #{scoring_model_forward.5} parent=0 // pred_region
    _
  $region9: #{scoring_model_forward.5} parent=0 // pred_fallthru
    _
  // Predicated region
  $region10: #{scoring_model_forward.5} parent=0 // pred_check
    _
  $region11: #{scoring_model_forward.5} parent=0 // pred_check_branch
    %27 = sbr.rel (0) target = $region13
  $region12: #{scoring_model_forward.5} parent=0 // pred_region
    _
  $region13: #{scoring_model_forward.5} parent=0 // pred_fallthru
    _
  // Predicated region
  $region14: #{scoring_model_forward.5} parent=0 // pred_check
    _
  $region15: #{scoring_model_forward.5} parent=0 // pred_check_branch
    %29 = sbr.rel (0) target = $region17
  $region16: #{scoring_model_forward.5} parent=0 // pred_region
    _
  $region17: #{scoring_model_forward.5} parent=0 // pred_fallthru
    _
  // Predicated region
  $region18: #{scoring_model_forward.5} parent=0 // pred_check
    _
  $region19: #{scoring_model_forward.5} parent=0 // pred_check_branch
    %31 = sbr.rel (0) target = $region21
  $region20: #{scoring_model_forward.5} parent=0 // pred_region
    _
  $region21: #{scoring_model_forward.5} parent=0 // pred_fallthru
    _
  // Predicated region
  $region22: #{scoring_model_forward.5} parent=0 // pred_check
    _
  $region23: #{scoring_model_forward.5} parent=0 // pred_check_branch
    %33 = sbr.rel (0) target = $region25
  $region24: #{scoring_model_forward.5} parent=0 // pred_region
    _
  $region25: #{scoring_model_forward.5} parent=0 // pred_fallthru
    _
  // Predicated region
  $region26: #{scoring_model_forward.5} parent=0 // pred_check
    _
  $region27: #{scoring_model_forward.5} parent=0 // pred_check_branch
    %35 = sbr.rel (0) target = $region29
  $region28: #{scoring_model_forward.5} parent=0 // pred_region
    _
  $region29: #{scoring_model_forward.5} parent=0 // pred_fallthru
    _
  // Predicated region
  $region30: #{scoring_model_forward.5} parent=0 // pred_check
    _
  $region31: #{scoring_model_forward.5} parent=0 // pred_check_branch
    %37 = sbr.rel (0) target = $region33
  $region32: #{scoring_model_forward.5} parent=0 // pred_region
    _
  $region33: #{scoring_model_forward.5} parent=0 // pred_fallthru
    _
  // Predicated region
  $region34: #{scoring_model_forward.5} parent=0 // pred_check
    _
  $region35: #{scoring_model_forward.5} parent=0 // pred_check_branch
    %39 = sbr.rel (0) target = $region37
  $region36: #{scoring_model_forward.5} parent=0 // pred_region
    _
  $region37: #{scoring_model_forward.5} parent=0 // pred_fallthru
    _
  // Predicated region
  $region38: #{scoring_model_forward.5} parent=0 // pred_check
    _
  $region39: #{scoring_model_forward.5} parent=0 // pred_check_branch
    %41 = sbr.rel (0) target = $region41
  $region40: #{scoring_model_forward.5} parent=0 // pred_region
    _
  $region41: #{scoring_model_forward.5} parent=0 // pred_fallthru
    _
  // Predicated region
  $region42: #{scoring_model_forward.5} parent=0 // pred_check
    _
  $region43: #{scoring_model_forward.5} parent=0 // pred_check_branch
    %43 = sbr.rel (0) target = $region45
  $region44: #{scoring_model_forward.5} parent=0 // pred_region
    _
  $region45: #{scoring_model_forward.5} parent=0 // pred_fallthru
    _
  // Predicated region
  $region46: #{scoring_model_forward.5} parent=0 // pred_check
    _
  $region47: #{scoring_model_forward.5} parent=0 // pred_check_branch
    %45 = sbr.rel (0) target = $region49
  $region48: #{scoring_model_forward.5} parent=0 // pred_region
    _
  $region49: #{scoring_model_forward.5} parent=0 // pred_fallthru
    _
  // Predicated region
  $region50: #{scoring_model_forward.5} parent=0 // pred_check
    _
  $region51: #{scoring_model_forward.5} parent=0 // pred_check_branch
    %47 = sbr.rel (0) target = $region53
  $region52: #{scoring_model_forward.5} parent=0 // pred_region
    _
  $region53: #{scoring_model_forward.5} parent=0 // pred_fallthru
    _
  // Predicated region
  $region54: #{scoring_model_forward.5} parent=0 // pred_check
    _
  $region55: #{scoring_model_forward.5} parent=0 // pred_check_branch
    %49 = sbr.rel (0) target = $region57
  $region56: #{scoring_model_forward.5} parent=0 // pred_region
    _
  $region57: #{scoring_model_forward.5} parent=0 // pred_fallthru
    _
  // Predicated region
  $region58: #{scoring_model_forward.5} parent=0 // pred_check
    _
  $region59: #{scoring_model_forward.5} parent=0 // pred_check_branch
    %51 = sbr.rel (0) target = $region61
  $region60: #{scoring_model_forward.5} parent=0 // pred_region
    _
  $region61: #{scoring_model_forward.5} parent=0 // pred_fallthru
    _
  // Predicated region
  $region62: #{scoring_model_forward.5} parent=0 // pred_check
    _
  $region63: #{scoring_model_forward.5} parent=0 // pred_check_branch
    %53 = sbr.rel (0) target = $region65
  $region64: #{scoring_model_forward.5} parent=0 // pred_region
    _
  $region65: #{scoring_model_forward.5} parent=0 // pred_fallthru
    _
  // Predicated region
  $region66: #{scoring_model_forward.5} parent=0 // pred_check
    _
  $region67: #{scoring_model_forward.5} parent=0 // pred_check_branch
    %55 = sbr.rel (0) target = $region69
  $region68: #{scoring_model_forward.5} parent=0 // pred_region
    _
  $region69: #{scoring_model_forward.5} parent=0 // pred_fallthru
    _
  %v57 = vld [vmem:[%s0] sm:$0xff]
  %v58 = vld [vmem:[%s0 + $0x8] sm:$0xf]
  %v59 = vld [vmem:[%s0 + $0xc] sm:$0xff]
  %v60 = vld [vmem:[%s0 + $0x14] sm:$0xf]
  %v61 = vld [vmem:[%s0 + $0x18] sm:$0xff]
  %v62 = vld [vmem:[%s0 + $0x20] sm:$0xf]
  %v63 = vld [vmem:[%s0 + $0x24] sm:$0xff]
  %v64 = vld [vmem:[%s0 + $0x2c] sm:$0xf]
  %v65 = vld [vmem:[%s0 + $0x30] sm:$0xff]
  %v66 = vld [vmem:[%s0 + $0x38] sm:$0xf]
  %v67 = vld [vmem:[%s0 + $0x3c] sm:$0xff]
  %v68 = vld [vmem:[%s0 + $0x44] sm:$0xf]
  %v69 = vld [vmem:[%s0 + $0x48] sm:$0xff]
  %v70 = vld [vmem:[%s0 + $0x50] sm:$0xf]
  %v71 = vld [vmem:[%s0 + $0x54] sm:$0xff]
  %v72 = vld [vmem:[%s0 + $0x5c] sm:$0xf]
  %v73 = vld [vmem:[%s0 + $0x60] sm:$0xff]
  %v74 = vld [vmem:[%s0 + $0x68] sm:$0xf]
  %v75 = vld [vmem:[%s0 + $0x6c] sm:$0xff]
  %v76 = vld [vmem:[%s0 + $0x74] sm:$0xf]
  %v77 = vld [vmem:[%s0 + $0x78] sm:$0xff]
  %v78 = vld [vmem:[%s0 + $0x80] sm:$0xf]
  %v79 = vld [vmem:[%s0 + $0x84] sm:$0xff]
  %v80 = vld [vmem:[%s0 + $0x8c] sm:$0xf]
  %v81 = vld [vmem:[%s0 + $0x90] sm:$0xff]
  %v82 = vld [vmem:[%s0 + $0x98] sm:$0xf]
  %v83 = vld [vmem:[%s0 + $0x9c] sm:$0xff]
  %v84 = vld [vmem:[%s0 + $0xa4] sm:$0xf]
  %v85 = vld [vmem:[%s0 + $0xa8] sm:$0xff]
  %v86 = vld [vmem:[%s0 + $0xb0] sm:$0xf]
  %v87 = vld [vmem:[%s0 + $0xb4] sm:$0xff]
  %v88 = vld [vmem:[%s0 + $0xbc] sm:$0xf]
  %v89 = vld [vmem:[%s1] sm:$0xff]
  %v90 = vld [vmem:[%s1 + $0x8] sm:$0xff]
  %v91 = vld [vmem:[%s1 + $0x10] sm:$0xff]
  %v92 = vld [vmem:[%s1 + $0x18] sm:$0xff]
  %v93 = vld [vmem:[%s1 + $0x20] sm:$0xff]
  %v94 = vld [vmem:[%s1 + $0x28] sm:$0xff]
  %v95 = vld [vmem:[%s1 + $0x30] sm:$0xff]
  %v96 = vld [vmem:[%s1 + $0x38] sm:$0xff]
  %v97 = vld [vmem:[%s1 + $0x40] sm:$0xff]
  %v98 = vld [vmem:[%s1 + $0x48] sm:$0xff]
  %v99 = vld [vmem:[%s1 + $0x50] sm:$0xff]
  %v100 = vld [vmem:[%s1 + $0x58] sm:$0xff]
  %v101 = vld [vmem:[%s1 + $0x60] sm:$0xff]
  %v102 = vld [vmem:[%s1 + $0x68] sm:$0xff]
  %v103 = vld [vmem:[%s1 + $0x70] sm:$0xff]
  %v104 = vld [vmem:[%s1 + $0x78] sm:$0xff]
  %v105 = vld [vmem:[%s2] sm:$0xff]
  %v106 = vld [vmem:[%s2 + $0x8] sm:$0x7f]
  %v107 = vld [vmem:[%s4] sm:$0xf]
  %v108 = vld [vmem:[%s4 + $0x4] sm:$0xf]
  %v109 = vld [vmem:[%s4 + $0x8] sm:$0xf]
  %v110 = vld [vmem:[%s4 + $0xc] sm:$0xf]
  %v111 = vld [vmem:[%s4 + $0x10] sm:$0xf]
  %v112 = vld [vmem:[%s4 + $0x14] sm:$0xf]
  %v113 = vld [vmem:[%s4 + $0x18] sm:$0xf]
  %v114 = vld [vmem:[%s4 + $0x1c] sm:$0xf]
  %v115 = vld [vmem:[%s4 + $0x20] sm:$0xf]
  %v116 = vld [vmem:[%s4 + $0x24] sm:$0xf]
  %v117 = vld [vmem:[%s4 + $0x28] sm:$0xf]
  %v118 = vld [vmem:[%s4 + $0x2c] sm:$0xf]
  %v119 = vld [vmem:[%s4 + $0x30] sm:$0xf]
  %v120 = vld [vmem:[%s4 + $0x34] sm:$0xf]
  %v121 = vld [vmem:[%s4 + $0x38] sm:$0xf]
  %v122 = vld [vmem:[%s4 + $0x3c] sm:$0xf]
  %v123 = vld [vmem:[%s4 + $0x40] sm:$0xf]
  %v124 = vld [vmem:[%s4 + $0x44] sm:$0xf]
  %v125 = vld [vmem:[%s4 + $0x48] sm:$0xf]
  %v126 = vld [vmem:[%s4 + $0x4c] sm:$0xf]
  %v127 = vld [vmem:[%s4 + $0x50] sm:$0xf]
  %v128 = vld [vmem:[%s4 + $0x54] sm:$0xf]
  %v129 = vld [vmem:[%s4 + $0x58] sm:$0xf]
  %v130 = vld [vmem:[%s4 + $0x5c] sm:$0xf]
  %v131 = vld [vmem:[%s4 + $0x60] sm:$0xf]
  %v132 = vld [vmem:[%s4 + $0x64] sm:$0xf]
  %v133 = vld [vmem:[%s4 + $0x68] sm:$0xf]
  %v134 = vld [vmem:[%s4 + $0x6c] sm:$0xf]
  %v135 = vld [vmem:[%s4 + $0x70] sm:$0xf]
  %v136 = vld [vmem:[%s4 + $0x74] sm:$0xf]
  %v137 = vld [vmem:[%s4 + $0x78] sm:$0xf]
  %v138 = vld [vmem:[%s4 + $0x7c] sm:$0xf]
  %v139 = vld [vmem:[%s4 + $0x80] sm:$0xf]
  %v140 = vld [vmem:[%s5] sm:$0x1f]
  %v141 = vld [vmem:[%s6] sm:$0x1]
  %v142 = vld [vmem:[%s3] sm:$0xff]
  %v143 = vld [vmem:[%s3 + $0x8] sm:$0x7f]
  %vm144 = vcmask 121856
  %v146 = vsel %vm144, %v89, 0
  %v149 = vsel %vm144, %v90, 0
  %v152 = vsel %vm144, %v91, 0
  %v155 = vsel %vm144, %v92, 0
  %v158 = vsel %vm144, %v93, 0
  %v161 = vsel %vm144, %v94, 0
  %v164 = vsel %vm144, %v95, 0
  %v167 = vsel %vm144, %v96, 0
  %v170 = vsel %vm144, %v97, 0
  %v173 = vsel %vm144, %v98, 0
  %v176 = vsel %vm144, %v99, 0
  %v179 = vsel %vm144, %v100, 0
  %v182 = vsel %vm144, %v101, 0
  %v185 = vsel %vm144, %v102, 0
  %v188 = vsel %vm144, %v103, 0
  %v191 = vsel %vm144, %v104, 0
  %vm193 = vcmask 1046528
  %v195 = vsel %vm193, %v106, 0
  %197 = vmatprep.subr.mxu0 0.0
  %198 = vmatpush1.msra.mxu0 %v105
  %199 = vmatprep.subr.mxu0 0.0
  %200 = vmatpush1.msra.mxu0 %v195
  %201 = vmatprep.subr.mxu0 0.0
  %202 = vmatpush1.msra.mxu0 0.0
  %203 = vmatprep.subr.mxu0 0.0
  %204 = vmatpush1.msra.mxu0 0.0
  %205 = vmatprep.subr.mxu0 0.0
  %206 = vmatpush1.msra.mxu0 0.0
  %207 = vmatprep.subr.mxu0 0.0
  %208 = vmatpush1.msra.mxu0 0.0
  %209 = vmatprep.subr.mxu0 0.0
  %210 = vmatpush1.msra.mxu0 0.0
  %211 = vmatprep.subr.mxu0 0.0
  %212 = vmatpush1.msra.mxu0 0.0
  %213 = vmatprep.subr.mxu0 0.0
  %214 = vmatpush1.msra.mxu0 0.0
  %215 = vmatprep.subr.mxu0 0.0
  %216 = vmatpush1.msra.mxu0 0.0
  %217 = vmatprep.subr.mxu0 0.0
  %218 = vmatpush1.msra.mxu0 0.0
  %219 = vmatprep.subr.mxu0 0.0
  %220 = vmatpush1.msra.mxu0 0.0
  %221 = vmatprep.subr.mxu0 0.0
  %222 = vmatpush1.msra.mxu0 0.0
  %223 = vmatprep.subr.mxu0 0.0
  %224 = vmatpush1.msra.mxu0 0.0
  %225 = vmatprep.subr.mxu0 0.0
  %226 = vmatpush1.msra.mxu0 0.0
  %227 = vmatprep.subr.mxu0 0.0
  %228 = vmatpush1.msra.mxu0 0.0
  %229 = vmatprep.subr.mxu0 0.0
  %230 = vmatpush1.msra.mxu0 0.0
  %231 = vmatprep.subr.mxu0 0.0
  %232 = vmatpush1.msra.mxu0 0.0
  %233 = vmatprep.subr.mxu0 0.0
  %234 = vmatpush1.msra.mxu0 0.0
  %235 = vmatprep.subr.mxu0 0.0
  %236 = vmatpush1.msra.mxu0 0.0
  %237 = vmatprep.subr.mxu0 0.0
  %238 = vmatpush1.msra.mxu0 0.0
  %239 = vmatprep.subr.mxu0 0.0
  %240 = vmatpush1.msra.mxu0 0.0
  %241 = vmatprep.subr.mxu0 0.0
  %242 = vmatpush1.msra.mxu0 0.0
  %243 = vmatprep.subr.mxu0 0.0
  %244 = vmatpush1.msra.mxu0 0.0
  %245 = vmatprep.subr.mxu0 0.0
  %246 = vmatpush1.msra.mxu0 0.0
  %247 = vmatprep.subr.mxu0 0.0
  %248 = vmatpush1.msra.mxu0 0.0
  %249 = vmatprep.subr.mxu0 0.0
  %250 = vmatpush1.msra.mxu0 0.0
  %251 = vmatprep.subr.mxu0 0.0
  %252 = vmatpush1.msra.mxu0 0.0
  %253 = vmatprep.subr.mxu0 0.0
  %254 = vmatpush1.msra.mxu0 0.0
  %255 = vmatprep.subr.mxu0 0.0
  %256 = vmatpush1.msra.mxu0 0.0
  %257 = vmatprep.subr.mxu0 0.0
  %258 = vmatpush1.msra.mxu0 0.0
  %259 = vmatprep.subr.mxu0 0.0
  %260 = vmatpush1.msra.mxu0 0.0
  %261 = vmatprep.mubr.f32.mxu0 0.0
  %262 = vmatmul.mubr.f32.gmra.mrb[0].mxu0 %v146
  %v263 = vpop.f32.mrb[0].mxu0
  %v264 = vadd.f32 0.0, %v263
  %v265 = vpop.f32.mrb[0].mxu0
  %266 = vmatprep.mubr.f32.mxu0 0.0
  %267 = vmatmul.mubr.f32.gmra.mrb[0].mxu0 %v149
  %v268 = vpop.f32.mrb[0].mxu0
  %v269 = vadd.f32 0.0, %v268
  %v270 = vpop.f32.mrb[0].mxu0
  %271 = vmatprep.mubr.f32.mxu0 0.0
  %272 = vmatmul.mubr.f32.gmra.mrb[0].mxu0 %v152
  %v273 = vpop.f32.mrb[0].mxu0
  %v274 = vadd.f32 0.0, %v273
  %v275 = vpop.f32.mrb[0].mxu0
  %276 = vmatprep.mubr.f32.mxu0 0.0
  %277 = vmatmul.mubr.f32.gmra.mrb[0].mxu0 %v155
  %v278 = vpop.f32.mrb[0].mxu0
  %v279 = vadd.f32 0.0, %v278
  %v280 = vpop.f32.mrb[0].mxu0
  %281 = vmatprep.mubr.f32.mxu0 0.0
  %282 = vmatmul.mubr.f32.gmra.mrb[0].mxu0 %v158
  %v283 = vpop.f32.mrb[0].mxu0
  %v284 = vadd.f32 0.0, %v283
  %v285 = vpop.f32.mrb[0].mxu0
  %286 = vmatprep.mubr.f32.mxu0 0.0
  %287 = vmatmul.mubr.f32.gmra.mrb[0].mxu0 %v161
  %v288 = vpop.f32.mrb[0].mxu0
  %v289 = vadd.f32 0.0, %v288
  %v290 = vpop.f32.mrb[0].mxu0
  %291 = vmatprep.mubr.f32.mxu0 0.0
  %292 = vmatmul.mubr.f32.gmra.mrb[0].mxu0 %v164
  %v293 = vpop.f32.mrb[0].mxu0
  %v294 = vadd.f32 0.0, %v293
  %v295 = vpop.f32.mrb[0].mxu0
  %296 = vmatprep.mubr.f32.mxu0 0.0
  %297 = vmatmul.mubr.f32.gmra.mrb[0].mxu0 %v167
  %v298 = vpop.f32.mrb[0].mxu0
  %v299 = vadd.f32 0.0, %v298
  %v300 = vpop.f32.mrb[0].mxu0
  %301 = vmatprep.mubr.f32.mxu0 0.0
  %302 = vmatmul.mubr.f32.gmra.mrb[0].mxu0 %v170
  %v303 = vpop.f32.mrb[0].mxu0
  %v304 = vadd.f32 0.0, %v303
  %v305 = vpop.f32.mrb[0].mxu0
  %306 = vmatprep.mubr.f32.mxu0 0.0
  %307 = vmatmul.mubr.f32.gmra.mrb[0].mxu0 %v173
  %v308 = vpop.f32.mrb[0].mxu0
  %v309 = vadd.f32 0.0, %v308
  %v310 = vpop.f32.mrb[0].mxu0
  %311 = vmatprep.mubr.f32.mxu0 0.0
  %312 = vmatmul.mubr.f32.gmra.mrb[0].mxu0 %v176
  %v313 = vpop.f32.mrb[0].mxu0
  %v314 = vadd.f32 0.0, %v313
  %v315 = vpop.f32.mrb[0].mxu0
  %316 = vmatprep.mubr.f32.mxu0 0.0
  %317 = vmatmul.mubr.f32.gmra.mrb[0].mxu0 %v179
  %v318 = vpop.f32.mrb[0].mxu0
  %v319 = vadd.f32 0.0, %v318
  %v320 = vpop.f32.mrb[0].mxu0
  %321 = vmatprep.mubr.f32.mxu0 0.0
  %322 = vmatmul.mubr.f32.gmra.mrb[0].mxu0 %v182
  %v323 = vpop.f32.mrb[0].mxu0
  %v324 = vadd.f32 0.0, %v323
  %v325 = vpop.f32.mrb[0].mxu0
  %326 = vmatprep.mubr.f32.mxu0 0.0
  %327 = vmatmul.mubr.f32.gmra.mrb[0].mxu0 %v185
  %v328 = vpop.f32.mrb[0].mxu0
  %v329 = vadd.f32 0.0, %v328
  %v330 = vpop.f32.mrb[0].mxu0
  %331 = vmatprep.mubr.f32.mxu0 0.0
  %332 = vmatmul.mubr.f32.gmra.mrb[0].mxu0 %v188
  %v333 = vpop.f32.mrb[0].mxu0
  %v334 = vadd.f32 0.0, %v333
  %v335 = vpop.f32.mrb[0].mxu0
  %336 = vmatprep.mubr.f32.mxu0 0.0
  %337 = vmatmul.mubr.f32.gmra.mrb[0].mxu0 %v191
  %v338 = vpop.f32.mrb[0].mxu0
  %v339 = vadd.f32 0.0, %v338
  %v340 = vpop.f32.mrb[0].mxu0
  %341 = vdwg.mxu0
  %v342 = vmul.f32 %v264, %v264
  %v343 = vmul.f32 %v269, %v269
  %v344 = vmul.f32 %v274, %v274
  %v345 = vmul.f32 %v279, %v279
  %v346 = vmul.f32 %v284, %v284
  %v347 = vmul.f32 %v289, %v289
  %v348 = vmul.f32 %v294, %v294
  %v349 = vmul.f32 %v299, %v299
  %v350 = vmul.f32 %v304, %v304
  %v351 = vmul.f32 %v309, %v309
  %v352 = vmul.f32 %v314, %v314
  %v353 = vmul.f32 %v319, %v319
  %v354 = vmul.f32 %v324, %v324
  %v355 = vmul.f32 %v329, %v329
  %v356 = vmul.f32 %v334, %v334
  %v357 = vmul.f32 %v339, %v339
  %374 = vrot.lane.b32.xlu0 %v342, 123
  %v375 = vpop.permute.xlu0 %374
  %376 = vrot.lane.b32.xlu0 %v343, 123
  %v377 = vpop.permute.xlu0 %376
  %378 = vrot.lane.b32.xlu0 %v344, 123
  %v379 = vpop.permute.xlu0 %378
  %380 = vrot.lane.b32.xlu0 %v345, 123
  %v381 = vpop.permute.xlu0 %380
  %382 = vrot.lane.b32.xlu0 %v346, 123
  %v383 = vpop.permute.xlu0 %382
  %384 = vrot.lane.b32.xlu0 %v347, 123
  %v385 = vpop.permute.xlu0 %384
  %386 = vrot.lane.b32.xlu0 %v348, 123
  %v387 = vpop.permute.xlu0 %386
  %388 = vrot.lane.b32.xlu0 %v349, 123
  %v389 = vpop.permute.xlu0 %388
  %390 = vrot.lane.b32.xlu0 %v350, 123
  %v391 = vpop.permute.xlu0 %390
  %392 = vrot.lane.b32.xlu0 %v351, 123
  %v393 = vpop.permute.xlu0 %392
  %394 = vrot.lane.b32.xlu0 %v352, 123
  %v395 = vpop.permute.xlu0 %394
  %396 = vrot.lane.b32.xlu0 %v353, 123
  %v397 = vpop.permute.xlu0 %396
  %398 = vrot.lane.b32.xlu0 %v354, 123
  %v399 = vpop.permute.xlu0 %398
  %400 = vrot.lane.b32.xlu0 %v355, 123
  %v401 = vpop.permute.xlu0 %400
  %402 = vrot.lane.b32.xlu0 %v356, 123
  %v403 = vpop.permute.xlu0 %402
  %404 = vrot.lane.b32.xlu0 %v357, 123
  %v405 = vpop.permute.xlu0 %404
  %v422 = vadd.f32 %v342, %v375
  %v423 = vadd.f32 %v343, %v377
  %v424 = vadd.f32 %v344, %v379
  %v425 = vadd.f32 %v345, %v381
  %v426 = vadd.f32 %v346, %v383
  %v427 = vadd.f32 %v347, %v385
  %v428 = vadd.f32 %v348, %v387
  %v429 = vadd.f32 %v349, %v389
  %v430 = vadd.f32 %v350, %v391
  %v431 = vadd.f32 %v351, %v393
  %v432 = vadd.f32 %v352, %v395
  %v433 = vadd.f32 %v353, %v397
  %v434 = vadd.f32 %v354, %v399
  %v435 = vadd.f32 %v355, %v401
  %v436 = vadd.f32 %v356, %v403
  %v437 = vadd.f32 %v357, %v405
  %438 = vrot.lane.b32.xlu0 %v342, 118
  %v439 = vpop.permute.xlu0 %438
  %440 = vrot.lane.b32.xlu0 %v343, 118
  %v441 = vpop.permute.xlu0 %440
  %442 = vrot.lane.b32.xlu0 %v344, 118
  %v443 = vpop.permute.xlu0 %442
  %444 = vrot.lane.b32.xlu0 %v345, 118
  %v445 = vpop.permute.xlu0 %444
  %446 = vrot.lane.b32.xlu0 %v346, 118
  %v447 = vpop.permute.xlu0 %446
  %448 = vrot.lane.b32.xlu0 %v347, 118
  %v449 = vpop.permute.xlu0 %448
  %450 = vrot.lane.b32.xlu0 %v348, 118
  %v451 = vpop.permute.xlu0 %450
  %452 = vrot.lane.b32.xlu0 %v349, 118
  %v453 = vpop.permute.xlu0 %452
  %454 = vrot.lane.b32.xlu0 %v350, 118
  %v455 = vpop.permute.xlu0 %454
  %456 = vrot.lane.b32.xlu0 %v351, 118
  %v457 = vpop.permute.xlu0 %456
  %458 = vrot.lane.b32.xlu0 %v352, 118
  %v459 = vpop.permute.xlu0 %458
  %460 = vrot.lane.b32.xlu0 %v353, 118
  %v461 = vpop.permute.xlu0 %460
  %462 = vrot.lane.b32.xlu0 %v354, 118
  %v463 = vpop.permute.xlu0 %462
  %464 = vrot.lane.b32.xlu0 %v355, 118
  %v465 = vpop.permute.xlu0 %464
  %466 = vrot.lane.b32.xlu0 %v356, 118
  %v467 = vpop.permute.xlu0 %466
  %468 = vrot.lane.b32.xlu0 %v357, 118
  %v469 = vpop.permute.xlu0 %468
  %v486 = vadd.f32 %v422, %v439
  %v487 = vadd.f32 %v423, %v441
  %v488 = vadd.f32 %v424, %v443
  %v489 = vadd.f32 %v425, %v445
  %v490 = vadd.f32 %v426, %v447
  %v491 = vadd.f32 %v427, %v449
  %v492 = vadd.f32 %v428, %v451
  %v493 = vadd.f32 %v429, %v453
  %v494 = vadd.f32 %v430, %v455
  %v495 = vadd.f32 %v431, %v457
  %v496 = vadd.f32 %v432, %v459
  %v497 = vadd.f32 %v433, %v461
  %v498 = vadd.f32 %v434, %v463
  %v499 = vadd.f32 %v435, %v465
  %v500 = vadd.f32 %v436, %v467
  %v501 = vadd.f32 %v437, %v469
  %v502 = vmax.f32 %v486, 1e-08
  %v503 = vmax.f32 %v487, 1e-08
  %v504 = vmax.f32 %v488, 1e-08
  %v505 = vmax.f32 %v489, 1e-08
  %v506 = vmax.f32 %v490, 1e-08
  %v507 = vmax.f32 %v491, 1e-08
  %v508 = vmax.f32 %v492, 1e-08
  %v509 = vmax.f32 %v493, 1e-08
  %v510 = vmax.f32 %v494, 1e-08
  %v511 = vmax.f32 %v495, 1e-08
  %v512 = vmax.f32 %v496, 1e-08
  %v513 = vmax.f32 %v497, 1e-08
  %v514 = vmax.f32 %v498, 1e-08
  %v515 = vmax.f32 %v499, 1e-08
  %v516 = vmax.f32 %v500, 1e-08
  %v517 = vmax.f32 %v501, 1e-08
  %v518 = vrsqrt.pop %v502
  %v519 = vmul.f32 %v502, %v518
  %vm520 = vcmp.eq.f32.partialorder %v502, inf
  %v521 = vsel %vm520, %v502, %v519
  %vm522 = vcmp.eq.f32.partialorder %v502, 0.0
  %v523 = vand.u32 %v502, 2147483648
  %v524 = vsel %vm522, %v523, %v521
  %v525 = vrsqrt.pop %v503
  %v526 = vmul.f32 %v503, %v525
  %vm527 = vcmp.eq.f32.partialorder %v503, inf
  %v528 = vsel %vm527, %v503, %v526
  %vm529 = vcmp.eq.f32.partialorder %v503, 0.0
  %v530 = vand.u32 %v503, 2147483648
  %v531 = vsel %vm529, %v530, %v528
  %v532 = vrsqrt.pop %v504
  %v533 = vmul.f32 %v504, %v532
  %vm534 = vcmp.eq.f32.partialorder %v504, inf
  %v535 = vsel %vm534, %v504, %v533
  %vm536 = vcmp.eq.f32.partialorder %v504, 0.0
  %v537 = vand.u32 %v504, 2147483648
  %v538 = vsel %vm536, %v537, %v535
  %v539 = vrsqrt.pop %v505
  %v540 = vmul.f32 %v505, %v539
  %vm541 = vcmp.eq.f32.partialorder %v505, inf
  %v542 = vsel %vm541, %v505, %v540
  %vm543 = vcmp.eq.f32.partialorder %v505, 0.0
  %v544 = vand.u32 %v505, 2147483648
  %v545 = vsel %vm543, %v544, %v542
  %v546 = vrsqrt.pop %v506
  %v547 = vmul.f32 %v506, %v546
  %vm548 = vcmp.eq.f32.partialorder %v506, inf
  %v549 = vsel %vm548, %v506, %v547
  %vm550 = vcmp.eq.f32.partialorder %v506, 0.0
  %v551 = vand.u32 %v506, 2147483648
  %v552 = vsel %vm550, %v551, %v549
  %v553 = vrsqrt.pop %v507
  %v554 = vmul.f32 %v507, %v553
  %vm555 = vcmp.eq.f32.partialorder %v507, inf
  %v556 = vsel %vm555, %v507, %v554
  %vm557 = vcmp.eq.f32.partialorder %v507, 0.0
  %v558 = vand.u32 %v507, 2147483648
  %v559 = vsel %vm557, %v558, %v556
  %v560 = vrsqrt.pop %v508
  %v561 = vmul.f32 %v508, %v560
  %vm562 = vcmp.eq.f32.partialorder %v508, inf
  %v563 = vsel %vm562, %v508, %v561
  %vm564 = vcmp.eq.f32.partialorder %v508, 0.0
  %v565 = vand.u32 %v508, 2147483648
  %v566 = vsel %vm564, %v565, %v563
  %v567 = vrsqrt.pop %v509
  %v568 = vmul.f32 %v509, %v567
  %vm569 = vcmp.eq.f32.partialorder %v509, inf
  %v570 = vsel %vm569, %v509, %v568
  %vm571 = vcmp.eq.f32.partialorder %v509, 0.0
  %v572 = vand.u32 %v509, 2147483648
  %v573 = vsel %vm571, %v572, %v570
  %v574 = vrsqrt.pop %v510
  %v575 = vmul.f32 %v510, %v574
  %vm576 = vcmp.eq.f32.partialorder %v510, inf
  %v577 = vsel %vm576, %v510, %v575
  %vm578 = vcmp.eq.f32.partialorder %v510, 0.0
  %v579 = vand.u32 %v510, 2147483648
  %v580 = vsel %vm578, %v579, %v577
  %v581 = vrsqrt.pop %v511
  %v582 = vmul.f32 %v511, %v581
  %vm583 = vcmp.eq.f32.partialorder %v511, inf
  %v584 = vsel %vm583, %v511, %v582
  %vm585 = vcmp.eq.f32.partialorder %v511, 0.0
  %v586 = vand.u32 %v511, 2147483648
  %v587 = vsel %vm585, %v586, %v584
  %v588 = vrsqrt.pop %v512
  %v589 = vmul.f32 %v512, %v588
  %vm590 = vcmp.eq.f32.partialorder %v512, inf
  %v591 = vsel %vm590, %v512, %v589
  %vm592 = vcmp.eq.f32.partialorder %v512, 0.0
  %v593 = vand.u32 %v512, 2147483648
  %v594 = vsel %vm592, %v593, %v591
  %v595 = vrsqrt.pop %v513
  %v596 = vmul.f32 %v513, %v595
  %vm597 = vcmp.eq.f32.partialorder %v513, inf
  %v598 = vsel %vm597, %v513, %v596
  %vm599 = vcmp.eq.f32.partialorder %v513, 0.0
  %v600 = vand.u32 %v513, 2147483648
  %v601 = vsel %vm599, %v600, %v598
  %v602 = vrsqrt.pop %v514
  %v603 = vmul.f32 %v514, %v602
  %vm604 = vcmp.eq.f32.partialorder %v514, inf
  %v605 = vsel %vm604, %v514, %v603
  %vm606 = vcmp.eq.f32.partialorder %v514, 0.0
  %v607 = vand.u32 %v514, 2147483648
  %v608 = vsel %vm606, %v607, %v605
  %v609 = vrsqrt.pop %v515
  %v610 = vmul.f32 %v515, %v609
  %vm611 = vcmp.eq.f32.partialorder %v515, inf
  %v612 = vsel %vm611, %v515, %v610
  %vm613 = vcmp.eq.f32.partialorder %v515, 0.0
  %v614 = vand.u32 %v515, 2147483648
  %v615 = vsel %vm613, %v614, %v612
  %v616 = vrsqrt.pop %v516
  %v617 = vmul.f32 %v516, %v616
  %vm618 = vcmp.eq.f32.partialorder %v516, inf
  %v619 = vsel %vm618, %v516, %v617
  %vm620 = vcmp.eq.f32.partialorder %v516, 0.0
  %v621 = vand.u32 %v516, 2147483648
  %v622 = vsel %vm620, %v621, %v619
  %v623 = vrsqrt.pop %v517
  %v624 = vmul.f32 %v517, %v623
  %vm625 = vcmp.eq.f32.partialorder %v517, inf
  %v626 = vsel %vm625, %v517, %v624
  %vm627 = vcmp.eq.f32.partialorder %v517, 0.0
  %v628 = vand.u32 %v517, 2147483648
  %v629 = vsel %vm627, %v628, %v626
  %v631 = vlaneseq
  %v632 = vshrl.u32 %v631, 7
  %v633 = vsub.s32 0, %v632
  %v634 = vrot.slane %v141, %v633
  %v668 = vunpack.c.l.b16 %v57
  %v669 = vunpack.c.h.b16 %v57
  %v670 = vunpack.c.l.b16 %v58
  %v671 = vunpack.c.l.b16 %v59
  %v672 = vunpack.c.h.b16 %v59
  %v673 = vunpack.c.l.b16 %v60
  %v674 = vunpack.c.l.b16 %v61
  %v675 = vunpack.c.h.b16 %v61
  %v676 = vunpack.c.l.b16 %v62
  %v677 = vunpack.c.l.b16 %v63
  %v678 = vunpack.c.h.b16 %v63
  %v679 = vunpack.c.l.b16 %v64
  %v680 = vunpack.c.l.b16 %v65
  %v681 = vunpack.c.h.b16 %v65
  %v682 = vunpack.c.l.b16 %v66
  %v683 = vunpack.c.l.b16 %v67
  %v684 = vunpack.c.h.b16 %v67
  %v685 = vunpack.c.l.b16 %v68
  %v686 = vunpack.c.l.b16 %v69
  %v687 = vunpack.c.h.b16 %v69
  %v688 = vunpack.c.l.b16 %v70
  %v689 = vunpack.c.l.b16 %v71
  %v690 = vunpack.c.h.b16 %v71
  %v691 = vunpack.c.l.b16 %v72
  %v692 = vunpack.c.l.b16 %v73
  %v693 = vunpack.c.h.b16 %v73
  %v694 = vunpack.c.l.b16 %v74
  %v695 = vunpack.c.l.b16 %v75
  %v696 = vunpack.c.h.b16 %v75
  %v697 = vunpack.c.l.b16 %v76
  %v698 = vunpack.c.l.b16 %v77
  %v699 = vunpack.c.h.b16 %v77
  %v700 = vunpack.c.l.b16 %v78
  %v701 = vunpack.c.l.b16 %v79
  %v702 = vunpack.c.h.b16 %v79
  %v703 = vunpack.c.l.b16 %v80
  %v704 = vunpack.c.l.b16 %v81
  %v705 = vunpack.c.h.b16 %v81
  %v706 = vunpack.c.l.b16 %v82
  %v707 = vunpack.c.l.b16 %v83
  %v708 = vunpack.c.h.b16 %v83
  %v709 = vunpack.c.l.b16 %v84
  %v710 = vunpack.c.l.b16 %v85
  %v711 = vunpack.c.h.b16 %v85
  %v712 = vunpack.c.l.b16 %v86
  %v713 = vunpack.c.l.b16 %v87
  %v714 = vunpack.c.h.b16 %v87
  %v715 = vunpack.c.l.b16 %v88
  %v716 = vpack.c.b16 %v671, %v668
  %v717 = vpack.c.b16 %v672, %v669
  %v718 = vpack.c.b16 %v673, %v670
  %v719 = vpack.c.b16 %v677, %v674
  %v720 = vpack.c.b16 %v678, %v675
  %v721 = vpack.c.b16 %v679, %v676
  %v722 = vpack.c.b16 %v683, %v680
  %v723 = vpack.c.b16 %v684, %v681
  %v724 = vpack.c.b16 %v685, %v682
  %v725 = vpack.c.b16 %v689, %v686
  %v726 = vpack.c.b16 %v690, %v687
  %v727 = vpack.c.b16 %v691, %v688
  %v728 = vpack.c.b16 %v695, %v692
  %v729 = vpack.c.b16 %v696, %v693
  %v730 = vpack.c.b16 %v697, %v694
  %v731 = vpack.c.b16 %v701, %v698
  %v732 = vpack.c.b16 %v702, %v699
  %v733 = vpack.c.b16 %v703, %v700
  %v734 = vpack.c.b16 %v707, %v704
  %v735 = vpack.c.b16 %v708, %v705
  %v736 = vpack.c.b16 %v709, %v706
  %v737 = vpack.c.b16 %v713, %v710
  %v738 = vpack.c.b16 %v714, %v711
  %v739 = vpack.c.b16 %v715, %v712
  %v789 = vunpack.c.l.b16 %v107
  %v790 = vunpack.c.l.b16 %v108
  %v791 = vunpack.c.l.b16 %v109
  %v792 = vunpack.c.l.b16 %v110
  %v793 = vunpack.c.l.b16 %v111
  %v794 = vunpack.c.l.b16 %v112
  %v795 = vunpack.c.l.b16 %v113
  %v796 = vunpack.c.l.b16 %v114
  %v797 = vunpack.c.l.b16 %v115
  %v798 = vunpack.c.l.b16 %v116
  %v799 = vunpack.c.l.b16 %v117
  %v800 = vunpack.c.l.b16 %v118
  %v801 = vunpack.c.l.b16 %v119
  %v802 = vunpack.c.l.b16 %v120
  %v803 = vunpack.c.l.b16 %v121
  %v804 = vunpack.c.l.b16 %v122
  %v805 = vunpack.c.l.b16 %v123
  %v806 = vunpack.c.l.b16 %v124
  %v807 = vunpack.c.l.b16 %v125
  %v808 = vunpack.c.l.b16 %v126
  %v809 = vunpack.c.l.b16 %v127
  %v810 = vunpack.c.l.b16 %v128
  %v811 = vunpack.c.l.b16 %v129
  %v812 = vunpack.c.l.b16 %v130
  %v813 = vunpack.c.l.b16 %v131
  %v814 = vunpack.c.l.b16 %v132
  %v815 = vunpack.c.l.b16 %v133
  %v816 = vunpack.c.l.b16 %v134
  %v817 = vunpack.c.l.b16 %v135
  %v818 = vunpack.c.l.b16 %v136
  %v819 = vunpack.c.l.b16 %v137
  %v820 = vunpack.c.l.b16 %v138
  %v821 = vunpack.c.l.b16 %v139
  %v822 = vpack.c.b16 %v790, %v789
  %v823 = vpack.c.b16 %v792, %v791
  %v824 = vpack.c.b16 %v794, %v793
  %v825 = vpack.c.b16 %v796, %v795
  %v826 = vpack.c.b16 %v798, %v797
  %v827 = vpack.c.b16 %v800, %v799
  %v828 = vpack.c.b16 %v802, %v801
  %v829 = vpack.c.b16 %v804, %v803
  %v830 = vpack.c.b16 %v806, %v805
  %v831 = vpack.c.b16 %v808, %v807
  %v832 = vpack.c.b16 %v810, %v809
  %v833 = vpack.c.b16 %v812, %v811
  %v834 = vpack.c.b16 %v814, %v813
  %v835 = vpack.c.b16 %v816, %v815
  %v836 = vpack.c.b16 %v818, %v817
  %v837 = vpack.c.b16 %v820, %v819
  %v838 = vpack.c.b16 %v821, %v821
  %vm855 = vcmask 64512
  %v857 = vsel %vm855, %v718, 0
  %v860 = vsel %vm855, %v721, 0
  %v863 = vsel %vm855, %v724, 0
  %v866 = vsel %vm855, %v727, 0
  %v869 = vsel %vm855, %v730, 0
  %v872 = vsel %vm855, %v733, 0
  %v875 = vsel %vm855, %v736, 0
  %v878 = vsel %vm855, %v739, 0
  %vm880 = vcmask 1043456
  %v882 = vsel %vm880, %v838, 0
  %884 = vmatprep.subr.bf16.mxu0 0
  %885 = vmatpush1.bf16.msra.mxu0 %v822
  %886 = vmatprep.subr.bf16.mxu0 0
  %887 = vmatpush1.bf16.msra.mxu0 %v823
  %888 = vmatprep.subr.bf16.mxu0 0
  %889 = vmatpush1.bf16.msra.mxu0 %v824
  %890 = vmatprep.subr.bf16.mxu0 0
  %891 = vmatpush1.bf16.msra.mxu0 %v825
  %892 = vmatprep.subr.bf16.mxu0 0
  %893 = vmatpush1.bf16.msra.mxu0 %v826
  %894 = vmatprep.subr.bf16.mxu0 0
  %895 = vmatpush1.bf16.msra.mxu0 %v827
  %896 = vmatprep.subr.bf16.mxu0 0
  %897 = vmatpush1.bf16.msra.mxu0 %v828
  %898 = vmatprep.subr.bf16.mxu0 0
  %899 = vmatpush1.bf16.msra.mxu0 %v829
  %900 = vmatprep.subr.bf16.mxu0 0
  %901 = vmatpush1.bf16.msra.mxu0 %v830
  %902 = vmatprep.subr.bf16.mxu0 0
  %903 = vmatpush1.bf16.msra.mxu0 %v831
  %904 = vmatprep.subr.bf16.mxu0 0
  %905 = vmatpush1.bf16.msra.mxu0 %v832
  %906 = vmatprep.subr.bf16.mxu0 0
  %907 = vmatpush1.bf16.msra.mxu0 %v833
  %908 = vmatprep.subr.bf16.mxu0 0
  %909 = vmatpush1.bf16.msra.mxu0 %v834
  %910 = vmatprep.subr.bf16.mxu0 0
  %911 = vmatpush1.bf16.msra.mxu0 %v835
  %912 = vmatprep.subr.bf16.mxu0 0
  %913 = vmatpush1.bf16.msra.mxu0 %v836
  %914 = vmatprep.subr.bf16.mxu0 0
  %915 = vmatpush1.bf16.msra.mxu0 %v837
  %916 = vmatprep.mubr.bf16.mxu0 %v717
  %917 = vmatmul.mubr.bf16.gmra.mrb[0].mxu0 %v716
  %v918 = vpop.f32.mrb[0].mxu0
  %v919 = vadd.f32 %v634, %v918
  %v920 = vpop.f32.mrb[0].mxu0
  %v921 = vpop.f32.mrb[0].mxu0
  %v922 = vadd.f32 %v634, %v921
  %v923 = vpop.f32.mrb[0].mxu0
  %924 = vmatprep.mubr.bf16.mxu0 %v720
  %925 = vmatmul.mubr.bf16.gmra.mrb[0].mxu0 %v719
  %v926 = vpop.f32.mrb[0].mxu0
  %v927 = vadd.f32 %v634, %v926
  %v928 = vpop.f32.mrb[0].mxu0
  %v929 = vpop.f32.mrb[0].mxu0
  %v930 = vadd.f32 %v634, %v929
  %v931 = vpop.f32.mrb[0].mxu0
  %932 = vmatprep.mubr.bf16.mxu0 %v723
  %933 = vmatmul.mubr.bf16.gmra.mrb[0].mxu0 %v722
  %v934 = vpop.f32.mrb[0].mxu0
  %v935 = vadd.f32 %v634, %v934
  %v936 = vpop.f32.mrb[0].mxu0
  %v937 = vpop.f32.mrb[0].mxu0
  %v938 = vadd.f32 %v634, %v937
  %v939 = vpop.f32.mrb[0].mxu0
  %940 = vmatprep.mubr.bf16.mxu0 %v726
  %941 = vmatmul.mubr.bf16.gmra.mrb[0].mxu0 %v725
  %v942 = vpop.f32.mrb[0].mxu0
  %v943 = vadd.f32 %v634, %v942
  %v944 = vpop.f32.mrb[0].mxu0
  %v945 = vpop.f32.mrb[0].mxu0
  %v946 = vadd.f32 %v634, %v945
  %v947 = vpop.f32.mrb[0].mxu0
  %948 = vmatprep.mubr.bf16.mxu0 %v729
  %949 = vmatmul.mubr.bf16.gmra.mrb[0].mxu0 %v728
  %v950 = vpop.f32.mrb[0].mxu0
  %v951 = vadd.f32 %v634, %v950
  %v952 = vpop.f32.mrb[0].mxu0
  %v953 = vpop.f32.mrb[0].mxu0
  %v954 = vadd.f32 %v634, %v953
  %v955 = vpop.f32.mrb[0].mxu0
  %956 = vmatprep.mubr.bf16.mxu0 %v732
  %957 = vmatmul.mubr.bf16.gmra.mrb[0].mxu0 %v731
  %v958 = vpop.f32.mrb[0].mxu0
  %v959 = vadd.f32 %v634, %v958
  %v960 = vpop.f32.mrb[0].mxu0
  %v961 = vpop.f32.mrb[0].mxu0
  %v962 = vadd.f32 %v634, %v961
  %v963 = vpop.f32.mrb[0].mxu0
  %964 = vmatprep.mubr.bf16.mxu0 %v735
  %965 = vmatmul.mubr.bf16.gmra.mrb[0].mxu0 %v734
  %v966 = vpop.f32.mrb[0].mxu0
  %v967 = vadd.f32 %v634, %v966
  %v968 = vpop.f32.mrb[0].mxu0
  %v969 = vpop.f32.mrb[0].mxu0
  %v970 = vadd.f32 %v634, %v969
  %v971 = vpop.f32.mrb[0].mxu0
  %972 = vmatprep.mubr.bf16.mxu0 %v738
  %973 = vmatmul.mubr.bf16.gmra.mrb[0].mxu0 %v737
  %v974 = vpop.f32.mrb[0].mxu0
  %v975 = vadd.f32 %v634, %v974
  %v976 = vpop.f32.mrb[0].mxu0
  %v977 = vpop.f32.mrb[0].mxu0
  %v978 = vadd.f32 %v634, %v977
  %v979 = vpop.f32.mrb[0].mxu0
  %980 = vdwg.mxu0
  %981 = vmatprep.subr.bf16.mxu0 0
  %982 = vmatpush1.bf16.msra.mxu0 %v882
  %983 = vmatprep.subr.bf16.mxu0 0
  %984 = vmatpush1.bf16.msra.mxu0 0
  %985 = vmatprep.subr.bf16.mxu0 0
  %986 = vmatpush1.bf16.msra.mxu0 0
  %987 = vmatprep.subr.bf16.mxu0 0
  %988 = vmatpush1.bf16.msra.mxu0 0
  %989 = vmatprep.subr.bf16.mxu0 0
  %990 = vmatpush1.bf16.msra.mxu0 0
  %991 = vmatprep.subr.bf16.mxu0 0
  %992 = vmatpush1.bf16.msra.mxu0 0
  %993 = vmatprep.subr.bf16.mxu0 0
  %994 = vmatpush1.bf16.msra.mxu0 0
  %995 = vmatprep.subr.bf16.mxu0 0
  %996 = vmatpush1.bf16.msra.mxu0 0
  %997 = vmatprep.subr.bf16.mxu0 0
  %998 = vmatpush1.bf16.msra.mxu0 0
  %999 = vmatprep.subr.bf16.mxu0 0
  %1000 = vmatpush1.bf16.msra.mxu0 0
  %1001 = vmatprep.subr.bf16.mxu0 0
  %1002 = vmatpush1.bf16.msra.mxu0 0
  %1003 = vmatprep.subr.bf16.mxu0 0
  %1004 = vmatpush1.bf16.msra.mxu0 0
  %1005 = vmatprep.subr.bf16.mxu0 0
  %1006 = vmatpush1.bf16.msra.mxu0 0
  %1007 = vmatprep.subr.bf16.mxu0 0
  %1008 = vmatpush1.bf16.msra.mxu0 0
  %1009 = vmatprep.subr.bf16.mxu0 0
  %1010 = vmatpush1.bf16.msra.mxu0 0
  %1011 = vmatprep.subr.bf16.mxu0 0
  %1012 = vmatpush1.bf16.msra.mxu0 0
  %1013 = vmatprep.mubr.bf16.mxu0 0
  %1014 = vmatmul.mubr.bf16.gmra.mrb[0].mxu0 %v857
  %v1015 = vpop.f32.mrb[0].mxu0
  %v1016 = vadd.f32 %v919, %v1015
  %v1017 = vpop.f32.mrb[0].mxu0
  %v1018 = vpop.f32.mrb[0].mxu0
  %v1019 = vadd.f32 %v922, %v1018
  %v1020 = vpop.f32.mrb[0].mxu0
  %1021 = vmatprep.mubr.bf16.mxu0 0
  %1022 = vmatmul.mubr.bf16.gmra.mrb[0].mxu0 %v860
  %v1023 = vpop.f32.mrb[0].mxu0
  %v1024 = vadd.f32 %v927, %v1023
  %v1025 = vpop.f32.mrb[0].mxu0
  %v1026 = vpop.f32.mrb[0].mxu0
  %v1027 = vadd.f32 %v930, %v1026
  %v1028 = vpop.f32.mrb[0].mxu0
  %1029 = vmatprep.mubr.bf16.mxu0 0
  %1030 = vmatmul.mubr.bf16.gmra.mrb[0].mxu0 %v863
  %v1031 = vpop.f32.mrb[0].mxu0
  %v1032 = vadd.f32 %v935, %v1031
  %v1033 = vpop.f32.mrb[0].mxu0
  %v1034 = vpop.f32.mrb[0].mxu0
  %v1035 = vadd.f32 %v938, %v1034
  %v1036 = vpop.f32.mrb[0].mxu0
  %1037 = vmatprep.mubr.bf16.mxu0 0
  %1038 = vmatmul.mubr.bf16.gmra.mrb[0].mxu0 %v866
  %v1039 = vpop.f32.mrb[0].mxu0
  %v1040 = vadd.f32 %v943, %v1039
  %v1041 = vpop.f32.mrb[0].mxu0
  %v1042 = vpop.f32.mrb[0].mxu0
  %v1043 = vadd.f32 %v946, %v1042
  %v1044 = vpop.f32.mrb[0].mxu0
  %1045 = vmatprep.mubr.bf16.mxu0 0
  %1046 = vmatmul.mubr.bf16.gmra.mrb[0].mxu0 %v869
  %v1047 = vpop.f32.mrb[0].mxu0
  %v1048 = vadd.f32 %v951, %v1047
  %v1049 = vpop.f32.mrb[0].mxu0
  %v1050 = vpop.f32.mrb[0].mxu0
  %v1051 = vadd.f32 %v954, %v1050
  %v1052 = vpop.f32.mrb[0].mxu0
  %1053 = vmatprep.mubr.bf16.mxu0 0
  %1054 = vmatmul.mubr.bf16.gmra.mrb[0].mxu0 %v872
  %v1055 = vpop.f32.mrb[0].mxu0
  %v1056 = vadd.f32 %v959, %v1055
  %v1057 = vpop.f32.mrb[0].mxu0
  %v1058 = vpop.f32.mrb[0].mxu0
  %v1059 = vadd.f32 %v962, %v1058
  %v1060 = vpop.f32.mrb[0].mxu0
  %1061 = vmatprep.mubr.bf16.mxu0 0
  %1062 = vmatmul.mubr.bf16.gmra.mrb[0].mxu0 %v875
  %v1063 = vpop.f32.mrb[0].mxu0
  %v1064 = vadd.f32 %v967, %v1063
  %v1065 = vpop.f32.mrb[0].mxu0
  %v1066 = vpop.f32.mrb[0].mxu0
  %v1067 = vadd.f32 %v970, %v1066
  %v1068 = vpop.f32.mrb[0].mxu0
  %1069 = vmatprep.mubr.bf16.mxu0 0
  %1070 = vmatmul.mubr.bf16.gmra.mrb[0].mxu0 %v878
  %v1071 = vpop.f32.mrb[0].mxu0
  %v1072 = vadd.f32 %v975, %v1071
  %v1073 = vpop.f32.mrb[0].mxu0
  %v1074 = vpop.f32.mrb[0].mxu0
  %v1075 = vadd.f32 %v978, %v1074
  %v1076 = vpop.f32.mrb[0].mxu0
  %1077 = vdwg.mxu0
  %1079 = vset.pattern.permute.xlu0 0
  %1080 = vperm.xlu0 %1079, %v524
  %v1081 = vpop.permute.xlu0 %1080
  %1084 = vset.pattern.permute.xlu0 0
  %1085 = vperm.xlu0 %1084, %v531
  %v1086 = vpop.permute.xlu0 %1085
  %1089 = vset.pattern.permute.xlu0 0
  %1090 = vperm.xlu0 %1089, %v538
  %v1091 = vpop.permute.xlu0 %1090
  %1094 = vset.pattern.permute.xlu0 0
  %1095 = vperm.xlu0 %1094, %v545
  %v1096 = vpop.permute.xlu0 %1095
  %1099 = vset.pattern.permute.xlu0 0
  %1100 = vperm.xlu0 %1099, %v552
  %v1101 = vpop.permute.xlu0 %1100
  %1104 = vset.pattern.permute.xlu0 0
  %1105 = vperm.xlu0 %1104, %v559
  %v1106 = vpop.permute.xlu0 %1105
  %1109 = vset.pattern.permute.xlu0 0
  %1110 = vperm.xlu0 %1109, %v566
  %v1111 = vpop.permute.xlu0 %1110
  %1114 = vset.pattern.permute.xlu0 0
  %1115 = vperm.xlu0 %1114, %v573
  %v1116 = vpop.permute.xlu0 %1115
  %1119 = vset.pattern.permute.xlu0 0
  %1120 = vperm.xlu0 %1119, %v580
  %v1121 = vpop.permute.xlu0 %1120
  %1124 = vset.pattern.permute.xlu0 0
  %1125 = vperm.xlu0 %1124, %v587
  %v1126 = vpop.permute.xlu0 %1125
  %1129 = vset.pattern.permute.xlu0 0
  %1130 = vperm.xlu0 %1129, %v594
  %v1131 = vpop.permute.xlu0 %1130
  %1134 = vset.pattern.permute.xlu0 0
  %1135 = vperm.xlu0 %1134, %v601
  %v1136 = vpop.permute.xlu0 %1135
  %1139 = vset.pattern.permute.xlu0 0
  %1140 = vperm.xlu0 %1139, %v608
  %v1141 = vpop.permute.xlu0 %1140
  %1144 = vset.pattern.permute.xlu0 0
  %1145 = vperm.xlu0 %1144, %v615
  %v1146 = vpop.permute.xlu0 %1145
  %1149 = vset.pattern.permute.xlu0 0
  %1150 = vperm.xlu0 %1149, %v622
  %v1151 = vpop.permute.xlu0 %1150
  %1154 = vset.pattern.permute.xlu0 0
  %1155 = vperm.xlu0 %1154, %v629
  %v1156 = vpop.permute.xlu0 %1155
  %v1158 = vlaneseq
  %v1159 = vshrl.u32 %v1158, 7
  %v1160 = vsub.s32 0, %v1159
  %v1161 = vrot.slane %v140, %v1160
  %v1162 = vmul.f32 %v1081, %v1161
  %v1163 = vmul.f32 %v1086, %v1161
  %v1164 = vmul.f32 %v1091, %v1161
  %v1165 = vmul.f32 %v1096, %v1161
  %v1166 = vmul.f32 %v1101, %v1161
  %v1167 = vmul.f32 %v1106, %v1161
  %v1168 = vmul.f32 %v1111, %v1161
  %v1169 = vmul.f32 %v1116, %v1161
  %v1170 = vmul.f32 %v1121, %v1161
  %v1171 = vmul.f32 %v1126, %v1161
  %v1172 = vmul.f32 %v1131, %v1161
  %v1173 = vmul.f32 %v1136, %v1161
  %v1174 = vmul.f32 %v1141, %v1161
  %v1175 = vmul.f32 %v1146, %v1161
  %v1176 = vmul.f32 %v1151, %v1161
  %v1177 = vmul.f32 %v1156, %v1161
  %v1178 = vadd.f32 %v1016, %v1162
  %v1179 = vadd.f32 %v1019, %v1163
  %v1180 = vadd.f32 %v1024, %v1164
  %v1181 = vadd.f32 %v1027, %v1165
  %v1182 = vadd.f32 %v1032, %v1166
  %v1183 = vadd.f32 %v1035, %v1167
  %v1184 = vadd.f32 %v1040, %v1168
  %v1185 = vadd.f32 %v1043, %v1169
  %v1186 = vadd.f32 %v1048, %v1170
  %v1187 = vadd.f32 %v1051, %v1171
  %v1188 = vadd.f32 %v1056, %v1172
  %v1189 = vadd.f32 %v1059, %v1173
  %v1190 = vadd.f32 %v1064, %v1174
  %v1191 = vadd.f32 %v1067, %v1175
  %v1192 = vadd.f32 %v1072, %v1176
  %v1193 = vadd.f32 %v1075, %v1177
  %1194 = vset.pattern.permute.xlu0 1
  %1195 = vperm.xlu0 %1194, %v524
  %v1196 = vpop.permute.xlu0 %1195
  %1198 = vset.pattern.permute.xlu0 1
  %1199 = vperm.xlu0 %1198, %v531
  %v1200 = vpop.permute.xlu0 %1199
  %1202 = vset.pattern.permute.xlu0 1
  %1203 = vperm.xlu0 %1202, %v538
  %v1204 = vpop.permute.xlu0 %1203
  %1206 = vset.pattern.permute.xlu0 1
  %1207 = vperm.xlu0 %1206, %v545
  %v1208 = vpop.permute.xlu0 %1207
  %1210 = vset.pattern.permute.xlu0 1
  %1211 = vperm.xlu0 %1210, %v552
  %v1212 = vpop.permute.xlu0 %1211
  %1214 = vset.pattern.permute.xlu0 1
  %1215 = vperm.xlu0 %1214, %v559
  %v1216 = vpop.permute.xlu0 %1215
  %1218 = vset.pattern.permute.xlu0 1
  %1219 = vperm.xlu0 %1218, %v566
  %v1220 = vpop.permute.xlu0 %1219
  %1222 = vset.pattern.permute.xlu0 1
  %1223 = vperm.xlu0 %1222, %v573
  %v1224 = vpop.permute.xlu0 %1223
  %1226 = vset.pattern.permute.xlu0 1
  %1227 = vperm.xlu0 %1226, %v580
  %v1228 = vpop.permute.xlu0 %1227
  %1230 = vset.pattern.permute.xlu0 1
  %1231 = vperm.xlu0 %1230, %v587
  %v1232 = vpop.permute.xlu0 %1231
  %1234 = vset.pattern.permute.xlu0 1
  %1235 = vperm.xlu0 %1234, %v594
  %v1236 = vpop.permute.xlu0 %1235
  %1238 = vset.pattern.permute.xlu0 1
  %1239 = vperm.xlu0 %1238, %v601
  %v1240 = vpop.permute.xlu0 %1239
  %1242 = vset.pattern.permute.xlu0 1
  %1243 = vperm.xlu0 %1242, %v608
  %v1244 = vpop.permute.xlu0 %1243
  %1246 = vset.pattern.permute.xlu0 1
  %1247 = vperm.xlu0 %1246, %v615
  %v1248 = vpop.permute.xlu0 %1247
  %1250 = vset.pattern.permute.xlu0 1
  %1251 = vperm.xlu0 %1250, %v622
  %v1252 = vpop.permute.xlu0 %1251
  %1254 = vset.pattern.permute.xlu0 1
  %1255 = vperm.xlu0 %1254, %v629
  %v1256 = vpop.permute.xlu0 %1255
  %v1258 = vlaneseq
  %v1259 = vshrl.u32 %v1258, 7
  %v1260 = vsub.s32 1, %v1259
  %v1261 = vrot.slane %v140, %v1260
  %v1262 = vmul.f32 %v1196, %v1261
  %v1263 = vmul.f32 %v1200, %v1261
  %v1264 = vmul.f32 %v1204, %v1261
  %v1265 = vmul.f32 %v1208, %v1261
  %v1266 = vmul.f32 %v1212, %v1261
  %v1267 = vmul.f32 %v1216, %v1261
  %v1268 = vmul.f32 %v1220, %v1261
  %v1269 = vmul.f32 %v1224, %v1261
  %v1270 = vmul.f32 %v1228, %v1261
  %v1271 = vmul.f32 %v1232, %v1261
  %v1272 = vmul.f32 %v1236, %v1261
  %v1273 = vmul.f32 %v1240, %v1261
  %v1274 = vmul.f32 %v1244, %v1261
  %v1275 = vmul.f32 %v1248, %v1261
  %v1276 = vmul.f32 %v1252, %v1261
  %v1277 = vmul.f32 %v1256, %v1261
  %v1278 = vadd.f32 %v1178, %v1262
  %v1279 = vadd.f32 %v1179, %v1263
  %v1280 = vadd.f32 %v1180, %v1264
  %v1281 = vadd.f32 %v1181, %v1265
  %v1282 = vadd.f32 %v1182, %v1266
  %v1283 = vadd.f32 %v1183, %v1267
  %v1284 = vadd.f32 %v1184, %v1268
  %v1285 = vadd.f32 %v1185, %v1269
  %v1286 = vadd.f32 %v1186, %v1270
  %v1287 = vadd.f32 %v1187, %v1271
  %v1288 = vadd.f32 %v1188, %v1272
  %v1289 = vadd.f32 %v1189, %v1273
  %v1290 = vadd.f32 %v1190, %v1274
  %v1291 = vadd.f32 %v1191, %v1275
  %v1292 = vadd.f32 %v1192, %v1276
  %v1293 = vadd.f32 %v1193, %v1277
  %1294 = vset.pattern.permute.xlu0 2
  %1295 = vperm.xlu0 %1294, %v524
  %v1296 = vpop.permute.xlu0 %1295
  %1298 = vset.pattern.permute.xlu0 2
  %1299 = vperm.xlu0 %1298, %v531
  %v1300 = vpop.permute.xlu0 %1299
  %1302 = vset.pattern.permute.xlu0 2
  %1303 = vperm.xlu0 %1302, %v538
  %v1304 = vpop.permute.xlu0 %1303
  %1306 = vset.pattern.permute.xlu0 2
  %1307 = vperm.xlu0 %1306, %v545
  %v1308 = vpop.permute.xlu0 %1307
  %1310 = vset.pattern.permute.xlu0 2
  %1311 = vperm.xlu0 %1310, %v552
  %v1312 = vpop.permute.xlu0 %1311
  %1314 = vset.pattern.permute.xlu0 2
  %1315 = vperm.xlu0 %1314, %v559
  %v1316 = vpop.permute.xlu0 %1315
  %1318 = vset.pattern.permute.xlu0 2
  %1319 = vperm.xlu0 %1318, %v566
  %v1320 = vpop.permute.xlu0 %1319
  %1322 = vset.pattern.permute.xlu0 2
  %1323 = vperm.xlu0 %1322, %v573
  %v1324 = vpop.permute.xlu0 %1323
  %1326 = vset.pattern.permute.xlu0 2
  %1327 = vperm.xlu0 %1326, %v580
  %v1328 = vpop.permute.xlu0 %1327
  %1330 = vset.pattern.permute.xlu0 2
  %1331 = vperm.xlu0 %1330, %v587
  %v1332 = vpop.permute.xlu0 %1331
  %1334 = vset.pattern.permute.xlu0 2
  %1335 = vperm.xlu0 %1334, %v594
  %v1336 = vpop.permute.xlu0 %1335
  %1338 = vset.pattern.permute.xlu0 2
  %1339 = vperm.xlu0 %1338, %v601
  %v1340 = vpop.permute.xlu0 %1339
  %1342 = vset.pattern.permute.xlu0 2
  %1343 = vperm.xlu0 %1342, %v608
  %v1344 = vpop.permute.xlu0 %1343
  %1346 = vset.pattern.permute.xlu0 2
  %1347 = vperm.xlu0 %1346, %v615
  %v1348 = vpop.permute.xlu0 %1347
  %1350 = vset.pattern.permute.xlu0 2
  %1351 = vperm.xlu0 %1350, %v622
  %v1352 = vpop.permute.xlu0 %1351
  %1354 = vset.pattern.permute.xlu0 2
  %1355 = vperm.xlu0 %1354, %v629
  %v1356 = vpop.permute.xlu0 %1355
  %v1358 = vlaneseq
  %v1359 = vshrl.u32 %v1358, 7
  %v1360 = vsub.s32 2, %v1359
  %v1361 = vrot.slane %v140, %v1360
  %v1362 = vmul.f32 %v1296, %v1361
  %v1363 = vmul.f32 %v1300, %v1361
  %v1364 = vmul.f32 %v1304, %v1361
  %v1365 = vmul.f32 %v1308, %v1361
  %v1366 = vmul.f32 %v1312, %v1361
  %v1367 = vmul.f32 %v1316, %v1361
  %v1368 = vmul.f32 %v1320, %v1361
  %v1369 = vmul.f32 %v1324, %v1361
  %v1370 = vmul.f32 %v1328, %v1361
  %v1371 = vmul.f32 %v1332, %v1361
  %v1372 = vmul.f32 %v1336, %v1361
  %v1373 = vmul.f32 %v1340, %v1361
  %v1374 = vmul.f32 %v1344, %v1361
  %v1375 = vmul.f32 %v1348, %v1361
  %v1376 = vmul.f32 %v1352, %v1361
  %v1377 = vmul.f32 %v1356, %v1361
  %v1378 = vadd.f32 %v1278, %v1362
  %v1379 = vadd.f32 %v1279, %v1363
  %v1380 = vadd.f32 %v1280, %v1364
  %v1381 = vadd.f32 %v1281, %v1365
  %v1382 = vadd.f32 %v1282, %v1366
  %v1383 = vadd.f32 %v1283, %v1367
  %v1384 = vadd.f32 %v1284, %v1368
  %v1385 = vadd.f32 %v1285, %v1369
  %v1386 = vadd.f32 %v1286, %v1370
  %v1387 = vadd.f32 %v1287, %v1371
  %v1388 = vadd.f32 %v1288, %v1372
  %v1389 = vadd.f32 %v1289, %v1373
  %v1390 = vadd.f32 %v1290, %v1374
  %v1391 = vadd.f32 %v1291, %v1375
  %v1392 = vadd.f32 %v1292, %v1376
  %v1393 = vadd.f32 %v1293, %v1377
  %1394 = vset.pattern.permute.xlu0 3
  %1395 = vperm.xlu0 %1394, %v524
  %v1396 = vpop.permute.xlu0 %1395
  %1398 = vset.pattern.permute.xlu0 3
  %1399 = vperm.xlu0 %1398, %v531
  %v1400 = vpop.permute.xlu0 %1399
  %1402 = vset.pattern.permute.xlu0 3
  %1403 = vperm.xlu0 %1402, %v538
  %v1404 = vpop.permute.xlu0 %1403
  %1406 = vset.pattern.permute.xlu0 3
  %1407 = vperm.xlu0 %1406, %v545
  %v1408 = vpop.permute.xlu0 %1407
  %1410 = vset.pattern.permute.xlu0 3
  %1411 = vperm.xlu0 %1410, %v552
  %v1412 = vpop.permute.xlu0 %1411
  %1414 = vset.pattern.permute.xlu0 3
  %1415 = vperm.xlu0 %1414, %v559
  %v1416 = vpop.permute.xlu0 %1415
  %1418 = vset.pattern.permute.xlu0 3
  %1419 = vperm.xlu0 %1418, %v566
  %v1420 = vpop.permute.xlu0 %1419
  %1422 = vset.pattern.permute.xlu0 3
  %1423 = vperm.xlu0 %1422, %v573
  %v1424 = vpop.permute.xlu0 %1423
  %1426 = vset.pattern.permute.xlu0 3
  %1427 = vperm.xlu0 %1426, %v580
  %v1428 = vpop.permute.xlu0 %1427
  %1430 = vset.pattern.permute.xlu0 3
  %1431 = vperm.xlu0 %1430, %v587
  %v1432 = vpop.permute.xlu0 %1431
  %1434 = vset.pattern.permute.xlu0 3
  %1435 = vperm.xlu0 %1434, %v594
  %v1436 = vpop.permute.xlu0 %1435
  %1438 = vset.pattern.permute.xlu0 3
  %1439 = vperm.xlu0 %1438, %v601
  %v1440 = vpop.permute.xlu0 %1439
  %1442 = vset.pattern.permute.xlu0 3
  %1443 = vperm.xlu0 %1442, %v608
  %v1444 = vpop.permute.xlu0 %1443
  %1446 = vset.pattern.permute.xlu0 3
  %1447 = vperm.xlu0 %1446, %v615
  %v1448 = vpop.permute.xlu0 %1447
  %1450 = vset.pattern.permute.xlu0 3
  %1451 = vperm.xlu0 %1450, %v622
  %v1452 = vpop.permute.xlu0 %1451
  %1454 = vset.pattern.permute.xlu0 3
  %1455 = vperm.xlu0 %1454, %v629
  %v1456 = vpop.permute.xlu0 %1455
  %v1458 = vlaneseq
  %v1459 = vshrl.u32 %v1458, 7
  %v1460 = vsub.s32 3, %v1459
  %v1461 = vrot.slane %v140, %v1460
  %v1462 = vmul.f32 %v1396, %v1461
  %v1463 = vmul.f32 %v1400, %v1461
  %v1464 = vmul.f32 %v1404, %v1461
  %v1465 = vmul.f32 %v1408, %v1461
  %v1466 = vmul.f32 %v1412, %v1461
  %v1467 = vmul.f32 %v1416, %v1461
  %v1468 = vmul.f32 %v1420, %v1461
  %v1469 = vmul.f32 %v1424, %v1461
  %v1470 = vmul.f32 %v1428, %v1461
  %v1471 = vmul.f32 %v1432, %v1461
  %v1472 = vmul.f32 %v1436, %v1461
  %v1473 = vmul.f32 %v1440, %v1461
  %v1474 = vmul.f32 %v1444, %v1461
  %v1475 = vmul.f32 %v1448, %v1461
  %v1476 = vmul.f32 %v1452, %v1461
  %v1477 = vmul.f32 %v1456, %v1461
  %v1478 = vadd.f32 %v1378, %v1462
  %v1479 = vadd.f32 %v1379, %v1463
  %v1480 = vadd.f32 %v1380, %v1464
  %v1481 = vadd.f32 %v1381, %v1465
  %v1482 = vadd.f32 %v1382, %v1466
  %v1483 = vadd.f32 %v1383, %v1467
  %v1484 = vadd.f32 %v1384, %v1468
  %v1485 = vadd.f32 %v1385, %v1469
  %v1486 = vadd.f32 %v1386, %v1470
  %v1487 = vadd.f32 %v1387, %v1471
  %v1488 = vadd.f32 %v1388, %v1472
  %v1489 = vadd.f32 %v1389, %v1473
  %v1490 = vadd.f32 %v1390, %v1474
  %v1491 = vadd.f32 %v1391, %v1475
  %v1492 = vadd.f32 %v1392, %v1476
  %v1493 = vadd.f32 %v1393, %v1477
  %1494 = vset.pattern.permute.xlu0 4
  %1495 = vperm.xlu0 %1494, %v524
  %v1496 = vpop.permute.xlu0 %1495
  %1498 = vset.pattern.permute.xlu0 4
  %1499 = vperm.xlu0 %1498, %v531
  %v1500 = vpop.permute.xlu0 %1499
  %1502 = vset.pattern.permute.xlu0 4
  %1503 = vperm.xlu0 %1502, %v538
  %v1504 = vpop.permute.xlu0 %1503
  %1506 = vset.pattern.permute.xlu0 4
  %1507 = vperm.xlu0 %1506, %v545
  %v1508 = vpop.permute.xlu0 %1507
  %1510 = vset.pattern.permute.xlu0 4
  %1511 = vperm.xlu0 %1510, %v552
  %v1512 = vpop.permute.xlu0 %1511
  %1514 = vset.pattern.permute.xlu0 4
  %1515 = vperm.xlu0 %1514, %v559
  %v1516 = vpop.permute.xlu0 %1515
  %1518 = vset.pattern.permute.xlu0 4
  %1519 = vperm.xlu0 %1518, %v566
  %v1520 = vpop.permute.xlu0 %1519
  %1522 = vset.pattern.permute.xlu0 4
  %1523 = vperm.xlu0 %1522, %v573
  %v1524 = vpop.permute.xlu0 %1523
  %1526 = vset.pattern.permute.xlu0 4
  %1527 = vperm.xlu0 %1526, %v580
  %v1528 = vpop.permute.xlu0 %1527
  %1530 = vset.pattern.permute.xlu0 4
  %1531 = vperm.xlu0 %1530, %v587
  %v1532 = vpop.permute.xlu0 %1531
  %1534 = vset.pattern.permute.xlu0 4
  %1535 = vperm.xlu0 %1534, %v594
  %v1536 = vpop.permute.xlu0 %1535
  %1538 = vset.pattern.permute.xlu0 4
  %1539 = vperm.xlu0 %1538, %v601
  %v1540 = vpop.permute.xlu0 %1539
  %1542 = vset.pattern.permute.xlu0 4
  %1543 = vperm.xlu0 %1542, %v608
  %v1544 = vpop.permute.xlu0 %1543
  %1546 = vset.pattern.permute.xlu0 4
  %1547 = vperm.xlu0 %1546, %v615
  %v1548 = vpop.permute.xlu0 %1547
  %1550 = vset.pattern.permute.xlu0 4
  %1551 = vperm.xlu0 %1550, %v622
  %v1552 = vpop.permute.xlu0 %1551
  %1554 = vset.pattern.permute.xlu0 4
  %1555 = vperm.xlu0 %1554, %v629
  %v1556 = vpop.permute.xlu0 %1555
  %v1558 = vlaneseq
  %v1559 = vshrl.u32 %v1558, 7
  %v1560 = vsub.s32 4, %v1559
  %v1561 = vrot.slane %v140, %v1560
  %v1562 = vmul.f32 %v1496, %v1561
  %v1563 = vmul.f32 %v1500, %v1561
  %v1564 = vmul.f32 %v1504, %v1561
  %v1565 = vmul.f32 %v1508, %v1561
  %v1566 = vmul.f32 %v1512, %v1561
  %v1567 = vmul.f32 %v1516, %v1561
  %v1568 = vmul.f32 %v1520, %v1561
  %v1569 = vmul.f32 %v1524, %v1561
  %v1570 = vmul.f32 %v1528, %v1561
  %v1571 = vmul.f32 %v1532, %v1561
  %v1572 = vmul.f32 %v1536, %v1561
  %v1573 = vmul.f32 %v1540, %v1561
  %v1574 = vmul.f32 %v1544, %v1561
  %v1575 = vmul.f32 %v1548, %v1561
  %v1576 = vmul.f32 %v1552, %v1561
  %v1577 = vmul.f32 %v1556, %v1561
  %v1578 = vadd.f32 %v1478, %v1562
  %v1579 = vadd.f32 %v1479, %v1563
  %v1580 = vadd.f32 %v1480, %v1564
  %v1581 = vadd.f32 %v1481, %v1565
  %v1582 = vadd.f32 %v1482, %v1566
  %v1583 = vadd.f32 %v1483, %v1567
  %v1584 = vadd.f32 %v1484, %v1568
  %v1585 = vadd.f32 %v1485, %v1569
  %v1586 = vadd.f32 %v1486, %v1570
  %v1587 = vadd.f32 %v1487, %v1571
  %v1588 = vadd.f32 %v1488, %v1572
  %v1589 = vadd.f32 %v1489, %v1573
  %v1590 = vadd.f32 %v1490, %v1574
  %v1591 = vadd.f32 %v1491, %v1575
  %v1592 = vadd.f32 %v1492, %v1576
  %v1593 = vadd.f32 %v1493, %v1577
  %v1594 = vmax.f32 %v1578, 0.0
  %v1595 = vmax.f32 %v1579, 0.0
  %v1596 = vmax.f32 %v1580, 0.0
  %v1597 = vmax.f32 %v1581, 0.0
  %v1598 = vmax.f32 %v1582, 0.0
  %v1599 = vmax.f32 %v1583, 0.0
  %v1600 = vmax.f32 %v1584, 0.0
  %v1601 = vmax.f32 %v1585, 0.0
  %v1602 = vmax.f32 %v1586, 0.0
  %v1603 = vmax.f32 %v1587, 0.0
  %v1604 = vmax.f32 %v1588, 0.0
  %v1605 = vmax.f32 %v1589, 0.0
  %v1606 = vmax.f32 %v1590, 0.0
  %v1607 = vmax.f32 %v1591, 0.0
  %v1608 = vmax.f32 %v1592, 0.0
  %v1609 = vmax.f32 %v1593, 0.0
  %v1611 = vsel %vm144, %v264, 0
  %v1614 = vsel %vm144, %v269, 0
  %v1617 = vsel %vm144, %v274, 0
  %v1620 = vsel %vm144, %v279, 0
  %v1623 = vsel %vm144, %v284, 0
  %v1626 = vsel %vm144, %v289, 0
  %v1629 = vsel %vm144, %v294, 0
  %v1632 = vsel %vm144, %v299, 0
  %v1635 = vsel %vm144, %v304, 0
  %v1638 = vsel %vm144, %v309, 0
  %v1641 = vsel %vm144, %v314, 0
  %v1644 = vsel %vm144, %v319, 0
  %v1647 = vsel %vm144, %v324, 0
  %v1650 = vsel %vm144, %v329, 0
  %v1653 = vsel %vm144, %v334, 0
  %v1656 = vsel %vm144, %v339, 0
  %v1659 = vsel %vm193, %v143, 0
  %1661 = vmatprep.subr.mxu0 0.0
  %1662 = vmatpush1.msra.mxu0 %v142
  %1663 = vmatprep.subr.mxu0 0.0
  %1664 = vmatpush1.msra.mxu0 %v1659
  %1665 = vmatprep.subr.mxu0 0.0
  %1666 = vmatpush1.msra.mxu0 0.0
  %1667 = vmatprep.subr.mxu0 0.0
  %1668 = vmatpush1.msra.mxu0 0.0
  %1669 = vmatprep.subr.mxu0 0.0
  %1670 = vmatpush1.msra.mxu0 0.0
  %1671 = vmatprep.subr.mxu0 0.0
  %1672 = vmatpush1.msra.mxu0 0.0
  %1673 = vmatprep.subr.mxu0 0.0
  %1674 = vmatpush1.msra.mxu0 0.0
  %1675 = vmatprep.subr.mxu0 0.0
  %1676 = vmatpush1.msra.mxu0 0.0
  %1677 = vmatprep.subr.mxu0 0.0
  %1678 = vmatpush1.msra.mxu0 0.0
  %1679 = vmatprep.subr.mxu0 0.0
  %1680 = vmatpush1.msra.mxu0 0.0
  %1681 = vmatprep.subr.mxu0 0.0
  %1682 = vmatpush1.msra.mxu0 0.0
  %1683 = vmatprep.subr.mxu0 0.0
  %1684 = vmatpush1.msra.mxu0 0.0
  %1685 = vmatprep.subr.mxu0 0.0
  %1686 = vmatpush1.msra.mxu0 0.0
  %1687 = vmatprep.subr.mxu0 0.0
  %1688 = vmatpush1.msra.mxu0 0.0
  %1689 = vmatprep.subr.mxu0 0.0
  %1690 = vmatpush1.msra.mxu0 0.0
  %1691 = vmatprep.subr.mxu0 0.0
  %1692 = vmatpush1.msra.mxu0 0.0
  %1693 = vmatprep.subr.mxu0 0.0
  %1694 = vmatpush1.msra.mxu0 0.0
  %1695 = vmatprep.subr.mxu0 0.0
  %1696 = vmatpush1.msra.mxu0 0.0
  %1697 = vmatprep.subr.mxu0 0.0
  %1698 = vmatpush1.msra.mxu0 0.0
  %1699 = vmatprep.subr.mxu0 0.0
  %1700 = vmatpush1.msra.mxu0 0.0
  %1701 = vmatprep.subr.mxu0 0.0
  %1702 = vmatpush1.msra.mxu0 0.0
  %1703 = vmatprep.subr.mxu0 0.0
  %1704 = vmatpush1.msra.mxu0 0.0
  %1705 = vmatprep.subr.mxu0 0.0
  %1706 = vmatpush1.msra.mxu0 0.0
  %1707 = vmatprep.subr.mxu0 0.0
  %1708 = vmatpush1.msra.mxu0 0.0
  %1709 = vmatprep.subr.mxu0 0.0
  %1710 = vmatpush1.msra.mxu0 0.0
  %1711 = vmatprep.subr.mxu0 0.0
  %1712 = vmatpush1.msra.mxu0 0.0
  %1713 = vmatprep.subr.mxu0 0.0
  %1714 = vmatpush1.msra.mxu0 0.0
  %1715 = vmatprep.subr.mxu0 0.0
  %1716 = vmatpush1.msra.mxu0 0.0
  %1717 = vmatprep.subr.mxu0 0.0
  %1718 = vmatpush1.msra.mxu0 0.0
  %1719 = vmatprep.subr.mxu0 0.0
  %1720 = vmatpush1.msra.mxu0 0.0
  %1721 = vmatprep.subr.mxu0 0.0
  %1722 = vmatpush1.msra.mxu0 0.0
  %1723 = vmatprep.subr.mxu0 0.0
  %1724 = vmatpush1.msra.mxu0 0.0
  %1725 = vmatprep.mubr.f32.mxu0 0.0
  %1726 = vmatmul.mubr.f32.gmra.mrb[0].mxu0 %v1611
  %v1727 = vpop.f32.mrb[0].mxu0
  %v1728 = vadd.f32 0.0, %v1727
  %v1729 = vpop.f32.mrb[0].mxu0
  %1730 = vmatprep.mubr.f32.mxu0 0.0
  %1731 = vmatmul.mubr.f32.gmra.mrb[0].mxu0 %v1614
  %v1732 = vpop.f32.mrb[0].mxu0
  %v1733 = vadd.f32 0.0, %v1732
  %v1734 = vpop.f32.mrb[0].mxu0
  %1735 = vmatprep.mubr.f32.mxu0 0.0
  %1736 = vmatmul.mubr.f32.gmra.mrb[0].mxu0 %v1617
  %v1737 = vpop.f32.mrb[0].mxu0
  %v1738 = vadd.f32 0.0, %v1737
  %v1739 = vpop.f32.mrb[0].mxu0
  %1740 = vmatprep.mubr.f32.mxu0 0.0
  %1741 = vmatmul.mubr.f32.gmra.mrb[0].mxu0 %v1620
  %v1742 = vpop.f32.mrb[0].mxu0
  %v1743 = vadd.f32 0.0, %v1742
  %v1744 = vpop.f32.mrb[0].mxu0
  %1745 = vmatprep.mubr.f32.mxu0 0.0
  %1746 = vmatmul.mubr.f32.gmra.mrb[0].mxu0 %v1623
  %v1747 = vpop.f32.mrb[0].mxu0
  %v1748 = vadd.f32 0.0, %v1747
  %v1749 = vpop.f32.mrb[0].mxu0
  %1750 = vmatprep.mubr.f32.mxu0 0.0
  %1751 = vmatmul.mubr.f32.gmra.mrb[0].mxu0 %v1626
  %v1752 = vpop.f32.mrb[0].mxu0
  %v1753 = vadd.f32 0.0, %v1752
  %v1754 = vpop.f32.mrb[0].mxu0
  %1755 = vmatprep.mubr.f32.mxu0 0.0
  %1756 = vmatmul.mubr.f32.gmra.mrb[0].mxu0 %v1629
  %v1757 = vpop.f32.mrb[0].mxu0
  %v1758 = vadd.f32 0.0, %v1757
  %v1759 = vpop.f32.mrb[0].mxu0
  %1760 = vmatprep.mubr.f32.mxu0 0.0
  %1761 = vmatmul.mubr.f32.gmra.mrb[0].mxu0 %v1632
  %v1762 = vpop.f32.mrb[0].mxu0
  %v1763 = vadd.f32 0.0, %v1762
  %v1764 = vpop.f32.mrb[0].mxu0
  %1765 = vmatprep.mubr.f32.mxu0 0.0
  %1766 = vmatmul.mubr.f32.gmra.mrb[0].mxu0 %v1635
  %v1767 = vpop.f32.mrb[0].mxu0
  %v1768 = vadd.f32 0.0, %v1767
  %v1769 = vpop.f32.mrb[0].mxu0
  %1770 = vmatprep.mubr.f32.mxu0 0.0
  %1771 = vmatmul.mubr.f32.gmra.mrb[0].mxu0 %v1638
  %v1772 = vpop.f32.mrb[0].mxu0
  %v1773 = vadd.f32 0.0, %v1772
  %v1774 = vpop.f32.mrb[0].mxu0
  %1775 = vmatprep.mubr.f32.mxu0 0.0
  %1776 = vmatmul.mubr.f32.gmra.mrb[0].mxu0 %v1641
  %v1777 = vpop.f32.mrb[0].mxu0
  %v1778 = vadd.f32 0.0, %v1777
  %v1779 = vpop.f32.mrb[0].mxu0
  %1780 = vmatprep.mubr.f32.mxu0 0.0
  %1781 = vmatmul.mubr.f32.gmra.mrb[0].mxu0 %v1644
  %v1782 = vpop.f32.mrb[0].mxu0
  %v1783 = vadd.f32 0.0, %v1782
  %v1784 = vpop.f32.mrb[0].mxu0
  %1785 = vmatprep.mubr.f32.mxu0 0.0
  %1786 = vmatmul.mubr.f32.gmra.mrb[0].mxu0 %v1647
  %v1787 = vpop.f32.mrb[0].mxu0
  %v1788 = vadd.f32 0.0, %v1787
  %v1789 = vpop.f32.mrb[0].mxu0
  %1790 = vmatprep.mubr.f32.mxu0 0.0
  %1791 = vmatmul.mubr.f32.gmra.mrb[0].mxu0 %v1650
  %v1792 = vpop.f32.mrb[0].mxu0
  %v1793 = vadd.f32 0.0, %v1792
  %v1794 = vpop.f32.mrb[0].mxu0
  %1795 = vmatprep.mubr.f32.mxu0 0.0
  %1796 = vmatmul.mubr.f32.gmra.mrb[0].mxu0 %v1653
  %v1797 = vpop.f32.mrb[0].mxu0
  %v1798 = vadd.f32 0.0, %v1797
  %v1799 = vpop.f32.mrb[0].mxu0
  %1800 = vmatprep.mubr.f32.mxu0 0.0
  %1801 = vmatmul.mubr.f32.gmra.mrb[0].mxu0 %v1656
  %v1802 = vpop.f32.mrb[0].mxu0
  %v1803 = vadd.f32 0.0, %v1802
  %v1804 = vpop.f32.mrb[0].mxu0
  %1805 = vdwg.mxu0
  %v1806 = vmul.f32 %v1728, %v1728
  %v1807 = vmul.f32 %v1733, %v1733
  %v1808 = vmul.f32 %v1738, %v1738
  %v1809 = vmul.f32 %v1743, %v1743
  %v1810 = vmul.f32 %v1748, %v1748
  %v1811 = vmul.f32 %v1753, %v1753
  %v1812 = vmul.f32 %v1758, %v1758
  %v1813 = vmul.f32 %v1763, %v1763
  %v1814 = vmul.f32 %v1768, %v1768
  %v1815 = vmul.f32 %v1773, %v1773
  %v1816 = vmul.f32 %v1778, %v1778
  %v1817 = vmul.f32 %v1783, %v1783
  %v1818 = vmul.f32 %v1788, %v1788
  %v1819 = vmul.f32 %v1793, %v1793
  %v1820 = vmul.f32 %v1798, %v1798
  %v1821 = vmul.f32 %v1803, %v1803
  %1838 = vrot.lane.b32.xlu0 %v1806, 126
  %v1839 = vpop.permute.xlu0 %1838
  %1840 = vrot.lane.b32.xlu0 %v1807, 126
  %v1841 = vpop.permute.xlu0 %1840
  %1842 = vrot.lane.b32.xlu0 %v1808, 126
  %v1843 = vpop.permute.xlu0 %1842
  %1844 = vrot.lane.b32.xlu0 %v1809, 126
  %v1845 = vpop.permute.xlu0 %1844
  %1846 = vrot.lane.b32.xlu0 %v1810, 126
  %v1847 = vpop.permute.xlu0 %1846
  %1848 = vrot.lane.b32.xlu0 %v1811, 126
  %v1849 = vpop.permute.xlu0 %1848
  %1850 = vrot.lane.b32.xlu0 %v1812, 126
  %v1851 = vpop.permute.xlu0 %1850
  %1852 = vrot.lane.b32.xlu0 %v1813, 126
  %v1853 = vpop.permute.xlu0 %1852
  %1854 = vrot.lane.b32.xlu0 %v1814, 126
  %v1855 = vpop.permute.xlu0 %1854
  %1856 = vrot.lane.b32.xlu0 %v1815, 126
  %v1857 = vpop.permute.xlu0 %1856
  %1858 = vrot.lane.b32.xlu0 %v1816, 126
  %v1859 = vpop.permute.xlu0 %1858
  %1860 = vrot.lane.b32.xlu0 %v1817, 126
  %v1861 = vpop.permute.xlu0 %1860
  %1862 = vrot.lane.b32.xlu0 %v1818, 126
  %v1863 = vpop.permute.xlu0 %1862
  %1864 = vrot.lane.b32.xlu0 %v1819, 126
  %v1865 = vpop.permute.xlu0 %1864
  %1866 = vrot.lane.b32.xlu0 %v1820, 126
  %v1867 = vpop.permute.xlu0 %1866
  %1868 = vrot.lane.b32.xlu0 %v1821, 126
  %v1869 = vpop.permute.xlu0 %1868
  %v1886 = vadd.f32 %v1806, %v1839
  %v1887 = vadd.f32 %v1807, %v1841
  %v1888 = vadd.f32 %v1808, %v1843
  %v1889 = vadd.f32 %v1809, %v1845
  %v1890 = vadd.f32 %v1810, %v1847
  %v1891 = vadd.f32 %v1811, %v1849
  %v1892 = vadd.f32 %v1812, %v1851
  %v1893 = vadd.f32 %v1813, %v1853
  %v1894 = vadd.f32 %v1814, %v1855
  %v1895 = vadd.f32 %v1815, %v1857
  %v1896 = vadd.f32 %v1816, %v1859
  %v1897 = vadd.f32 %v1817, %v1861
  %v1898 = vadd.f32 %v1818, %v1863
  %v1899 = vadd.f32 %v1819, %v1865
  %v1900 = vadd.f32 %v1820, %v1867
  %v1901 = vadd.f32 %v1821, %v1869
  %1902 = vrot.lane.b32.xlu0 %v1806, 124
  %v1903 = vpop.permute.xlu0 %1902
  %1904 = vrot.lane.b32.xlu0 %v1807, 124
  %v1905 = vpop.permute.xlu0 %1904
  %1906 = vrot.lane.b32.xlu0 %v1808, 124
  %v1907 = vpop.permute.xlu0 %1906
  %1908 = vrot.lane.b32.xlu0 %v1809, 124
  %v1909 = vpop.permute.xlu0 %1908
  %1910 = vrot.lane.b32.xlu0 %v1810, 124
  %v1911 = vpop.permute.xlu0 %1910
  %1912 = vrot.lane.b32.xlu0 %v1811, 124
  %v1913 = vpop.permute.xlu0 %1912
  %1914 = vrot.lane.b32.xlu0 %v1812, 124
  %v1915 = vpop.permute.xlu0 %1914
  %1916 = vrot.lane.b32.xlu0 %v1813, 124
  %v1917 = vpop.permute.xlu0 %1916
  %1918 = vrot.lane.b32.xlu0 %v1814, 124
  %v1919 = vpop.permute.xlu0 %1918
  %1920 = vrot.lane.b32.xlu0 %v1815, 124
  %v1921 = vpop.permute.xlu0 %1920
  %1922 = vrot.lane.b32.xlu0 %v1816, 124
  %v1923 = vpop.permute.xlu0 %1922
  %1924 = vrot.lane.b32.xlu0 %v1817, 124
  %v1925 = vpop.permute.xlu0 %1924
  %1926 = vrot.lane.b32.xlu0 %v1818, 124
  %v1927 = vpop.permute.xlu0 %1926
  %1928 = vrot.lane.b32.xlu0 %v1819, 124
  %v1929 = vpop.permute.xlu0 %1928
  %1930 = vrot.lane.b32.xlu0 %v1820, 124
  %v1931 = vpop.permute.xlu0 %1930
  %1932 = vrot.lane.b32.xlu0 %v1821, 124
  %v1933 = vpop.permute.xlu0 %1932
  %v1950 = vadd.f32 %v1886, %v1903
  %v1951 = vadd.f32 %v1887, %v1905
  %v1952 = vadd.f32 %v1888, %v1907
  %v1953 = vadd.f32 %v1889, %v1909
  %v1954 = vadd.f32 %v1890, %v1911
  %v1955 = vadd.f32 %v1891, %v1913
  %v1956 = vadd.f32 %v1892, %v1915
  %v1957 = vadd.f32 %v1893, %v1917
  %v1958 = vadd.f32 %v1894, %v1919
  %v1959 = vadd.f32 %v1895, %v1921
  %v1960 = vadd.f32 %v1896, %v1923
  %v1961 = vadd.f32 %v1897, %v1925
  %v1962 = vadd.f32 %v1898, %v1927
  %v1963 = vadd.f32 %v1899, %v1929
  %v1964 = vadd.f32 %v1900, %v1931
  %v1965 = vadd.f32 %v1901, %v1933
  %v1966 = vmax.f32 %v1950, 1e-08
  %v1967 = vmax.f32 %v1951, 1e-08
  %v1968 = vmax.f32 %v1952, 1e-08
  %v1969 = vmax.f32 %v1953, 1e-08
  %v1970 = vmax.f32 %v1954, 1e-08
  %v1971 = vmax.f32 %v1955, 1e-08
  %v1972 = vmax.f32 %v1956, 1e-08
  %v1973 = vmax.f32 %v1957, 1e-08
  %v1974 = vmax.f32 %v1958, 1e-08
  %v1975 = vmax.f32 %v1959, 1e-08
  %v1976 = vmax.f32 %v1960, 1e-08
  %v1977 = vmax.f32 %v1961, 1e-08
  %v1978 = vmax.f32 %v1962, 1e-08
  %v1979 = vmax.f32 %v1963, 1e-08
  %v1980 = vmax.f32 %v1964, 1e-08
  %v1981 = vmax.f32 %v1965, 1e-08
  %v1982 = vrsqrt.pop %v1966
  %v1983 = vmul.f32 %v1966, %v1982
  %vm1984 = vcmp.eq.f32.partialorder %v1966, inf
  %v1985 = vsel %vm1984, %v1966, %v1983
  %vm1986 = vcmp.eq.f32.partialorder %v1966, 0.0
  %v1987 = vand.u32 %v1966, 2147483648
  %v1988 = vsel %vm1986, %v1987, %v1985
  %v1989 = vrsqrt.pop %v1967
  %v1990 = vmul.f32 %v1967, %v1989
  %vm1991 = vcmp.eq.f32.partialorder %v1967, inf
  %v1992 = vsel %vm1991, %v1967, %v1990
  %vm1993 = vcmp.eq.f32.partialorder %v1967, 0.0
  %v1994 = vand.u32 %v1967, 2147483648
  %v1995 = vsel %vm1993, %v1994, %v1992
  %v1996 = vrsqrt.pop %v1968
  %v1997 = vmul.f32 %v1968, %v1996
  %vm1998 = vcmp.eq.f32.partialorder %v1968, inf
  %v1999 = vsel %vm1998, %v1968, %v1997
  %vm2000 = vcmp.eq.f32.partialorder %v1968, 0.0
  %v2001 = vand.u32 %v1968, 2147483648
  %v2002 = vsel %vm2000, %v2001, %v1999
  %v2003 = vrsqrt.pop %v1969
  %v2004 = vmul.f32 %v1969, %v2003
  %vm2005 = vcmp.eq.f32.partialorder %v1969, inf
  %v2006 = vsel %vm2005, %v1969, %v2004
  %vm2007 = vcmp.eq.f32.partialorder %v1969, 0.0
  %v2008 = vand.u32 %v1969, 2147483648
  %v2009 = vsel %vm2007, %v2008, %v2006
  %v2010 = vrsqrt.pop %v1970
  %v2011 = vmul.f32 %v1970, %v2010
  %vm2012 = vcmp.eq.f32.partialorder %v1970, inf
  %v2013 = vsel %vm2012, %v1970, %v2011
  %vm2014 = vcmp.eq.f32.partialorder %v1970, 0.0
  %v2015 = vand.u32 %v1970, 2147483648
  %v2016 = vsel %vm2014, %v2015, %v2013
  %v2017 = vrsqrt.pop %v1971
  %v2018 = vmul.f32 %v1971, %v2017
  %vm2019 = vcmp.eq.f32.partialorder %v1971, inf
  %v2020 = vsel %vm2019, %v1971, %v2018
  %vm2021 = vcmp.eq.f32.partialorder %v1971, 0.0
  %v2022 = vand.u32 %v1971, 2147483648
  %v2023 = vsel %vm2021, %v2022, %v2020
  %v2024 = vrsqrt.pop %v1972
  %v2025 = vmul.f32 %v1972, %v2024
  %vm2026 = vcmp.eq.f32.partialorder %v1972, inf
  %v2027 = vsel %vm2026, %v1972, %v2025
  %vm2028 = vcmp.eq.f32.partialorder %v1972, 0.0
  %v2029 = vand.u32 %v1972, 2147483648
  %v2030 = vsel %vm2028, %v2029, %v2027
  %v2031 = vrsqrt.pop %v1973
  %v2032 = vmul.f32 %v1973, %v2031
  %vm2033 = vcmp.eq.f32.partialorder %v1973, inf
  %v2034 = vsel %vm2033, %v1973, %v2032
  %vm2035 = vcmp.eq.f32.partialorder %v1973, 0.0
  %v2036 = vand.u32 %v1973, 2147483648
  %v2037 = vsel %vm2035, %v2036, %v2034
  %v2038 = vrsqrt.pop %v1974
  %v2039 = vmul.f32 %v1974, %v2038
  %vm2040 = vcmp.eq.f32.partialorder %v1974, inf
  %v2041 = vsel %vm2040, %v1974, %v2039
  %vm2042 = vcmp.eq.f32.partialorder %v1974, 0.0
  %v2043 = vand.u32 %v1974, 2147483648
  %v2044 = vsel %vm2042, %v2043, %v2041
  %v2045 = vrsqrt.pop %v1975
  %v2046 = vmul.f32 %v1975, %v2045
  %vm2047 = vcmp.eq.f32.partialorder %v1975, inf
  %v2048 = vsel %vm2047, %v1975, %v2046
  %vm2049 = vcmp.eq.f32.partialorder %v1975, 0.0
  %v2050 = vand.u32 %v1975, 2147483648
  %v2051 = vsel %vm2049, %v2050, %v2048
  %v2052 = vrsqrt.pop %v1976
  %v2053 = vmul.f32 %v1976, %v2052
  %vm2054 = vcmp.eq.f32.partialorder %v1976, inf
  %v2055 = vsel %vm2054, %v1976, %v2053
  %vm2056 = vcmp.eq.f32.partialorder %v1976, 0.0
  %v2057 = vand.u32 %v1976, 2147483648
  %v2058 = vsel %vm2056, %v2057, %v2055
  %v2059 = vrsqrt.pop %v1977
  %v2060 = vmul.f32 %v1977, %v2059
  %vm2061 = vcmp.eq.f32.partialorder %v1977, inf
  %v2062 = vsel %vm2061, %v1977, %v2060
  %vm2063 = vcmp.eq.f32.partialorder %v1977, 0.0
  %v2064 = vand.u32 %v1977, 2147483648
  %v2065 = vsel %vm2063, %v2064, %v2062
  %v2066 = vrsqrt.pop %v1978
  %v2067 = vmul.f32 %v1978, %v2066
  %vm2068 = vcmp.eq.f32.partialorder %v1978, inf
  %v2069 = vsel %vm2068, %v1978, %v2067
  %vm2070 = vcmp.eq.f32.partialorder %v1978, 0.0
  %v2071 = vand.u32 %v1978, 2147483648
  %v2072 = vsel %vm2070, %v2071, %v2069
  %v2073 = vrsqrt.pop %v1979
  %v2074 = vmul.f32 %v1979, %v2073
  %vm2075 = vcmp.eq.f32.partialorder %v1979, inf
  %v2076 = vsel %vm2075, %v1979, %v2074
  %vm2077 = vcmp.eq.f32.partialorder %v1979, 0.0
  %v2078 = vand.u32 %v1979, 2147483648
  %v2079 = vsel %vm2077, %v2078, %v2076
  %v2080 = vrsqrt.pop %v1980
  %v2081 = vmul.f32 %v1980, %v2080
  %vm2082 = vcmp.eq.f32.partialorder %v1980, inf
  %v2083 = vsel %vm2082, %v1980, %v2081
  %vm2084 = vcmp.eq.f32.partialorder %v1980, 0.0
  %v2085 = vand.u32 %v1980, 2147483648
  %v2086 = vsel %vm2084, %v2085, %v2083
  %v2087 = vrsqrt.pop %v1981
  %v2088 = vmul.f32 %v1981, %v2087
  %vm2089 = vcmp.eq.f32.partialorder %v1981, inf
  %v2090 = vsel %vm2089, %v1981, %v2088
  %vm2091 = vcmp.eq.f32.partialorder %v1981, 0.0
  %v2092 = vand.u32 %v1981, 2147483648
  %v2093 = vsel %vm2091, %v2092, %v2090
  %v2094 = vxor.u32 %v1988, 2147483648
  %v2095 = vxor.u32 %v1995, 2147483648
  %v2096 = vxor.u32 %v2002, 2147483648
  %v2097 = vxor.u32 %v2009, 2147483648
  %v2098 = vxor.u32 %v2016, 2147483648
  %v2099 = vxor.u32 %v2023, 2147483648
  %v2100 = vxor.u32 %v2030, 2147483648
  %v2101 = vxor.u32 %v2037, 2147483648
  %v2102 = vxor.u32 %v2044, 2147483648
  %v2103 = vxor.u32 %v2051, 2147483648
  %v2104 = vxor.u32 %v2058, 2147483648
  %v2105 = vxor.u32 %v2065, 2147483648
  %v2106 = vxor.u32 %v2072, 2147483648
  %v2107 = vxor.u32 %v2079, 2147483648
  %v2108 = vxor.u32 %v2086, 2147483648
  %v2109 = vxor.u32 %v2093, 2147483648
  %v2110 = vmul.f32 %v2094, 1.442695
  %v2111 = vpow.pop %v2110
  %v2112 = vmul.f32 %v2095, 1.442695
  %v2113 = vpow.pop %v2112
  %v2114 = vmul.f32 %v2096, 1.442695
  %v2115 = vpow.pop %v2114
  %v2116 = vmul.f32 %v2097, 1.442695
  %v2117 = vpow.pop %v2116
  %v2118 = vmul.f32 %v2098, 1.442695
  %v2119 = vpow.pop %v2118
  %v2120 = vmul.f32 %v2099, 1.442695
  %v2121 = vpow.pop %v2120
  %v2122 = vmul.f32 %v2100, 1.442695
  %v2123 = vpow.pop %v2122
  %v2124 = vmul.f32 %v2101, 1.442695
  %v2125 = vpow.pop %v2124
  %v2126 = vmul.f32 %v2102, 1.442695
  %v2127 = vpow.pop %v2126
  %v2128 = vmul.f32 %v2103, 1.442695
  %v2129 = vpow.pop %v2128
  %v2130 = vmul.f32 %v2104, 1.442695
  %v2131 = vpow.pop %v2130
  %v2132 = vmul.f32 %v2105, 1.442695
  %v2133 = vpow.pop %v2132
  %v2134 = vmul.f32 %v2106, 1.442695
  %v2135 = vpow.pop %v2134
  %v2136 = vmul.f32 %v2107, 1.442695
  %v2137 = vpow.pop %v2136
  %v2138 = vmul.f32 %v2108, 1.442695
  %v2139 = vpow.pop %v2138
  %v2140 = vmul.f32 %v2109, 1.442695
  %v2141 = vpow.pop %v2140
  %v2142 = vadd.f32 %v2111, 1.0
  %v2143 = vadd.f32 %v2113, 1.0
  %v2144 = vadd.f32 %v2115, 1.0
  %v2145 = vadd.f32 %v2117, 1.0
  %v2146 = vadd.f32 %v2119, 1.0
  %v2147 = vadd.f32 %v2121, 1.0
  %v2148 = vadd.f32 %v2123, 1.0
  %v2149 = vadd.f32 %v2125, 1.0
  %v2150 = vadd.f32 %v2127, 1.0
  %v2151 = vadd.f32 %v2129, 1.0
  %v2152 = vadd.f32 %v2131, 1.0
  %v2153 = vadd.f32 %v2133, 1.0
  %v2154 = vadd.f32 %v2135, 1.0
  %v2155 = vadd.f32 %v2137, 1.0
  %v2156 = vadd.f32 %v2139, 1.0
  %v2157 = vadd.f32 %v2141, 1.0
  %v2158 = vrcp.pop %v2142
  %v2159 = vmul.f32 1.0, %v2158
  %v2160 = vrcp.pop %v2143
  %v2161 = vmul.f32 1.0, %v2160
  %v2162 = vrcp.pop %v2144
  %v2163 = vmul.f32 1.0, %v2162
  %v2164 = vrcp.pop %v2145
  %v2165 = vmul.f32 1.0, %v2164
  %v2166 = vrcp.pop %v2146
  %v2167 = vmul.f32 1.0, %v2166
  %v2168 = vrcp.pop %v2147
  %v2169 = vmul.f32 1.0, %v2168
  %v2170 = vrcp.pop %v2148
  %v2171 = vmul.f32 1.0, %v2170
  %v2172 = vrcp.pop %v2149
  %v2173 = vmul.f32 1.0, %v2172
  %v2174 = vrcp.pop %v2150
  %v2175 = vmul.f32 1.0, %v2174
  %v2176 = vrcp.pop %v2151
  %v2177 = vmul.f32 1.0, %v2176
  %v2178 = vrcp.pop %v2152
  %v2179 = vmul.f32 1.0, %v2178
  %v2180 = vrcp.pop %v2153
  %v2181 = vmul.f32 1.0, %v2180
  %v2182 = vrcp.pop %v2154
  %v2183 = vmul.f32 1.0, %v2182
  %v2184 = vrcp.pop %v2155
  %v2185 = vmul.f32 1.0, %v2184
  %v2186 = vrcp.pop %v2156
  %v2187 = vmul.f32 1.0, %v2186
  %v2188 = vrcp.pop %v2157
  %v2189 = vmul.f32 1.0, %v2188
  %2206 = vrot.lane.b32.xlu0 %v2159, 2
  %v2207 = vpop.permute.xlu0 %2206
  %2208 = vrot.lane.b32.xlu0 %v2161, 2
  %v2209 = vpop.permute.xlu0 %2208
  %2210 = vrot.lane.b32.xlu0 %v2163, 2
  %v2211 = vpop.permute.xlu0 %2210
  %2212 = vrot.lane.b32.xlu0 %v2165, 2
  %v2213 = vpop.permute.xlu0 %2212
  %2214 = vrot.lane.b32.xlu0 %v2167, 2
  %v2215 = vpop.permute.xlu0 %2214
  %2216 = vrot.lane.b32.xlu0 %v2169, 2
  %v2217 = vpop.permute.xlu0 %2216
  %2218 = vrot.lane.b32.xlu0 %v2171, 2
  %v2219 = vpop.permute.xlu0 %2218
  %2220 = vrot.lane.b32.xlu0 %v2173, 2
  %v2221 = vpop.permute.xlu0 %2220
  %2222 = vrot.lane.b32.xlu0 %v2175, 2
  %v2223 = vpop.permute.xlu0 %2222
  %2224 = vrot.lane.b32.xlu0 %v2177, 2
  %v2225 = vpop.permute.xlu0 %2224
  %2226 = vrot.lane.b32.xlu0 %v2179, 2
  %v2227 = vpop.permute.xlu0 %2226
  %2228 = vrot.lane.b32.xlu0 %v2181, 2
  %v2229 = vpop.permute.xlu0 %2228
  %2230 = vrot.lane.b32.xlu0 %v2183, 2
  %v2231 = vpop.permute.xlu0 %2230
  %2232 = vrot.lane.b32.xlu0 %v2185, 2
  %v2233 = vpop.permute.xlu0 %2232
  %2234 = vrot.lane.b32.xlu0 %v2187, 2
  %v2235 = vpop.permute.xlu0 %2234
  %2236 = vrot.lane.b32.xlu0 %v2189, 2
  %v2237 = vpop.permute.xlu0 %2236
  %2254 = vrot.lane.b32.xlu0 %v2159, 4
  %v2255 = vpop.permute.xlu0 %2254
  %2256 = vrot.lane.b32.xlu0 %v2161, 4
  %v2257 = vpop.permute.xlu0 %2256
  %2258 = vrot.lane.b32.xlu0 %v2163, 4
  %v2259 = vpop.permute.xlu0 %2258
  %2260 = vrot.lane.b32.xlu0 %v2165, 4
  %v2261 = vpop.permute.xlu0 %2260
  %2262 = vrot.lane.b32.xlu0 %v2167, 4
  %v2263 = vpop.permute.xlu0 %2262
  %2264 = vrot.lane.b32.xlu0 %v2169, 4
  %v2265 = vpop.permute.xlu0 %2264
  %2266 = vrot.lane.b32.xlu0 %v2171, 4
  %v2267 = vpop.permute.xlu0 %2266
  %2268 = vrot.lane.b32.xlu0 %v2173, 4
  %v2269 = vpop.permute.xlu0 %2268
  %2270 = vrot.lane.b32.xlu0 %v2175, 4
  %v2271 = vpop.permute.xlu0 %2270
  %2272 = vrot.lane.b32.xlu0 %v2177, 4
  %v2273 = vpop.permute.xlu0 %2272
  %2274 = vrot.lane.b32.xlu0 %v2179, 4
  %v2275 = vpop.permute.xlu0 %2274
  %2276 = vrot.lane.b32.xlu0 %v2181, 4
  %v2277 = vpop.permute.xlu0 %2276
  %2278 = vrot.lane.b32.xlu0 %v2183, 4
  %v2279 = vpop.permute.xlu0 %2278
  %2280 = vrot.lane.b32.xlu0 %v2185, 4
  %v2281 = vpop.permute.xlu0 %2280
  %2282 = vrot.lane.b32.xlu0 %v2187, 4
  %v2283 = vpop.permute.xlu0 %2282
  %2284 = vrot.lane.b32.xlu0 %v2189, 4
  %v2285 = vpop.permute.xlu0 %2284
  %vm2302 = vcmask 15360
  %v2303 = vsel %vm2302, %v2159, %v2207
  %v2304 = vsel %vm2302, %v2161, %v2209
  %v2305 = vsel %vm2302, %v2163, %v2211
  %v2306 = vsel %vm2302, %v2165, %v2213
  %v2307 = vsel %vm2302, %v2167, %v2215
  %v2308 = vsel %vm2302, %v2169, %v2217
  %v2309 = vsel %vm2302, %v2171, %v2219
  %v2310 = vsel %vm2302, %v2173, %v2221
  %v2311 = vsel %vm2302, %v2175, %v2223
  %v2312 = vsel %vm2302, %v2177, %v2225
  %v2313 = vsel %vm2302, %v2179, %v2227
  %v2314 = vsel %vm2302, %v2181, %v2229
  %v2315 = vsel %vm2302, %v2183, %v2231
  %v2316 = vsel %vm2302, %v2185, %v2233
  %v2317 = vsel %vm2302, %v2187, %v2235
  %v2318 = vsel %vm2302, %v2189, %v2237
  %vm2319 = vcmask 31744
  %v2320 = vsel %vm2319, %v2303, %v2255
  %v2321 = vsel %vm2319, %v2304, %v2257
  %v2322 = vsel %vm2319, %v2305, %v2259
  %v2323 = vsel %vm2319, %v2306, %v2261
  %v2324 = vsel %vm2319, %v2307, %v2263
  %v2325 = vsel %vm2319, %v2308, %v2265
  %v2326 = vsel %vm2319, %v2309, %v2267
  %v2327 = vsel %vm2319, %v2310, %v2269
  %v2328 = vsel %vm2319, %v2311, %v2271
  %v2329 = vsel %vm2319, %v2312, %v2273
  %v2330 = vsel %vm2319, %v2313, %v2275
  %v2331 = vsel %vm2319, %v2314, %v2277
  %v2332 = vsel %vm2319, %v2315, %v2279
  %v2333 = vsel %vm2319, %v2316, %v2281
  %v2334 = vsel %vm2319, %v2317, %v2283
  %v2335 = vsel %vm2319, %v2318, %v2285
  %v2336 = vmul.f32 %v1728, %v2320
  %v2337 = vmul.f32 %v1733, %v2321
  %v2338 = vmul.f32 %v1738, %v2322
  %v2339 = vmul.f32 %v1743, %v2323
  %v2340 = vmul.f32 %v1748, %v2324
  %v2341 = vmul.f32 %v1753, %v2325
  %v2342 = vmul.f32 %v1758, %v2326
  %v2343 = vmul.f32 %v1763, %v2327
  %v2344 = vmul.f32 %v1768, %v2328
  %v2345 = vmul.f32 %v1773, %v2329
  %v2346 = vmul.f32 %v1778, %v2330
  %v2347 = vmul.f32 %v1783, %v2331
  %v2348 = vmul.f32 %v1788, %v2332
  %v2349 = vmul.f32 %v1793, %v2333
  %v2350 = vmul.f32 %v1798, %v2334
  %v2351 = vmul.f32 %v1803, %v2335
  %v2352 = vld [vmem:[%s7] sm:$0x3f]
  %v2353 = vld [vmem:[%s9] sm:$0xf]
  %v2354 = vld [vmem:[%s9 + $0x4] sm:$0xf]
  %v2355 = vld [vmem:[%s9 + $0x8] sm:$0xf]
  %v2356 = vld [vmem:[%s9 + $0xc] sm:$0xf]
  %v2357 = vld [vmem:[%s9 + $0x10] sm:$0xf]
  %v2358 = vld [vmem:[%s9 + $0x14] sm:$0xf]
  %v2359 = vld [vmem:[%s9 + $0x18] sm:$0xf]
  %v2360 = vld [vmem:[%s9 + $0x1c] sm:$0xf]
  %v2361 = vld [vmem:[%s9 + $0x20] sm:$0xf]
  %v2362 = vld [vmem:[%s9 + $0x24] sm:$0xf]
  %v2363 = vld [vmem:[%s9 + $0x28] sm:$0xf]
  %v2364 = vld [vmem:[%s9 + $0x2c] sm:$0xf]
  %v2365 = vld [vmem:[%s9 + $0x30] sm:$0xf]
  %v2366 = vld [vmem:[%s9 + $0x34] sm:$0xf]
  %v2367 = vld [vmem:[%s9 + $0x38] sm:$0xf]
  %v2368 = vld [vmem:[%s9 + $0x3c] sm:$0xf]
  %v2369 = vld [vmem:[%s10] sm:$0x3]
  %v2370 = vld [vmem:[%s11] sm:$0x1]
  %v2371 = vld [vmem:[%s8] sm:$0x3f]
  %vm2372 = vcmask 48128
  %v2374 = vsel %vm2372, %v2336, 0
  %v2377 = vsel %vm2372, %v2337, 0
  %v2380 = vsel %vm2372, %v2338, 0
  %v2383 = vsel %vm2372, %v2339, 0
  %v2386 = vsel %vm2372, %v2340, 0
  %v2389 = vsel %vm2372, %v2341, 0
  %v2392 = vsel %vm2372, %v2342, 0
  %v2395 = vsel %vm2372, %v2343, 0
  %v2398 = vsel %vm2372, %v2344, 0
  %v2401 = vsel %vm2372, %v2345, 0
  %v2404 = vsel %vm2372, %v2346, 0
  %v2407 = vsel %vm2372, %v2347, 0
  %v2410 = vsel %vm2372, %v2348, 0
  %v2413 = vsel %vm2372, %v2349, 0
  %v2416 = vsel %vm2372, %v2350, 0
  %v2419 = vsel %vm2372, %v2351, 0
  %vm2421 = vcmask 1045504
  %v2423 = vsel %vm2421, %v2352, 0
  %2425 = vmatprep.subr.mxu0 0.0
  %2426 = vmatpush1.msra.mxu0 %v2423
  %2427 = vmatprep.subr.mxu0 0.0
  %2428 = vmatpush1.msra.mxu0 0.0
  %2429 = vmatprep.subr.mxu0 0.0
  %2430 = vmatpush1.msra.mxu0 0.0
  %2431 = vmatprep.subr.mxu0 0.0
  %2432 = vmatpush1.msra.mxu0 0.0
  %2433 = vmatprep.subr.mxu0 0.0
  %2434 = vmatpush1.msra.mxu0 0.0
  %2435 = vmatprep.subr.mxu0 0.0
  %2436 = vmatpush1.msra.mxu0 0.0
  %2437 = vmatprep.subr.mxu0 0.0
  %2438 = vmatpush1.msra.mxu0 0.0
  %2439 = vmatprep.subr.mxu0 0.0
  %2440 = vmatpush1.msra.mxu0 0.0
  %2441 = vmatprep.subr.mxu0 0.0
  %2442 = vmatpush1.msra.mxu0 0.0
  %2443 = vmatprep.subr.mxu0 0.0
  %2444 = vmatpush1.msra.mxu0 0.0
  %2445 = vmatprep.subr.mxu0 0.0
  %2446 = vmatpush1.msra.mxu0 0.0
  %2447 = vmatprep.subr.mxu0 0.0
  %2448 = vmatpush1.msra.mxu0 0.0
  %2449 = vmatprep.subr.mxu0 0.0
  %2450 = vmatpush1.msra.mxu0 0.0
  %2451 = vmatprep.subr.mxu0 0.0
  %2452 = vmatpush1.msra.mxu0 0.0
  %2453 = vmatprep.subr.mxu0 0.0
  %2454 = vmatpush1.msra.mxu0 0.0
  %2455 = vmatprep.subr.mxu0 0.0
  %2456 = vmatpush1.msra.mxu0 0.0
  %2457 = vmatprep.subr.mxu0 0.0
  %2458 = vmatpush1.msra.mxu0 0.0
  %2459 = vmatprep.subr.mxu0 0.0
  %2460 = vmatpush1.msra.mxu0 0.0
  %2461 = vmatprep.subr.mxu0 0.0
  %2462 = vmatpush1.msra.mxu0 0.0
  %2463 = vmatprep.subr.mxu0 0.0
  %2464 = vmatpush1.msra.mxu0 0.0
  %2465 = vmatprep.subr.mxu0 0.0
  %2466 = vmatpush1.msra.mxu0 0.0
  %2467 = vmatprep.subr.mxu0 0.0
  %2468 = vmatpush1.msra.mxu0 0.0
  %2469 = vmatprep.subr.mxu0 0.0
  %2470 = vmatpush1.msra.mxu0 0.0
  %2471 = vmatprep.subr.mxu0 0.0
  %2472 = vmatpush1.msra.mxu0 0.0
  %2473 = vmatprep.subr.mxu0 0.0
  %2474 = vmatpush1.msra.mxu0 0.0
  %2475 = vmatprep.subr.mxu0 0.0
  %2476 = vmatpush1.msra.mxu0 0.0
  %2477 = vmatprep.subr.mxu0 0.0
  %2478 = vmatpush1.msra.mxu0 0.0
  %2479 = vmatprep.subr.mxu0 0.0
  %2480 = vmatpush1.msra.mxu0 0.0
  %2481 = vmatprep.subr.mxu0 0.0
  %2482 = vmatpush1.msra.mxu0 0.0
  %2483 = vmatprep.subr.mxu0 0.0
  %2484 = vmatpush1.msra.mxu0 0.0
  %2485 = vmatprep.subr.mxu0 0.0
  %2486 = vmatpush1.msra.mxu0 0.0
  %2487 = vmatprep.subr.mxu0 0.0
  %2488 = vmatpush1.msra.mxu0 0.0
  %2489 = vmatprep.mubr.f32.mxu0 0.0
  %2490 = vmatmul.mubr.f32.gmra.mrb[0].mxu0 %v2374
  %v2491 = vpop.f32.mrb[0].mxu0
  %v2492 = vadd.f32 0.0, %v2491
  %v2493 = vpop.f32.mrb[0].mxu0
  %2494 = vmatprep.mubr.f32.mxu0 0.0
  %2495 = vmatmul.mubr.f32.gmra.mrb[0].mxu0 %v2377
  %v2496 = vpop.f32.mrb[0].mxu0
  %v2497 = vadd.f32 0.0, %v2496
  %v2498 = vpop.f32.mrb[0].mxu0
  %2499 = vmatprep.mubr.f32.mxu0 0.0
  %2500 = vmatmul.mubr.f32.gmra.mrb[0].mxu0 %v2380
  %v2501 = vpop.f32.mrb[0].mxu0
  %v2502 = vadd.f32 0.0, %v2501
  %v2503 = vpop.f32.mrb[0].mxu0
  %2504 = vmatprep.mubr.f32.mxu0 0.0
  %2505 = vmatmul.mubr.f32.gmra.mrb[0].mxu0 %v2383
  %v2506 = vpop.f32.mrb[0].mxu0
  %v2507 = vadd.f32 0.0, %v2506
  %v2508 = vpop.f32.mrb[0].mxu0
  %2509 = vmatprep.mubr.f32.mxu0 0.0
  %2510 = vmatmul.mubr.f32.gmra.mrb[0].mxu0 %v2386
  %v2511 = vpop.f32.mrb[0].mxu0
  %v2512 = vadd.f32 0.0, %v2511
  %v2513 = vpop.f32.mrb[0].mxu0
  %2514 = vmatprep.mubr.f32.mxu0 0.0
  %2515 = vmatmul.mubr.f32.gmra.mrb[0].mxu0 %v2389
  %v2516 = vpop.f32.mrb[0].mxu0
  %v2517 = vadd.f32 0.0, %v2516
  %v2518 = vpop.f32.mrb[0].mxu0
  %2519 = vmatprep.mubr.f32.mxu0 0.0
  %2520 = vmatmul.mubr.f32.gmra.mrb[0].mxu0 %v2392
  %v2521 = vpop.f32.mrb[0].mxu0
  %v2522 = vadd.f32 0.0, %v2521
  %v2523 = vpop.f32.mrb[0].mxu0
  %2524 = vmatprep.mubr.f32.mxu0 0.0
  %2525 = vmatmul.mubr.f32.gmra.mrb[0].mxu0 %v2395
  %v2526 = vpop.f32.mrb[0].mxu0
  %v2527 = vadd.f32 0.0, %v2526
  %v2528 = vpop.f32.mrb[0].mxu0
  %2529 = vmatprep.mubr.f32.mxu0 0.0
  %2530 = vmatmul.mubr.f32.gmra.mrb[0].mxu0 %v2398
  %v2531 = vpop.f32.mrb[0].mxu0
  %v2532 = vadd.f32 0.0, %v2531
  %v2533 = vpop.f32.mrb[0].mxu0
  %2534 = vmatprep.mubr.f32.mxu0 0.0
  %2535 = vmatmul.mubr.f32.gmra.mrb[0].mxu0 %v2401
  %v2536 = vpop.f32.mrb[0].mxu0
  %v2537 = vadd.f32 0.0, %v2536
  %v2538 = vpop.f32.mrb[0].mxu0
  %2539 = vmatprep.mubr.f32.mxu0 0.0
  %2540 = vmatmul.mubr.f32.gmra.mrb[0].mxu0 %v2404
  %v2541 = vpop.f32.mrb[0].mxu0
  %v2542 = vadd.f32 0.0, %v2541
  %v2543 = vpop.f32.mrb[0].mxu0
  %2544 = vmatprep.mubr.f32.mxu0 0.0
  %2545 = vmatmul.mubr.f32.gmra.mrb[0].mxu0 %v2407
  %v2546 = vpop.f32.mrb[0].mxu0
  %v2547 = vadd.f32 0.0, %v2546
  %v2548 = vpop.f32.mrb[0].mxu0
  %2549 = vmatprep.mubr.f32.mxu0 0.0
  %2550 = vmatmul.mubr.f32.gmra.mrb[0].mxu0 %v2410
  %v2551 = vpop.f32.mrb[0].mxu0
  %v2552 = vadd.f32 0.0, %v2551
  %v2553 = vpop.f32.mrb[0].mxu0
  %2554 = vmatprep.mubr.f32.mxu0 0.0
  %2555 = vmatmul.mubr.f32.gmra.mrb[0].mxu0 %v2413
  %v2556 = vpop.f32.mrb[0].mxu0
  %v2557 = vadd.f32 0.0, %v2556
  %v2558 = vpop.f32.mrb[0].mxu0
  %2559 = vmatprep.mubr.f32.mxu0 0.0
  %2560 = vmatmul.mubr.f32.gmra.mrb[0].mxu0 %v2416
  %v2561 = vpop.f32.mrb[0].mxu0
  %v2562 = vadd.f32 0.0, %v2561
  %v2563 = vpop.f32.mrb[0].mxu0
  %2564 = vmatprep.mubr.f32.mxu0 0.0
  %2565 = vmatmul.mubr.f32.gmra.mrb[0].mxu0 %v2419
  %v2566 = vpop.f32.mrb[0].mxu0
  %v2567 = vadd.f32 0.0, %v2566
  %v2568 = vpop.f32.mrb[0].mxu0
  %2569 = vdwg.mxu0
  %v2570 = vmul.f32 %v2492, %v2492
  %v2571 = vmul.f32 %v2497, %v2497
  %v2572 = vmul.f32 %v2502, %v2502
  %v2573 = vmul.f32 %v2507, %v2507
  %v2574 = vmul.f32 %v2512, %v2512
  %v2575 = vmul.f32 %v2517, %v2517
  %v2576 = vmul.f32 %v2522, %v2522
  %v2577 = vmul.f32 %v2527, %v2527
  %v2578 = vmul.f32 %v2532, %v2532
  %v2579 = vmul.f32 %v2537, %v2537
  %v2580 = vmul.f32 %v2542, %v2542
  %v2581 = vmul.f32 %v2547, %v2547
  %v2582 = vmul.f32 %v2552, %v2552
  %v2583 = vmul.f32 %v2557, %v2557
  %v2584 = vmul.f32 %v2562, %v2562
  %v2585 = vmul.f32 %v2567, %v2567
  %2602 = vrot.lane.b32.xlu0 %v2570, 126
  %v2603 = vpop.permute.xlu0 %2602
  %2604 = vrot.lane.b32.xlu0 %v2571, 126
  %v2605 = vpop.permute.xlu0 %2604
  %2606 = vrot.lane.b32.xlu0 %v2572, 126
  %v2607 = vpop.permute.xlu0 %2606
  %2608 = vrot.lane.b32.xlu0 %v2573, 126
  %v2609 = vpop.permute.xlu0 %2608
  %2610 = vrot.lane.b32.xlu0 %v2574, 126
  %v2611 = vpop.permute.xlu0 %2610
  %2612 = vrot.lane.b32.xlu0 %v2575, 126
  %v2613 = vpop.permute.xlu0 %2612
  %2614 = vrot.lane.b32.xlu0 %v2576, 126
  %v2615 = vpop.permute.xlu0 %2614
  %2616 = vrot.lane.b32.xlu0 %v2577, 126
  %v2617 = vpop.permute.xlu0 %2616
  %2618 = vrot.lane.b32.xlu0 %v2578, 126
  %v2619 = vpop.permute.xlu0 %2618
  %2620 = vrot.lane.b32.xlu0 %v2579, 126
  %v2621 = vpop.permute.xlu0 %2620
  %2622 = vrot.lane.b32.xlu0 %v2580, 126
  %v2623 = vpop.permute.xlu0 %2622
  %2624 = vrot.lane.b32.xlu0 %v2581, 126
  %v2625 = vpop.permute.xlu0 %2624
  %2626 = vrot.lane.b32.xlu0 %v2582, 126
  %v2627 = vpop.permute.xlu0 %2626
  %2628 = vrot.lane.b32.xlu0 %v2583, 126
  %v2629 = vpop.permute.xlu0 %2628
  %2630 = vrot.lane.b32.xlu0 %v2584, 126
  %v2631 = vpop.permute.xlu0 %2630
  %2632 = vrot.lane.b32.xlu0 %v2585, 126
  %v2633 = vpop.permute.xlu0 %2632
  %v2650 = vadd.f32 %v2570, %v2603
  %v2651 = vadd.f32 %v2571, %v2605
  %v2652 = vadd.f32 %v2572, %v2607
  %v2653 = vadd.f32 %v2573, %v2609
  %v2654 = vadd.f32 %v2574, %v2611
  %v2655 = vadd.f32 %v2575, %v2613
  %v2656 = vadd.f32 %v2576, %v2615
  %v2657 = vadd.f32 %v2577, %v2617
  %v2658 = vadd.f32 %v2578, %v2619
  %v2659 = vadd.f32 %v2579, %v2621
  %v2660 = vadd.f32 %v2580, %v2623
  %v2661 = vadd.f32 %v2581, %v2625
  %v2662 = vadd.f32 %v2582, %v2627
  %v2663 = vadd.f32 %v2583, %v2629
  %v2664 = vadd.f32 %v2584, %v2631
  %v2665 = vadd.f32 %v2585, %v2633
  %2666 = vrot.lane.b32.xlu0 %v2570, 124
  %v2667 = vpop.permute.xlu0 %2666
  %2668 = vrot.lane.b32.xlu0 %v2571, 124
  %v2669 = vpop.permute.xlu0 %2668
  %2670 = vrot.lane.b32.xlu0 %v2572, 124
  %v2671 = vpop.permute.xlu0 %2670
  %2672 = vrot.lane.b32.xlu0 %v2573, 124
  %v2673 = vpop.permute.xlu0 %2672
  %2674 = vrot.lane.b32.xlu0 %v2574, 124
  %v2675 = vpop.permute.xlu0 %2674
  %2676 = vrot.lane.b32.xlu0 %v2575, 124
  %v2677 = vpop.permute.xlu0 %2676
  %2678 = vrot.lane.b32.xlu0 %v2576, 124
  %v2679 = vpop.permute.xlu0 %2678
  %2680 = vrot.lane.b32.xlu0 %v2577, 124
  %v2681 = vpop.permute.xlu0 %2680
  %2682 = vrot.lane.b32.xlu0 %v2578, 124
  %v2683 = vpop.permute.xlu0 %2682
  %2684 = vrot.lane.b32.xlu0 %v2579, 124
  %v2685 = vpop.permute.xlu0 %2684
  %2686 = vrot.lane.b32.xlu0 %v2580, 124
  %v2687 = vpop.permute.xlu0 %2686
  %2688 = vrot.lane.b32.xlu0 %v2581, 124
  %v2689 = vpop.permute.xlu0 %2688
  %2690 = vrot.lane.b32.xlu0 %v2582, 124
  %v2691 = vpop.permute.xlu0 %2690
  %2692 = vrot.lane.b32.xlu0 %v2583, 124
  %v2693 = vpop.permute.xlu0 %2692
  %2694 = vrot.lane.b32.xlu0 %v2584, 124
  %v2695 = vpop.permute.xlu0 %2694
  %2696 = vrot.lane.b32.xlu0 %v2585, 124
  %v2697 = vpop.permute.xlu0 %2696
  %v2714 = vadd.f32 %v2650, %v2667
  %v2715 = vadd.f32 %v2651, %v2669
  %v2716 = vadd.f32 %v2652, %v2671
  %v2717 = vadd.f32 %v2653, %v2673
  %v2718 = vadd.f32 %v2654, %v2675
  %v2719 = vadd.f32 %v2655, %v2677
  %v2720 = vadd.f32 %v2656, %v2679
  %v2721 = vadd.f32 %v2657, %v2681
  %v2722 = vadd.f32 %v2658, %v2683
  %v2723 = vadd.f32 %v2659, %v2685
  %v2724 = vadd.f32 %v2660, %v2687
  %v2725 = vadd.f32 %v2661, %v2689
  %v2726 = vadd.f32 %v2662, %v2691
  %v2727 = vadd.f32 %v2663, %v2693
  %v2728 = vadd.f32 %v2664, %v2695
  %v2729 = vadd.f32 %v2665, %v2697
  %v2730 = vmax.f32 %v2714, 1e-08
  %v2731 = vmax.f32 %v2715, 1e-08
  %v2732 = vmax.f32 %v2716, 1e-08
  %v2733 = vmax.f32 %v2717, 1e-08
  %v2734 = vmax.f32 %v2718, 1e-08
  %v2735 = vmax.f32 %v2719, 1e-08
  %v2736 = vmax.f32 %v2720, 1e-08
  %v2737 = vmax.f32 %v2721, 1e-08
  %v2738 = vmax.f32 %v2722, 1e-08
  %v2739 = vmax.f32 %v2723, 1e-08
  %v2740 = vmax.f32 %v2724, 1e-08
  %v2741 = vmax.f32 %v2725, 1e-08
  %v2742 = vmax.f32 %v2726, 1e-08
  %v2743 = vmax.f32 %v2727, 1e-08
  %v2744 = vmax.f32 %v2728, 1e-08
  %v2745 = vmax.f32 %v2729, 1e-08
  %v2746 = vrsqrt.pop %v2730
  %v2747 = vmul.f32 %v2730, %v2746
  %vm2748 = vcmp.eq.f32.partialorder %v2730, inf
  %v2749 = vsel %vm2748, %v2730, %v2747
  %vm2750 = vcmp.eq.f32.partialorder %v2730, 0.0
  %v2751 = vand.u32 %v2730, 2147483648
  %v2752 = vsel %vm2750, %v2751, %v2749
  %v2753 = vrsqrt.pop %v2731
  %v2754 = vmul.f32 %v2731, %v2753
  %vm2755 = vcmp.eq.f32.partialorder %v2731, inf
  %v2756 = vsel %vm2755, %v2731, %v2754
  %vm2757 = vcmp.eq.f32.partialorder %v2731, 0.0
  %v2758 = vand.u32 %v2731, 2147483648
  %v2759 = vsel %vm2757, %v2758, %v2756
  %v2760 = vrsqrt.pop %v2732
  %v2761 = vmul.f32 %v2732, %v2760
  %vm2762 = vcmp.eq.f32.partialorder %v2732, inf
  %v2763 = vsel %vm2762, %v2732, %v2761
  %vm2764 = vcmp.eq.f32.partialorder %v2732, 0.0
  %v2765 = vand.u32 %v2732, 2147483648
  %v2766 = vsel %vm2764, %v2765, %v2763
  %v2767 = vrsqrt.pop %v2733
  %v2768 = vmul.f32 %v2733, %v2767
  %vm2769 = vcmp.eq.f32.partialorder %v2733, inf
  %v2770 = vsel %vm2769, %v2733, %v2768
  %vm2771 = vcmp.eq.f32.partialorder %v2733, 0.0
  %v2772 = vand.u32 %v2733, 2147483648
  %v2773 = vsel %vm2771, %v2772, %v2770
  %v2774 = vrsqrt.pop %v2734
  %v2775 = vmul.f32 %v2734, %v2774
  %vm2776 = vcmp.eq.f32.partialorder %v2734, inf
  %v2777 = vsel %vm2776, %v2734, %v2775
  %vm2778 = vcmp.eq.f32.partialorder %v2734, 0.0
  %v2779 = vand.u32 %v2734, 2147483648
  %v2780 = vsel %vm2778, %v2779, %v2777
  %v2781 = vrsqrt.pop %v2735
  %v2782 = vmul.f32 %v2735, %v2781
  %vm2783 = vcmp.eq.f32.partialorder %v2735, inf
  %v2784 = vsel %vm2783, %v2735, %v2782
  %vm2785 = vcmp.eq.f32.partialorder %v2735, 0.0
  %v2786 = vand.u32 %v2735, 2147483648
  %v2787 = vsel %vm2785, %v2786, %v2784
  %v2788 = vrsqrt.pop %v2736
  %v2789 = vmul.f32 %v2736, %v2788
  %vm2790 = vcmp.eq.f32.partialorder %v2736, inf
  %v2791 = vsel %vm2790, %v2736, %v2789
  %vm2792 = vcmp.eq.f32.partialorder %v2736, 0.0
  %v2793 = vand.u32 %v2736, 2147483648
  %v2794 = vsel %vm2792, %v2793, %v2791
  %v2795 = vrsqrt.pop %v2737
  %v2796 = vmul.f32 %v2737, %v2795
  %vm2797 = vcmp.eq.f32.partialorder %v2737, inf
  %v2798 = vsel %vm2797, %v2737, %v2796
  %vm2799 = vcmp.eq.f32.partialorder %v2737, 0.0
  %v2800 = vand.u32 %v2737, 2147483648
  %v2801 = vsel %vm2799, %v2800, %v2798
  %v2802 = vrsqrt.pop %v2738
  %v2803 = vmul.f32 %v2738, %v2802
  %vm2804 = vcmp.eq.f32.partialorder %v2738, inf
  %v2805 = vsel %vm2804, %v2738, %v2803
  %vm2806 = vcmp.eq.f32.partialorder %v2738, 0.0
  %v2807 = vand.u32 %v2738, 2147483648
  %v2808 = vsel %vm2806, %v2807, %v2805
  %v2809 = vrsqrt.pop %v2739
  %v2810 = vmul.f32 %v2739, %v2809
  %vm2811 = vcmp.eq.f32.partialorder %v2739, inf
  %v2812 = vsel %vm2811, %v2739, %v2810
  %vm2813 = vcmp.eq.f32.partialorder %v2739, 0.0
  %v2814 = vand.u32 %v2739, 2147483648
  %v2815 = vsel %vm2813, %v2814, %v2812
  %v2816 = vrsqrt.pop %v2740
  %v2817 = vmul.f32 %v2740, %v2816
  %vm2818 = vcmp.eq.f32.partialorder %v2740, inf
  %v2819 = vsel %vm2818, %v2740, %v2817
  %vm2820 = vcmp.eq.f32.partialorder %v2740, 0.0
  %v2821 = vand.u32 %v2740, 2147483648
  %v2822 = vsel %vm2820, %v2821, %v2819
  %v2823 = vrsqrt.pop %v2741
  %v2824 = vmul.f32 %v2741, %v2823
  %vm2825 = vcmp.eq.f32.partialorder %v2741, inf
  %v2826 = vsel %vm2825, %v2741, %v2824
  %vm2827 = vcmp.eq.f32.partialorder %v2741, 0.0
  %v2828 = vand.u32 %v2741, 2147483648
  %v2829 = vsel %vm2827, %v2828, %v2826
  %v2830 = vrsqrt.pop %v2742
  %v2831 = vmul.f32 %v2742, %v2830
  %vm2832 = vcmp.eq.f32.partialorder %v2742, inf
  %v2833 = vsel %vm2832, %v2742, %v2831
  %vm2834 = vcmp.eq.f32.partialorder %v2742, 0.0
  %v2835 = vand.u32 %v2742, 2147483648
  %v2836 = vsel %vm2834, %v2835, %v2833
  %v2837 = vrsqrt.pop %v2743
  %v2838 = vmul.f32 %v2743, %v2837
  %vm2839 = vcmp.eq.f32.partialorder %v2743, inf
  %v2840 = vsel %vm2839, %v2743, %v2838
  %vm2841 = vcmp.eq.f32.partialorder %v2743, 0.0
  %v2842 = vand.u32 %v2743, 2147483648
  %v2843 = vsel %vm2841, %v2842, %v2840
  %v2844 = vrsqrt.pop %v2744
  %v2845 = vmul.f32 %v2744, %v2844
  %vm2846 = vcmp.eq.f32.partialorder %v2744, inf
  %v2847 = vsel %vm2846, %v2744, %v2845
  %vm2848 = vcmp.eq.f32.partialorder %v2744, 0.0
  %v2849 = vand.u32 %v2744, 2147483648
  %v2850 = vsel %vm2848, %v2849, %v2847
  %v2851 = vrsqrt.pop %v2745
  %v2852 = vmul.f32 %v2745, %v2851
  %vm2853 = vcmp.eq.f32.partialorder %v2745, inf
  %v2854 = vsel %vm2853, %v2745, %v2852
  %vm2855 = vcmp.eq.f32.partialorder %v2745, 0.0
  %v2856 = vand.u32 %v2745, 2147483648
  %v2857 = vsel %vm2855, %v2856, %v2854
  %v2858 = vpack.c.bf16 %v1595, %v1594
  %v2859 = vpack.c.bf16 %v1597, %v1596
  %v2860 = vpack.c.bf16 %v1599, %v1598
  %v2861 = vpack.c.bf16 %v1601, %v1600
  %v2862 = vpack.c.bf16 %v1603, %v1602
  %v2863 = vpack.c.bf16 %v1605, %v1604
  %v2864 = vpack.c.bf16 %v1607, %v1606
  %v2865 = vpack.c.bf16 %v1609, %v1608
  %v2867 = vlaneseq
  %v2868 = vshrl.u32 %v2867, 7
  %v2869 = vsub.s32 0, %v2868
  %v2870 = vrot.slane %v2370, %v2869
  %v2888 = vunpack.c.l.b16 %v2353
  %v2889 = vunpack.c.l.b16 %v2354
  %v2890 = vunpack.c.l.b16 %v2355
  %v2891 = vunpack.c.l.b16 %v2356
  %v2892 = vunpack.c.l.b16 %v2357
  %v2893 = vunpack.c.l.b16 %v2358
  %v2894 = vunpack.c.l.b16 %v2359
  %v2895 = vunpack.c.l.b16 %v2360
  %v2896 = vunpack.c.l.b16 %v2361
  %v2897 = vunpack.c.l.b16 %v2362
  %v2898 = vunpack.c.l.b16 %v2363
  %v2899 = vunpack.c.l.b16 %v2364
  %v2900 = vunpack.c.l.b16 %v2365
  %v2901 = vunpack.c.l.b16 %v2366
  %v2902 = vunpack.c.l.b16 %v2367
  %v2903 = vunpack.c.l.b16 %v2368
  %v2904 = vpack.c.b16 %v2889, %v2888
  %v2905 = vpack.c.b16 %v2891, %v2890
  %v2906 = vpack.c.b16 %v2893, %v2892
  %v2907 = vpack.c.b16 %v2895, %v2894
  %v2908 = vpack.c.b16 %v2897, %v2896
  %v2909 = vpack.c.b16 %v2899, %v2898
  %v2910 = vpack.c.b16 %v2901, %v2900
  %v2911 = vpack.c.b16 %v2903, %v2902
  %2920 = vmatprep.subr.bf16.mxu0 0
  %2921 = vmatpush1.bf16.msra.mxu0 %v2904
  %2922 = vmatprep.subr.bf16.mxu0 0
  %2923 = vmatpush1.bf16.msra.mxu0 %v2905
  %2924 = vmatprep.subr.bf16.mxu0 0
  %2925 = vmatpush1.bf16.msra.mxu0 %v2906
  %2926 = vmatprep.subr.bf16.mxu0 0
  %2927 = vmatpush1.bf16.msra.mxu0 %v2907
  %2928 = vmatprep.subr.bf16.mxu0 0
  %2929 = vmatpush1.bf16.msra.mxu0 %v2908
  %2930 = vmatprep.subr.bf16.mxu0 0
  %2931 = vmatpush1.bf16.msra.mxu0 %v2909
  %2932 = vmatprep.subr.bf16.mxu0 0
  %2933 = vmatpush1.bf16.msra.mxu0 %v2910
  %2934 = vmatprep.subr.bf16.mxu0 0
  %2935 = vmatpush1.bf16.msra.mxu0 %v2911
  %2936 = vmatprep.subr.bf16.mxu0 0
  %2937 = vmatpush1.bf16.msra.mxu0 0
  %2938 = vmatprep.subr.bf16.mxu0 0
  %2939 = vmatpush1.bf16.msra.mxu0 0
  %2940 = vmatprep.subr.bf16.mxu0 0
  %2941 = vmatpush1.bf16.msra.mxu0 0
  %2942 = vmatprep.subr.bf16.mxu0 0
  %2943 = vmatpush1.bf16.msra.mxu0 0
  %2944 = vmatprep.subr.bf16.mxu0 0
  %2945 = vmatpush1.bf16.msra.mxu0 0
  %2946 = vmatprep.subr.bf16.mxu0 0
  %2947 = vmatpush1.bf16.msra.mxu0 0
  %2948 = vmatprep.subr.bf16.mxu0 0
  %2949 = vmatpush1.bf16.msra.mxu0 0
  %2950 = vmatprep.subr.bf16.mxu0 0
  %2951 = vmatpush1.bf16.msra.mxu0 0
  %2952 = vmatprep.mubr.bf16.mxu0 0
  %2953 = vmatmul.mubr.bf16.gmra.mrb[0].mxu0 %v2858
  %v2954 = vpop.f32.mrb[0].mxu0
  %v2955 = vadd.f32 %v2870, %v2954
  %v2956 = vpop.f32.mrb[0].mxu0
  %v2957 = vpop.f32.mrb[0].mxu0
  %v2958 = vadd.f32 %v2870, %v2957
  %v2959 = vpop.f32.mrb[0].mxu0
  %2960 = vmatprep.mubr.bf16.mxu0 0
  %2961 = vmatmul.mubr.bf16.gmra.mrb[0].mxu0 %v2859
  %v2962 = vpop.f32.mrb[0].mxu0
  %v2963 = vadd.f32 %v2870, %v2962
  %v2964 = vpop.f32.mrb[0].mxu0
  %v2965 = vpop.f32.mrb[0].mxu0
  %v2966 = vadd.f32 %v2870, %v2965
  %v2967 = vpop.f32.mrb[0].mxu0
  %2968 = vmatprep.mubr.bf16.mxu0 0
  %2969 = vmatmul.mubr.bf16.gmra.mrb[0].mxu0 %v2860
  %v2970 = vpop.f32.mrb[0].mxu0
  %v2971 = vadd.f32 %v2870, %v2970
  %v2972 = vpop.f32.mrb[0].mxu0
  %v2973 = vpop.f32.mrb[0].mxu0
  %v2974 = vadd.f32 %v2870, %v2973
  %v2975 = vpop.f32.mrb[0].mxu0
  %2976 = vmatprep.mubr.bf16.mxu0 0
  %2977 = vmatmul.mubr.bf16.gmra.mrb[0].mxu0 %v2861
  %v2978 = vpop.f32.mrb[0].mxu0
  %v2979 = vadd.f32 %v2870, %v2978
  %v2980 = vpop.f32.mrb[0].mxu0
  %v2981 = vpop.f32.mrb[0].mxu0
  %v2982 = vadd.f32 %v2870, %v2981
  %v2983 = vpop.f32.mrb[0].mxu0
  %2984 = vmatprep.mubr.bf16.mxu0 0
  %2985 = vmatmul.mubr.bf16.gmra.mrb[0].mxu0 %v2862
  %v2986 = vpop.f32.mrb[0].mxu0
  %v2987 = vadd.f32 %v2870, %v2986
  %v2988 = vpop.f32.mrb[0].mxu0
  %v2989 = vpop.f32.mrb[0].mxu0
  %v2990 = vadd.f32 %v2870, %v2989
  %v2991 = vpop.f32.mrb[0].mxu0
  %2992 = vmatprep.mubr.bf16.mxu0 0
  %2993 = vmatmul.mubr.bf16.gmra.mrb[0].mxu0 %v2863
  %v2994 = vpop.f32.mrb[0].mxu0
  %v2995 = vadd.f32 %v2870, %v2994
  %v2996 = vpop.f32.mrb[0].mxu0
  %v2997 = vpop.f32.mrb[0].mxu0
  %v2998 = vadd.f32 %v2870, %v2997
  %v2999 = vpop.f32.mrb[0].mxu0
  %3000 = vmatprep.mubr.bf16.mxu0 0
  %3001 = vmatmul.mubr.bf16.gmra.mrb[0].mxu0 %v2864
  %v3002 = vpop.f32.mrb[0].mxu0
  %v3003 = vadd.f32 %v2870, %v3002
  %v3004 = vpop.f32.mrb[0].mxu0
  %v3005 = vpop.f32.mrb[0].mxu0
  %v3006 = vadd.f32 %v2870, %v3005
  %v3007 = vpop.f32.mrb[0].mxu0
  %3008 = vmatprep.mubr.bf16.mxu0 0
  %3009 = vmatmul.mubr.bf16.gmra.mrb[0].mxu0 %v2865
  %v3010 = vpop.f32.mrb[0].mxu0
  %v3011 = vadd.f32 %v2870, %v3010
  %v3012 = vpop.f32.mrb[0].mxu0
  %v3013 = vpop.f32.mrb[0].mxu0
  %v3014 = vadd.f32 %v2870, %v3013
  %v3015 = vpop.f32.mrb[0].mxu0
  %3016 = vdwg.mxu0
  %3018 = vset.pattern.permute.xlu0 0
  %3019 = vperm.xlu0 %3018, %v2752
  %v3020 = vpop.permute.xlu0 %3019
  %3023 = vset.pattern.permute.xlu0 0
  %3024 = vperm.xlu0 %3023, %v2759
  %v3025 = vpop.permute.xlu0 %3024
  %3028 = vset.pattern.permute.xlu0 0
  %3029 = vperm.xlu0 %3028, %v2766
  %v3030 = vpop.permute.xlu0 %3029
  %3033 = vset.pattern.permute.xlu0 0
  %3034 = vperm.xlu0 %3033, %v2773
  %v3035 = vpop.permute.xlu0 %3034
  %3038 = vset.pattern.permute.xlu0 0
  %3039 = vperm.xlu0 %3038, %v2780
  %v3040 = vpop.permute.xlu0 %3039
  %3043 = vset.pattern.permute.xlu0 0
  %3044 = vperm.xlu0 %3043, %v2787
  %v3045 = vpop.permute.xlu0 %3044
  %3048 = vset.pattern.permute.xlu0 0
  %3049 = vperm.xlu0 %3048, %v2794
  %v3050 = vpop.permute.xlu0 %3049
  %3053 = vset.pattern.permute.xlu0 0
  %3054 = vperm.xlu0 %3053, %v2801
  %v3055 = vpop.permute.xlu0 %3054
  %3058 = vset.pattern.permute.xlu0 0
  %3059 = vperm.xlu0 %3058, %v2808
  %v3060 = vpop.permute.xlu0 %3059
  %3063 = vset.pattern.permute.xlu0 0
  %3064 = vperm.xlu0 %3063, %v2815
  %v3065 = vpop.permute.xlu0 %3064
  %3068 = vset.pattern.permute.xlu0 0
  %3069 = vperm.xlu0 %3068, %v2822
  %v3070 = vpop.permute.xlu0 %3069
  %3073 = vset.pattern.permute.xlu0 0
  %3074 = vperm.xlu0 %3073, %v2829
  %v3075 = vpop.permute.xlu0 %3074
  %3078 = vset.pattern.permute.xlu0 0
  %3079 = vperm.xlu0 %3078, %v2836
  %v3080 = vpop.permute.xlu0 %3079
  %3083 = vset.pattern.permute.xlu0 0
  %3084 = vperm.xlu0 %3083, %v2843
  %v3085 = vpop.permute.xlu0 %3084
  %3088 = vset.pattern.permute.xlu0 0
  %3089 = vperm.xlu0 %3088, %v2850
  %v3090 = vpop.permute.xlu0 %3089
  %3093 = vset.pattern.permute.xlu0 0
  %3094 = vperm.xlu0 %3093, %v2857
  %v3095 = vpop.permute.xlu0 %3094
  %v3097 = vlaneseq
  %v3098 = vshrl.u32 %v3097, 7
  %v3099 = vsub.s32 0, %v3098
  %v3100 = vrot.slane %v2369, %v3099
  %v3101 = vmul.f32 %v3020, %v3100
  %v3102 = vmul.f32 %v3025, %v3100
  %v3103 = vmul.f32 %v3030, %v3100
  %v3104 = vmul.f32 %v3035, %v3100
  %v3105 = vmul.f32 %v3040, %v3100
  %v3106 = vmul.f32 %v3045, %v3100
  %v3107 = vmul.f32 %v3050, %v3100
  %v3108 = vmul.f32 %v3055, %v3100
  %v3109 = vmul.f32 %v3060, %v3100
  %v3110 = vmul.f32 %v3065, %v3100
  %v3111 = vmul.f32 %v3070, %v3100
  %v3112 = vmul.f32 %v3075, %v3100
  %v3113 = vmul.f32 %v3080, %v3100
  %v3114 = vmul.f32 %v3085, %v3100
  %v3115 = vmul.f32 %v3090, %v3100
  %v3116 = vmul.f32 %v3095, %v3100
  %v3117 = vadd.f32 %v2955, %v3101
  %v3118 = vadd.f32 %v2958, %v3102
  %v3119 = vadd.f32 %v2963, %v3103
  %v3120 = vadd.f32 %v2966, %v3104
  %v3121 = vadd.f32 %v2971, %v3105
  %v3122 = vadd.f32 %v2974, %v3106
  %v3123 = vadd.f32 %v2979, %v3107
  %v3124 = vadd.f32 %v2982, %v3108
  %v3125 = vadd.f32 %v2987, %v3109
  %v3126 = vadd.f32 %v2990, %v3110
  %v3127 = vadd.f32 %v2995, %v3111
  %v3128 = vadd.f32 %v2998, %v3112
  %v3129 = vadd.f32 %v3003, %v3113
  %v3130 = vadd.f32 %v3006, %v3114
  %v3131 = vadd.f32 %v3011, %v3115
  %v3132 = vadd.f32 %v3014, %v3116
  %3133 = vset.pattern.permute.xlu0 1
  %3134 = vperm.xlu0 %3133, %v2752
  %v3135 = vpop.permute.xlu0 %3134
  %3137 = vset.pattern.permute.xlu0 1
  %3138 = vperm.xlu0 %3137, %v2759
  %v3139 = vpop.permute.xlu0 %3138
  %3141 = vset.pattern.permute.xlu0 1
  %3142 = vperm.xlu0 %3141, %v2766
  %v3143 = vpop.permute.xlu0 %3142
  %3145 = vset.pattern.permute.xlu0 1
  %3146 = vperm.xlu0 %3145, %v2773
  %v3147 = vpop.permute.xlu0 %3146
  %3149 = vset.pattern.permute.xlu0 1
  %3150 = vperm.xlu0 %3149, %v2780
  %v3151 = vpop.permute.xlu0 %3150
  %3153 = vset.pattern.permute.xlu0 1
  %3154 = vperm.xlu0 %3153, %v2787
  %v3155 = vpop.permute.xlu0 %3154
  %3157 = vset.pattern.permute.xlu0 1
  %3158 = vperm.xlu0 %3157, %v2794
  %v3159 = vpop.permute.xlu0 %3158
  %3161 = vset.pattern.permute.xlu0 1
  %3162 = vperm.xlu0 %3161, %v2801
  %v3163 = vpop.permute.xlu0 %3162
  %3165 = vset.pattern.permute.xlu0 1
  %3166 = vperm.xlu0 %3165, %v2808
  %v3167 = vpop.permute.xlu0 %3166
  %3169 = vset.pattern.permute.xlu0 1
  %3170 = vperm.xlu0 %3169, %v2815
  %v3171 = vpop.permute.xlu0 %3170
  %3173 = vset.pattern.permute.xlu0 1
  %3174 = vperm.xlu0 %3173, %v2822
  %v3175 = vpop.permute.xlu0 %3174
  %3177 = vset.pattern.permute.xlu0 1
  %3178 = vperm.xlu0 %3177, %v2829
  %v3179 = vpop.permute.xlu0 %3178
  %3181 = vset.pattern.permute.xlu0 1
  %3182 = vperm.xlu0 %3181, %v2836
  %v3183 = vpop.permute.xlu0 %3182
  %3185 = vset.pattern.permute.xlu0 1
  %3186 = vperm.xlu0 %3185, %v2843
  %v3187 = vpop.permute.xlu0 %3186
  %3189 = vset.pattern.permute.xlu0 1
  %3190 = vperm.xlu0 %3189, %v2850
  %v3191 = vpop.permute.xlu0 %3190
  %3193 = vset.pattern.permute.xlu0 1
  %3194 = vperm.xlu0 %3193, %v2857
  %v3195 = vpop.permute.xlu0 %3194
  %v3197 = vlaneseq
  %v3198 = vshrl.u32 %v3197, 7
  %v3199 = vsub.s32 1, %v3198
  %v3200 = vrot.slane %v2369, %v3199
  %v3201 = vmul.f32 %v3135, %v3200
  %v3202 = vmul.f32 %v3139, %v3200
  %v3203 = vmul.f32 %v3143, %v3200
  %v3204 = vmul.f32 %v3147, %v3200
  %v3205 = vmul.f32 %v3151, %v3200
  %v3206 = vmul.f32 %v3155, %v3200
  %v3207 = vmul.f32 %v3159, %v3200
  %v3208 = vmul.f32 %v3163, %v3200
  %v3209 = vmul.f32 %v3167, %v3200
  %v3210 = vmul.f32 %v3171, %v3200
  %v3211 = vmul.f32 %v3175, %v3200
  %v3212 = vmul.f32 %v3179, %v3200
  %v3213 = vmul.f32 %v3183, %v3200
  %v3214 = vmul.f32 %v3187, %v3200
  %v3215 = vmul.f32 %v3191, %v3200
  %v3216 = vmul.f32 %v3195, %v3200
  %v3217 = vadd.f32 %v3117, %v3201
  %v3218 = vadd.f32 %v3118, %v3202
  %v3219 = vadd.f32 %v3119, %v3203
  %v3220 = vadd.f32 %v3120, %v3204
  %v3221 = vadd.f32 %v3121, %v3205
  %v3222 = vadd.f32 %v3122, %v3206
  %v3223 = vadd.f32 %v3123, %v3207
  %v3224 = vadd.f32 %v3124, %v3208
  %v3225 = vadd.f32 %v3125, %v3209
  %v3226 = vadd.f32 %v3126, %v3210
  %v3227 = vadd.f32 %v3127, %v3211
  %v3228 = vadd.f32 %v3128, %v3212
  %v3229 = vadd.f32 %v3129, %v3213
  %v3230 = vadd.f32 %v3130, %v3214
  %v3231 = vadd.f32 %v3131, %v3215
  %v3232 = vadd.f32 %v3132, %v3216
  %v3233 = vmax.f32 %v3217, 0.0
  %v3234 = vmax.f32 %v3218, 0.0
  %v3235 = vmax.f32 %v3219, 0.0
  %v3236 = vmax.f32 %v3220, 0.0
  %v3237 = vmax.f32 %v3221, 0.0
  %v3238 = vmax.f32 %v3222, 0.0
  %v3239 = vmax.f32 %v3223, 0.0
  %v3240 = vmax.f32 %v3224, 0.0
  %v3241 = vmax.f32 %v3225, 0.0
  %v3242 = vmax.f32 %v3226, 0.0
  %v3243 = vmax.f32 %v3227, 0.0
  %v3244 = vmax.f32 %v3228, 0.0
  %v3245 = vmax.f32 %v3229, 0.0
  %v3246 = vmax.f32 %v3230, 0.0
  %v3247 = vmax.f32 %v3231, 0.0
  %v3248 = vmax.f32 %v3232, 0.0
  %v3250 = vsel %vm2372, %v2492, 0
  %v3253 = vsel %vm2372, %v2497, 0
  %v3256 = vsel %vm2372, %v2502, 0
  %v3259 = vsel %vm2372, %v2507, 0
  %v3262 = vsel %vm2372, %v2512, 0
  %v3265 = vsel %vm2372, %v2517, 0
  %v3268 = vsel %vm2372, %v2522, 0
  %v3271 = vsel %vm2372, %v2527, 0
  %v3274 = vsel %vm2372, %v2532, 0
  %v3277 = vsel %vm2372, %v2537, 0
  %v3280 = vsel %vm2372, %v2542, 0
  %v3283 = vsel %vm2372, %v2547, 0
  %v3286 = vsel %vm2372, %v2552, 0
  %v3289 = vsel %vm2372, %v2557, 0
  %v3292 = vsel %vm2372, %v2562, 0
  %v3295 = vsel %vm2372, %v2567, 0
  %v3298 = vsel %vm2421, %v2371, 0
  %3300 = vmatprep.subr.mxu0 0.0
  %3301 = vmatpush1.msra.mxu0 %v3298
  %3302 = vmatprep.subr.mxu0 0.0
  %3303 = vmatpush1.msra.mxu0 0.0
  %3304 = vmatprep.subr.mxu0 0.0
  %3305 = vmatpush1.msra.mxu0 0.0
  %3306 = vmatprep.subr.mxu0 0.0
  %3307 = vmatpush1.msra.mxu0 0.0
  %3308 = vmatprep.subr.mxu0 0.0
  %3309 = vmatpush1.msra.mxu0 0.0
  %3310 = vmatprep.subr.mxu0 0.0
  %3311 = vmatpush1.msra.mxu0 0.0
  %3312 = vmatprep.subr.mxu0 0.0
  %3313 = vmatpush1.msra.mxu0 0.0
  %3314 = vmatprep.subr.mxu0 0.0
  %3315 = vmatpush1.msra.mxu0 0.0
  %3316 = vmatprep.subr.mxu0 0.0
  %3317 = vmatpush1.msra.mxu0 0.0
  %3318 = vmatprep.subr.mxu0 0.0
  %3319 = vmatpush1.msra.mxu0 0.0
  %3320 = vmatprep.subr.mxu0 0.0
  %3321 = vmatpush1.msra.mxu0 0.0
  %3322 = vmatprep.subr.mxu0 0.0
  %3323 = vmatpush1.msra.mxu0 0.0
  %3324 = vmatprep.subr.mxu0 0.0
  %3325 = vmatpush1.msra.mxu0 0.0
  %3326 = vmatprep.subr.mxu0 0.0
  %3327 = vmatpush1.msra.mxu0 0.0
  %3328 = vmatprep.subr.mxu0 0.0
  %3329 = vmatpush1.msra.mxu0 0.0
  %3330 = vmatprep.subr.mxu0 0.0
  %3331 = vmatpush1.msra.mxu0 0.0
  %3332 = vmatprep.subr.mxu0 0.0
  %3333 = vmatpush1.msra.mxu0 0.0
  %3334 = vmatprep.subr.mxu0 0.0
  %3335 = vmatpush1.msra.mxu0 0.0
  %3336 = vmatprep.subr.mxu0 0.0
  %3337 = vmatpush1.msra.mxu0 0.0
  %3338 = vmatprep.subr.mxu0 0.0
  %3339 = vmatpush1.msra.mxu0 0.0
  %3340 = vmatprep.subr.mxu0 0.0
  %3341 = vmatpush1.msra.mxu0 0.0
  %3342 = vmatprep.subr.mxu0 0.0
  %3343 = vmatpush1.msra.mxu0 0.0
  %3344 = vmatprep.subr.mxu0 0.0
  %3345 = vmatpush1.msra.mxu0 0.0
  %3346 = vmatprep.subr.mxu0 0.0
  %3347 = vmatpush1.msra.mxu0 0.0
  %3348 = vmatprep.subr.mxu0 0.0
  %3349 = vmatpush1.msra.mxu0 0.0
  %3350 = vmatprep.subr.mxu0 0.0
  %3351 = vmatpush1.msra.mxu0 0.0
  %3352 = vmatprep.subr.mxu0 0.0
  %3353 = vmatpush1.msra.mxu0 0.0
  %3354 = vmatprep.subr.mxu0 0.0
  %3355 = vmatpush1.msra.mxu0 0.0
  %3356 = vmatprep.subr.mxu0 0.0
  %3357 = vmatpush1.msra.mxu0 0.0
  %3358 = vmatprep.subr.mxu0 0.0
  %3359 = vmatpush1.msra.mxu0 0.0
  %3360 = vmatprep.subr.mxu0 0.0
  %3361 = vmatpush1.msra.mxu0 0.0
  %3362 = vmatprep.subr.mxu0 0.0
  %3363 = vmatpush1.msra.mxu0 0.0
  %3364 = vmatprep.mubr.f32.mxu0 0.0
  %3365 = vmatmul.mubr.f32.gmra.mrb[0].mxu0 %v3250
  %v3366 = vpop.f32.mrb[0].mxu0
  %v3367 = vadd.f32 0.0, %v3366
  %v3368 = vpop.f32.mrb[0].mxu0
  %3369 = vmatprep.mubr.f32.mxu0 0.0
  %3370 = vmatmul.mubr.f32.gmra.mrb[0].mxu0 %v3253
  %v3371 = vpop.f32.mrb[0].mxu0
  %v3372 = vadd.f32 0.0, %v3371
  %v3373 = vpop.f32.mrb[0].mxu0
  %3374 = vmatprep.mubr.f32.mxu0 0.0
  %3375 = vmatmul.mubr.f32.gmra.mrb[0].mxu0 %v3256
  %v3376 = vpop.f32.mrb[0].mxu0
  %v3377 = vadd.f32 0.0, %v3376
  %v3378 = vpop.f32.mrb[0].mxu0
  %3379 = vmatprep.mubr.f32.mxu0 0.0
  %3380 = vmatmul.mubr.f32.gmra.mrb[0].mxu0 %v3259
  %v3381 = vpop.f32.mrb[0].mxu0
  %v3382 = vadd.f32 0.0, %v3381
  %v3383 = vpop.f32.mrb[0].mxu0
  %3384 = vmatprep.mubr.f32.mxu0 0.0
  %3385 = vmatmul.mubr.f32.gmra.mrb[0].mxu0 %v3262
  %v3386 = vpop.f32.mrb[0].mxu0
  %v3387 = vadd.f32 0.0, %v3386
  %v3388 = vpop.f32.mrb[0].mxu0
  %3389 = vmatprep.mubr.f32.mxu0 0.0
  %3390 = vmatmul.mubr.f32.gmra.mrb[0].mxu0 %v3265
  %v3391 = vpop.f32.mrb[0].mxu0
  %v3392 = vadd.f32 0.0, %v3391
  %v3393 = vpop.f32.mrb[0].mxu0
  %3394 = vmatprep.mubr.f32.mxu0 0.0
  %3395 = vmatmul.mubr.f32.gmra.mrb[0].mxu0 %v3268
  %v3396 = vpop.f32.mrb[0].mxu0
  %v3397 = vadd.f32 0.0, %v3396
  %v3398 = vpop.f32.mrb[0].mxu0
  %3399 = vmatprep.mubr.f32.mxu0 0.0
  %3400 = vmatmul.mubr.f32.gmra.mrb[0].mxu0 %v3271
  %v3401 = vpop.f32.mrb[0].mxu0
  %v3402 = vadd.f32 0.0, %v3401
  %v3403 = vpop.f32.mrb[0].mxu0
  %3404 = vmatprep.mubr.f32.mxu0 0.0
  %3405 = vmatmul.mubr.f32.gmra.mrb[0].mxu0 %v3274
  %v3406 = vpop.f32.mrb[0].mxu0
  %v3407 = vadd.f32 0.0, %v3406
  %v3408 = vpop.f32.mrb[0].mxu0
  %3409 = vmatprep.mubr.f32.mxu0 0.0
  %3410 = vmatmul.mubr.f32.gmra.mrb[0].mxu0 %v3277
  %v3411 = vpop.f32.mrb[0].mxu0
  %v3412 = vadd.f32 0.0, %v3411
  %v3413 = vpop.f32.mrb[0].mxu0
  %3414 = vmatprep.mubr.f32.mxu0 0.0
  %3415 = vmatmul.mubr.f32.gmra.mrb[0].mxu0 %v3280
  %v3416 = vpop.f32.mrb[0].mxu0
  %v3417 = vadd.f32 0.0, %v3416
  %v3418 = vpop.f32.mrb[0].mxu0
  %3419 = vmatprep.mubr.f32.mxu0 0.0
  %3420 = vmatmul.mubr.f32.gmra.mrb[0].mxu0 %v3283
  %v3421 = vpop.f32.mrb[0].mxu0
  %v3422 = vadd.f32 0.0, %v3421
  %v3423 = vpop.f32.mrb[0].mxu0
  %3424 = vmatprep.mubr.f32.mxu0 0.0
  %3425 = vmatmul.mubr.f32.gmra.mrb[0].mxu0 %v3286
  %v3426 = vpop.f32.mrb[0].mxu0
  %v3427 = vadd.f32 0.0, %v3426
  %v3428 = vpop.f32.mrb[0].mxu0
  %3429 = vmatprep.mubr.f32.mxu0 0.0
  %3430 = vmatmul.mubr.f32.gmra.mrb[0].mxu0 %v3289
  %v3431 = vpop.f32.mrb[0].mxu0
  %v3432 = vadd.f32 0.0, %v3431
  %v3433 = vpop.f32.mrb[0].mxu0
  %3434 = vmatprep.mubr.f32.mxu0 0.0
  %3435 = vmatmul.mubr.f32.gmra.mrb[0].mxu0 %v3292
  %v3436 = vpop.f32.mrb[0].mxu0
  %v3437 = vadd.f32 0.0, %v3436
  %v3438 = vpop.f32.mrb[0].mxu0
  %3439 = vmatprep.mubr.f32.mxu0 0.0
  %3440 = vmatmul.mubr.f32.gmra.mrb[0].mxu0 %v3295
  %v3441 = vpop.f32.mrb[0].mxu0
  %v3442 = vadd.f32 0.0, %v3441
  %v3443 = vpop.f32.mrb[0].mxu0
  %3444 = vdwg.mxu0
  %v3445 = vmul.f32 %v3367, %v3367
  %v3446 = vmul.f32 %v3372, %v3372
  %v3447 = vmul.f32 %v3377, %v3377
  %v3448 = vmul.f32 %v3382, %v3382
  %v3449 = vmul.f32 %v3387, %v3387
  %v3450 = vmul.f32 %v3392, %v3392
  %v3451 = vmul.f32 %v3397, %v3397
  %v3452 = vmul.f32 %v3402, %v3402
  %v3453 = vmul.f32 %v3407, %v3407
  %v3454 = vmul.f32 %v3412, %v3412
  %v3455 = vmul.f32 %v3417, %v3417
  %v3456 = vmul.f32 %v3422, %v3422
  %v3457 = vmul.f32 %v3427, %v3427
  %v3458 = vmul.f32 %v3432, %v3432
  %v3459 = vmul.f32 %v3437, %v3437
  %v3460 = vmul.f32 %v3442, %v3442
  %3477 = vrot.lane.b32.xlu0 %v3445, 126
  %v3478 = vpop.permute.xlu0 %3477
  %3479 = vrot.lane.b32.xlu0 %v3446, 126
  %v3480 = vpop.permute.xlu0 %3479
  %3481 = vrot.lane.b32.xlu0 %v3447, 126
  %v3482 = vpop.permute.xlu0 %3481
  %3483 = vrot.lane.b32.xlu0 %v3448, 126
  %v3484 = vpop.permute.xlu0 %3483
  %3485 = vrot.lane.b32.xlu0 %v3449, 126
  %v3486 = vpop.permute.xlu0 %3485
  %3487 = vrot.lane.b32.xlu0 %v3450, 126
  %v3488 = vpop.permute.xlu0 %3487
  %3489 = vrot.lane.b32.xlu0 %v3451, 126
  %v3490 = vpop.permute.xlu0 %3489
  %3491 = vrot.lane.b32.xlu0 %v3452, 126
  %v3492 = vpop.permute.xlu0 %3491
  %3493 = vrot.lane.b32.xlu0 %v3453, 126
  %v3494 = vpop.permute.xlu0 %3493
  %3495 = vrot.lane.b32.xlu0 %v3454, 126
  %v3496 = vpop.permute.xlu0 %3495
  %3497 = vrot.lane.b32.xlu0 %v3455, 126
  %v3498 = vpop.permute.xlu0 %3497
  %3499 = vrot.lane.b32.xlu0 %v3456, 126
  %v3500 = vpop.permute.xlu0 %3499
  %3501 = vrot.lane.b32.xlu0 %v3457, 126
  %v3502 = vpop.permute.xlu0 %3501
  %3503 = vrot.lane.b32.xlu0 %v3458, 126
  %v3504 = vpop.permute.xlu0 %3503
  %3505 = vrot.lane.b32.xlu0 %v3459, 126
  %v3506 = vpop.permute.xlu0 %3505
  %3507 = vrot.lane.b32.xlu0 %v3460, 126
  %v3508 = vpop.permute.xlu0 %3507
  %v3525 = vadd.f32 %v3445, %v3478
  %v3526 = vadd.f32 %v3446, %v3480
  %v3527 = vadd.f32 %v3447, %v3482
  %v3528 = vadd.f32 %v3448, %v3484
  %v3529 = vadd.f32 %v3449, %v3486
  %v3530 = vadd.f32 %v3450, %v3488
  %v3531 = vadd.f32 %v3451, %v3490
  %v3532 = vadd.f32 %v3452, %v3492
  %v3533 = vadd.f32 %v3453, %v3494
  %v3534 = vadd.f32 %v3454, %v3496
  %v3535 = vadd.f32 %v3455, %v3498
  %v3536 = vadd.f32 %v3456, %v3500
  %v3537 = vadd.f32 %v3457, %v3502
  %v3538 = vadd.f32 %v3458, %v3504
  %v3539 = vadd.f32 %v3459, %v3506
  %v3540 = vadd.f32 %v3460, %v3508
  %3541 = vrot.lane.b32.xlu0 %v3445, 124
  %v3542 = vpop.permute.xlu0 %3541
  %3543 = vrot.lane.b32.xlu0 %v3446, 124
  %v3544 = vpop.permute.xlu0 %3543
  %3545 = vrot.lane.b32.xlu0 %v3447, 124
  %v3546 = vpop.permute.xlu0 %3545
  %3547 = vrot.lane.b32.xlu0 %v3448, 124
  %v3548 = vpop.permute.xlu0 %3547
  %3549 = vrot.lane.b32.xlu0 %v3449, 124
  %v3550 = vpop.permute.xlu0 %3549
  %3551 = vrot.lane.b32.xlu0 %v3450, 124
  %v3552 = vpop.permute.xlu0 %3551
  %3553 = vrot.lane.b32.xlu0 %v3451, 124
  %v3554 = vpop.permute.xlu0 %3553
  %3555 = vrot.lane.b32.xlu0 %v3452, 124
  %v3556 = vpop.permute.xlu0 %3555
  %3557 = vrot.lane.b32.xlu0 %v3453, 124
  %v3558 = vpop.permute.xlu0 %3557
  %3559 = vrot.lane.b32.xlu0 %v3454, 124
  %v3560 = vpop.permute.xlu0 %3559
  %3561 = vrot.lane.b32.xlu0 %v3455, 124
  %v3562 = vpop.permute.xlu0 %3561
  %3563 = vrot.lane.b32.xlu0 %v3456, 124
  %v3564 = vpop.permute.xlu0 %3563
  %3565 = vrot.lane.b32.xlu0 %v3457, 124
  %v3566 = vpop.permute.xlu0 %3565
  %3567 = vrot.lane.b32.xlu0 %v3458, 124
  %v3568 = vpop.permute.xlu0 %3567
  %3569 = vrot.lane.b32.xlu0 %v3459, 124
  %v3570 = vpop.permute.xlu0 %3569
  %3571 = vrot.lane.b32.xlu0 %v3460, 124
  %v3572 = vpop.permute.xlu0 %3571
  %v3589 = vadd.f32 %v3525, %v3542
  %v3590 = vadd.f32 %v3526, %v3544
  %v3591 = vadd.f32 %v3527, %v3546
  %v3592 = vadd.f32 %v3528, %v3548
  %v3593 = vadd.f32 %v3529, %v3550
  %v3594 = vadd.f32 %v3530, %v3552
  %v3595 = vadd.f32 %v3531, %v3554
  %v3596 = vadd.f32 %v3532, %v3556
  %v3597 = vadd.f32 %v3533, %v3558
  %v3598 = vadd.f32 %v3534, %v3560
  %v3599 = vadd.f32 %v3535, %v3562
  %v3600 = vadd.f32 %v3536, %v3564
  %v3601 = vadd.f32 %v3537, %v3566
  %v3602 = vadd.f32 %v3538, %v3568
  %v3603 = vadd.f32 %v3539, %v3570
  %v3604 = vadd.f32 %v3540, %v3572
  %v3605 = vmax.f32 %v3589, 1e-08
  %v3606 = vmax.f32 %v3590, 1e-08
  %v3607 = vmax.f32 %v3591, 1e-08
  %v3608 = vmax.f32 %v3592, 1e-08
  %v3609 = vmax.f32 %v3593, 1e-08
  %v3610 = vmax.f32 %v3594, 1e-08
  %v3611 = vmax.f32 %v3595, 1e-08
  %v3612 = vmax.f32 %v3596, 1e-08
  %v3613 = vmax.f32 %v3597, 1e-08
  %v3614 = vmax.f32 %v3598, 1e-08
  %v3615 = vmax.f32 %v3599, 1e-08
  %v3616 = vmax.f32 %v3600, 1e-08
  %v3617 = vmax.f32 %v3601, 1e-08
  %v3618 = vmax.f32 %v3602, 1e-08
  %v3619 = vmax.f32 %v3603, 1e-08
  %v3620 = vmax.f32 %v3604, 1e-08
  %v3621 = vrsqrt.pop %v3605
  %v3622 = vmul.f32 %v3605, %v3621
  %vm3623 = vcmp.eq.f32.partialorder %v3605, inf
  %v3624 = vsel %vm3623, %v3605, %v3622
  %vm3625 = vcmp.eq.f32.partialorder %v3605, 0.0
  %v3626 = vand.u32 %v3605, 2147483648
  %v3627 = vsel %vm3625, %v3626, %v3624
  %v3628 = vrsqrt.pop %v3606
  %v3629 = vmul.f32 %v3606, %v3628
  %vm3630 = vcmp.eq.f32.partialorder %v3606, inf
  %v3631 = vsel %vm3630, %v3606, %v3629
  %vm3632 = vcmp.eq.f32.partialorder %v3606, 0.0
  %v3633 = vand.u32 %v3606, 2147483648
  %v3634 = vsel %vm3632, %v3633, %v3631
  %v3635 = vrsqrt.pop %v3607
  %v3636 = vmul.f32 %v3607, %v3635
  %vm3637 = vcmp.eq.f32.partialorder %v3607, inf
  %v3638 = vsel %vm3637, %v3607, %v3636
  %vm3639 = vcmp.eq.f32.partialorder %v3607, 0.0
  %v3640 = vand.u32 %v3607, 2147483648
  %v3641 = vsel %vm3639, %v3640, %v3638
  %v3642 = vrsqrt.pop %v3608
  %v3643 = vmul.f32 %v3608, %v3642
  %vm3644 = vcmp.eq.f32.partialorder %v3608, inf
  %v3645 = vsel %vm3644, %v3608, %v3643
  %vm3646 = vcmp.eq.f32.partialorder %v3608, 0.0
  %v3647 = vand.u32 %v3608, 2147483648
  %v3648 = vsel %vm3646, %v3647, %v3645
  %v3649 = vrsqrt.pop %v3609
  %v3650 = vmul.f32 %v3609, %v3649
  %vm3651 = vcmp.eq.f32.partialorder %v3609, inf
  %v3652 = vsel %vm3651, %v3609, %v3650
  %vm3653 = vcmp.eq.f32.partialorder %v3609, 0.0
  %v3654 = vand.u32 %v3609, 2147483648
  %v3655 = vsel %vm3653, %v3654, %v3652
  %v3656 = vrsqrt.pop %v3610
  %v3657 = vmul.f32 %v3610, %v3656
  %vm3658 = vcmp.eq.f32.partialorder %v3610, inf
  %v3659 = vsel %vm3658, %v3610, %v3657
  %vm3660 = vcmp.eq.f32.partialorder %v3610, 0.0
  %v3661 = vand.u32 %v3610, 2147483648
  %v3662 = vsel %vm3660, %v3661, %v3659
  %v3663 = vrsqrt.pop %v3611
  %v3664 = vmul.f32 %v3611, %v3663
  %vm3665 = vcmp.eq.f32.partialorder %v3611, inf
  %v3666 = vsel %vm3665, %v3611, %v3664
  %vm3667 = vcmp.eq.f32.partialorder %v3611, 0.0
  %v3668 = vand.u32 %v3611, 2147483648
  %v3669 = vsel %vm3667, %v3668, %v3666
  %v3670 = vrsqrt.pop %v3612
  %v3671 = vmul.f32 %v3612, %v3670
  %vm3672 = vcmp.eq.f32.partialorder %v3612, inf
  %v3673 = vsel %vm3672, %v3612, %v3671
  %vm3674 = vcmp.eq.f32.partialorder %v3612, 0.0
  %v3675 = vand.u32 %v3612, 2147483648
  %v3676 = vsel %vm3674, %v3675, %v3673
  %v3677 = vrsqrt.pop %v3613
  %v3678 = vmul.f32 %v3613, %v3677
  %vm3679 = vcmp.eq.f32.partialorder %v3613, inf
  %v3680 = vsel %vm3679, %v3613, %v3678
  %vm3681 = vcmp.eq.f32.partialorder %v3613, 0.0
  %v3682 = vand.u32 %v3613, 2147483648
  %v3683 = vsel %vm3681, %v3682, %v3680
  %v3684 = vrsqrt.pop %v3614
  %v3685 = vmul.f32 %v3614, %v3684
  %vm3686 = vcmp.eq.f32.partialorder %v3614, inf
  %v3687 = vsel %vm3686, %v3614, %v3685
  %vm3688 = vcmp.eq.f32.partialorder %v3614, 0.0
  %v3689 = vand.u32 %v3614, 2147483648
  %v3690 = vsel %vm3688, %v3689, %v3687
  %v3691 = vrsqrt.pop %v3615
  %v3692 = vmul.f32 %v3615, %v3691
  %vm3693 = vcmp.eq.f32.partialorder %v3615, inf
  %v3694 = vsel %vm3693, %v3615, %v3692
  %vm3695 = vcmp.eq.f32.partialorder %v3615, 0.0
  %v3696 = vand.u32 %v3615, 2147483648
  %v3697 = vsel %vm3695, %v3696, %v3694
  %v3698 = vrsqrt.pop %v3616
  %v3699 = vmul.f32 %v3616, %v3698
  %vm3700 = vcmp.eq.f32.partialorder %v3616, inf
  %v3701 = vsel %vm3700, %v3616, %v3699
  %vm3702 = vcmp.eq.f32.partialorder %v3616, 0.0
  %v3703 = vand.u32 %v3616, 2147483648
  %v3704 = vsel %vm3702, %v3703, %v3701
  %v3705 = vrsqrt.pop %v3617
  %v3706 = vmul.f32 %v3617, %v3705
  %vm3707 = vcmp.eq.f32.partialorder %v3617, inf
  %v3708 = vsel %vm3707, %v3617, %v3706
  %vm3709 = vcmp.eq.f32.partialorder %v3617, 0.0
  %v3710 = vand.u32 %v3617, 2147483648
  %v3711 = vsel %vm3709, %v3710, %v3708
  %v3712 = vrsqrt.pop %v3618
  %v3713 = vmul.f32 %v3618, %v3712
  %vm3714 = vcmp.eq.f32.partialorder %v3618, inf
  %v3715 = vsel %vm3714, %v3618, %v3713
  %vm3716 = vcmp.eq.f32.partialorder %v3618, 0.0
  %v3717 = vand.u32 %v3618, 2147483648
  %v3718 = vsel %vm3716, %v3717, %v3715
  %v3719 = vrsqrt.pop %v3619
  %v3720 = vmul.f32 %v3619, %v3719
  %vm3721 = vcmp.eq.f32.partialorder %v3619, inf
  %v3722 = vsel %vm3721, %v3619, %v3720
  %vm3723 = vcmp.eq.f32.partialorder %v3619, 0.0
  %v3724 = vand.u32 %v3619, 2147483648
  %v3725 = vsel %vm3723, %v3724, %v3722
  %v3726 = vrsqrt.pop %v3620
  %v3727 = vmul.f32 %v3620, %v3726
  %vm3728 = vcmp.eq.f32.partialorder %v3620, inf
  %v3729 = vsel %vm3728, %v3620, %v3727
  %vm3730 = vcmp.eq.f32.partialorder %v3620, 0.0
  %v3731 = vand.u32 %v3620, 2147483648
  %v3732 = vsel %vm3730, %v3731, %v3729
  %v3733 = vxor.u32 %v3627, 2147483648
  %v3734 = vxor.u32 %v3634, 2147483648
  %v3735 = vxor.u32 %v3641, 2147483648
  %v3736 = vxor.u32 %v3648, 2147483648
  %v3737 = vxor.u32 %v3655, 2147483648
  %v3738 = vxor.u32 %v3662, 2147483648
  %v3739 = vxor.u32 %v3669, 2147483648
  %v3740 = vxor.u32 %v3676, 2147483648
  %v3741 = vxor.u32 %v3683, 2147483648
  %v3742 = vxor.u32 %v3690, 2147483648
  %v3743 = vxor.u32 %v3697, 2147483648
  %v3744 = vxor.u32 %v3704, 2147483648
  %v3745 = vxor.u32 %v3711, 2147483648
  %v3746 = vxor.u32 %v3718, 2147483648
  %v3747 = vxor.u32 %v3725, 2147483648
  %v3748 = vxor.u32 %v3732, 2147483648
  %v3749 = vmul.f32 %v3733, 1.442695
  %v3750 = vpow.pop %v3749
  %v3751 = vmul.f32 %v3734, 1.442695
  %v3752 = vpow.pop %v3751
  %v3753 = vmul.f32 %v3735, 1.442695
  %v3754 = vpow.pop %v3753
  %v3755 = vmul.f32 %v3736, 1.442695
  %v3756 = vpow.pop %v3755
  %v3757 = vmul.f32 %v3737, 1.442695
  %v3758 = vpow.pop %v3757
  %v3759 = vmul.f32 %v3738, 1.442695
  %v3760 = vpow.pop %v3759
  %v3761 = vmul.f32 %v3739, 1.442695
  %v3762 = vpow.pop %v3761
  %v3763 = vmul.f32 %v3740, 1.442695
  %v3764 = vpow.pop %v3763
  %v3765 = vmul.f32 %v3741, 1.442695
  %v3766 = vpow.pop %v3765
  %v3767 = vmul.f32 %v3742, 1.442695
  %v3768 = vpow.pop %v3767
  %v3769 = vmul.f32 %v3743, 1.442695
  %v3770 = vpow.pop %v3769
  %v3771 = vmul.f32 %v3744, 1.442695
  %v3772 = vpow.pop %v3771
  %v3773 = vmul.f32 %v3745, 1.442695
  %v3774 = vpow.pop %v3773
  %v3775 = vmul.f32 %v3746, 1.442695
  %v3776 = vpow.pop %v3775
  %v3777 = vmul.f32 %v3747, 1.442695
  %v3778 = vpow.pop %v3777
  %v3779 = vmul.f32 %v3748, 1.442695
  %v3780 = vpow.pop %v3779
  %v3781 = vadd.f32 %v3750, 1.0
  %v3782 = vadd.f32 %v3752, 1.0
  %v3783 = vadd.f32 %v3754, 1.0
  %v3784 = vadd.f32 %v3756, 1.0
  %v3785 = vadd.f32 %v3758, 1.0
  %v3786 = vadd.f32 %v3760, 1.0
  %v3787 = vadd.f32 %v3762, 1.0
  %v3788 = vadd.f32 %v3764, 1.0
  %v3789 = vadd.f32 %v3766, 1.0
  %v3790 = vadd.f32 %v3768, 1.0
  %v3791 = vadd.f32 %v3770, 1.0
  %v3792 = vadd.f32 %v3772, 1.0
  %v3793 = vadd.f32 %v3774, 1.0
  %v3794 = vadd.f32 %v3776, 1.0
  %v3795 = vadd.f32 %v3778, 1.0
  %v3796 = vadd.f32 %v3780, 1.0
  %v3797 = vrcp.pop %v3781
  %v3798 = vmul.f32 1.0, %v3797
  %v3799 = vrcp.pop %v3782
  %v3800 = vmul.f32 1.0, %v3799
  %v3801 = vrcp.pop %v3783
  %v3802 = vmul.f32 1.0, %v3801
  %v3803 = vrcp.pop %v3784
  %v3804 = vmul.f32 1.0, %v3803
  %v3805 = vrcp.pop %v3785
  %v3806 = vmul.f32 1.0, %v3805
  %v3807 = vrcp.pop %v3786
  %v3808 = vmul.f32 1.0, %v3807
  %v3809 = vrcp.pop %v3787
  %v3810 = vmul.f32 1.0, %v3809
  %v3811 = vrcp.pop %v3788
  %v3812 = vmul.f32 1.0, %v3811
  %v3813 = vrcp.pop %v3789
  %v3814 = vmul.f32 1.0, %v3813
  %v3815 = vrcp.pop %v3790
  %v3816 = vmul.f32 1.0, %v3815
  %v3817 = vrcp.pop %v3791
  %v3818 = vmul.f32 1.0, %v3817
  %v3819 = vrcp.pop %v3792
  %v3820 = vmul.f32 1.0, %v3819
  %v3821 = vrcp.pop %v3793
  %v3822 = vmul.f32 1.0, %v3821
  %v3823 = vrcp.pop %v3794
  %v3824 = vmul.f32 1.0, %v3823
  %v3825 = vrcp.pop %v3795
  %v3826 = vmul.f32 1.0, %v3825
  %v3827 = vrcp.pop %v3796
  %v3828 = vmul.f32 1.0, %v3827
  %3845 = vrot.lane.b32.xlu0 %v3798, 2
  %v3846 = vpop.permute.xlu0 %3845
  %3847 = vrot.lane.b32.xlu0 %v3800, 2
  %v3848 = vpop.permute.xlu0 %3847
  %3849 = vrot.lane.b32.xlu0 %v3802, 2
  %v3850 = vpop.permute.xlu0 %3849
  %3851 = vrot.lane.b32.xlu0 %v3804, 2
  %v3852 = vpop.permute.xlu0 %3851
  %3853 = vrot.lane.b32.xlu0 %v3806, 2
  %v3854 = vpop.permute.xlu0 %3853
  %3855 = vrot.lane.b32.xlu0 %v3808, 2
  %v3856 = vpop.permute.xlu0 %3855
  %3857 = vrot.lane.b32.xlu0 %v3810, 2
  %v3858 = vpop.permute.xlu0 %3857
  %3859 = vrot.lane.b32.xlu0 %v3812, 2
  %v3860 = vpop.permute.xlu0 %3859
  %3861 = vrot.lane.b32.xlu0 %v3814, 2
  %v3862 = vpop.permute.xlu0 %3861
  %3863 = vrot.lane.b32.xlu0 %v3816, 2
  %v3864 = vpop.permute.xlu0 %3863
  %3865 = vrot.lane.b32.xlu0 %v3818, 2
  %v3866 = vpop.permute.xlu0 %3865
  %3867 = vrot.lane.b32.xlu0 %v3820, 2
  %v3868 = vpop.permute.xlu0 %3867
  %3869 = vrot.lane.b32.xlu0 %v3822, 2
  %v3870 = vpop.permute.xlu0 %3869
  %3871 = vrot.lane.b32.xlu0 %v3824, 2
  %v3872 = vpop.permute.xlu0 %3871
  %3873 = vrot.lane.b32.xlu0 %v3826, 2
  %v3874 = vpop.permute.xlu0 %3873
  %3875 = vrot.lane.b32.xlu0 %v3828, 2
  %v3876 = vpop.permute.xlu0 %3875
  %3893 = vrot.lane.b32.xlu0 %v3798, 4
  %v3894 = vpop.permute.xlu0 %3893
  %3895 = vrot.lane.b32.xlu0 %v3800, 4
  %v3896 = vpop.permute.xlu0 %3895
  %3897 = vrot.lane.b32.xlu0 %v3802, 4
  %v3898 = vpop.permute.xlu0 %3897
  %3899 = vrot.lane.b32.xlu0 %v3804, 4
  %v3900 = vpop.permute.xlu0 %3899
  %3901 = vrot.lane.b32.xlu0 %v3806, 4
  %v3902 = vpop.permute.xlu0 %3901
  %3903 = vrot.lane.b32.xlu0 %v3808, 4
  %v3904 = vpop.permute.xlu0 %3903
  %3905 = vrot.lane.b32.xlu0 %v3810, 4
  %v3906 = vpop.permute.xlu0 %3905
  %3907 = vrot.lane.b32.xlu0 %v3812, 4
  %v3908 = vpop.permute.xlu0 %3907
  %3909 = vrot.lane.b32.xlu0 %v3814, 4
  %v3910 = vpop.permute.xlu0 %3909
  %3911 = vrot.lane.b32.xlu0 %v3816, 4
  %v3912 = vpop.permute.xlu0 %3911
  %3913 = vrot.lane.b32.xlu0 %v3818, 4
  %v3914 = vpop.permute.xlu0 %3913
  %3915 = vrot.lane.b32.xlu0 %v3820, 4
  %v3916 = vpop.permute.xlu0 %3915
  %3917 = vrot.lane.b32.xlu0 %v3822, 4
  %v3918 = vpop.permute.xlu0 %3917
  %3919 = vrot.lane.b32.xlu0 %v3824, 4
  %v3920 = vpop.permute.xlu0 %3919
  %3921 = vrot.lane.b32.xlu0 %v3826, 4
  %v3922 = vpop.permute.xlu0 %3921
  %3923 = vrot.lane.b32.xlu0 %v3828, 4
  %v3924 = vpop.permute.xlu0 %3923
  %v3941 = vsel %vm2302, %v3798, %v3846
  %v3942 = vsel %vm2302, %v3800, %v3848
  %v3943 = vsel %vm2302, %v3802, %v3850
  %v3944 = vsel %vm2302, %v3804, %v3852
  %v3945 = vsel %vm2302, %v3806, %v3854
  %v3946 = vsel %vm2302, %v3808, %v3856
  %v3947 = vsel %vm2302, %v3810, %v3858
  %v3948 = vsel %vm2302, %v3812, %v3860
  %v3949 = vsel %vm2302, %v3814, %v3862
  %v3950 = vsel %vm2302, %v3816, %v3864
  %v3951 = vsel %vm2302, %v3818, %v3866
  %v3952 = vsel %vm2302, %v3820, %v3868
  %v3953 = vsel %vm2302, %v3822, %v3870
  %v3954 = vsel %vm2302, %v3824, %v3872
  %v3955 = vsel %vm2302, %v3826, %v3874
  %v3956 = vsel %vm2302, %v3828, %v3876
  %v3957 = vsel %vm2319, %v3941, %v3894
  %v3958 = vsel %vm2319, %v3942, %v3896
  %v3959 = vsel %vm2319, %v3943, %v3898
  %v3960 = vsel %vm2319, %v3944, %v3900
  %v3961 = vsel %vm2319, %v3945, %v3902
  %v3962 = vsel %vm2319, %v3946, %v3904
  %v3963 = vsel %vm2319, %v3947, %v3906
  %v3964 = vsel %vm2319, %v3948, %v3908
  %v3965 = vsel %vm2319, %v3949, %v3910
  %v3966 = vsel %vm2319, %v3950, %v3912
  %v3967 = vsel %vm2319, %v3951, %v3914
  %v3968 = vsel %vm2319, %v3952, %v3916
  %v3969 = vsel %vm2319, %v3953, %v3918
  %v3970 = vsel %vm2319, %v3954, %v3920
  %v3971 = vsel %vm2319, %v3955, %v3922
  %v3972 = vsel %vm2319, %v3956, %v3924
  %v3973 = vmul.f32 %v3367, %v3957
  %v3974 = vmul.f32 %v3372, %v3958
  %v3975 = vmul.f32 %v3377, %v3959
  %v3976 = vmul.f32 %v3382, %v3960
  %v3977 = vmul.f32 %v3387, %v3961
  %v3978 = vmul.f32 %v3392, %v3962
  %v3979 = vmul.f32 %v3397, %v3963
  %v3980 = vmul.f32 %v3402, %v3964
  %v3981 = vmul.f32 %v3407, %v3965
  %v3982 = vmul.f32 %v3412, %v3966
  %v3983 = vmul.f32 %v3417, %v3967
  %v3984 = vmul.f32 %v3422, %v3968
  %v3985 = vmul.f32 %v3427, %v3969
  %v3986 = vmul.f32 %v3432, %v3970
  %v3987 = vmul.f32 %v3437, %v3971
  %v3988 = vmul.f32 %v3442, %v3972
  %v3989 = vld [vmem:[%s12] sm:$0x3f]
  %v3990 = vld [vmem:[%s14] sm:$0xf]
  %v3991 = vld [vmem:[%s14 + $0x4] sm:$0xf]
  %v3992 = vld [vmem:[%s14 + $0x8] sm:$0xf]
  %v3993 = vld [vmem:[%s14 + $0xc] sm:$0xf]
  %v3994 = vld [vmem:[%s14 + $0x10] sm:$0xf]
  %v3995 = vld [vmem:[%s14 + $0x14] sm:$0xf]
  %v3996 = vld [vmem:[%s14 + $0x18] sm:$0xf]
  %v3997 = vld [vmem:[%s14 + $0x1c] sm:$0xf]
  %v3998 = vld [vmem:[%s14 + $0x20] sm:$0xf]
  %v3999 = vld [vmem:[%s14 + $0x24] sm:$0xf]
  %v4000 = vld [vmem:[%s14 + $0x28] sm:$0xf]
  %v4001 = vld [vmem:[%s14 + $0x2c] sm:$0xf]
  %v4002 = vld [vmem:[%s14 + $0x30] sm:$0xf]
  %v4003 = vld [vmem:[%s14 + $0x34] sm:$0xf]
  %v4004 = vld [vmem:[%s14 + $0x38] sm:$0xf]
  %v4005 = vld [vmem:[%s14 + $0x3c] sm:$0xf]
  %v4006 = vld [vmem:[%s15] sm:$0x3]
  %v4007 = vld [vmem:[%s16] sm:$0x1]
  %v4008 = vld [vmem:[%s13] sm:$0x3f]
  %v4010 = vsel %vm2372, %v3973, 0
  %v4013 = vsel %vm2372, %v3974, 0
  %v4016 = vsel %vm2372, %v3975, 0
  %v4019 = vsel %vm2372, %v3976, 0
  %v4022 = vsel %vm2372, %v3977, 0
  %v4025 = vsel %vm2372, %v3978, 0
  %v4028 = vsel %vm2372, %v3979, 0
  %v4031 = vsel %vm2372, %v3980, 0
  %v4034 = vsel %vm2372, %v3981, 0
  %v4037 = vsel %vm2372, %v3982, 0
  %v4040 = vsel %vm2372, %v3983, 0
  %v4043 = vsel %vm2372, %v3984, 0
  %v4046 = vsel %vm2372, %v3985, 0
  %v4049 = vsel %vm2372, %v3986, 0
  %v4052 = vsel %vm2372, %v3987, 0
  %v4055 = vsel %vm2372, %v3988, 0
  %v4058 = vsel %vm2421, %v3989, 0
  %4060 = vmatprep.subr.mxu0 0.0
  %4061 = vmatpush1.msra.mxu0 %v4058
  %4062 = vmatprep.subr.mxu0 0.0
  %4063 = vmatpush1.msra.mxu0 0.0
  %4064 = vmatprep.subr.mxu0 0.0
  %4065 = vmatpush1.msra.mxu0 0.0
  %4066 = vmatprep.subr.mxu0 0.0
  %4067 = vmatpush1.msra.mxu0 0.0
  %4068 = vmatprep.subr.mxu0 0.0
  %4069 = vmatpush1.msra.mxu0 0.0
  %4070 = vmatprep.subr.mxu0 0.0
  %4071 = vmatpush1.msra.mxu0 0.0
  %4072 = vmatprep.subr.mxu0 0.0
  %4073 = vmatpush1.msra.mxu0 0.0
  %4074 = vmatprep.subr.mxu0 0.0
  %4075 = vmatpush1.msra.mxu0 0.0
  %4076 = vmatprep.subr.mxu0 0.0
  %4077 = vmatpush1.msra.mxu0 0.0
  %4078 = vmatprep.subr.mxu0 0.0
  %4079 = vmatpush1.msra.mxu0 0.0
  %4080 = vmatprep.subr.mxu0 0.0
  %4081 = vmatpush1.msra.mxu0 0.0
  %4082 = vmatprep.subr.mxu0 0.0
  %4083 = vmatpush1.msra.mxu0 0.0
  %4084 = vmatprep.subr.mxu0 0.0
  %4085 = vmatpush1.msra.mxu0 0.0
  %4086 = vmatprep.subr.mxu0 0.0
  %4087 = vmatpush1.msra.mxu0 0.0
  %4088 = vmatprep.subr.mxu0 0.0
  %4089 = vmatpush1.msra.mxu0 0.0
  %4090 = vmatprep.subr.mxu0 0.0
  %4091 = vmatpush1.msra.mxu0 0.0
  %4092 = vmatprep.subr.mxu0 0.0
  %4093 = vmatpush1.msra.mxu0 0.0
  %4094 = vmatprep.subr.mxu0 0.0
  %4095 = vmatpush1.msra.mxu0 0.0
  %4096 = vmatprep.subr.mxu0 0.0
  %4097 = vmatpush1.msra.mxu0 0.0
  %4098 = vmatprep.subr.mxu0 0.0
  %4099 = vmatpush1.msra.mxu0 0.0
  %4100 = vmatprep.subr.mxu0 0.0
  %4101 = vmatpush1.msra.mxu0 0.0
  %4102 = vmatprep.subr.mxu0 0.0
  %4103 = vmatpush1.msra.mxu0 0.0
  %4104 = vmatprep.subr.mxu0 0.0
  %4105 = vmatpush1.msra.mxu0 0.0
  %4106 = vmatprep.subr.mxu0 0.0
  %4107 = vmatpush1.msra.mxu0 0.0
  %4108 = vmatprep.subr.mxu0 0.0
  %4109 = vmatpush1.msra.mxu0 0.0
  %4110 = vmatprep.subr.mxu0 0.0
  %4111 = vmatpush1.msra.mxu0 0.0
  %4112 = vmatprep.subr.mxu0 0.0
  %4113 = vmatpush1.msra.mxu0 0.0
  %4114 = vmatprep.subr.mxu0 0.0
  %4115 = vmatpush1.msra.mxu0 0.0
  %4116 = vmatprep.subr.mxu0 0.0
  %4117 = vmatpush1.msra.mxu0 0.0
  %4118 = vmatprep.subr.mxu0 0.0
  %4119 = vmatpush1.msra.mxu0 0.0
  %4120 = vmatprep.subr.mxu0 0.0
  %4121 = vmatpush1.msra.mxu0 0.0
  %4122 = vmatprep.subr.mxu0 0.0
  %4123 = vmatpush1.msra.mxu0 0.0
  %4124 = vmatprep.mubr.f32.mxu0 0.0
  %4125 = vmatmul.mubr.f32.gmra.mrb[0].mxu0 %v4010
  %v4126 = vpop.f32.mrb[0].mxu0
  %v4127 = vadd.f32 0.0, %v4126
  %v4128 = vpop.f32.mrb[0].mxu0
  %4129 = vmatprep.mubr.f32.mxu0 0.0
  %4130 = vmatmul.mubr.f32.gmra.mrb[0].mxu0 %v4013
  %v4131 = vpop.f32.mrb[0].mxu0
  %v4132 = vadd.f32 0.0, %v4131
  %v4133 = vpop.f32.mrb[0].mxu0
  %4134 = vmatprep.mubr.f32.mxu0 0.0
  %4135 = vmatmul.mubr.f32.gmra.mrb[0].mxu0 %v4016
  %v4136 = vpop.f32.mrb[0].mxu0
  %v4137 = vadd.f32 0.0, %v4136
  %v4138 = vpop.f32.mrb[0].mxu0
  %4139 = vmatprep.mubr.f32.mxu0 0.0
  %4140 = vmatmul.mubr.f32.gmra.mrb[0].mxu0 %v4019
  %v4141 = vpop.f32.mrb[0].mxu0
  %v4142 = vadd.f32 0.0, %v4141
  %v4143 = vpop.f32.mrb[0].mxu0
  %4144 = vmatprep.mubr.f32.mxu0 0.0
  %4145 = vmatmul.mubr.f32.gmra.mrb[0].mxu0 %v4022
  %v4146 = vpop.f32.mrb[0].mxu0
  %v4147 = vadd.f32 0.0, %v4146
  %v4148 = vpop.f32.mrb[0].mxu0
  %4149 = vmatprep.mubr.f32.mxu0 0.0
  %4150 = vmatmul.mubr.f32.gmra.mrb[0].mxu0 %v4025
  %v4151 = vpop.f32.mrb[0].mxu0
  %v4152 = vadd.f32 0.0, %v4151
  %v4153 = vpop.f32.mrb[0].mxu0
  %4154 = vmatprep.mubr.f32.mxu0 0.0
  %4155 = vmatmul.mubr.f32.gmra.mrb[0].mxu0 %v4028
  %v4156 = vpop.f32.mrb[0].mxu0
  %v4157 = vadd.f32 0.0, %v4156
  %v4158 = vpop.f32.mrb[0].mxu0
  %4159 = vmatprep.mubr.f32.mxu0 0.0
  %4160 = vmatmul.mubr.f32.gmra.mrb[0].mxu0 %v4031
  %v4161 = vpop.f32.mrb[0].mxu0
  %v4162 = vadd.f32 0.0, %v4161
  %v4163 = vpop.f32.mrb[0].mxu0
  %4164 = vmatprep.mubr.f32.mxu0 0.0
  %4165 = vmatmul.mubr.f32.gmra.mrb[0].mxu0 %v4034
  %v4166 = vpop.f32.mrb[0].mxu0
  %v4167 = vadd.f32 0.0, %v4166
  %v4168 = vpop.f32.mrb[0].mxu0
  %4169 = vmatprep.mubr.f32.mxu0 0.0
  %4170 = vmatmul.mubr.f32.gmra.mrb[0].mxu0 %v4037
  %v4171 = vpop.f32.mrb[0].mxu0
  %v4172 = vadd.f32 0.0, %v4171
  %v4173 = vpop.f32.mrb[0].mxu0
  %4174 = vmatprep.mubr.f32.mxu0 0.0
  %4175 = vmatmul.mubr.f32.gmra.mrb[0].mxu0 %v4040
  %v4176 = vpop.f32.mrb[0].mxu0
  %v4177 = vadd.f32 0.0, %v4176
  %v4178 = vpop.f32.mrb[0].mxu0
  %4179 = vmatprep.mubr.f32.mxu0 0.0
  %4180 = vmatmul.mubr.f32.gmra.mrb[0].mxu0 %v4043
  %v4181 = vpop.f32.mrb[0].mxu0
  %v4182 = vadd.f32 0.0, %v4181
  %v4183 = vpop.f32.mrb[0].mxu0
  %4184 = vmatprep.mubr.f32.mxu0 0.0
  %4185 = vmatmul.mubr.f32.gmra.mrb[0].mxu0 %v4046
  %v4186 = vpop.f32.mrb[0].mxu0
  %v4187 = vadd.f32 0.0, %v4186
  %v4188 = vpop.f32.mrb[0].mxu0
  %4189 = vmatprep.mubr.f32.mxu0 0.0
  %4190 = vmatmul.mubr.f32.gmra.mrb[0].mxu0 %v4049
  %v4191 = vpop.f32.mrb[0].mxu0
  %v4192 = vadd.f32 0.0, %v4191
  %v4193 = vpop.f32.mrb[0].mxu0
  %4194 = vmatprep.mubr.f32.mxu0 0.0
  %4195 = vmatmul.mubr.f32.gmra.mrb[0].mxu0 %v4052
  %v4196 = vpop.f32.mrb[0].mxu0
  %v4197 = vadd.f32 0.0, %v4196
  %v4198 = vpop.f32.mrb[0].mxu0
  %4199 = vmatprep.mubr.f32.mxu0 0.0
  %4200 = vmatmul.mubr.f32.gmra.mrb[0].mxu0 %v4055
  %v4201 = vpop.f32.mrb[0].mxu0
  %v4202 = vadd.f32 0.0, %v4201
  %v4203 = vpop.f32.mrb[0].mxu0
  %4204 = vdwg.mxu0
  %v4205 = vmul.f32 %v4127, %v4127
  %v4206 = vmul.f32 %v4132, %v4132
  %v4207 = vmul.f32 %v4137, %v4137
  %v4208 = vmul.f32 %v4142, %v4142
  %v4209 = vmul.f32 %v4147, %v4147
  %v4210 = vmul.f32 %v4152, %v4152
  %v4211 = vmul.f32 %v4157, %v4157
  %v4212 = vmul.f32 %v4162, %v4162
  %v4213 = vmul.f32 %v4167, %v4167
  %v4214 = vmul.f32 %v4172, %v4172
  %v4215 = vmul.f32 %v4177, %v4177
  %v4216 = vmul.f32 %v4182, %v4182
  %v4217 = vmul.f32 %v4187, %v4187
  %v4218 = vmul.f32 %v4192, %v4192
  %v4219 = vmul.f32 %v4197, %v4197
  %v4220 = vmul.f32 %v4202, %v4202
  %4237 = vrot.lane.b32.xlu0 %v4205, 126
  %v4238 = vpop.permute.xlu0 %4237
  %4239 = vrot.lane.b32.xlu0 %v4206, 126
  %v4240 = vpop.permute.xlu0 %4239
  %4241 = vrot.lane.b32.xlu0 %v4207, 126
  %v4242 = vpop.permute.xlu0 %4241
  %4243 = vrot.lane.b32.xlu0 %v4208, 126
  %v4244 = vpop.permute.xlu0 %4243
  %4245 = vrot.lane.b32.xlu0 %v4209, 126
  %v4246 = vpop.permute.xlu0 %4245
  %4247 = vrot.lane.b32.xlu0 %v4210, 126
  %v4248 = vpop.permute.xlu0 %4247
  %4249 = vrot.lane.b32.xlu0 %v4211, 126
  %v4250 = vpop.permute.xlu0 %4249
  %4251 = vrot.lane.b32.xlu0 %v4212, 126
  %v4252 = vpop.permute.xlu0 %4251
  %4253 = vrot.lane.b32.xlu0 %v4213, 126
  %v4254 = vpop.permute.xlu0 %4253
  %4255 = vrot.lane.b32.xlu0 %v4214, 126
  %v4256 = vpop.permute.xlu0 %4255
  %4257 = vrot.lane.b32.xlu0 %v4215, 126
  %v4258 = vpop.permute.xlu0 %4257
  %4259 = vrot.lane.b32.xlu0 %v4216, 126
  %v4260 = vpop.permute.xlu0 %4259
  %4261 = vrot.lane.b32.xlu0 %v4217, 126
  %v4262 = vpop.permute.xlu0 %4261
  %4263 = vrot.lane.b32.xlu0 %v4218, 126
  %v4264 = vpop.permute.xlu0 %4263
  %4265 = vrot.lane.b32.xlu0 %v4219, 126
  %v4266 = vpop.permute.xlu0 %4265
  %4267 = vrot.lane.b32.xlu0 %v4220, 126
  %v4268 = vpop.permute.xlu0 %4267
  %v4285 = vadd.f32 %v4205, %v4238
  %v4286 = vadd.f32 %v4206, %v4240
  %v4287 = vadd.f32 %v4207, %v4242
  %v4288 = vadd.f32 %v4208, %v4244
  %v4289 = vadd.f32 %v4209, %v4246
  %v4290 = vadd.f32 %v4210, %v4248
  %v4291 = vadd.f32 %v4211, %v4250
  %v4292 = vadd.f32 %v4212, %v4252
  %v4293 = vadd.f32 %v4213, %v4254
  %v4294 = vadd.f32 %v4214, %v4256
  %v4295 = vadd.f32 %v4215, %v4258
  %v4296 = vadd.f32 %v4216, %v4260
  %v4297 = vadd.f32 %v4217, %v4262
  %v4298 = vadd.f32 %v4218, %v4264
  %v4299 = vadd.f32 %v4219, %v4266
  %v4300 = vadd.f32 %v4220, %v4268
  %4301 = vrot.lane.b32.xlu0 %v4205, 124
  %v4302 = vpop.permute.xlu0 %4301
  %4303 = vrot.lane.b32.xlu0 %v4206, 124
  %v4304 = vpop.permute.xlu0 %4303
  %4305 = vrot.lane.b32.xlu0 %v4207, 124
  %v4306 = vpop.permute.xlu0 %4305
  %4307 = vrot.lane.b32.xlu0 %v4208, 124
  %v4308 = vpop.permute.xlu0 %4307
  %4309 = vrot.lane.b32.xlu0 %v4209, 124
  %v4310 = vpop.permute.xlu0 %4309
  %4311 = vrot.lane.b32.xlu0 %v4210, 124
  %v4312 = vpop.permute.xlu0 %4311
  %4313 = vrot.lane.b32.xlu0 %v4211, 124
  %v4314 = vpop.permute.xlu0 %4313
  %4315 = vrot.lane.b32.xlu0 %v4212, 124
  %v4316 = vpop.permute.xlu0 %4315
  %4317 = vrot.lane.b32.xlu0 %v4213, 124
  %v4318 = vpop.permute.xlu0 %4317
  %4319 = vrot.lane.b32.xlu0 %v4214, 124
  %v4320 = vpop.permute.xlu0 %4319
  %4321 = vrot.lane.b32.xlu0 %v4215, 124
  %v4322 = vpop.permute.xlu0 %4321
  %4323 = vrot.lane.b32.xlu0 %v4216, 124
  %v4324 = vpop.permute.xlu0 %4323
  %4325 = vrot.lane.b32.xlu0 %v4217, 124
  %v4326 = vpop.permute.xlu0 %4325
  %4327 = vrot.lane.b32.xlu0 %v4218, 124
  %v4328 = vpop.permute.xlu0 %4327
  %4329 = vrot.lane.b32.xlu0 %v4219, 124
  %v4330 = vpop.permute.xlu0 %4329
  %4331 = vrot.lane.b32.xlu0 %v4220, 124
  %v4332 = vpop.permute.xlu0 %4331
  %v4349 = vadd.f32 %v4285, %v4302
  %v4350 = vadd.f32 %v4286, %v4304
  %v4351 = vadd.f32 %v4287, %v4306
  %v4352 = vadd.f32 %v4288, %v4308
  %v4353 = vadd.f32 %v4289, %v4310
  %v4354 = vadd.f32 %v4290, %v4312
  %v4355 = vadd.f32 %v4291, %v4314
  %v4356 = vadd.f32 %v4292, %v4316
  %v4357 = vadd.f32 %v4293, %v4318
  %v4358 = vadd.f32 %v4294, %v4320
  %v4359 = vadd.f32 %v4295, %v4322
  %v4360 = vadd.f32 %v4296, %v4324
  %v4361 = vadd.f32 %v4297, %v4326
  %v4362 = vadd.f32 %v4298, %v4328
  %v4363 = vadd.f32 %v4299, %v4330
  %v4364 = vadd.f32 %v4300, %v4332
  %v4365 = vmax.f32 %v4349, 1e-08
  %v4366 = vmax.f32 %v4350, 1e-08
  %v4367 = vmax.f32 %v4351, 1e-08
  %v4368 = vmax.f32 %v4352, 1e-08
  %v4369 = vmax.f32 %v4353, 1e-08
  %v4370 = vmax.f32 %v4354, 1e-08
  %v4371 = vmax.f32 %v4355, 1e-08
  %v4372 = vmax.f32 %v4356, 1e-08
  %v4373 = vmax.f32 %v4357, 1e-08
  %v4374 = vmax.f32 %v4358, 1e-08
  %v4375 = vmax.f32 %v4359, 1e-08
  %v4376 = vmax.f32 %v4360, 1e-08
  %v4377 = vmax.f32 %v4361, 1e-08
  %v4378 = vmax.f32 %v4362, 1e-08
  %v4379 = vmax.f32 %v4363, 1e-08
  %v4380 = vmax.f32 %v4364, 1e-08
  %v4381 = vrsqrt.pop %v4365
  %v4382 = vmul.f32 %v4365, %v4381
  %vm4383 = vcmp.eq.f32.partialorder %v4365, inf
  %v4384 = vsel %vm4383, %v4365, %v4382
  %vm4385 = vcmp.eq.f32.partialorder %v4365, 0.0
  %v4386 = vand.u32 %v4365, 2147483648
  %v4387 = vsel %vm4385, %v4386, %v4384
  %v4388 = vrsqrt.pop %v4366
  %v4389 = vmul.f32 %v4366, %v4388
  %vm4390 = vcmp.eq.f32.partialorder %v4366, inf
  %v4391 = vsel %vm4390, %v4366, %v4389
  %vm4392 = vcmp.eq.f32.partialorder %v4366, 0.0
  %v4393 = vand.u32 %v4366, 2147483648
  %v4394 = vsel %vm4392, %v4393, %v4391
  %v4395 = vrsqrt.pop %v4367
  %v4396 = vmul.f32 %v4367, %v4395
  %vm4397 = vcmp.eq.f32.partialorder %v4367, inf
  %v4398 = vsel %vm4397, %v4367, %v4396
  %vm4399 = vcmp.eq.f32.partialorder %v4367, 0.0
  %v4400 = vand.u32 %v4367, 2147483648
  %v4401 = vsel %vm4399, %v4400, %v4398
  %v4402 = vrsqrt.pop %v4368
  %v4403 = vmul.f32 %v4368, %v4402
  %vm4404 = vcmp.eq.f32.partialorder %v4368, inf
  %v4405 = vsel %vm4404, %v4368, %v4403
  %vm4406 = vcmp.eq.f32.partialorder %v4368, 0.0
  %v4407 = vand.u32 %v4368, 2147483648
  %v4408 = vsel %vm4406, %v4407, %v4405
  %v4409 = vrsqrt.pop %v4369
  %v4410 = vmul.f32 %v4369, %v4409
  %vm4411 = vcmp.eq.f32.partialorder %v4369, inf
  %v4412 = vsel %vm4411, %v4369, %v4410
  %vm4413 = vcmp.eq.f32.partialorder %v4369, 0.0
  %v4414 = vand.u32 %v4369, 2147483648
  %v4415 = vsel %vm4413, %v4414, %v4412
  %v4416 = vrsqrt.pop %v4370
  %v4417 = vmul.f32 %v4370, %v4416
  %vm4418 = vcmp.eq.f32.partialorder %v4370, inf
  %v4419 = vsel %vm4418, %v4370, %v4417
  %vm4420 = vcmp.eq.f32.partialorder %v4370, 0.0
  %v4421 = vand.u32 %v4370, 2147483648
  %v4422 = vsel %vm4420, %v4421, %v4419
  %v4423 = vrsqrt.pop %v4371
  %v4424 = vmul.f32 %v4371, %v4423
  %vm4425 = vcmp.eq.f32.partialorder %v4371, inf
  %v4426 = vsel %vm4425, %v4371, %v4424
  %vm4427 = vcmp.eq.f32.partialorder %v4371, 0.0
  %v4428 = vand.u32 %v4371, 2147483648
  %v4429 = vsel %vm4427, %v4428, %v4426
  %v4430 = vrsqrt.pop %v4372
  %v4431 = vmul.f32 %v4372, %v4430
  %vm4432 = vcmp.eq.f32.partialorder %v4372, inf
  %v4433 = vsel %vm4432, %v4372, %v4431
  %vm4434 = vcmp.eq.f32.partialorder %v4372, 0.0
  %v4435 = vand.u32 %v4372, 2147483648
  %v4436 = vsel %vm4434, %v4435, %v4433
  %v4437 = vrsqrt.pop %v4373
  %v4438 = vmul.f32 %v4373, %v4437
  %vm4439 = vcmp.eq.f32.partialorder %v4373, inf
  %v4440 = vsel %vm4439, %v4373, %v4438
  %vm4441 = vcmp.eq.f32.partialorder %v4373, 0.0
  %v4442 = vand.u32 %v4373, 2147483648
  %v4443 = vsel %vm4441, %v4442, %v4440
  %v4444 = vrsqrt.pop %v4374
  %v4445 = vmul.f32 %v4374, %v4444
  %vm4446 = vcmp.eq.f32.partialorder %v4374, inf
  %v4447 = vsel %vm4446, %v4374, %v4445
  %vm4448 = vcmp.eq.f32.partialorder %v4374, 0.0
  %v4449 = vand.u32 %v4374, 2147483648
  %v4450 = vsel %vm4448, %v4449, %v4447
  %v4451 = vrsqrt.pop %v4375
  %v4452 = vmul.f32 %v4375, %v4451
  %vm4453 = vcmp.eq.f32.partialorder %v4375, inf
  %v4454 = vsel %vm4453, %v4375, %v4452
  %vm4455 = vcmp.eq.f32.partialorder %v4375, 0.0
  %v4456 = vand.u32 %v4375, 2147483648
  %v4457 = vsel %vm4455, %v4456, %v4454
  %v4458 = vrsqrt.pop %v4376
  %v4459 = vmul.f32 %v4376, %v4458
  %vm4460 = vcmp.eq.f32.partialorder %v4376, inf
  %v4461 = vsel %vm4460, %v4376, %v4459
  %vm4462 = vcmp.eq.f32.partialorder %v4376, 0.0
  %v4463 = vand.u32 %v4376, 2147483648
  %v4464 = vsel %vm4462, %v4463, %v4461
  %v4465 = vrsqrt.pop %v4377
  %v4466 = vmul.f32 %v4377, %v4465
  %vm4467 = vcmp.eq.f32.partialorder %v4377, inf
  %v4468 = vsel %vm4467, %v4377, %v4466
  %vm4469 = vcmp.eq.f32.partialorder %v4377, 0.0
  %v4470 = vand.u32 %v4377, 2147483648
  %v4471 = vsel %vm4469, %v4470, %v4468
  %v4472 = vrsqrt.pop %v4378
  %v4473 = vmul.f32 %v4378, %v4472
  %vm4474 = vcmp.eq.f32.partialorder %v4378, inf
  %v4475 = vsel %vm4474, %v4378, %v4473
  %vm4476 = vcmp.eq.f32.partialorder %v4378, 0.0
  %v4477 = vand.u32 %v4378, 2147483648
  %v4478 = vsel %vm4476, %v4477, %v4475
  %v4479 = vrsqrt.pop %v4379
  %v4480 = vmul.f32 %v4379, %v4479
  %vm4481 = vcmp.eq.f32.partialorder %v4379, inf
  %v4482 = vsel %vm4481, %v4379, %v4480
  %vm4483 = vcmp.eq.f32.partialorder %v4379, 0.0
  %v4484 = vand.u32 %v4379, 2147483648
  %v4485 = vsel %vm4483, %v4484, %v4482
  %v4486 = vrsqrt.pop %v4380
  %v4487 = vmul.f32 %v4380, %v4486
  %vm4488 = vcmp.eq.f32.partialorder %v4380, inf
  %v4489 = vsel %vm4488, %v4380, %v4487
  %vm4490 = vcmp.eq.f32.partialorder %v4380, 0.0
  %v4491 = vand.u32 %v4380, 2147483648
  %v4492 = vsel %vm4490, %v4491, %v4489
  %v4493 = vpack.c.bf16 %v3234, %v3233
  %v4494 = vpack.c.bf16 %v3236, %v3235
  %v4495 = vpack.c.bf16 %v3238, %v3237
  %v4496 = vpack.c.bf16 %v3240, %v3239
  %v4497 = vpack.c.bf16 %v3242, %v3241
  %v4498 = vpack.c.bf16 %v3244, %v3243
  %v4499 = vpack.c.bf16 %v3246, %v3245
  %v4500 = vpack.c.bf16 %v3248, %v3247
  %v4502 = vlaneseq
  %v4503 = vshrl.u32 %v4502, 7
  %v4504 = vsub.s32 0, %v4503
  %v4505 = vrot.slane %v4007, %v4504
  %v4523 = vunpack.c.l.b16 %v3990
  %v4524 = vunpack.c.l.b16 %v3991
  %v4525 = vunpack.c.l.b16 %v3992
  %v4526 = vunpack.c.l.b16 %v3993
  %v4527 = vunpack.c.l.b16 %v3994
  %v4528 = vunpack.c.l.b16 %v3995
  %v4529 = vunpack.c.l.b16 %v3996
  %v4530 = vunpack.c.l.b16 %v3997
  %v4531 = vunpack.c.l.b16 %v3998
  %v4532 = vunpack.c.l.b16 %v3999
  %v4533 = vunpack.c.l.b16 %v4000
  %v4534 = vunpack.c.l.b16 %v4001
  %v4535 = vunpack.c.l.b16 %v4002
  %v4536 = vunpack.c.l.b16 %v4003
  %v4537 = vunpack.c.l.b16 %v4004
  %v4538 = vunpack.c.l.b16 %v4005
  %v4539 = vpack.c.b16 %v4524, %v4523
  %v4540 = vpack.c.b16 %v4526, %v4525
  %v4541 = vpack.c.b16 %v4528, %v4527
  %v4542 = vpack.c.b16 %v4530, %v4529
  %v4543 = vpack.c.b16 %v4532, %v4531
  %v4544 = vpack.c.b16 %v4534, %v4533
  %v4545 = vpack.c.b16 %v4536, %v4535
  %v4546 = vpack.c.b16 %v4538, %v4537
  %4555 = vmatprep.subr.bf16.mxu0 0
  %4556 = vmatpush1.bf16.msra.mxu0 %v4539
  %4557 = vmatprep.subr.bf16.mxu0 0
  %4558 = vmatpush1.bf16.msra.mxu0 %v4540
  %4559 = vmatprep.subr.bf16.mxu0 0
  %4560 = vmatpush1.bf16.msra.mxu0 %v4541
  %4561 = vmatprep.subr.bf16.mxu0 0
  %4562 = vmatpush1.bf16.msra.mxu0 %v4542
  %4563 = vmatprep.subr.bf16.mxu0 0
  %4564 = vmatpush1.bf16.msra.mxu0 %v4543
  %4565 = vmatprep.subr.bf16.mxu0 0
  %4566 = vmatpush1.bf16.msra.mxu0 %v4544
  %4567 = vmatprep.subr.bf16.mxu0 0
  %4568 = vmatpush1.bf16.msra.mxu0 %v4545
  %4569 = vmatprep.subr.bf16.mxu0 0
  %4570 = vmatpush1.bf16.msra.mxu0 %v4546
  %4571 = vmatprep.subr.bf16.mxu0 0
  %4572 = vmatpush1.bf16.msra.mxu0 0
  %4573 = vmatprep.subr.bf16.mxu0 0
  %4574 = vmatpush1.bf16.msra.mxu0 0
  %4575 = vmatprep.subr.bf16.mxu0 0
  %4576 = vmatpush1.bf16.msra.mxu0 0
  %4577 = vmatprep.subr.bf16.mxu0 0
  %4578 = vmatpush1.bf16.msra.mxu0 0
  %4579 = vmatprep.subr.bf16.mxu0 0
  %4580 = vmatpush1.bf16.msra.mxu0 0
  %4581 = vmatprep.subr.bf16.mxu0 0
  %4582 = vmatpush1.bf16.msra.mxu0 0
  %4583 = vmatprep.subr.bf16.mxu0 0
  %4584 = vmatpush1.bf16.msra.mxu0 0
  %4585 = vmatprep.subr.bf16.mxu0 0
  %4586 = vmatpush1.bf16.msra.mxu0 0
  %4587 = vmatprep.mubr.bf16.mxu0 0
  %4588 = vmatmul.mubr.bf16.gmra.mrb[0].mxu0 %v4493
  %v4589 = vpop.f32.mrb[0].mxu0
  %v4590 = vadd.f32 %v4505, %v4589
  %v4591 = vpop.f32.mrb[0].mxu0
  %v4592 = vpop.f32.mrb[0].mxu0
  %v4593 = vadd.f32 %v4505, %v4592
  %v4594 = vpop.f32.mrb[0].mxu0
  %4595 = vmatprep.mubr.bf16.mxu0 0
  %4596 = vmatmul.mubr.bf16.gmra.mrb[0].mxu0 %v4494
  %v4597 = vpop.f32.mrb[0].mxu0
  %v4598 = vadd.f32 %v4505, %v4597
  %v4599 = vpop.f32.mrb[0].mxu0
  %v4600 = vpop.f32.mrb[0].mxu0
  %v4601 = vadd.f32 %v4505, %v4600
  %v4602 = vpop.f32.mrb[0].mxu0
  %4603 = vmatprep.mubr.bf16.mxu0 0
  %4604 = vmatmul.mubr.bf16.gmra.mrb[0].mxu0 %v4495
  %v4605 = vpop.f32.mrb[0].mxu0
  %v4606 = vadd.f32 %v4505, %v4605
  %v4607 = vpop.f32.mrb[0].mxu0
  %v4608 = vpop.f32.mrb[0].mxu0
  %v4609 = vadd.f32 %v4505, %v4608
  %v4610 = vpop.f32.mrb[0].mxu0
  %4611 = vmatprep.mubr.bf16.mxu0 0
  %4612 = vmatmul.mubr.bf16.gmra.mrb[0].mxu0 %v4496
  %v4613 = vpop.f32.mrb[0].mxu0
  %v4614 = vadd.f32 %v4505, %v4613
  %v4615 = vpop.f32.mrb[0].mxu0
  %v4616 = vpop.f32.mrb[0].mxu0
  %v4617 = vadd.f32 %v4505, %v4616
  %v4618 = vpop.f32.mrb[0].mxu0
  %4619 = vmatprep.mubr.bf16.mxu0 0
  %4620 = vmatmul.mubr.bf16.gmra.mrb[0].mxu0 %v4497
  %v4621 = vpop.f32.mrb[0].mxu0
  %v4622 = vadd.f32 %v4505, %v4621
  %v4623 = vpop.f32.mrb[0].mxu0
  %v4624 = vpop.f32.mrb[0].mxu0
  %v4625 = vadd.f32 %v4505, %v4624
  %v4626 = vpop.f32.mrb[0].mxu0
  %4627 = vmatprep.mubr.bf16.mxu0 0
  %4628 = vmatmul.mubr.bf16.gmra.mrb[0].mxu0 %v4498
  %v4629 = vpop.f32.mrb[0].mxu0
  %v4630 = vadd.f32 %v4505, %v4629
  %v4631 = vpop.f32.mrb[0].mxu0
  %v4632 = vpop.f32.mrb[0].mxu0
  %v4633 = vadd.f32 %v4505, %v4632
  %v4634 = vpop.f32.mrb[0].mxu0
  %4635 = vmatprep.mubr.bf16.mxu0 0
  %4636 = vmatmul.mubr.bf16.gmra.mrb[0].mxu0 %v4499
  %v4637 = vpop.f32.mrb[0].mxu0
  %v4638 = vadd.f32 %v4505, %v4637
  %v4639 = vpop.f32.mrb[0].mxu0
  %v4640 = vpop.f32.mrb[0].mxu0
  %v4641 = vadd.f32 %v4505, %v4640
  %v4642 = vpop.f32.mrb[0].mxu0
  %4643 = vmatprep.mubr.bf16.mxu0 0
  %4644 = vmatmul.mubr.bf16.gmra.mrb[0].mxu0 %v4500
  %v4645 = vpop.f32.mrb[0].mxu0
  %v4646 = vadd.f32 %v4505, %v4645
  %v4647 = vpop.f32.mrb[0].mxu0
  %v4648 = vpop.f32.mrb[0].mxu0
  %v4649 = vadd.f32 %v4505, %v4648
  %v4650 = vpop.f32.mrb[0].mxu0
  %4651 = vdwg.mxu0
  %4653 = vset.pattern.permute.xlu0 0
  %4654 = vperm.xlu0 %4653, %v4387
  %v4655 = vpop.permute.xlu0 %4654
  %4658 = vset.pattern.permute.xlu0 0
  %4659 = vperm.xlu0 %4658, %v4394
  %v4660 = vpop.permute.xlu0 %4659
  %4663 = vset.pattern.permute.xlu0 0
  %4664 = vperm.xlu0 %4663, %v4401
  %v4665 = vpop.permute.xlu0 %4664
  %4668 = vset.pattern.permute.xlu0 0
  %4669 = vperm.xlu0 %4668, %v4408
  %v4670 = vpop.permute.xlu0 %4669
  %4673 = vset.pattern.permute.xlu0 0
  %4674 = vperm.xlu0 %4673, %v4415
  %v4675 = vpop.permute.xlu0 %4674
  %4678 = vset.pattern.permute.xlu0 0
  %4679 = vperm.xlu0 %4678, %v4422
  %v4680 = vpop.permute.xlu0 %4679
  %4683 = vset.pattern.permute.xlu0 0
  %4684 = vperm.xlu0 %4683, %v4429
  %v4685 = vpop.permute.xlu0 %4684
  %4688 = vset.pattern.permute.xlu0 0
  %4689 = vperm.xlu0 %4688, %v4436
  %v4690 = vpop.permute.xlu0 %4689
  %4693 = vset.pattern.permute.xlu0 0
  %4694 = vperm.xlu0 %4693, %v4443
  %v4695 = vpop.permute.xlu0 %4694
  %4698 = vset.pattern.permute.xlu0 0
  %4699 = vperm.xlu0 %4698, %v4450
  %v4700 = vpop.permute.xlu0 %4699
  %4703 = vset.pattern.permute.xlu0 0
  %4704 = vperm.xlu0 %4703, %v4457
  %v4705 = vpop.permute.xlu0 %4704
  %4708 = vset.pattern.permute.xlu0 0
  %4709 = vperm.xlu0 %4708, %v4464
  %v4710 = vpop.permute.xlu0 %4709
  %4713 = vset.pattern.permute.xlu0 0
  %4714 = vperm.xlu0 %4713, %v4471
  %v4715 = vpop.permute.xlu0 %4714
  %4718 = vset.pattern.permute.xlu0 0
  %4719 = vperm.xlu0 %4718, %v4478
  %v4720 = vpop.permute.xlu0 %4719
  %4723 = vset.pattern.permute.xlu0 0
  %4724 = vperm.xlu0 %4723, %v4485
  %v4725 = vpop.permute.xlu0 %4724
  %4728 = vset.pattern.permute.xlu0 0
  %4729 = vperm.xlu0 %4728, %v4492
  %v4730 = vpop.permute.xlu0 %4729
  %v4732 = vlaneseq
  %v4733 = vshrl.u32 %v4732, 7
  %v4734 = vsub.s32 0, %v4733
  %v4735 = vrot.slane %v4006, %v4734
  %v4736 = vmul.f32 %v4655, %v4735
  %v4737 = vmul.f32 %v4660, %v4735
  %v4738 = vmul.f32 %v4665, %v4735
  %v4739 = vmul.f32 %v4670, %v4735
  %v4740 = vmul.f32 %v4675, %v4735
  %v4741 = vmul.f32 %v4680, %v4735
  %v4742 = vmul.f32 %v4685, %v4735
  %v4743 = vmul.f32 %v4690, %v4735
  %v4744 = vmul.f32 %v4695, %v4735
  %v4745 = vmul.f32 %v4700, %v4735
  %v4746 = vmul.f32 %v4705, %v4735
  %v4747 = vmul.f32 %v4710, %v4735
  %v4748 = vmul.f32 %v4715, %v4735
  %v4749 = vmul.f32 %v4720, %v4735
  %v4750 = vmul.f32 %v4725, %v4735
  %v4751 = vmul.f32 %v4730, %v4735
  %v4752 = vadd.f32 %v4590, %v4736
  %v4753 = vadd.f32 %v4593, %v4737
  %v4754 = vadd.f32 %v4598, %v4738
  %v4755 = vadd.f32 %v4601, %v4739
  %v4756 = vadd.f32 %v4606, %v4740
  %v4757 = vadd.f32 %v4609, %v4741
  %v4758 = vadd.f32 %v4614, %v4742
  %v4759 = vadd.f32 %v4617, %v4743
  %v4760 = vadd.f32 %v4622, %v4744
  %v4761 = vadd.f32 %v4625, %v4745
  %v4762 = vadd.f32 %v4630, %v4746
  %v4763 = vadd.f32 %v4633, %v4747
  %v4764 = vadd.f32 %v4638, %v4748
  %v4765 = vadd.f32 %v4641, %v4749
  %v4766 = vadd.f32 %v4646, %v4750
  %v4767 = vadd.f32 %v4649, %v4751
  %4768 = vset.pattern.permute.xlu0 1
  %4769 = vperm.xlu0 %4768, %v4387
  %v4770 = vpop.permute.xlu0 %4769
  %4772 = vset.pattern.permute.xlu0 1
  %4773 = vperm.xlu0 %4772, %v4394
  %v4774 = vpop.permute.xlu0 %4773
  %4776 = vset.pattern.permute.xlu0 1
  %4777 = vperm.xlu0 %4776, %v4401
  %v4778 = vpop.permute.xlu0 %4777
  %4780 = vset.pattern.permute.xlu0 1
  %4781 = vperm.xlu0 %4780, %v4408
  %v4782 = vpop.permute.xlu0 %4781
  %4784 = vset.pattern.permute.xlu0 1
  %4785 = vperm.xlu0 %4784, %v4415
  %v4786 = vpop.permute.xlu0 %4785
  %4788 = vset.pattern.permute.xlu0 1
  %4789 = vperm.xlu0 %4788, %v4422
  %v4790 = vpop.permute.xlu0 %4789
  %4792 = vset.pattern.permute.xlu0 1
  %4793 = vperm.xlu0 %4792, %v4429
  %v4794 = vpop.permute.xlu0 %4793
  %4796 = vset.pattern.permute.xlu0 1
  %4797 = vperm.xlu0 %4796, %v4436
  %v4798 = vpop.permute.xlu0 %4797
  %4800 = vset.pattern.permute.xlu0 1
  %4801 = vperm.xlu0 %4800, %v4443
  %v4802 = vpop.permute.xlu0 %4801
  %4804 = vset.pattern.permute.xlu0 1
  %4805 = vperm.xlu0 %4804, %v4450
  %v4806 = vpop.permute.xlu0 %4805
  %4808 = vset.pattern.permute.xlu0 1
  %4809 = vperm.xlu0 %4808, %v4457
  %v4810 = vpop.permute.xlu0 %4809
  %4812 = vset.pattern.permute.xlu0 1
  %4813 = vperm.xlu0 %4812, %v4464
  %v4814 = vpop.permute.xlu0 %4813
  %4816 = vset.pattern.permute.xlu0 1
  %4817 = vperm.xlu0 %4816, %v4471
  %v4818 = vpop.permute.xlu0 %4817
  %4820 = vset.pattern.permute.xlu0 1
  %4821 = vperm.xlu0 %4820, %v4478
  %v4822 = vpop.permute.xlu0 %4821
  %4824 = vset.pattern.permute.xlu0 1
  %4825 = vperm.xlu0 %4824, %v4485
  %v4826 = vpop.permute.xlu0 %4825
  %4828 = vset.pattern.permute.xlu0 1
  %4829 = vperm.xlu0 %4828, %v4492
  %v4830 = vpop.permute.xlu0 %4829
  %v4832 = vlaneseq
  %v4833 = vshrl.u32 %v4832, 7
  %v4834 = vsub.s32 1, %v4833
  %v4835 = vrot.slane %v4006, %v4834
  %v4836 = vmul.f32 %v4770, %v4835
  %v4837 = vmul.f32 %v4774, %v4835
  %v4838 = vmul.f32 %v4778, %v4835
  %v4839 = vmul.f32 %v4782, %v4835
  %v4840 = vmul.f32 %v4786, %v4835
  %v4841 = vmul.f32 %v4790, %v4835
  %v4842 = vmul.f32 %v4794, %v4835
  %v4843 = vmul.f32 %v4798, %v4835
  %v4844 = vmul.f32 %v4802, %v4835
  %v4845 = vmul.f32 %v4806, %v4835
  %v4846 = vmul.f32 %v4810, %v4835
  %v4847 = vmul.f32 %v4814, %v4835
  %v4848 = vmul.f32 %v4818, %v4835
  %v4849 = vmul.f32 %v4822, %v4835
  %v4850 = vmul.f32 %v4826, %v4835
  %v4851 = vmul.f32 %v4830, %v4835
  %v4852 = vadd.f32 %v4752, %v4836
  %v4853 = vadd.f32 %v4753, %v4837
  %v4854 = vadd.f32 %v4754, %v4838
  %v4855 = vadd.f32 %v4755, %v4839
  %v4856 = vadd.f32 %v4756, %v4840
  %v4857 = vadd.f32 %v4757, %v4841
  %v4858 = vadd.f32 %v4758, %v4842
  %v4859 = vadd.f32 %v4759, %v4843
  %v4860 = vadd.f32 %v4760, %v4844
  %v4861 = vadd.f32 %v4761, %v4845
  %v4862 = vadd.f32 %v4762, %v4846
  %v4863 = vadd.f32 %v4763, %v4847
  %v4864 = vadd.f32 %v4764, %v4848
  %v4865 = vadd.f32 %v4765, %v4849
  %v4866 = vadd.f32 %v4766, %v4850
  %v4867 = vadd.f32 %v4767, %v4851
  %v4869 = vsel %vm2372, %v4127, 0
  %v4872 = vsel %vm2372, %v4132, 0
  %v4875 = vsel %vm2372, %v4137, 0
  %v4878 = vsel %vm2372, %v4142, 0
  %v4881 = vsel %vm2372, %v4147, 0
  %v4884 = vsel %vm2372, %v4152, 0
  %v4887 = vsel %vm2372, %v4157, 0
  %v4890 = vsel %vm2372, %v4162, 0
  %v4893 = vsel %vm2372, %v4167, 0
  %v4896 = vsel %vm2372, %v4172, 0
  %v4899 = vsel %vm2372, %v4177, 0
  %v4902 = vsel %vm2372, %v4182, 0
  %v4905 = vsel %vm2372, %v4187, 0
  %v4908 = vsel %vm2372, %v4192, 0
  %v4911 = vsel %vm2372, %v4197, 0
  %v4914 = vsel %vm2372, %v4202, 0
  %v4917 = vsel %vm2421, %v4008, 0
  %4919 = vmatprep.subr.mxu0 0.0
  %4920 = vmatpush1.msra.mxu0 %v4917
  %4921 = vmatprep.subr.mxu0 0.0
  %4922 = vmatpush1.msra.mxu0 0.0
  %4923 = vmatprep.subr.mxu0 0.0
  %4924 = vmatpush1.msra.mxu0 0.0
  %4925 = vmatprep.subr.mxu0 0.0
  %4926 = vmatpush1.msra.mxu0 0.0
  %4927 = vmatprep.subr.mxu0 0.0
  %4928 = vmatpush1.msra.mxu0 0.0
  %4929 = vmatprep.subr.mxu0 0.0
  %4930 = vmatpush1.msra.mxu0 0.0
  %4931 = vmatprep.subr.mxu0 0.0
  %4932 = vmatpush1.msra.mxu0 0.0
  %4933 = vmatprep.subr.mxu0 0.0
  %4934 = vmatpush1.msra.mxu0 0.0
  %4935 = vmatprep.subr.mxu0 0.0
  %4936 = vmatpush1.msra.mxu0 0.0
  %4937 = vmatprep.subr.mxu0 0.0
  %4938 = vmatpush1.msra.mxu0 0.0
  %4939 = vmatprep.subr.mxu0 0.0
  %4940 = vmatpush1.msra.mxu0 0.0
  %4941 = vmatprep.subr.mxu0 0.0
  %4942 = vmatpush1.msra.mxu0 0.0
  %4943 = vmatprep.subr.mxu0 0.0
  %4944 = vmatpush1.msra.mxu0 0.0
  %4945 = vmatprep.subr.mxu0 0.0
  %4946 = vmatpush1.msra.mxu0 0.0
  %4947 = vmatprep.subr.mxu0 0.0
  %4948 = vmatpush1.msra.mxu0 0.0
  %4949 = vmatprep.subr.mxu0 0.0
  %4950 = vmatpush1.msra.mxu0 0.0
  %4951 = vmatprep.subr.mxu0 0.0
  %4952 = vmatpush1.msra.mxu0 0.0
  %4953 = vmatprep.subr.mxu0 0.0
  %4954 = vmatpush1.msra.mxu0 0.0
  %4955 = vmatprep.subr.mxu0 0.0
  %4956 = vmatpush1.msra.mxu0 0.0
  %4957 = vmatprep.subr.mxu0 0.0
  %4958 = vmatpush1.msra.mxu0 0.0
  %4959 = vmatprep.subr.mxu0 0.0
  %4960 = vmatpush1.msra.mxu0 0.0
  %4961 = vmatprep.subr.mxu0 0.0
  %4962 = vmatpush1.msra.mxu0 0.0
  %4963 = vmatprep.subr.mxu0 0.0
  %4964 = vmatpush1.msra.mxu0 0.0
  %4965 = vmatprep.subr.mxu0 0.0
  %4966 = vmatpush1.msra.mxu0 0.0
  %4967 = vmatprep.subr.mxu0 0.0
  %4968 = vmatpush1.msra.mxu0 0.0
  %4969 = vmatprep.subr.mxu0 0.0
  %4970 = vmatpush1.msra.mxu0 0.0
  %4971 = vmatprep.subr.mxu0 0.0
  %4972 = vmatpush1.msra.mxu0 0.0
  %4973 = vmatprep.subr.mxu0 0.0
  %4974 = vmatpush1.msra.mxu0 0.0
  %4975 = vmatprep.subr.mxu0 0.0
  %4976 = vmatpush1.msra.mxu0 0.0
  %4977 = vmatprep.subr.mxu0 0.0
  %4978 = vmatpush1.msra.mxu0 0.0
  %4979 = vmatprep.subr.mxu0 0.0
  %4980 = vmatpush1.msra.mxu0 0.0
  %4981 = vmatprep.subr.mxu0 0.0
  %4982 = vmatpush1.msra.mxu0 0.0
  %4983 = vmatprep.mubr.f32.mxu0 0.0
  %4984 = vmatmul.mubr.f32.gmra.mrb[0].mxu0 %v4869
  %v4985 = vpop.f32.mrb[0].mxu0
  %v4986 = vadd.f32 0.0, %v4985
  %v4987 = vpop.f32.mrb[0].mxu0
  %4988 = vmatprep.mubr.f32.mxu0 0.0
  %4989 = vmatmul.mubr.f32.gmra.mrb[0].mxu0 %v4872
  %v4990 = vpop.f32.mrb[0].mxu0
  %v4991 = vadd.f32 0.0, %v4990
  %v4992 = vpop.f32.mrb[0].mxu0
  %4993 = vmatprep.mubr.f32.mxu0 0.0
  %4994 = vmatmul.mubr.f32.gmra.mrb[0].mxu0 %v4875
  %v4995 = vpop.f32.mrb[0].mxu0
  %v4996 = vadd.f32 0.0, %v4995
  %v4997 = vpop.f32.mrb[0].mxu0
  %4998 = vmatprep.mubr.f32.mxu0 0.0
  %4999 = vmatmul.mubr.f32.gmra.mrb[0].mxu0 %v4878
  %v5000 = vpop.f32.mrb[0].mxu0
  %v5001 = vadd.f32 0.0, %v5000
  %v5002 = vpop.f32.mrb[0].mxu0
  %5003 = vmatprep.mubr.f32.mxu0 0.0
  %5004 = vmatmul.mubr.f32.gmra.mrb[0].mxu0 %v4881
  %v5005 = vpop.f32.mrb[0].mxu0
  %v5006 = vadd.f32 0.0, %v5005
  %v5007 = vpop.f32.mrb[0].mxu0
  %5008 = vmatprep.mubr.f32.mxu0 0.0
  %5009 = vmatmul.mubr.f32.gmra.mrb[0].mxu0 %v4884
  %v5010 = vpop.f32.mrb[0].mxu0
  %v5011 = vadd.f32 0.0, %v5010
  %v5012 = vpop.f32.mrb[0].mxu0
  %5013 = vmatprep.mubr.f32.mxu0 0.0
  %5014 = vmatmul.mubr.f32.gmra.mrb[0].mxu0 %v4887
  %v5015 = vpop.f32.mrb[0].mxu0
  %v5016 = vadd.f32 0.0, %v5015
  %v5017 = vpop.f32.mrb[0].mxu0
  %5018 = vmatprep.mubr.f32.mxu0 0.0
  %5019 = vmatmul.mubr.f32.gmra.mrb[0].mxu0 %v4890
  %v5020 = vpop.f32.mrb[0].mxu0
  %v5021 = vadd.f32 0.0, %v5020
  %v5022 = vpop.f32.mrb[0].mxu0
  %5023 = vmatprep.mubr.f32.mxu0 0.0
  %5024 = vmatmul.mubr.f32.gmra.mrb[0].mxu0 %v4893
  %v5025 = vpop.f32.mrb[0].mxu0
  %v5026 = vadd.f32 0.0, %v5025
  %v5027 = vpop.f32.mrb[0].mxu0
  %5028 = vmatprep.mubr.f32.mxu0 0.0
  %5029 = vmatmul.mubr.f32.gmra.mrb[0].mxu0 %v4896
  %v5030 = vpop.f32.mrb[0].mxu0
  %v5031 = vadd.f32 0.0, %v5030
  %v5032 = vpop.f32.mrb[0].mxu0
  %5033 = vmatprep.mubr.f32.mxu0 0.0
  %5034 = vmatmul.mubr.f32.gmra.mrb[0].mxu0 %v4899
  %v5035 = vpop.f32.mrb[0].mxu0
  %v5036 = vadd.f32 0.0, %v5035
  %v5037 = vpop.f32.mrb[0].mxu0
  %5038 = vmatprep.mubr.f32.mxu0 0.0
  %5039 = vmatmul.mubr.f32.gmra.mrb[0].mxu0 %v4902
  %v5040 = vpop.f32.mrb[0].mxu0
  %v5041 = vadd.f32 0.0, %v5040
  %v5042 = vpop.f32.mrb[0].mxu0
  %5043 = vmatprep.mubr.f32.mxu0 0.0
  %5044 = vmatmul.mubr.f32.gmra.mrb[0].mxu0 %v4905
  %v5045 = vpop.f32.mrb[0].mxu0
  %v5046 = vadd.f32 0.0, %v5045
  %v5047 = vpop.f32.mrb[0].mxu0
  %5048 = vmatprep.mubr.f32.mxu0 0.0
  %5049 = vmatmul.mubr.f32.gmra.mrb[0].mxu0 %v4908
  %v5050 = vpop.f32.mrb[0].mxu0
  %v5051 = vadd.f32 0.0, %v5050
  %v5052 = vpop.f32.mrb[0].mxu0
  %5053 = vmatprep.mubr.f32.mxu0 0.0
  %5054 = vmatmul.mubr.f32.gmra.mrb[0].mxu0 %v4911
  %v5055 = vpop.f32.mrb[0].mxu0
  %v5056 = vadd.f32 0.0, %v5055
  %v5057 = vpop.f32.mrb[0].mxu0
  %5058 = vmatprep.mubr.f32.mxu0 0.0
  %5059 = vmatmul.mubr.f32.gmra.mrb[0].mxu0 %v4914
  %v5060 = vpop.f32.mrb[0].mxu0
  %v5061 = vadd.f32 0.0, %v5060
  %v5062 = vpop.f32.mrb[0].mxu0
  %5063 = vdwg.mxu0
  %v5064 = vpack.c.bf16 %v4853, %v4852
  %v5065 = vpack.c.bf16 %v4991, %v4986
  %v5066 = vpack.c.bf16 %v4855, %v4854
  %v5067 = vpack.c.bf16 %v5001, %v4996
  %v5068 = vpack.c.bf16 %v4857, %v4856
  %v5069 = vpack.c.bf16 %v5011, %v5006
  %v5070 = vpack.c.bf16 %v4859, %v4858
  %v5071 = vpack.c.bf16 %v5021, %v5016
  %v5072 = vpack.c.bf16 %v4861, %v4860
  %v5073 = vpack.c.bf16 %v5031, %v5026
  %v5074 = vpack.c.bf16 %v4863, %v4862
  %v5075 = vpack.c.bf16 %v5041, %v5036
  %v5076 = vpack.c.bf16 %v4865, %v4864
  %v5077 = vpack.c.bf16 %v5051, %v5046
  %v5078 = vpack.c.bf16 %v4867, %v4866
  %v5079 = vpack.c.bf16 %v5061, %v5056
  %v5096 = vunpack.c.l.b16 %v5064
  %v5097 = vunpack.c.l.b16 %v5065
  %v5098 = vunpack.c.h.b16 %v5064
  %v5099 = vunpack.c.h.b16 %v5065
  %v5100 = vunpack.c.l.b16 %v5066
  %v5101 = vunpack.c.l.b16 %v5067
  %v5102 = vunpack.c.h.b16 %v5066
  %v5103 = vunpack.c.h.b16 %v5067
  %v5104 = vunpack.c.l.b16 %v5068
  %v5105 = vunpack.c.l.b16 %v5069
  %v5106 = vunpack.c.h.b16 %v5068
  %v5107 = vunpack.c.h.b16 %v5069
  %v5108 = vunpack.c.l.b16 %v5070
  %v5109 = vunpack.c.l.b16 %v5071
  %v5110 = vunpack.c.h.b16 %v5070
  %v5111 = vunpack.c.h.b16 %v5071
  %v5112 = vunpack.c.l.b16 %v5072
  %v5113 = vunpack.c.l.b16 %v5073
  %v5114 = vunpack.c.h.b16 %v5072
  %v5115 = vunpack.c.h.b16 %v5073
  %v5116 = vunpack.c.l.b16 %v5074
  %v5117 = vunpack.c.l.b16 %v5075
  %v5118 = vunpack.c.h.b16 %v5074
  %v5119 = vunpack.c.h.b16 %v5075
  %v5120 = vunpack.c.l.b16 %v5076
  %v5121 = vunpack.c.l.b16 %v5077
  %v5122 = vunpack.c.h.b16 %v5076
  %v5123 = vunpack.c.h.b16 %v5077
  %v5124 = vunpack.c.l.b16 %v5078
  %v5125 = vunpack.c.l.b16 %v5079
  %v5126 = vunpack.c.h.b16 %v5078
  %v5127 = vunpack.c.h.b16 %v5079
  %v5128 = vpack.c.b16 %v5097, %v5096
  %v5129 = vpack.c.b16 %v5099, %v5098
  %v5130 = vpack.c.b16 %v5101, %v5100
  %v5131 = vpack.c.b16 %v5103, %v5102
  %v5132 = vpack.c.b16 %v5105, %v5104
  %v5133 = vpack.c.b16 %v5107, %v5106
  %v5134 = vpack.c.b16 %v5109, %v5108
  %v5135 = vpack.c.b16 %v5111, %v5110
  %v5136 = vpack.c.b16 %v5113, %v5112
  %v5137 = vpack.c.b16 %v5115, %v5114
  %v5138 = vpack.c.b16 %v5117, %v5116
  %v5139 = vpack.c.b16 %v5119, %v5118
  %v5140 = vpack.c.b16 %v5121, %v5120
  %v5141 = vpack.c.b16 %v5123, %v5122
  %v5142 = vpack.c.b16 %v5125, %v5124
  %v5143 = vpack.c.b16 %v5127, %v5126
  %vm5160 = vcmask 48132
  %vm5161 = vmor %vm5160, %vm880
  %5162 = vst.msk [vmem:[%s17] sm:$0xff] %vm5161, %v5128
  %5163 = vst.msk [vmem:[%s17 + $0x8] sm:$0xff] %vm5161, %v5129
  %5164 = vst.msk [vmem:[%s17 + $0x10] sm:$0xff] %vm5161, %v5130
  %5165 = vst.msk [vmem:[%s17 + $0x18] sm:$0xff] %vm5161, %v5131
  %5166 = vst.msk [vmem:[%s17 + $0x20] sm:$0xff] %vm5161, %v5132
  %5167 = vst.msk [vmem:[%s17 + $0x28] sm:$0xff] %vm5161, %v5133
  %5168 = vst.msk [vmem:[%s17 + $0x30] sm:$0xff] %vm5161, %v5134
  %5169 = vst.msk [vmem:[%s17 + $0x38] sm:$0xff] %vm5161, %v5135
  %5170 = vst.msk [vmem:[%s17 + $0x40] sm:$0xff] %vm5161, %v5136
  %5171 = vst.msk [vmem:[%s17 + $0x48] sm:$0xff] %vm5161, %v5137
  %5172 = vst.msk [vmem:[%s17 + $0x50] sm:$0xff] %vm5161, %v5138
  %5173 = vst.msk [vmem:[%s17 + $0x58] sm:$0xff] %vm5161, %v5139
  %5174 = vst.msk [vmem:[%s17 + $0x60] sm:$0xff] %vm5161, %v5140
  %5175 = vst.msk [vmem:[%s17 + $0x68] sm:$0xff] %vm5161, %v5141
  %5176 = vst.msk [vmem:[%s17 + $0x70] sm:$0xff] %vm5161, %v5142
  %5177 = vst.msk [vmem:[%s17 + $0x78] sm:$0xff] %vm5161, %v5143
  // Predicated region
  $region70: #{scoring_model_forward.5} parent=0 // pred_check
    _
  $region71: #{scoring_model_forward.5} parent=0 // pred_check_branch
    %5179 = sbr.rel (0) target = $region73
  $region72: #{scoring_model_forward.5} parent=0 // pred_region
    _
  $region73: #{scoring_model_forward.5} parent=0 // pred_fallthru
    _
  // Predicated region
  $region74: #{scoring_model_forward.5} parent=0 // pred_check
    _
  $region75: #{scoring_model_forward.5} parent=0 // pred_check_branch
    %5181 = sbr.rel (0) target = $region77
  $region76: #{scoring_model_forward.5} parent=0 // pred_region
    _
  $region77: #{scoring_model_forward.5} parent=0 // pred_fallthru
    _

</llo_original>
